<compile_context>
chip_gen: v6e
topology: v6e:2x2x1
jax: 0.10.0
libtpu: 0.0.40
codegen_flags: <defaults>
</compile_context>

<pallas_src>
import jax
import jax.numpy as jnp
from jax.experimental import pallas as pl
from jax.experimental.pallas import tpu as pltpu

N_BATCH, H, W = 2, 28, 28
CIN, PLANES, NUM_CLASSES = 1, 16, 10
EPS = 1e-5

HP, WP = H + 2, W + 2            # zero-padded spatial extent (pad=1 for the 3x3 convs)
PIMG = HP * WP                   # 900 padded pixels per image
SPAN = N_BATCH * PIMG            # 1800 padded pixels, both images back to back
MARGIN = 32                      # >= 31 = max |tap offset|; keeps shifted slices in bounds
LTOT = 1920                      # MARGIN + SPAN + tail, multiple of 128 (lane dense)
K_LIN = PLANES * NUM_CLASSES     # 160 reordered linear-weight columns (c*10 + j)

# 3x3 tap offsets in the flat padded-pixel (lane) index, (ky, kx) row-major.
TAP_OFFSETS = tuple((ky - 1) * WP + (kx - 1) for ky in range(3) for kx in range(3))

# Column layout of the packed per-channel parameter table (16 x 16).
COL_W1, COL_B1, COL_B2, COL_SCS, COL_SCB, CP_COLS = 0, 9, 10, 11, 12, 16


# ------------------------------ fused Pallas kernel ------------------------------

def _fused_resnet_kernel(x_ref, mask_ref, cp_ref, w2_ref, linb_ref, wlin_hbm,
                         out_ref, h1_ref, wlin_vmem, wlin_sem):
    # Prefetch the (largest) linear weight HBM -> VMEM; overlaps the conv compute.
    wlin_copy = pltpu.make_async_copy(wlin_hbm, wlin_vmem, wlin_sem)
    wlin_copy.start()

    mask = mask_ref[...]                                     # (1, SPAN) interior mask

    # ---- conv1 (3x3, Cin=1) + BN1 + ReLU: 9 VPU broadcast-FMAs over shifted views ----
    acc1 = jnp.zeros((PLANES, SPAN), jnp.float32)
    for t, off in enumerate(TAP_OFFSETS):
        xs = x_ref[0:1, MARGIN + off:MARGIN + off + SPAN]    # (1, SPAN)
        acc1 = acc1 + cp_ref[:, COL_W1 + t:COL_W1 + t + 1] * xs
    h1 = jnp.maximum(acc1 + cp_ref[:, COL_B1:COL_B1 + 1], 0.0) * mask

    # Stage h1 with a zero padding ring / zero margins so conv2 can read shifted views.
    h1_ref[...] = jnp.zeros((PLANES, LTOT), jnp.float32)
    h1_ref[:, MARGIN:MARGIN + SPAN] = h1

    # ---- conv2 (3x3, 16->16) + BN2: 9 small MXU matmuls over shifted views ----------
    acc2 = jnp.zeros((PLANES, SPAN), jnp.float32)
    for t, off in enumerate(TAP_OFFSETS):
        hs = h1_ref[:, MARGIN + off:MARGIN + off + SPAN]     # (16, SPAN)
        acc2 = acc2 + jnp.dot(w2_ref[t], hs, preferred_element_type=jnp.float32)

    # ---- shortcut (1x1 conv + BN folded to per-channel scale/bias), residual ReLU ---
    x0 = x_ref[0:1, MARGIN:MARGIN + SPAN]                    # (1, SPAN)
    shortcut = cp_ref[:, COL_SCS:COL_SCS + 1] * x0 + cp_ref[:, COL_SCB:COL_SCB + 1]
    h2 = jnp.maximum(acc2 + cp_ref[:, COL_B2:COL_B2 + 1] + shortcut, 0.0) * mask

    # ---- Linear, with the NCHW-flatten permutation pre-folded into wlin -------------
    # wlin[q', c*10+j] = lin_w[j, c*784 + y*28 + x] at q' = (y+1)*30 + (x+1), 0 on the
    # padding ring, so out[n, j] = lin_b[j] + sum_c (h2_n @ wlin)[c, c*10 + j].
    wlin_copy.wait()
    wlin = wlin_vmem[...]                                    # (PIMG, K_LIN)
    for n in range(N_BATCH):
        h2n = h2[:, n * PIMG:(n + 1) * PIMG]                 # (16, 900)
        m = jnp.dot(h2n, wlin, preferred_element_type=jnp.float32)   # (16, 160)
        acc = linb_ref[...]                                  # (1, 10)
        for c in range(PLANES):
            acc = acc + m[c:c + 1, c * NUM_CLASSES:(c + 1) * NUM_CLASSES]
        out_ref[n:n + 1, :] = acc


# --------------------------------- parameter prep ---------------------------------

def bn_fold(gamma, beta, mean, var, eps=EPS):
    scale = gamma / jnp.sqrt(var + eps)
    return scale, beta - mean * scale


def init_params(key):
    k1, k2, k3, k4 = jax.random.split(key, 4)

    def kaiming(k, shape, fan_in):
        return jax.random.normal(k, shape, jnp.float32) * jnp.sqrt(2.0 / fan_in)

    params = dict(
        conv1_w=kaiming(k1, (PLANES, CIN, 3, 3), CIN * 9),
        conv2_w=kaiming(k2, (PLANES, PLANES, 3, 3), PLANES * 9),
        short_w=kaiming(k3, (PLANES, CIN, 1, 1), CIN),
        lin_w=kaiming(k4, (NUM_CLASSES, PLANES * H * W), PLANES * H * W),
        lin_b=jnp.zeros((NUM_CLASSES,), jnp.float32),
    )

    # BatchNorm2d defaults (eval mode): gamma=1, beta=0, running_mean=0, running_var=1
    def bn():
        return (jnp.ones((PLANES,), jnp.float32), jnp.zeros((PLANES,), jnp.float32),
                jnp.zeros((PLANES,), jnp.float32), jnp.ones((PLANES,), jnp.float32))

    params["bn1"], params["bn2"], params["bn_s"] = bn(), bn(), bn()
    return params


def prepare_params(params):
    """One-time (outside the hot path) repack of weights into the kernel layout."""
    s1, b1 = bn_fold(*params["bn1"])
    s2, b2 = bn_fold(*params["bn2"])
    ss, bs = bn_fold(*params["bn_s"])

    # Packed per-channel table: cols 0..8 = BN1-folded conv1 taps, then biases/scales.
    cp = jnp.zeros((PLANES, CP_COLS), jnp.float32)
    cp = cp.at[:, COL_W1:COL_W1 + 9].set(
        params["conv1_w"].reshape(PLANES, 9) * s1[:, None])
    cp = cp.at[:, COL_B1].set(b1)
    cp = cp.at[:, COL_B2].set(b2)
    cp = cp.at[:, COL_SCS].set(params["short_w"].reshape(PLANES) * ss)
    cp = cp.at[:, COL_SCB].set(bs)

    # conv2 weights with BN2 scale folded in: w2m[t, c_out, c_in].
    w2m = jnp.transpose(params["conv2_w"], (2, 3, 0, 1)).reshape(9, PLANES, PLANES)
    w2m = w2m * s2.reshape(1, PLANES, 1)

    # Linear weight reordered to padded-(y,x)-major, (c,j)-minor columns, zero rows on
    # the padding ring (also masks any ring garbage in h2).
    wl = params["lin_w"].reshape(NUM_CLASSES, PLANES, H, W)
    wl = jnp.transpose(wl, (2, 3, 1, 0)).reshape(H, W, K_LIN)
    wl = jnp.pad(wl, ((1, 1), (1, 1), (0, 0))).reshape(PIMG, K_LIN)

    # Interior-pixel mask over the flat padded span (zeroes the padding ring).
    m2d = jnp.zeros((HP, WP), jnp.float32).at[1:H + 1, 1:W + 1].set(1.0)
    mask = jnp.tile(m2d.reshape(-1), (N_BATCH,)).reshape(1, SPAN)

    return dict(cp=cp, w2m=w2m, wlin2=wl,
                lin_b=params["lin_b"].reshape(1, NUM_CLASSES), mask=mask)


# ------------------------------------ forward -------------------------------------

@jax.jit
def simple_resnet_forward(prep, x_nchw):
    # Zero-padded flat-spatial input row: lane MARGIN + n*900 + yp*30 + xp.  (CIN == 1)
    x = x_nchw.astype(jnp.float32).reshape(N_BATCH, H, W)
    xpad = jnp.pad(x, ((0, 0), (1, 1), (1, 1)))                       # (N, 30, 30)
    xbuf = jnp.pad(xpad.reshape(1, SPAN),
                   ((0, 0), (MARGIN, LTOT - MARGIN - SPAN)))          # (1, 1920)

    vmem = pl.BlockSpec(memory_space=pltpu.MemorySpace.VMEM)
    return pl.pallas_call(
        _fused_resnet_kernel,
        out_shape=jax.ShapeDtypeStruct((N_BATCH, NUM_CLASSES), jnp.float32),
        in_specs=[vmem, vmem, vmem, vmem, vmem,
                  pl.BlockSpec(memory_space=pl.ANY)],      # linear weight stays in HBM
        out_specs=vmem,
        scratch_shapes=[
            pltpu.VMEM((PLANES, LTOT), jnp.float32),       # h1 with zero padding ring
            pltpu.VMEM((PIMG, K_LIN), jnp.float32),        # prefetched linear weight
            pltpu.SemaphoreType.DMA(()),
        ],
    )(xbuf, prep["mask"], prep["cp"], prep["w2m"], prep["lin_b"], prep["wlin2"])


# -------------------------------- pure-JAX reference -------------------------------

def reference_forward(params, x_nchw):
    def bn(x, p):
        g, b, m, v = (t.reshape(1, -1, 1, 1) for t in p)
        return (x - m) / jnp.sqrt(v + EPS) * g + b

    def conv(x, w, pad):
        return jax.lax.conv_general_dilated(
            x, w, (1, 1), [(pad, pad), (pad, pad)],
            dimension_numbers=("NCHW", "OIHW", "NCHW"),
            precision=jax.lax.Precision.HIGHEST)

    out = jax.nn.relu(bn(conv(x_nchw, params["conv1_w"], 1), params["bn1"]))
    out = bn(conv(out, params["conv2_w"], 1), params["bn2"])
    out = jax.nn.relu(out + bn(conv(x_nchw, params["short_w"], 0), params["bn_s"]))
    feat = out.reshape(out.shape[0], -1)
    return jnp.dot(feat, params["lin_w"].T,
                   precision=jax.lax.Precision.HIGHEST) + params["lin_b"]


if __name__ == "__main__":
    key = jax.random.PRNGKey(0)
    kp, kx = jax.random.split(key)
    params = init_params(kp)
    prep = prepare_params(params)

    x = jax.random.normal(kx, (N_BATCH, CIN, H, W), dtype=jnp.float32)
    logits = simple_resnet_forward(prep, x)
    jax.block_until_ready(logits)
    assert logits.shape == (N_BATCH, NUM_CLASSES)

    ref = reference_forward(params, x)
    err = float(jnp.max(jnp.abs(logits - ref)))
    assert err < 2e-2, f"kernel/reference mismatch, max abs err {err}"
    print("KERNEL_OK")
</pallas_src>

<mosaic_0001>
module attributes {stable_mosaic.version = 11 : i64} {
  func.func @_fused_resnet_kernel(%arg0: memref<1x1920xf32, #tpu.memory_space<vmem>>, %arg1: memref<1x1800xf32, #tpu.memory_space<vmem>>, %arg2: memref<16x16xf32, #tpu.memory_space<vmem>>, %arg3: memref<9x16x16xf32, #tpu.memory_space<vmem>>, %arg4: memref<1x10xf32, #tpu.memory_space<vmem>>, %arg5: memref<900x160xf32, #tpu.memory_space<any>>, %arg6: memref<2x10xf32, #tpu.memory_space<vmem>>, %arg7: memref<16x1920xf32, #tpu.memory_space<vmem>>, %arg8: memref<900x160xf32, #tpu.memory_space<vmem>>, %arg9: memref<!tpu.dma_semaphore, #tpu.memory_space<semaphore_mem>>) attributes {dimension_semantics = [], scalar_prefetch = 0 : i64, scratch_operands = 3 : i64, tpu.core_type = #tpu.core_type<tc>} {
    tpu.enqueue_dma source(%arg5 : memref<900x160xf32, #tpu.memory_space<any>>) target(%arg8 : memref<900x160xf32, #tpu.memory_space<vmem>>) target_semaphore(%arg9 : memref<!tpu.dma_semaphore, #tpu.memory_space<semaphore_mem>>)
    %c0 = arith.constant 0 : index
    %c0_0 = arith.constant 0 : index
    %0 = vector.load %arg1[%c0, %c0_0] : memref<1x1800xf32, #tpu.memory_space<vmem>>, vector<1x1800xf32>
    %cst = arith.constant 0.000000e+00 : f32
    %1 = vector.broadcast %cst : f32 to vector<16x1800xf32>
    %c0_1 = arith.constant 0 : index
    %c1 = arith.constant 1 : index
    %2 = vector.load %arg0[%c0_1, %c1] : memref<1x1920xf32, #tpu.memory_space<vmem>>, vector<1x1800xf32>
    %c0_2 = arith.constant 0 : index
    %c0_3 = arith.constant 0 : index
    %3 = vector.load %arg2[%c0_2, %c0_3] : memref<16x16xf32, #tpu.memory_space<vmem>>, vector<16x1xf32>
    %4 = vector.broadcast %3 : vector<16x1xf32> to vector<16x1800xf32>
    %5 = vector.broadcast %2 : vector<1x1800xf32> to vector<16x1800xf32>
    %6 = arith.mulf %4, %5 : vector<16x1800xf32>
    %7 = arith.addf %1, %6 : vector<16x1800xf32>
    %c0_4 = arith.constant 0 : index
    %c2 = arith.constant 2 : index
    %8 = vector.load %arg0[%c0_4, %c2] : memref<1x1920xf32, #tpu.memory_space<vmem>>, vector<1x1800xf32>
    %c0_5 = arith.constant 0 : index
    %c1_6 = arith.constant 1 : index
    %9 = vector.load %arg2[%c0_5, %c1_6] : memref<16x16xf32, #tpu.memory_space<vmem>>, vector<16x1xf32>
    %10 = vector.broadcast %9 : vector<16x1xf32> to vector<16x1800xf32>
    %11 = vector.broadcast %8 : vector<1x1800xf32> to vector<16x1800xf32>
    %12 = arith.mulf %10, %11 : vector<16x1800xf32>
    %13 = arith.addf %7, %12 : vector<16x1800xf32>
    %c0_7 = arith.constant 0 : index
    %c3 = arith.constant 3 : index
    %14 = vector.load %arg0[%c0_7, %c3] : memref<1x1920xf32, #tpu.memory_space<vmem>>, vector<1x1800xf32>
    %c0_8 = arith.constant 0 : index
    %c2_9 = arith.constant 2 : index
    %15 = vector.load %arg2[%c0_8, %c2_9] : memref<16x16xf32, #tpu.memory_space<vmem>>, vector<16x1xf32>
    %16 = vector.broadcast %15 : vector<16x1xf32> to vector<16x1800xf32>
    %17 = vector.broadcast %14 : vector<1x1800xf32> to vector<16x1800xf32>
    %18 = arith.mulf %16, %17 : vector<16x1800xf32>
    %19 = arith.addf %13, %18 : vector<16x1800xf32>
    %c0_10 = arith.constant 0 : index
    %c31 = arith.constant 31 : index
    %20 = vector.load %arg0[%c0_10, %c31] : memref<1x1920xf32, #tpu.memory_space<vmem>>, vector<1x1800xf32>
    %c0_11 = arith.constant 0 : index
    %c3_12 = arith.constant 3 : index
    %21 = vector.load %arg2[%c0_11, %c3_12] : memref<16x16xf32, #tpu.memory_space<vmem>>, vector<16x1xf32>
    %22 = vector.broadcast %21 : vector<16x1xf32> to vector<16x1800xf32>
    %23 = vector.broadcast %20 : vector<1x1800xf32> to vector<16x1800xf32>
    %24 = arith.mulf %22, %23 : vector<16x1800xf32>
    %25 = arith.addf %19, %24 : vector<16x1800xf32>
    %c0_13 = arith.constant 0 : index
    %c32 = arith.constant 32 : index
    %26 = vector.load %arg0[%c0_13, %c32] : memref<1x1920xf32, #tpu.memory_space<vmem>>, vector<1x1800xf32>
    %c0_14 = arith.constant 0 : index
    %c4 = arith.constant 4 : index
    %27 = vector.load %arg2[%c0_14, %c4] : memref<16x16xf32, #tpu.memory_space<vmem>>, vector<16x1xf32>
    %28 = vector.broadcast %27 : vector<16x1xf32> to vector<16x1800xf32>
    %29 = vector.broadcast %26 : vector<1x1800xf32> to vector<16x1800xf32>
    %30 = arith.mulf %28, %29 : vector<16x1800xf32>
    %31 = arith.addf %25, %30 : vector<16x1800xf32>
    %c0_15 = arith.constant 0 : index
    %c33 = arith.constant 33 : index
    %32 = vector.load %arg0[%c0_15, %c33] : memref<1x1920xf32, #tpu.memory_space<vmem>>, vector<1x1800xf32>
    %c0_16 = arith.constant 0 : index
    %c5 = arith.constant 5 : index
    %33 = vector.load %arg2[%c0_16, %c5] : memref<16x16xf32, #tpu.memory_space<vmem>>, vector<16x1xf32>
    %34 = vector.broadcast %33 : vector<16x1xf32> to vector<16x1800xf32>
    %35 = vector.broadcast %32 : vector<1x1800xf32> to vector<16x1800xf32>
    %36 = arith.mulf %34, %35 : vector<16x1800xf32>
    %37 = arith.addf %31, %36 : vector<16x1800xf32>
    %c0_17 = arith.constant 0 : index
    %c61 = arith.constant 61 : index
    %38 = vector.load %arg0[%c0_17, %c61] : memref<1x1920xf32, #tpu.memory_space<vmem>>, vector<1x1800xf32>
    %c0_18 = arith.constant 0 : index
    %c6 = arith.constant 6 : index
    %39 = vector.load %arg2[%c0_18, %c6] : memref<16x16xf32, #tpu.memory_space<vmem>>, vector<16x1xf32>
    %40 = vector.broadcast %39 : vector<16x1xf32> to vector<16x1800xf32>
    %41 = vector.broadcast %38 : vector<1x1800xf32> to vector<16x1800xf32>
    %42 = arith.mulf %40, %41 : vector<16x1800xf32>
    %43 = arith.addf %37, %42 : vector<16x1800xf32>
    %c0_19 = arith.constant 0 : index
    %c62 = arith.constant 62 : index
    %44 = vector.load %arg0[%c0_19, %c62] : memref<1x1920xf32, #tpu.memory_space<vmem>>, vector<1x1800xf32>
    %c0_20 = arith.constant 0 : index
    %c7 = arith.constant 7 : index
    %45 = vector.load %arg2[%c0_20, %c7] : memref<16x16xf32, #tpu.memory_space<vmem>>, vector<16x1xf32>
    %46 = vector.broadcast %45 : vector<16x1xf32> to vector<16x1800xf32>
    %47 = vector.broadcast %44 : vector<1x1800xf32> to vector<16x1800xf32>
    %48 = arith.mulf %46, %47 : vector<16x1800xf32>
    %49 = arith.addf %43, %48 : vector<16x1800xf32>
    %c0_21 = arith.constant 0 : index
    %c63 = arith.constant 63 : index
    %50 = vector.load %arg0[%c0_21, %c63] : memref<1x1920xf32, #tpu.memory_space<vmem>>, vector<1x1800xf32>
    %c0_22 = arith.constant 0 : index
    %c8 = arith.constant 8 : index
    %51 = vector.load %arg2[%c0_22, %c8] : memref<16x16xf32, #tpu.memory_space<vmem>>, vector<16x1xf32>
    %52 = vector.broadcast %51 : vector<16x1xf32> to vector<16x1800xf32>
    %53 = vector.broadcast %50 : vector<1x1800xf32> to vector<16x1800xf32>
    %54 = arith.mulf %52, %53 : vector<16x1800xf32>
    %55 = arith.addf %49, %54 : vector<16x1800xf32>
    %c0_23 = arith.constant 0 : index
    %c9 = arith.constant 9 : index
    %56 = vector.load %arg2[%c0_23, %c9] : memref<16x16xf32, #tpu.memory_space<vmem>>, vector<16x1xf32>
    %57 = vector.broadcast %56 : vector<16x1xf32> to vector<16x1800xf32>
    %58 = arith.addf %55, %57 : vector<16x1800xf32>
    %cst_24 = arith.constant 0.000000e+00 : f32
    %59 = vector.broadcast %cst_24 : f32 to vector<16x1800xf32>
    %60 = arith.maximumf %58, %59 : vector<16x1800xf32>
    %61 = vector.broadcast %0 : vector<1x1800xf32> to vector<16x1800xf32>
    %62 = arith.mulf %60, %61 : vector<16x1800xf32>
    %cst_25 = arith.constant 0.000000e+00 : f32
    %63 = vector.broadcast %cst_25 : f32 to vector<16x1920xf32>
    %c0_26 = arith.constant 0 : index
    %c0_27 = arith.constant 0 : index
    %64 = vector.load %arg7[%c0_26, %c0_27] : memref<16x1920xf32, #tpu.memory_space<vmem>>, vector<16x1920xf32>
    tpu.vector_store %arg7[%c0_26, %c0_27], %63 {strides = array<i32>} : memref<16x1920xf32, #tpu.memory_space<vmem>>, vector<16x1920xf32>,
    %c0_28 = arith.constant 0 : index
    %c32_29 = arith.constant 32 : index
    %65 = vector.load %arg7[%c0_28, %c32_29] : memref<16x1920xf32, #tpu.memory_space<vmem>>, vector<16x1800xf32>
    tpu.vector_store %arg7[%c0_28, %c32_29], %62 {strides = array<i32>} : memref<16x1920xf32, #tpu.memory_space<vmem>>, vector<16x1800xf32>,
    %cst_30 = arith.constant 0.000000e+00 : f32
    %66 = vector.broadcast %cst_30 : f32 to vector<16x1800xf32>
    %c0_31 = arith.constant 0 : index
    %c1_32 = arith.constant 1 : index
    %67 = vector.load %arg7[%c0_31, %c1_32] : memref<16x1920xf32, #tpu.memory_space<vmem>>, vector<16x1800xf32>
    %c0_33 = arith.constant 0 : index
    %c0_34 = arith.constant 0 : index
    %c0_35 = arith.constant 0 : index
    %68 = vector.load %arg3[%c0_33, %c0_34, %c0_35] : memref<9x16x16xf32, #tpu.memory_space<vmem>>, vector<1x16x16xf32>
    %69 = vector.shape_cast %68 : vector<1x16x16xf32> to vector<16x16xf32>
    %cst_36 = arith.constant dense<0.000000e+00> : vector<16x1800xf32>
    %70 = tpu.matmul %69, %67, %cst_36 {dimension_numbers = #tpu.dot_dimension_numbers<[1], [0], [0], [1], [0, 0, 1, 1], [], []>} : vector<16x16xf32>, vector<16x1800xf32>, vector<16x1800xf32> -> vector<16x1800xf32>
    %71 = arith.addf %66, %70 : vector<16x1800xf32>
    %c0_37 = arith.constant 0 : index
    %c2_38 = arith.constant 2 : index
    %72 = vector.load %arg7[%c0_37, %c2_38] : memref<16x1920xf32, #tpu.memory_space<vmem>>, vector<16x1800xf32>
    %c1_39 = arith.constant 1 : index
    %c0_40 = arith.constant 0 : index
    %c0_41 = arith.constant 0 : index
    %73 = vector.load %arg3[%c1_39, %c0_40, %c0_41] : memref<9x16x16xf32, #tpu.memory_space<vmem>>, vector<1x16x16xf32>
    %74 = vector.shape_cast %73 : vector<1x16x16xf32> to vector<16x16xf32>
    %cst_42 = arith.constant dense<0.000000e+00> : vector<16x1800xf32>
    %75 = tpu.matmul %74, %72, %cst_42 {dimension_numbers = #tpu.dot_dimension_numbers<[1], [0], [0], [1], [0, 0, 1, 1], [], []>} : vector<16x16xf32>, vector<16x1800xf32>, vector<16x1800xf32> -> vector<16x1800xf32>
    %76 = arith.addf %71, %75 : vector<16x1800xf32>
    %c0_43 = arith.constant 0 : index
    %c3_44 = arith.constant 3 : index
    %77 = vector.load %arg7[%c0_43, %c3_44] : memref<16x1920xf32, #tpu.memory_space<vmem>>, vector<16x1800xf32>
    %c2_45 = arith.constant 2 : index
    %c0_46 = arith.constant 0 : index
    %c0_47 = arith.constant 0 : index
    %78 = vector.load %arg3[%c2_45, %c0_46, %c0_47] : memref<9x16x16xf32, #tpu.memory_space<vmem>>, vector<1x16x16xf32>
    %79 = vector.shape_cast %78 : vector<1x16x16xf32> to vector<16x16xf32>
    %cst_48 = arith.constant dense<0.000000e+00> : vector<16x1800xf32>
    %80 = tpu.matmul %79, %77, %cst_48 {dimension_numbers = #tpu.dot_dimension_numbers<[1], [0], [0], [1], [0, 0, 1, 1], [], []>} : vector<16x16xf32>, vector<16x1800xf32>, vector<16x1800xf32> -> vector<16x1800xf32>
    %81 = arith.addf %76, %80 : vector<16x1800xf32>
    %c0_49 = arith.constant 0 : index
    %c31_50 = arith.constant 31 : index
    %82 = vector.load %arg7[%c0_49, %c31_50] : memref<16x1920xf32, #tpu.memory_space<vmem>>, vector<16x1800xf32>
    %c3_51 = arith.constant 3 : index
    %c0_52 = arith.constant 0 : index
    %c0_53 = arith.constant 0 : index
    %83 = vector.load %arg3[%c3_51, %c0_52, %c0_53] : memref<9x16x16xf32, #tpu.memory_space<vmem>>, vector<1x16x16xf32>
    %84 = vector.shape_cast %83 : vector<1x16x16xf32> to vector<16x16xf32>
    %cst_54 = arith.constant dense<0.000000e+00> : vector<16x1800xf32>
    %85 = tpu.matmul %84, %82, %cst_54 {dimension_numbers = #tpu.dot_dimension_numbers<[1], [0], [0], [1], [0, 0, 1, 1], [], []>} : vector<16x16xf32>, vector<16x1800xf32>, vector<16x1800xf32> -> vector<16x1800xf32>
    %86 = arith.addf %81, %85 : vector<16x1800xf32>
    %c0_55 = arith.constant 0 : index
    %c32_56 = arith.constant 32 : index
    %87 = vector.load %arg7[%c0_55, %c32_56] : memref<16x1920xf32, #tpu.memory_space<vmem>>, vector<16x1800xf32>
    %c4_57 = arith.constant 4 : index
    %c0_58 = arith.constant 0 : index
    %c0_59 = arith.constant 0 : index
    %88 = vector.load %arg3[%c4_57, %c0_58, %c0_59] : memref<9x16x16xf32, #tpu.memory_space<vmem>>, vector<1x16x16xf32>
    %89 = vector.shape_cast %88 : vector<1x16x16xf32> to vector<16x16xf32>
    %cst_60 = arith.constant dense<0.000000e+00> : vector<16x1800xf32>
    %90 = tpu.matmul %89, %87, %cst_60 {dimension_numbers = #tpu.dot_dimension_numbers<[1], [0], [0], [1], [0, 0, 1, 1], [], []>} : vector<16x16xf32>, vector<16x1800xf32>, vector<16x1800xf32> -> vector<16x1800xf32>
    %91 = arith.addf %86, %90 : vector<16x1800xf32>
    %c0_61 = arith.constant 0 : index
    %c33_62 = arith.constant 33 : index
    %92 = vector.load %arg7[%c0_61, %c33_62] : memref<16x1920xf32, #tpu.memory_space<vmem>>, vector<16x1800xf32>
    %c5_63 = arith.constant 5 : index
    %c0_64 = arith.constant 0 : index
    %c0_65 = arith.constant 0 : index
    %93 = vector.load %arg3[%c5_63, %c0_64, %c0_65] : memref<9x16x16xf32, #tpu.memory_space<vmem>>, vector<1x16x16xf32>
    %94 = vector.shape_cast %93 : vector<1x16x16xf32> to vector<16x16xf32>
    %cst_66 = arith.constant dense<0.000000e+00> : vector<16x1800xf32>
    %95 = tpu.matmul %94, %92, %cst_66 {dimension_numbers = #tpu.dot_dimension_numbers<[1], [0], [0], [1], [0, 0, 1, 1], [], []>} : vector<16x16xf32>, vector<16x1800xf32>, vector<16x1800xf32> -> vector<16x1800xf32>
    %96 = arith.addf %91, %95 : vector<16x1800xf32>
    %c0_67 = arith.constant 0 : index
    %c61_68 = arith.constant 61 : index
    %97 = vector.load %arg7[%c0_67, %c61_68] : memref<16x1920xf32, #tpu.memory_space<vmem>>, vector<16x1800xf32>
    %c6_69 = arith.constant 6 : index
    %c0_70 = arith.constant 0 : index
    %c0_71 = arith.constant 0 : index
    %98 = vector.load %arg3[%c6_69, %c0_70, %c0_71] : memref<9x16x16xf32, #tpu.memory_space<vmem>>, vector<1x16x16xf32>
    %99 = vector.shape_cast %98 : vector<1x16x16xf32> to vector<16x16xf32>
    %cst_72 = arith.constant dense<0.000000e+00> : vector<16x1800xf32>
    %100 = tpu.matmul %99, %97, %cst_72 {dimension_numbers = #tpu.dot_dimension_numbers<[1], [0], [0], [1], [0, 0, 1, 1], [], []>} : vector<16x16xf32>, vector<16x1800xf32>, vector<16x1800xf32> -> vector<16x1800xf32>
    %101 = arith.addf %96, %100 : vector<16x1800xf32>
    %c0_73 = arith.constant 0 : index
    %c62_74 = arith.constant 62 : index
    %102 = vector.load %arg7[%c0_73, %c62_74] : memref<16x1920xf32, #tpu.memory_space<vmem>>, vector<16x1800xf32>
    %c7_75 = arith.constant 7 : index
    %c0_76 = arith.constant 0 : index
    %c0_77 = arith.constant 0 : index
    %103 = vector.load %arg3[%c7_75, %c0_76, %c0_77] : memref<9x16x16xf32, #tpu.memory_space<vmem>>, vector<1x16x16xf32>
    %104 = vector.shape_cast %103 : vector<1x16x16xf32> to vector<16x16xf32>
    %cst_78 = arith.constant dense<0.000000e+00> : vector<16x1800xf32>
    %105 = tpu.matmul %104, %102, %cst_78 {dimension_numbers = #tpu.dot_dimension_numbers<[1], [0], [0], [1], [0, 0, 1, 1], [], []>} : vector<16x16xf32>, vector<16x1800xf32>, vector<16x1800xf32> -> vector<16x1800xf32>
    %106 = arith.addf %101, %105 : vector<16x1800xf32>
    %c0_79 = arith.constant 0 : index
    %c63_80 = arith.constant 63 : index
    %107 = vector.load %arg7[%c0_79, %c63_80] : memref<16x1920xf32, #tpu.memory_space<vmem>>, vector<16x1800xf32>
    %c8_81 = arith.constant 8 : index
    %c0_82 = arith.constant 0 : index
    %c0_83 = arith.constant 0 : index
    %108 = vector.load %arg3[%c8_81, %c0_82, %c0_83] : memref<9x16x16xf32, #tpu.memory_space<vmem>>, vector<1x16x16xf32>
    %109 = vector.shape_cast %108 : vector<1x16x16xf32> to vector<16x16xf32>
    %cst_84 = arith.constant dense<0.000000e+00> : vector<16x1800xf32>
    %110 = tpu.matmul %109, %107, %cst_84 {dimension_numbers = #tpu.dot_dimension_numbers<[1], [0], [0], [1], [0, 0, 1, 1], [], []>} : vector<16x16xf32>, vector<16x1800xf32>, vector<16x1800xf32> -> vector<16x1800xf32>
    %111 = arith.addf %106, %110 : vector<16x1800xf32>
    %c0_85 = arith.constant 0 : index
    %c32_86 = arith.constant 32 : index
    %112 = vector.load %arg0[%c0_85, %c32_86] : memref<1x1920xf32, #tpu.memory_space<vmem>>, vector<1x1800xf32>
    %c0_87 = arith.constant 0 : index
    %c11 = arith.constant 11 : index
    %113 = vector.load %arg2[%c0_87, %c11] : memref<16x16xf32, #tpu.memory_space<vmem>>, vector<16x1xf32>
    %114 = vector.broadcast %113 : vector<16x1xf32> to vector<16x1800xf32>
    %115 = vector.broadcast %112 : vector<1x1800xf32> to vector<16x1800xf32>
    %116 = arith.mulf %114, %115 : vector<16x1800xf32>
    %c0_88 = arith.constant 0 : index
    %c12 = arith.constant 12 : index
    %117 = vector.load %arg2[%c0_88, %c12] : memref<16x16xf32, #tpu.memory_space<vmem>>, vector<16x1xf32>
    %118 = vector.broadcast %117 : vector<16x1xf32> to vector<16x1800xf32>
    %119 = arith.addf %116, %118 : vector<16x1800xf32>
    %c0_89 = arith.constant 0 : index
    %c10 = arith.constant 10 : index
    %120 = vector.load %arg2[%c0_89, %c10] : memref<16x16xf32, #tpu.memory_space<vmem>>, vector<16x1xf32>
    %121 = vector.broadcast %120 : vector<16x1xf32> to vector<16x1800xf32>
    %122 = arith.addf %111, %121 : vector<16x1800xf32>
    %123 = arith.addf %122, %119 : vector<16x1800xf32>
    %cst_90 = arith.constant 0.000000e+00 : f32
    %124 = vector.broadcast %cst_90 : f32 to vector<16x1800xf32>
    %125 = arith.maximumf %123, %124 : vector<16x1800xf32>
    %126 = vector.broadcast %0 : vector<1x1800xf32> to vector<16x1800xf32>
    %127 = arith.mulf %125, %126 : vector<16x1800xf32>
    tpu.wait_dma2 semaphore(%arg9 : memref<!tpu.dma_semaphore, #tpu.memory_space<semaphore_mem>>) src(%arg5 : memref<900x160xf32, #tpu.memory_space<any>>) dst(%arg8 : memref<900x160xf32, #tpu.memory_space<vmem>>)
    %c0_91 = arith.constant 0 : index
    %c0_92 = arith.constant 0 : index
    %128 = vector.load %arg8[%c0_91, %c0_92] : memref<900x160xf32, #tpu.memory_space<vmem>>, vector<900x160xf32>
    %129 = vector.extract_strided_slice %127 {offsets = [0, 0], sizes = [16, 900], strides = [1, 1]} : vector<16x1800xf32> to vector<16x900xf32>
    %cst_93 = arith.constant dense<0.000000e+00> : vector<16x160xf32>
    %130 = tpu.matmul %129, %128, %cst_93 {dimension_numbers = #tpu.dot_dimension_numbers<[1], [0], [0], [1], [0, 0, 1, 1], [], []>} : vector<16x900xf32>, vector<900x160xf32>, vector<16x160xf32> -> vector<16x160xf32>
    %c0_94 = arith.constant 0 : index
    %c0_95 = arith.constant 0 : index
    %131 = vector.load %arg4[%c0_94, %c0_95] : memref<1x10xf32, #tpu.memory_space<vmem>>, vector<1x10xf32>
    %132 = vector.extract_strided_slice %130 {offsets = [0, 0], sizes = [1, 10], strides = [1, 1]} : vector<16x160xf32> to vector<1x10xf32>
    %133 = arith.addf %131, %132 : vector<1x10xf32>
    %134 = vector.extract_strided_slice %130 {offsets = [1, 10], sizes = [1, 10], strides = [1, 1]} : vector<16x160xf32> to vector<1x10xf32>
    %135 = arith.addf %133, %134 : vector<1x10xf32>
    %136 = vector.extract_strided_slice %130 {offsets = [2, 20], sizes = [1, 10], strides = [1, 1]} : vector<16x160xf32> to vector<1x10xf32>
    %137 = arith.addf %135, %136 : vector<1x10xf32>
    %138 = vector.extract_strided_slice %130 {offsets = [3, 30], sizes = [1, 10], strides = [1, 1]} : vector<16x160xf32> to vector<1x10xf32>
    %139 = arith.addf %137, %138 : vector<1x10xf32>
    %140 = vector.extract_strided_slice %130 {offsets = [4, 40], sizes = [1, 10], strides = [1, 1]} : vector<16x160xf32> to vector<1x10xf32>
    %141 = arith.addf %139, %140 : vector<1x10xf32>
    %142 = vector.extract_strided_slice %130 {offsets = [5, 50], sizes = [1, 10], strides = [1, 1]} : vector<16x160xf32> to vector<1x10xf32>
    %143 = arith.addf %141, %142 : vector<1x10xf32>
    %144 = vector.extract_strided_slice %130 {offsets = [6, 60], sizes = [1, 10], strides = [1, 1]} : vector<16x160xf32> to vector<1x10xf32>
    %145 = arith.addf %143, %144 : vector<1x10xf32>
    %146 = vector.extract_strided_slice %130 {offsets = [7, 70], sizes = [1, 10], strides = [1, 1]} : vector<16x160xf32> to vector<1x10xf32>
    %147 = arith.addf %145, %146 : vector<1x10xf32>
    %148 = vector.extract_strided_slice %130 {offsets = [8, 80], sizes = [1, 10], strides = [1, 1]} : vector<16x160xf32> to vector<1x10xf32>
    %149 = arith.addf %147, %148 : vector<1x10xf32>
    %150 = vector.extract_strided_slice %130 {offsets = [9, 90], sizes = [1, 10], strides = [1, 1]} : vector<16x160xf32> to vector<1x10xf32>
    %151 = arith.addf %149, %150 : vector<1x10xf32>
    %152 = vector.extract_strided_slice %130 {offsets = [10, 100], sizes = [1, 10], strides = [1, 1]} : vector<16x160xf32> to vector<1x10xf32>
    %153 = arith.addf %151, %152 : vector<1x10xf32>
    %154 = vector.extract_strided_slice %130 {offsets = [11, 110], sizes = [1, 10], strides = [1, 1]} : vector<16x160xf32> to vector<1x10xf32>
    %155 = arith.addf %153, %154 : vector<1x10xf32>
    %156 = vector.extract_strided_slice %130 {offsets = [12, 120], sizes = [1, 10], strides = [1, 1]} : vector<16x160xf32> to vector<1x10xf32>
    %157 = arith.addf %155, %156 : vector<1x10xf32>
    %158 = vector.extract_strided_slice %130 {offsets = [13, 130], sizes = [1, 10], strides = [1, 1]} : vector<16x160xf32> to vector<1x10xf32>
    %159 = arith.addf %157, %158 : vector<1x10xf32>
    %160 = vector.extract_strided_slice %130 {offsets = [14, 140], sizes = [1, 10], strides = [1, 1]} : vector<16x160xf32> to vector<1x10xf32>
    %161 = arith.addf %159, %160 : vector<1x10xf32>
    %162 = vector.extract_strided_slice %130 {offsets = [15, 150], sizes = [1, 10], strides = [1, 1]} : vector<16x160xf32> to vector<1x10xf32>
    %163 = arith.addf %161, %162 : vector<1x10xf32>
    %c0_96 = arith.constant 0 : index
    %c0_97 = arith.constant 0 : index
    %164 = vector.load %arg6[%c0_96, %c0_97] : memref<2x10xf32, #tpu.memory_space<vmem>>, vector<1x10xf32>
    tpu.vector_store %arg6[%c0_96, %c0_97], %163 {strides = array<i32>} : memref<2x10xf32, #tpu.memory_space<vmem>>, vector<1x10xf32>,
    %165 = vector.extract_strided_slice %127 {offsets = [0, 900], sizes = [16, 900], strides = [1, 1]} : vector<16x1800xf32> to vector<16x900xf32>
    %cst_98 = arith.constant dense<0.000000e+00> : vector<16x160xf32>
    %166 = tpu.matmul %165, %128, %cst_98 {dimension_numbers = #tpu.dot_dimension_numbers<[1], [0], [0], [1], [0, 0, 1, 1], [], []>} : vector<16x900xf32>, vector<900x160xf32>, vector<16x160xf32> -> vector<16x160xf32>
    %c0_99 = arith.constant 0 : index
    %c0_100 = arith.constant 0 : index
    %167 = vector.load %arg4[%c0_99, %c0_100] : memref<1x10xf32, #tpu.memory_space<vmem>>, vector<1x10xf32>
    %168 = vector.extract_strided_slice %166 {offsets = [0, 0], sizes = [1, 10], strides = [1, 1]} : vector<16x160xf32> to vector<1x10xf32>
    %169 = arith.addf %167, %168 : vector<1x10xf32>
    %170 = vector.extract_strided_slice %166 {offsets = [1, 10], sizes = [1, 10], strides = [1, 1]} : vector<16x160xf32> to vector<1x10xf32>
    %171 = arith.addf %169, %170 : vector<1x10xf32>
    %172 = vector.extract_strided_slice %166 {offsets = [2, 20], sizes = [1, 10], strides = [1, 1]} : vector<16x160xf32> to vector<1x10xf32>
    %173 = arith.addf %171, %172 : vector<1x10xf32>
    %174 = vector.extract_strided_slice %166 {offsets = [3, 30], sizes = [1, 10], strides = [1, 1]} : vector<16x160xf32> to vector<1x10xf32>
    %175 = arith.addf %173, %174 : vector<1x10xf32>
    %176 = vector.extract_strided_slice %166 {offsets = [4, 40], sizes = [1, 10], strides = [1, 1]} : vector<16x160xf32> to vector<1x10xf32>
    %177 = arith.addf %175, %176 : vector<1x10xf32>
    %178 = vector.extract_strided_slice %166 {offsets = [5, 50], sizes = [1, 10], strides = [1, 1]} : vector<16x160xf32> to vector<1x10xf32>
    %179 = arith.addf %177, %178 : vector<1x10xf32>
    %180 = vector.extract_strided_slice %166 {offsets = [6, 60], sizes = [1, 10], strides = [1, 1]} : vector<16x160xf32> to vector<1x10xf32>
    %181 = arith.addf %179, %180 : vector<1x10xf32>
    %182 = vector.extract_strided_slice %166 {offsets = [7, 70], sizes = [1, 10], strides = [1, 1]} : vector<16x160xf32> to vector<1x10xf32>
    %183 = arith.addf %181, %182 : vector<1x10xf32>
    %184 = vector.extract_strided_slice %166 {offsets = [8, 80], sizes = [1, 10], strides = [1, 1]} : vector<16x160xf32> to vector<1x10xf32>
    %185 = arith.addf %183, %184 : vector<1x10xf32>
    %186 = vector.extract_strided_slice %166 {offsets = [9, 90], sizes = [1, 10], strides = [1, 1]} : vector<16x160xf32> to vector<1x10xf32>
    %187 = arith.addf %185, %186 : vector<1x10xf32>
    %188 = vector.extract_strided_slice %166 {offsets = [10, 100], sizes = [1, 10], strides = [1, 1]} : vector<16x160xf32> to vector<1x10xf32>
    %189 = arith.addf %187, %188 : vector<1x10xf32>
    %190 = vector.extract_strided_slice %166 {offsets = [11, 110], sizes = [1, 10], strides = [1, 1]} : vector<16x160xf32> to vector<1x10xf32>
    %191 = arith.addf %189, %190 : vector<1x10xf32>
    %192 = vector.extract_strided_slice %166 {offsets = [12, 120], sizes = [1, 10], strides = [1, 1]} : vector<16x160xf32> to vector<1x10xf32>
    %193 = arith.addf %191, %192 : vector<1x10xf32>
    %194 = vector.extract_strided_slice %166 {offsets = [13, 130], sizes = [1, 10], strides = [1, 1]} : vector<16x160xf32> to vector<1x10xf32>
    %195 = arith.addf %193, %194 : vector<1x10xf32>
    %196 = vector.extract_strided_slice %166 {offsets = [14, 140], sizes = [1, 10], strides = [1, 1]} : vector<16x160xf32> to vector<1x10xf32>
    %197 = arith.addf %195, %196 : vector<1x10xf32>
    %198 = vector.extract_strided_slice %166 {offsets = [15, 150], sizes = [1, 10], strides = [1, 1]} : vector<16x160xf32> to vector<1x10xf32>
    %199 = arith.addf %197, %198 : vector<1x10xf32>
    %c1_101 = arith.constant 1 : index
    %c0_102 = arith.constant 0 : index
    %200 = vector.load %arg6[%c1_101, %c0_102] : memref<2x10xf32, #tpu.memory_space<vmem>>, vector<1x10xf32>
    tpu.vector_store %arg6[%c1_101, %c0_102], %199 {strides = array<i32>} : memref<2x10xf32, #tpu.memory_space<vmem>>, vector<1x10xf32>,
    return
  }
}

</mosaic_0001>

<llo_original>
// kernel: simple_resnet_forward.1
$region0: #{simple_resnet_forward.1}
  #allocation0 [shape = 'u32[]', space=smem, size = 0x4, offset = 0x4, fixed_abs, tag = 'smem constant byte address 0x4 - core index']
  #allocation1 [shape = 'u32[144,128]{1,0:T(1,128)}', space=vmem, size = 0x12000, scoped, tag = 'internal scratch']
  #allocation2 [shape = 'f32[16,1920]{1,0:T(8,128)}', space=vmem, size = 0x1e000, scoped, tag = 'scratch operand']
  #allocation3 [shape = 'f32[900,160]{1,0:T(8,128)}', space=vmem, size = 0xe2000, scoped, tag = 'scratch operand']
  #allocation4 [shape = 's32[1]{0}', space=sflag, size = 0x4, scoped, tag = 'scratch operand']
  #allocation7 [shape = 's32[]', space=sflag, size = 0x4, offset = 0, fixed_abs, tag = 'sflag constant byte address 0x0 - dummy sync flag']
  %s0 = inlined_call_operand.vmem [shape: f32[1,1920], index: 0, kind: input, shape index: {}]
  %s1 = inlined_call_operand.vmem [shape: f32[1,1800], index: 1, kind: input, shape index: {}]
  %s2 = inlined_call_operand.vmem [shape: f32[16,16], index: 2, kind: input, shape index: {}]
  %s3 = inlined_call_operand.vmem [shape: f32[9,16,16], index: 3, kind: input, shape index: {}]
  %s4 = inlined_call_operand.vmem [shape: f32[1,10], index: 4, kind: input, shape index: {}]
  %s5 = inlined_call_operand.vmem [shape: f32[900,160], index: 5, kind: input, shape index: {}]
  %s6 = inlined_call_operand.hbm [shape: f32[2,10], index: 6, kind: output, shape index: {}]
  %s7 = sld [smem:[#allocation0]]
  $region64: #{simple_resnet_forward.1} parent=0
    _
  %s9 = ssub.s32 1, %s7
  %s10 = scalar_select 0, %s9, %s7
  $region1: #{simple_resnet_forward.1} parent=0
    #allocation5 [shape = 'u8[1024]{0}', space=vmem, size = 0x400, scoped, tag = 'output window, operand 0, single buffered']
    #allocation6 [shape = 's32[1]{0}', space=sflag, size = 0x4, scoped, tag = 'scoped memory for simple_resnet_forward.1']
    %11 = vsyncpa [#allocation6], 0
    // Predicated region
    $region2: #{simple_resnet_forward.1} parent=1 // pred_check
      _
    $region3: #{simple_resnet_forward.1} parent=1 // pred_check_branch
      %13 = sbr.rel (0) target = $region5
    $region4: #{simple_resnet_forward.1} parent=1 // pred_region
      _
    $region5: #{simple_resnet_forward.1} parent=1 // pred_fallthru
      _
    // Predicated region
    $region6: #{simple_resnet_forward.1} parent=1 // pred_check
      _
    $region7: #{simple_resnet_forward.1} parent=1 // pred_check_branch
      %15 = sbr.rel (0) target = $region9
    $region8: #{simple_resnet_forward.1} parent=1 // pred_region
      _
    $region9: #{simple_resnet_forward.1} parent=1 // pred_fallthru
      _
    // Predicated region
    $region10: #{simple_resnet_forward.1} parent=1 // pred_check
      _
    $region11: #{simple_resnet_forward.1} parent=1 // pred_check_branch
      %17 = sbr.rel (0) target = $region13
    $region12: #{simple_resnet_forward.1} parent=1 // pred_region
      _
    $region13: #{simple_resnet_forward.1} parent=1 // pred_fallthru
      _
    // Predicated region
    $region14: #{simple_resnet_forward.1} parent=1 // pred_check
      _
    $region15: #{simple_resnet_forward.1} parent=1 // pred_check_branch
      %19 = sbr.rel (0) target = $region17
    $region16: #{simple_resnet_forward.1} parent=1 // pred_region
      _
    $region17: #{simple_resnet_forward.1} parent=1 // pred_fallthru
      _
    // Predicated region
    $region18: #{simple_resnet_forward.1} parent=1 // pred_check
      _
    $region19: #{simple_resnet_forward.1} parent=1 // pred_check_branch
      %21 = sbr.rel (0) target = $region21
    $region20: #{simple_resnet_forward.1} parent=1 // pred_region
      _
    $region21: #{simple_resnet_forward.1} parent=1 // pred_fallthru
      _
    %p23 = scmp.lt.u32.totalorder 1808, 8
    %p24 = pneg %p23
    // Predicated region
    $region22: #{simple_resnet_forward.1} parent=1 // pred_check
      _
    $region23: #{simple_resnet_forward.1} parent=1 // pred_check_branch
      %26 = sbr.rel (%p23) target = $region25
    $region24: #{simple_resnet_forward.1} parent=1 // pred_region
      %s42 = sand.u32 1808, 7
      %p43 = scmp.eq.s32.totalorder %s42, 0
      // Predicated region
      $region37: #{simple_resnet_forward.1} parent=24 // pred_check
        %p44 = pneg %p43
      $region38: #{simple_resnet_forward.1} parent=24 // pred_check_branch
        %46 = sbr.rel (%p44) target = $region40
      $region39: #{simple_resnet_forward.1} parent=24 // pred_region
        loop: start=0, step=1, limit=1
        $region41: #{simple_resnet_forward.1} parent=39 // loop_pre_header
          _
        $region42: #{simple_resnet_forward.1} parent=39 // loop_header
          %s48 = sphi 0, %s52
          %p49 = scmp.ge.s32.totalorder %s48, 1
          %s53 = sphi %s5, %s5
          %s54 = sphi [#allocation3], [#allocation3]
        $region43: #{simple_resnet_forward.1} parent=39 // loop_header_branch
          %51 = sbr.rel (%p49) target = $region47
        $region44: #{simple_resnet_forward.1} parent=39 // loop_body
          %v55 = vld [vmem:[%s53] sm:$0xff]
          %56 = vst [vmem:[%s54] sm:$0xff] %v55
          %v57 = vld [vmem:[%s53 + $0x8] sm:$0xff]
          %58 = vst [vmem:[%s54 + $0x8] sm:$0xff] %v57
          %v59 = vld [vmem:[%s53 + $0x10] sm:$0xff]
          %60 = vst [vmem:[%s54 + $0x10] sm:$0xff] %v59
          %v61 = vld [vmem:[%s53 + $0x18] sm:$0xff]
          %62 = vst [vmem:[%s54 + $0x18] sm:$0xff] %v61
          %v63 = vld [vmem:[%s53 + $0x20] sm:$0xff]
          %64 = vst [vmem:[%s54 + $0x20] sm:$0xff] %v63
          %v65 = vld [vmem:[%s53 + $0x28] sm:$0xff]
          %66 = vst [vmem:[%s54 + $0x28] sm:$0xff] %v65
          %v67 = vld [vmem:[%s53 + $0x30] sm:$0xff]
          %68 = vst [vmem:[%s54 + $0x30] sm:$0xff] %v67
          %v69 = vld [vmem:[%s53 + $0x38] sm:$0xff]
          %70 = vst [vmem:[%s54 + $0x38] sm:$0xff] %v69
          %v71 = vld [vmem:[%s53 + $0x40] sm:$0xff]
          %72 = vst [vmem:[%s54 + $0x40] sm:$0xff] %v71
          %v73 = vld [vmem:[%s53 + $0x48] sm:$0xff]
          %74 = vst [vmem:[%s54 + $0x48] sm:$0xff] %v73
          %v75 = vld [vmem:[%s53 + $0x50] sm:$0xff]
          %76 = vst [vmem:[%s54 + $0x50] sm:$0xff] %v75
          %v77 = vld [vmem:[%s53 + $0x58] sm:$0xff]
          %78 = vst [vmem:[%s54 + $0x58] sm:$0xff] %v77
          %v79 = vld [vmem:[%s53 + $0x60] sm:$0xff]
          %80 = vst [vmem:[%s54 + $0x60] sm:$0xff] %v79
          %v81 = vld [vmem:[%s53 + $0x68] sm:$0xff]
          %82 = vst [vmem:[%s54 + $0x68] sm:$0xff] %v81
          %v83 = vld [vmem:[%s53 + $0x70] sm:$0xff]
          %84 = vst [vmem:[%s54 + $0x70] sm:$0xff] %v83
          %v85 = vld [vmem:[%s53 + $0x78] sm:$0xff]
          %86 = vst [vmem:[%s54 + $0x78] sm:$0xff] %v85
          %v87 = vld [vmem:[%s53 + $0x80] sm:$0xff]
          %88 = vst [vmem:[%s54 + $0x80] sm:$0xff] %v87
          %v89 = vld [vmem:[%s53 + $0x88] sm:$0xff]
          %90 = vst [vmem:[%s54 + $0x88] sm:$0xff] %v89
          %v91 = vld [vmem:[%s53 + $0x90] sm:$0xff]
          %92 = vst [vmem:[%s54 + $0x90] sm:$0xff] %v91
          %v93 = vld [vmem:[%s53 + $0x98] sm:$0xff]
          %94 = vst [vmem:[%s54 + $0x98] sm:$0xff] %v93
          %v95 = vld [vmem:[%s53 + $0xa0] sm:$0xff]
          %96 = vst [vmem:[%s54 + $0xa0] sm:$0xff] %v95
          %v97 = vld [vmem:[%s53 + $0xa8] sm:$0xff]
          %98 = vst [vmem:[%s54 + $0xa8] sm:$0xff] %v97
          %v99 = vld [vmem:[%s53 + $0xb0] sm:$0xff]
          %100 = vst [vmem:[%s54 + $0xb0] sm:$0xff] %v99
          %v101 = vld [vmem:[%s53 + $0xb8] sm:$0xff]
          %102 = vst [vmem:[%s54 + $0xb8] sm:$0xff] %v101
          %v103 = vld [vmem:[%s53 + $0xc0] sm:$0xff]
          %104 = vst [vmem:[%s54 + $0xc0] sm:$0xff] %v103
          %v105 = vld [vmem:[%s53 + $0xc8] sm:$0xff]
          %106 = vst [vmem:[%s54 + $0xc8] sm:$0xff] %v105
          %v107 = vld [vmem:[%s53 + $0xd0] sm:$0xff]
          %108 = vst [vmem:[%s54 + $0xd0] sm:$0xff] %v107
          %v109 = vld [vmem:[%s53 + $0xd8] sm:$0xff]
          %110 = vst [vmem:[%s54 + $0xd8] sm:$0xff] %v109
          %v111 = vld [vmem:[%s53 + $0xe0] sm:$0xff]
          %112 = vst [vmem:[%s54 + $0xe0] sm:$0xff] %v111
          %v113 = vld [vmem:[%s53 + $0xe8] sm:$0xff]
          %114 = vst [vmem:[%s54 + $0xe8] sm:$0xff] %v113
          %v115 = vld [vmem:[%s53 + $0xf0] sm:$0xff]
          %116 = vst [vmem:[%s54 + $0xf0] sm:$0xff] %v115
          %v117 = vld [vmem:[%s53 + $0xf8] sm:$0xff]
          %118 = vst [vmem:[%s54 + $0xf8] sm:$0xff] %v117
          %v119 = vld [vmem:[%s53 + $0x100] sm:$0xff]
          %120 = vst [vmem:[%s54 + $0x100] sm:$0xff] %v119
          %v121 = vld [vmem:[%s53 + $0x108] sm:$0xff]
          %122 = vst [vmem:[%s54 + $0x108] sm:$0xff] %v121
          %v123 = vld [vmem:[%s53 + $0x110] sm:$0xff]
          %124 = vst [vmem:[%s54 + $0x110] sm:$0xff] %v123
          %v125 = vld [vmem:[%s53 + $0x118] sm:$0xff]
          %126 = vst [vmem:[%s54 + $0x118] sm:$0xff] %v125
          %v127 = vld [vmem:[%s53 + $0x120] sm:$0xff]
          %128 = vst [vmem:[%s54 + $0x120] sm:$0xff] %v127
          %v129 = vld [vmem:[%s53 + $0x128] sm:$0xff]
          %130 = vst [vmem:[%s54 + $0x128] sm:$0xff] %v129
          %v131 = vld [vmem:[%s53 + $0x130] sm:$0xff]
          %132 = vst [vmem:[%s54 + $0x130] sm:$0xff] %v131
          %v133 = vld [vmem:[%s53 + $0x138] sm:$0xff]
          %134 = vst [vmem:[%s54 + $0x138] sm:$0xff] %v133
          %v135 = vld [vmem:[%s53 + $0x140] sm:$0xff]
          %136 = vst [vmem:[%s54 + $0x140] sm:$0xff] %v135
          %v137 = vld [vmem:[%s53 + $0x148] sm:$0xff]
          %138 = vst [vmem:[%s54 + $0x148] sm:$0xff] %v137
          %v139 = vld [vmem:[%s53 + $0x150] sm:$0xff]
          %140 = vst [vmem:[%s54 + $0x150] sm:$0xff] %v139
          %v141 = vld [vmem:[%s53 + $0x158] sm:$0xff]
          %142 = vst [vmem:[%s54 + $0x158] sm:$0xff] %v141
          %v143 = vld [vmem:[%s53 + $0x160] sm:$0xff]
          %144 = vst [vmem:[%s54 + $0x160] sm:$0xff] %v143
          %v145 = vld [vmem:[%s53 + $0x168] sm:$0xff]
          %146 = vst [vmem:[%s54 + $0x168] sm:$0xff] %v145
          %v147 = vld [vmem:[%s53 + $0x170] sm:$0xff]
          %148 = vst [vmem:[%s54 + $0x170] sm:$0xff] %v147
          %v149 = vld [vmem:[%s53 + $0x178] sm:$0xff]
          %150 = vst [vmem:[%s54 + $0x178] sm:$0xff] %v149
          %v151 = vld [vmem:[%s53 + $0x180] sm:$0xff]
          %152 = vst [vmem:[%s54 + $0x180] sm:$0xff] %v151
          %v153 = vld [vmem:[%s53 + $0x188] sm:$0xff]
          %154 = vst [vmem:[%s54 + $0x188] sm:$0xff] %v153
          %v155 = vld [vmem:[%s53 + $0x190] sm:$0xff]
          %156 = vst [vmem:[%s54 + $0x190] sm:$0xff] %v155
          %v157 = vld [vmem:[%s53 + $0x198] sm:$0xff]
          %158 = vst [vmem:[%s54 + $0x198] sm:$0xff] %v157
          %v159 = vld [vmem:[%s53 + $0x1a0] sm:$0xff]
          %160 = vst [vmem:[%s54 + $0x1a0] sm:$0xff] %v159
          %v161 = vld [vmem:[%s53 + $0x1a8] sm:$0xff]
          %162 = vst [vmem:[%s54 + $0x1a8] sm:$0xff] %v161
          %v163 = vld [vmem:[%s53 + $0x1b0] sm:$0xff]
          %164 = vst [vmem:[%s54 + $0x1b0] sm:$0xff] %v163
          %v165 = vld [vmem:[%s53 + $0x1b8] sm:$0xff]
          %166 = vst [vmem:[%s54 + $0x1b8] sm:$0xff] %v165
          %v167 = vld [vmem:[%s53 + $0x1c0] sm:$0xff]
          %168 = vst [vmem:[%s54 + $0x1c0] sm:$0xff] %v167
          %v169 = vld [vmem:[%s53 + $0x1c8] sm:$0xff]
          %170 = vst [vmem:[%s54 + $0x1c8] sm:$0xff] %v169
          %v171 = vld [vmem:[%s53 + $0x1d0] sm:$0xff]
          %172 = vst [vmem:[%s54 + $0x1d0] sm:$0xff] %v171
          %v173 = vld [vmem:[%s53 + $0x1d8] sm:$0xff]
          %174 = vst [vmem:[%s54 + $0x1d8] sm:$0xff] %v173
          %v175 = vld [vmem:[%s53 + $0x1e0] sm:$0xff]
          %176 = vst [vmem:[%s54 + $0x1e0] sm:$0xff] %v175
          %v177 = vld [vmem:[%s53 + $0x1e8] sm:$0xff]
          %178 = vst [vmem:[%s54 + $0x1e8] sm:$0xff] %v177
          %v179 = vld [vmem:[%s53 + $0x1f0] sm:$0xff]
          %180 = vst [vmem:[%s54 + $0x1f0] sm:$0xff] %v179
          %v181 = vld [vmem:[%s53 + $0x1f8] sm:$0xff]
          %182 = vst [vmem:[%s54 + $0x1f8] sm:$0xff] %v181
          %v183 = vld [vmem:[%s53 + $0x200] sm:$0xff]
          %184 = vst [vmem:[%s54 + $0x200] sm:$0xff] %v183
          %v185 = vld [vmem:[%s53 + $0x208] sm:$0xff]
          %186 = vst [vmem:[%s54 + $0x208] sm:$0xff] %v185
          %v187 = vld [vmem:[%s53 + $0x210] sm:$0xff]
          %188 = vst [vmem:[%s54 + $0x210] sm:$0xff] %v187
          %v189 = vld [vmem:[%s53 + $0x218] sm:$0xff]
          %190 = vst [vmem:[%s54 + $0x218] sm:$0xff] %v189
          %v191 = vld [vmem:[%s53 + $0x220] sm:$0xff]
          %192 = vst [vmem:[%s54 + $0x220] sm:$0xff] %v191
          %v193 = vld [vmem:[%s53 + $0x228] sm:$0xff]
          %194 = vst [vmem:[%s54 + $0x228] sm:$0xff] %v193
          %v195 = vld [vmem:[%s53 + $0x230] sm:$0xff]
          %196 = vst [vmem:[%s54 + $0x230] sm:$0xff] %v195
          %v197 = vld [vmem:[%s53 + $0x238] sm:$0xff]
          %198 = vst [vmem:[%s54 + $0x238] sm:$0xff] %v197
          %v199 = vld [vmem:[%s53 + $0x240] sm:$0xff]
          %200 = vst [vmem:[%s54 + $0x240] sm:$0xff] %v199
          %v201 = vld [vmem:[%s53 + $0x248] sm:$0xff]
          %202 = vst [vmem:[%s54 + $0x248] sm:$0xff] %v201
          %v203 = vld [vmem:[%s53 + $0x250] sm:$0xff]
          %204 = vst [vmem:[%s54 + $0x250] sm:$0xff] %v203
          %v205 = vld [vmem:[%s53 + $0x258] sm:$0xff]
          %206 = vst [vmem:[%s54 + $0x258] sm:$0xff] %v205
          %v207 = vld [vmem:[%s53 + $0x260] sm:$0xff]
          %208 = vst [vmem:[%s54 + $0x260] sm:$0xff] %v207
          %v209 = vld [vmem:[%s53 + $0x268] sm:$0xff]
          %210 = vst [vmem:[%s54 + $0x268] sm:$0xff] %v209
          %v211 = vld [vmem:[%s53 + $0x270] sm:$0xff]
          %212 = vst [vmem:[%s54 + $0x270] sm:$0xff] %v211
          %v213 = vld [vmem:[%s53 + $0x278] sm:$0xff]
          %214 = vst [vmem:[%s54 + $0x278] sm:$0xff] %v213
          %v215 = vld [vmem:[%s53 + $0x280] sm:$0xff]
          %216 = vst [vmem:[%s54 + $0x280] sm:$0xff] %v215
          %v217 = vld [vmem:[%s53 + $0x288] sm:$0xff]
          %218 = vst [vmem:[%s54 + $0x288] sm:$0xff] %v217
          %v219 = vld [vmem:[%s53 + $0x290] sm:$0xff]
          %220 = vst [vmem:[%s54 + $0x290] sm:$0xff] %v219
          %v221 = vld [vmem:[%s53 + $0x298] sm:$0xff]
          %222 = vst [vmem:[%s54 + $0x298] sm:$0xff] %v221
          %v223 = vld [vmem:[%s53 + $0x2a0] sm:$0xff]
          %224 = vst [vmem:[%s54 + $0x2a0] sm:$0xff] %v223
          %v225 = vld [vmem:[%s53 + $0x2a8] sm:$0xff]
          %226 = vst [vmem:[%s54 + $0x2a8] sm:$0xff] %v225
          %v227 = vld [vmem:[%s53 + $0x2b0] sm:$0xff]
          %228 = vst [vmem:[%s54 + $0x2b0] sm:$0xff] %v227
          %v229 = vld [vmem:[%s53 + $0x2b8] sm:$0xff]
          %230 = vst [vmem:[%s54 + $0x2b8] sm:$0xff] %v229
          %v231 = vld [vmem:[%s53 + $0x2c0] sm:$0xff]
          %232 = vst [vmem:[%s54 + $0x2c0] sm:$0xff] %v231
          %v233 = vld [vmem:[%s53 + $0x2c8] sm:$0xff]
          %234 = vst [vmem:[%s54 + $0x2c8] sm:$0xff] %v233
          %v235 = vld [vmem:[%s53 + $0x2d0] sm:$0xff]
          %236 = vst [vmem:[%s54 + $0x2d0] sm:$0xff] %v235
          %v237 = vld [vmem:[%s53 + $0x2d8] sm:$0xff]
          %238 = vst [vmem:[%s54 + $0x2d8] sm:$0xff] %v237
          %v239 = vld [vmem:[%s53 + $0x2e0] sm:$0xff]
          %240 = vst [vmem:[%s54 + $0x2e0] sm:$0xff] %v239
          %v241 = vld [vmem:[%s53 + $0x2e8] sm:$0xff]
          %242 = vst [vmem:[%s54 + $0x2e8] sm:$0xff] %v241
          %v243 = vld [vmem:[%s53 + $0x2f0] sm:$0xff]
          %244 = vst [vmem:[%s54 + $0x2f0] sm:$0xff] %v243
          %v245 = vld [vmem:[%s53 + $0x2f8] sm:$0xff]
          %246 = vst [vmem:[%s54 + $0x2f8] sm:$0xff] %v245
          %v247 = vld [vmem:[%s53 + $0x300] sm:$0xff]
          %248 = vst [vmem:[%s54 + $0x300] sm:$0xff] %v247
          %v249 = vld [vmem:[%s53 + $0x308] sm:$0xff]
          %250 = vst [vmem:[%s54 + $0x308] sm:$0xff] %v249
          %v251 = vld [vmem:[%s53 + $0x310] sm:$0xff]
          %252 = vst [vmem:[%s54 + $0x310] sm:$0xff] %v251
          %v253 = vld [vmem:[%s53 + $0x318] sm:$0xff]
          %254 = vst [vmem:[%s54 + $0x318] sm:$0xff] %v253
          %v255 = vld [vmem:[%s53 + $0x320] sm:$0xff]
          %256 = vst [vmem:[%s54 + $0x320] sm:$0xff] %v255
          %v257 = vld [vmem:[%s53 + $0x328] sm:$0xff]
          %258 = vst [vmem:[%s54 + $0x328] sm:$0xff] %v257
          %v259 = vld [vmem:[%s53 + $0x330] sm:$0xff]
          %260 = vst [vmem:[%s54 + $0x330] sm:$0xff] %v259
          %v261 = vld [vmem:[%s53 + $0x338] sm:$0xff]
          %262 = vst [vmem:[%s54 + $0x338] sm:$0xff] %v261
          %v263 = vld [vmem:[%s53 + $0x340] sm:$0xff]
          %264 = vst [vmem:[%s54 + $0x340] sm:$0xff] %v263
          %v265 = vld [vmem:[%s53 + $0x348] sm:$0xff]
          %266 = vst [vmem:[%s54 + $0x348] sm:$0xff] %v265
          %v267 = vld [vmem:[%s53 + $0x350] sm:$0xff]
          %268 = vst [vmem:[%s54 + $0x350] sm:$0xff] %v267
          %v269 = vld [vmem:[%s53 + $0x358] sm:$0xff]
          %270 = vst [vmem:[%s54 + $0x358] sm:$0xff] %v269
          %v271 = vld [vmem:[%s53 + $0x360] sm:$0xff]
          %272 = vst [vmem:[%s54 + $0x360] sm:$0xff] %v271
          %v273 = vld [vmem:[%s53 + $0x368] sm:$0xff]
          %274 = vst [vmem:[%s54 + $0x368] sm:$0xff] %v273
          %v275 = vld [vmem:[%s53 + $0x370] sm:$0xff]
          %276 = vst [vmem:[%s54 + $0x370] sm:$0xff] %v275
          %v277 = vld [vmem:[%s53 + $0x378] sm:$0xff]
          %278 = vst [vmem:[%s54 + $0x378] sm:$0xff] %v277
          %v279 = vld [vmem:[%s53 + $0x380] sm:$0xff]
          %280 = vst [vmem:[%s54 + $0x380] sm:$0xff] %v279
          %v281 = vld [vmem:[%s53 + $0x388] sm:$0xff]
          %282 = vst [vmem:[%s54 + $0x388] sm:$0xff] %v281
          %v283 = vld [vmem:[%s53 + $0x390] sm:$0xff]
          %284 = vst [vmem:[%s54 + $0x390] sm:$0xff] %v283
          %v285 = vld [vmem:[%s53 + $0x398] sm:$0xff]
          %286 = vst [vmem:[%s54 + $0x398] sm:$0xff] %v285
          %v287 = vld [vmem:[%s53 + $0x3a0] sm:$0xff]
          %288 = vst [vmem:[%s54 + $0x3a0] sm:$0xff] %v287
          %v289 = vld [vmem:[%s53 + $0x3a8] sm:$0xff]
          %290 = vst [vmem:[%s54 + $0x3a8] sm:$0xff] %v289
          %v291 = vld [vmem:[%s53 + $0x3b0] sm:$0xff]
          %292 = vst [vmem:[%s54 + $0x3b0] sm:$0xff] %v291
          %v293 = vld [vmem:[%s53 + $0x3b8] sm:$0xff]
          %294 = vst [vmem:[%s54 + $0x3b8] sm:$0xff] %v293
          %v295 = vld [vmem:[%s53 + $0x3c0] sm:$0xff]
          %296 = vst [vmem:[%s54 + $0x3c0] sm:$0xff] %v295
          %v297 = vld [vmem:[%s53 + $0x3c8] sm:$0xff]
          %298 = vst [vmem:[%s54 + $0x3c8] sm:$0xff] %v297
          %v299 = vld [vmem:[%s53 + $0x3d0] sm:$0xff]
          %300 = vst [vmem:[%s54 + $0x3d0] sm:$0xff] %v299
          %v301 = vld [vmem:[%s53 + $0x3d8] sm:$0xff]
          %302 = vst [vmem:[%s54 + $0x3d8] sm:$0xff] %v301
          %v303 = vld [vmem:[%s53 + $0x3e0] sm:$0xff]
          %304 = vst [vmem:[%s54 + $0x3e0] sm:$0xff] %v303
          %v305 = vld [vmem:[%s53 + $0x3e8] sm:$0xff]
          %306 = vst [vmem:[%s54 + $0x3e8] sm:$0xff] %v305
          %v307 = vld [vmem:[%s53 + $0x3f0] sm:$0xff]
          %308 = vst [vmem:[%s54 + $0x3f0] sm:$0xff] %v307
          %v309 = vld [vmem:[%s53 + $0x3f8] sm:$0xff]
          %310 = vst [vmem:[%s54 + $0x3f8] sm:$0xff] %v309
          %v311 = vld [vmem:[%s53 + $0x400] sm:$0xff]
          %312 = vst [vmem:[%s54 + $0x400] sm:$0xff] %v311
          %v313 = vld [vmem:[%s53 + $0x408] sm:$0xff]
          %314 = vst [vmem:[%s54 + $0x408] sm:$0xff] %v313
          %v315 = vld [vmem:[%s53 + $0x410] sm:$0xff]
          %316 = vst [vmem:[%s54 + $0x410] sm:$0xff] %v315
          %v317 = vld [vmem:[%s53 + $0x418] sm:$0xff]
          %318 = vst [vmem:[%s54 + $0x418] sm:$0xff] %v317
          %v319 = vld [vmem:[%s53 + $0x420] sm:$0xff]
          %320 = vst [vmem:[%s54 + $0x420] sm:$0xff] %v319
          %v321 = vld [vmem:[%s53 + $0x428] sm:$0xff]
          %322 = vst [vmem:[%s54 + $0x428] sm:$0xff] %v321
          %v323 = vld [vmem:[%s53 + $0x430] sm:$0xff]
          %324 = vst [vmem:[%s54 + $0x430] sm:$0xff] %v323
          %v325 = vld [vmem:[%s53 + $0x438] sm:$0xff]
          %326 = vst [vmem:[%s54 + $0x438] sm:$0xff] %v325
          %v327 = vld [vmem:[%s53 + $0x440] sm:$0xff]
          %328 = vst [vmem:[%s54 + $0x440] sm:$0xff] %v327
          %v329 = vld [vmem:[%s53 + $0x448] sm:$0xff]
          %330 = vst [vmem:[%s54 + $0x448] sm:$0xff] %v329
          %v331 = vld [vmem:[%s53 + $0x450] sm:$0xff]
          %332 = vst [vmem:[%s54 + $0x450] sm:$0xff] %v331
          %v333 = vld [vmem:[%s53 + $0x458] sm:$0xff]
          %334 = vst [vmem:[%s54 + $0x458] sm:$0xff] %v333
          %v335 = vld [vmem:[%s53 + $0x460] sm:$0xff]
          %336 = vst [vmem:[%s54 + $0x460] sm:$0xff] %v335
          %v337 = vld [vmem:[%s53 + $0x468] sm:$0xff]
          %338 = vst [vmem:[%s54 + $0x468] sm:$0xff] %v337
          %v339 = vld [vmem:[%s53 + $0x470] sm:$0xff]
          %340 = vst [vmem:[%s54 + $0x470] sm:$0xff] %v339
          %v341 = vld [vmem:[%s53 + $0x478] sm:$0xff]
          %342 = vst [vmem:[%s54 + $0x478] sm:$0xff] %v341
          %v343 = vld [vmem:[%s53 + $0x480] sm:$0xff]
          %344 = vst [vmem:[%s54 + $0x480] sm:$0xff] %v343
          %v345 = vld [vmem:[%s53 + $0x488] sm:$0xff]
          %346 = vst [vmem:[%s54 + $0x488] sm:$0xff] %v345
          %v347 = vld [vmem:[%s53 + $0x490] sm:$0xff]
          %348 = vst [vmem:[%s54 + $0x490] sm:$0xff] %v347
          %v349 = vld [vmem:[%s53 + $0x498] sm:$0xff]
          %350 = vst [vmem:[%s54 + $0x498] sm:$0xff] %v349
          %v351 = vld [vmem:[%s53 + $0x4a0] sm:$0xff]
          %352 = vst [vmem:[%s54 + $0x4a0] sm:$0xff] %v351
          %v353 = vld [vmem:[%s53 + $0x4a8] sm:$0xff]
          %354 = vst [vmem:[%s54 + $0x4a8] sm:$0xff] %v353
          %v355 = vld [vmem:[%s53 + $0x4b0] sm:$0xff]
          %356 = vst [vmem:[%s54 + $0x4b0] sm:$0xff] %v355
          %v357 = vld [vmem:[%s53 + $0x4b8] sm:$0xff]
          %358 = vst [vmem:[%s54 + $0x4b8] sm:$0xff] %v357
          %v359 = vld [vmem:[%s53 + $0x4c0] sm:$0xff]
          %360 = vst [vmem:[%s54 + $0x4c0] sm:$0xff] %v359
          %v361 = vld [vmem:[%s53 + $0x4c8] sm:$0xff]
          %362 = vst [vmem:[%s54 + $0x4c8] sm:$0xff] %v361
          %v363 = vld [vmem:[%s53 + $0x4d0] sm:$0xff]
          %364 = vst [vmem:[%s54 + $0x4d0] sm:$0xff] %v363
          %v365 = vld [vmem:[%s53 + $0x4d8] sm:$0xff]
          %366 = vst [vmem:[%s54 + $0x4d8] sm:$0xff] %v365
          %v367 = vld [vmem:[%s53 + $0x4e0] sm:$0xff]
          %368 = vst [vmem:[%s54 + $0x4e0] sm:$0xff] %v367
          %v369 = vld [vmem:[%s53 + $0x4e8] sm:$0xff]
          %370 = vst [vmem:[%s54 + $0x4e8] sm:$0xff] %v369
          %v371 = vld [vmem:[%s53 + $0x4f0] sm:$0xff]
          %372 = vst [vmem:[%s54 + $0x4f0] sm:$0xff] %v371
          %v373 = vld [vmem:[%s53 + $0x4f8] sm:$0xff]
          %374 = vst [vmem:[%s54 + $0x4f8] sm:$0xff] %v373
          %v375 = vld [vmem:[%s53 + $0x500] sm:$0xff]
          %376 = vst [vmem:[%s54 + $0x500] sm:$0xff] %v375
          %v377 = vld [vmem:[%s53 + $0x508] sm:$0xff]
          %378 = vst [vmem:[%s54 + $0x508] sm:$0xff] %v377
          %v379 = vld [vmem:[%s53 + $0x510] sm:$0xff]
          %380 = vst [vmem:[%s54 + $0x510] sm:$0xff] %v379
          %v381 = vld [vmem:[%s53 + $0x518] sm:$0xff]
          %382 = vst [vmem:[%s54 + $0x518] sm:$0xff] %v381
          %v383 = vld [vmem:[%s53 + $0x520] sm:$0xff]
          %384 = vst [vmem:[%s54 + $0x520] sm:$0xff] %v383
          %v385 = vld [vmem:[%s53 + $0x528] sm:$0xff]
          %386 = vst [vmem:[%s54 + $0x528] sm:$0xff] %v385
          %v387 = vld [vmem:[%s53 + $0x530] sm:$0xff]
          %388 = vst [vmem:[%s54 + $0x530] sm:$0xff] %v387
          %v389 = vld [vmem:[%s53 + $0x538] sm:$0xff]
          %390 = vst [vmem:[%s54 + $0x538] sm:$0xff] %v389
          %v391 = vld [vmem:[%s53 + $0x540] sm:$0xff]
          %392 = vst [vmem:[%s54 + $0x540] sm:$0xff] %v391
          %v393 = vld [vmem:[%s53 + $0x548] sm:$0xff]
          %394 = vst [vmem:[%s54 + $0x548] sm:$0xff] %v393
          %v395 = vld [vmem:[%s53 + $0x550] sm:$0xff]
          %396 = vst [vmem:[%s54 + $0x550] sm:$0xff] %v395
          %v397 = vld [vmem:[%s53 + $0x558] sm:$0xff]
          %398 = vst [vmem:[%s54 + $0x558] sm:$0xff] %v397
          %v399 = vld [vmem:[%s53 + $0x560] sm:$0xff]
          %400 = vst [vmem:[%s54 + $0x560] sm:$0xff] %v399
          %v401 = vld [vmem:[%s53 + $0x568] sm:$0xff]
          %402 = vst [vmem:[%s54 + $0x568] sm:$0xff] %v401
          %v403 = vld [vmem:[%s53 + $0x570] sm:$0xff]
          %404 = vst [vmem:[%s54 + $0x570] sm:$0xff] %v403
          %v405 = vld [vmem:[%s53 + $0x578] sm:$0xff]
          %406 = vst [vmem:[%s54 + $0x578] sm:$0xff] %v405
          %v407 = vld [vmem:[%s53 + $0x580] sm:$0xff]
          %408 = vst [vmem:[%s54 + $0x580] sm:$0xff] %v407
          %v409 = vld [vmem:[%s53 + $0x588] sm:$0xff]
          %410 = vst [vmem:[%s54 + $0x588] sm:$0xff] %v409
          %v411 = vld [vmem:[%s53 + $0x590] sm:$0xff]
          %412 = vst [vmem:[%s54 + $0x590] sm:$0xff] %v411
          %v413 = vld [vmem:[%s53 + $0x598] sm:$0xff]
          %414 = vst [vmem:[%s54 + $0x598] sm:$0xff] %v413
          %v415 = vld [vmem:[%s53 + $0x5a0] sm:$0xff]
          %416 = vst [vmem:[%s54 + $0x5a0] sm:$0xff] %v415
          %v417 = vld [vmem:[%s53 + $0x5a8] sm:$0xff]
          %418 = vst [vmem:[%s54 + $0x5a8] sm:$0xff] %v417
          %v419 = vld [vmem:[%s53 + $0x5b0] sm:$0xff]
          %420 = vst [vmem:[%s54 + $0x5b0] sm:$0xff] %v419
          %v421 = vld [vmem:[%s53 + $0x5b8] sm:$0xff]
          %422 = vst [vmem:[%s54 + $0x5b8] sm:$0xff] %v421
          %v423 = vld [vmem:[%s53 + $0x5c0] sm:$0xff]
          %424 = vst [vmem:[%s54 + $0x5c0] sm:$0xff] %v423
          %v425 = vld [vmem:[%s53 + $0x5c8] sm:$0xff]
          %426 = vst [vmem:[%s54 + $0x5c8] sm:$0xff] %v425
          %v427 = vld [vmem:[%s53 + $0x5d0] sm:$0xff]
          %428 = vst [vmem:[%s54 + $0x5d0] sm:$0xff] %v427
          %v429 = vld [vmem:[%s53 + $0x5d8] sm:$0xff]
          %430 = vst [vmem:[%s54 + $0x5d8] sm:$0xff] %v429
          %v431 = vld [vmem:[%s53 + $0x5e0] sm:$0xff]
          %432 = vst [vmem:[%s54 + $0x5e0] sm:$0xff] %v431
          %v433 = vld [vmem:[%s53 + $0x5e8] sm:$0xff]
          %434 = vst [vmem:[%s54 + $0x5e8] sm:$0xff] %v433
          %v435 = vld [vmem:[%s53 + $0x5f0] sm:$0xff]
          %436 = vst [vmem:[%s54 + $0x5f0] sm:$0xff] %v435
          %v437 = vld [vmem:[%s53 + $0x5f8] sm:$0xff]
          %438 = vst [vmem:[%s54 + $0x5f8] sm:$0xff] %v437
          %v439 = vld [vmem:[%s53 + $0x600] sm:$0xff]
          %440 = vst [vmem:[%s54 + $0x600] sm:$0xff] %v439
          %v441 = vld [vmem:[%s53 + $0x608] sm:$0xff]
          %442 = vst [vmem:[%s54 + $0x608] sm:$0xff] %v441
          %v443 = vld [vmem:[%s53 + $0x610] sm:$0xff]
          %444 = vst [vmem:[%s54 + $0x610] sm:$0xff] %v443
          %v445 = vld [vmem:[%s53 + $0x618] sm:$0xff]
          %446 = vst [vmem:[%s54 + $0x618] sm:$0xff] %v445
          %v447 = vld [vmem:[%s53 + $0x620] sm:$0xff]
          %448 = vst [vmem:[%s54 + $0x620] sm:$0xff] %v447
          %v449 = vld [vmem:[%s53 + $0x628] sm:$0xff]
          %450 = vst [vmem:[%s54 + $0x628] sm:$0xff] %v449
          %v451 = vld [vmem:[%s53 + $0x630] sm:$0xff]
          %452 = vst [vmem:[%s54 + $0x630] sm:$0xff] %v451
          %v453 = vld [vmem:[%s53 + $0x638] sm:$0xff]
          %454 = vst [vmem:[%s54 + $0x638] sm:$0xff] %v453
          %v455 = vld [vmem:[%s53 + $0x640] sm:$0xff]
          %456 = vst [vmem:[%s54 + $0x640] sm:$0xff] %v455
          %v457 = vld [vmem:[%s53 + $0x648] sm:$0xff]
          %458 = vst [vmem:[%s54 + $0x648] sm:$0xff] %v457
          %v459 = vld [vmem:[%s53 + $0x650] sm:$0xff]
          %460 = vst [vmem:[%s54 + $0x650] sm:$0xff] %v459
          %v461 = vld [vmem:[%s53 + $0x658] sm:$0xff]
          %462 = vst [vmem:[%s54 + $0x658] sm:$0xff] %v461
          %v463 = vld [vmem:[%s53 + $0x660] sm:$0xff]
          %464 = vst [vmem:[%s54 + $0x660] sm:$0xff] %v463
          %v465 = vld [vmem:[%s53 + $0x668] sm:$0xff]
          %466 = vst [vmem:[%s54 + $0x668] sm:$0xff] %v465
          %v467 = vld [vmem:[%s53 + $0x670] sm:$0xff]
          %468 = vst [vmem:[%s54 + $0x670] sm:$0xff] %v467
          %v469 = vld [vmem:[%s53 + $0x678] sm:$0xff]
          %470 = vst [vmem:[%s54 + $0x678] sm:$0xff] %v469
          %v471 = vld [vmem:[%s53 + $0x680] sm:$0xff]
          %472 = vst [vmem:[%s54 + $0x680] sm:$0xff] %v471
          %v473 = vld [vmem:[%s53 + $0x688] sm:$0xff]
          %474 = vst [vmem:[%s54 + $0x688] sm:$0xff] %v473
          %v475 = vld [vmem:[%s53 + $0x690] sm:$0xff]
          %476 = vst [vmem:[%s54 + $0x690] sm:$0xff] %v475
          %v477 = vld [vmem:[%s53 + $0x698] sm:$0xff]
          %478 = vst [vmem:[%s54 + $0x698] sm:$0xff] %v477
          %v479 = vld [vmem:[%s53 + $0x6a0] sm:$0xff]
          %480 = vst [vmem:[%s54 + $0x6a0] sm:$0xff] %v479
          %v481 = vld [vmem:[%s53 + $0x6a8] sm:$0xff]
          %482 = vst [vmem:[%s54 + $0x6a8] sm:$0xff] %v481
          %v483 = vld [vmem:[%s53 + $0x6b0] sm:$0xff]
          %484 = vst [vmem:[%s54 + $0x6b0] sm:$0xff] %v483
          %v485 = vld [vmem:[%s53 + $0x6b8] sm:$0xff]
          %486 = vst [vmem:[%s54 + $0x6b8] sm:$0xff] %v485
          %v487 = vld [vmem:[%s53 + $0x6c0] sm:$0xff]
          %488 = vst [vmem:[%s54 + $0x6c0] sm:$0xff] %v487
          %v489 = vld [vmem:[%s53 + $0x6c8] sm:$0xff]
          %490 = vst [vmem:[%s54 + $0x6c8] sm:$0xff] %v489
          %v491 = vld [vmem:[%s53 + $0x6d0] sm:$0xff]
          %492 = vst [vmem:[%s54 + $0x6d0] sm:$0xff] %v491
          %v493 = vld [vmem:[%s53 + $0x6d8] sm:$0xff]
          %494 = vst [vmem:[%s54 + $0x6d8] sm:$0xff] %v493
          %v495 = vld [vmem:[%s53 + $0x6e0] sm:$0xff]
          %496 = vst [vmem:[%s54 + $0x6e0] sm:$0xff] %v495
          %v497 = vld [vmem:[%s53 + $0x6e8] sm:$0xff]
          %498 = vst [vmem:[%s54 + $0x6e8] sm:$0xff] %v497
          %v499 = vld [vmem:[%s53 + $0x6f0] sm:$0xff]
          %500 = vst [vmem:[%s54 + $0x6f0] sm:$0xff] %v499
          %v501 = vld [vmem:[%s53 + $0x6f8] sm:$0xff]
          %502 = vst [vmem:[%s54 + $0x6f8] sm:$0xff] %v501
          %v503 = vld [vmem:[%s53 + $0x700] sm:$0xff]
          %504 = vst [vmem:[%s54 + $0x700] sm:$0xff] %v503
          %v505 = vld [vmem:[%s53 + $0x708] sm:$0xff]
          %506 = vst [vmem:[%s54 + $0x708] sm:$0xff] %v505
        $region45: #{simple_resnet_forward.1} parent=39 // loop_footer
          %s52 = sadd.s32 1, %s48
        $region46: #{simple_resnet_forward.1} parent=39 // loop_footer_branch
          %47 = sbr.rel target = $region42
        $region47: #{simple_resnet_forward.1} parent=39 // loop_exit
          _
      $region40: #{simple_resnet_forward.1} parent=24 // pred_fallthru
        _
      %p507 = pneg %p43
      // Predicated region
      $region48: #{simple_resnet_forward.1} parent=24 // pred_check
        _
      $region49: #{simple_resnet_forward.1} parent=24 // pred_check_branch
        %509 = sbr.rel (%p43) target = $region51
      $region50: #{simple_resnet_forward.1} parent=24 // pred_region
        %s510 = sand.u32 1808, 7
      $region51: #{simple_resnet_forward.1} parent=24 // pred_fallthru
        _
    $region25: #{simple_resnet_forward.1} parent=1 // pred_fallthru
      _
    // Predicated region
    $region26: #{simple_resnet_forward.1} parent=1 // pred_check
      %p27 = pneg %p23
    $region27: #{simple_resnet_forward.1} parent=1 // pred_check_branch
      %29 = sbr.rel (%p27) target = $region29
    $region28: #{simple_resnet_forward.1} parent=1 // pred_region
      %s30 = sshll.u32 1, 1808
      %s31 = ssub.s32 %s30, 1
      loop: start=0, step=1, limit=1
      $region30: #{simple_resnet_forward.1} parent=28 // loop_pre_header
        _
      $region31: #{simple_resnet_forward.1} parent=28 // loop_header
        %s33 = sphi 0, %s37
        %p34 = scmp.ge.s32.totalorder %s33, 1
        %s38 = sphi %s5, %s5
        %s39 = sphi [#allocation3], [#allocation3]
      $region32: #{simple_resnet_forward.1} parent=28 // loop_header_branch
        %36 = sbr.rel (%p34) target = $region36
      $region33: #{simple_resnet_forward.1} parent=28 // loop_body
        %v40 = vld [vmem:[%s38] sm:%s31]
        %41 = vst [vmem:[%s39] sm:%s31] %v40
      $region34: #{simple_resnet_forward.1} parent=28 // loop_footer
        %s37 = sadd.s32 1, %s33
      $region35: #{simple_resnet_forward.1} parent=28 // loop_footer_branch
        %32 = sbr.rel target = $region31
      $region36: #{simple_resnet_forward.1} parent=28 // loop_exit
        _
    $region29: #{simple_resnet_forward.1} parent=1 // pred_fallthru
      _
    // Predicated region
    $region52: #{simple_resnet_forward.1} parent=1 // pred_check
      _
    $region53: #{simple_resnet_forward.1} parent=1 // pred_check_branch
      %513 = sbr.rel (0) target = $region55
    $region54: #{simple_resnet_forward.1} parent=1 // pred_region
      %514 = vsyncadd [#allocation4], 28928
    $region55: #{simple_resnet_forward.1} parent=1 // pred_fallthru
      _
    %v515 = vld [vmem:[%s1] sm:$0xff]
    %v516 = vld [vmem:[%s1 + $0x8] sm:$0x7f]
    %v517 = vld [vmem:[%s0] sm:$0xff]
    %v518 = vld [vmem:[%s0 + $0x8] sm:$0x7f]
    %v519 = vld [vmem:[%s2] sm:$0xff]
    %v520 = vld [vmem:[%s2 + $0x8] sm:$0xff]
    %522 = vset.pattern.permute.xlu0 0
    %523 = vperm.xlu0 %522, %v519
    %v524 = vpop.permute.xlu0 %523
    %527 = vset.pattern.permute.xlu0 0
    %528 = vperm.xlu0 %527, %v520
    %v529 = vpop.permute.xlu0 %528
    %v533 = vlaneseq
    %v534 = vshrl.u32 %v533, 7
    %v535 = vsub.s32 0, %v534
    %v536 = vrot.slane %v517, %v535
    %v537 = vlaneseq
    %v538 = vshrl.u32 %v537, 7
    %v539 = vsub.s32 1, %v538
    %v540 = vrot.slane %v517, %v539
    %v541 = vlaneseq
    %v542 = vshrl.u32 %v541, 7
    %v543 = vsub.s32 2, %v542
    %v544 = vrot.slane %v517, %v543
    %v545 = vlaneseq
    %v546 = vshrl.u32 %v545, 7
    %v547 = vsub.s32 3, %v546
    %v548 = vrot.slane %v517, %v547
    %v549 = vlaneseq
    %v550 = vshrl.u32 %v549, 7
    %v551 = vsub.s32 4, %v550
    %v552 = vrot.slane %v517, %v551
    %v553 = vlaneseq
    %v554 = vshrl.u32 %v553, 7
    %v555 = vsub.s32 5, %v554
    %v556 = vrot.slane %v517, %v555
    %v557 = vlaneseq
    %v558 = vshrl.u32 %v557, 7
    %v559 = vsub.s32 6, %v558
    %v560 = vrot.slane %v517, %v559
    %v561 = vlaneseq
    %v562 = vshrl.u32 %v561, 7
    %v563 = vsub.s32 7, %v562
    %v564 = vrot.slane %v517, %v563
    %v565 = vlaneseq
    %v566 = vshrl.u32 %v565, 7
    %v567 = vsub.s32 0, %v566
    %v568 = vrot.slane %v518, %v567
    %v569 = vlaneseq
    %v570 = vshrl.u32 %v569, 7
    %v571 = vsub.s32 1, %v570
    %v572 = vrot.slane %v518, %v571
    %v573 = vlaneseq
    %v574 = vshrl.u32 %v573, 7
    %v575 = vsub.s32 2, %v574
    %v576 = vrot.slane %v518, %v575
    %v577 = vlaneseq
    %v578 = vshrl.u32 %v577, 7
    %v579 = vsub.s32 3, %v578
    %v580 = vrot.slane %v518, %v579
    %v581 = vlaneseq
    %v582 = vshrl.u32 %v581, 7
    %v583 = vsub.s32 4, %v582
    %v584 = vrot.slane %v518, %v583
    %v585 = vlaneseq
    %v586 = vshrl.u32 %v585, 7
    %v587 = vsub.s32 5, %v586
    %v588 = vrot.slane %v518, %v587
    %v589 = vlaneseq
    %v590 = vshrl.u32 %v589, 7
    %v591 = vsub.s32 6, %v590
    %v592 = vrot.slane %v518, %v591
    %v608 = vmul.f32 %v524, %v536
    %v609 = vmul.f32 %v524, %v540
    %v610 = vmul.f32 %v524, %v544
    %v611 = vmul.f32 %v524, %v548
    %v612 = vmul.f32 %v524, %v552
    %v613 = vmul.f32 %v524, %v556
    %v614 = vmul.f32 %v524, %v560
    %v615 = vmul.f32 %v524, %v564
    %v616 = vmul.f32 %v524, %v568
    %v617 = vmul.f32 %v524, %v572
    %v618 = vmul.f32 %v524, %v576
    %v619 = vmul.f32 %v524, %v580
    %v620 = vmul.f32 %v524, %v584
    %v621 = vmul.f32 %v524, %v588
    %v622 = vmul.f32 %v524, %v592
    %v623 = vmul.f32 %v529, %v536
    %v624 = vmul.f32 %v529, %v540
    %v625 = vmul.f32 %v529, %v544
    %v626 = vmul.f32 %v529, %v548
    %v627 = vmul.f32 %v529, %v552
    %v628 = vmul.f32 %v529, %v556
    %v629 = vmul.f32 %v529, %v560
    %v630 = vmul.f32 %v529, %v564
    %v631 = vmul.f32 %v529, %v568
    %v632 = vmul.f32 %v529, %v572
    %v633 = vmul.f32 %v529, %v576
    %v634 = vmul.f32 %v529, %v580
    %v635 = vmul.f32 %v529, %v584
    %v636 = vmul.f32 %v529, %v588
    %v637 = vmul.f32 %v529, %v592
    %v638 = vadd.f32 %v608, 0.0
    %v639 = vadd.f32 %v609, 0.0
    %v640 = vadd.f32 %v610, 0.0
    %v641 = vadd.f32 %v611, 0.0
    %v642 = vadd.f32 %v612, 0.0
    %v643 = vadd.f32 %v613, 0.0
    %v644 = vadd.f32 %v614, 0.0
    %v645 = vadd.f32 %v615, 0.0
    %v646 = vadd.f32 %v616, 0.0
    %v647 = vadd.f32 %v617, 0.0
    %v648 = vadd.f32 %v618, 0.0
    %v649 = vadd.f32 %v619, 0.0
    %v650 = vadd.f32 %v620, 0.0
    %v651 = vadd.f32 %v621, 0.0
    %v652 = vadd.f32 %v622, 0.0
    %v653 = vadd.f32 %v623, 0.0
    %v654 = vadd.f32 %v624, 0.0
    %v655 = vadd.f32 %v625, 0.0
    %v656 = vadd.f32 %v626, 0.0
    %v657 = vadd.f32 %v627, 0.0
    %v658 = vadd.f32 %v628, 0.0
    %v659 = vadd.f32 %v629, 0.0
    %v660 = vadd.f32 %v630, 0.0
    %v661 = vadd.f32 %v631, 0.0
    %v662 = vadd.f32 %v632, 0.0
    %v663 = vadd.f32 %v633, 0.0
    %v664 = vadd.f32 %v634, 0.0
    %v665 = vadd.f32 %v635, 0.0
    %v666 = vadd.f32 %v636, 0.0
    %v667 = vadd.f32 %v637, 0.0
    %668 = vset.pattern.permute.xlu0 1
    %669 = vperm.xlu0 %668, %v519
    %v670 = vpop.permute.xlu0 %669
    %672 = vset.pattern.permute.xlu0 1
    %673 = vperm.xlu0 %672, %v520
    %v674 = vpop.permute.xlu0 %673
    %v676 = vmul.f32 %v670, %v536
    %v677 = vmul.f32 %v670, %v540
    %v678 = vmul.f32 %v670, %v544
    %v679 = vmul.f32 %v670, %v548
    %v680 = vmul.f32 %v670, %v552
    %v681 = vmul.f32 %v670, %v556
    %v682 = vmul.f32 %v670, %v560
    %v683 = vmul.f32 %v670, %v564
    %v684 = vmul.f32 %v670, %v568
    %v685 = vmul.f32 %v670, %v572
    %v686 = vmul.f32 %v670, %v576
    %v687 = vmul.f32 %v670, %v580
    %v688 = vmul.f32 %v670, %v584
    %v689 = vmul.f32 %v670, %v588
    %v690 = vmul.f32 %v670, %v592
    %v691 = vmul.f32 %v674, %v536
    %v692 = vmul.f32 %v674, %v540
    %v693 = vmul.f32 %v674, %v544
    %v694 = vmul.f32 %v674, %v548
    %v695 = vmul.f32 %v674, %v552
    %v696 = vmul.f32 %v674, %v556
    %v697 = vmul.f32 %v674, %v560
    %v698 = vmul.f32 %v674, %v564
    %v699 = vmul.f32 %v674, %v568
    %v700 = vmul.f32 %v674, %v572
    %v701 = vmul.f32 %v674, %v576
    %v702 = vmul.f32 %v674, %v580
    %v703 = vmul.f32 %v674, %v584
    %v704 = vmul.f32 %v674, %v588
    %v705 = vmul.f32 %v674, %v592
    %736 = vrot.lane.b32.xlu0 %v676, 127
    %v737 = vpop.permute.xlu0 %736
    %738 = vrot.lane.b32.xlu0 %v677, 127
    %v739 = vpop.permute.xlu0 %738
    %740 = vrot.lane.b32.xlu0 %v678, 127
    %v741 = vpop.permute.xlu0 %740
    %742 = vrot.lane.b32.xlu0 %v679, 127
    %v743 = vpop.permute.xlu0 %742
    %744 = vrot.lane.b32.xlu0 %v680, 127
    %v745 = vpop.permute.xlu0 %744
    %746 = vrot.lane.b32.xlu0 %v681, 127
    %v747 = vpop.permute.xlu0 %746
    %748 = vrot.lane.b32.xlu0 %v682, 127
    %v749 = vpop.permute.xlu0 %748
    %750 = vrot.lane.b32.xlu0 %v683, 127
    %v751 = vpop.permute.xlu0 %750
    %752 = vrot.lane.b32.xlu0 %v684, 127
    %v753 = vpop.permute.xlu0 %752
    %754 = vrot.lane.b32.xlu0 %v685, 127
    %v755 = vpop.permute.xlu0 %754
    %756 = vrot.lane.b32.xlu0 %v686, 127
    %v757 = vpop.permute.xlu0 %756
    %758 = vrot.lane.b32.xlu0 %v687, 127
    %v759 = vpop.permute.xlu0 %758
    %760 = vrot.lane.b32.xlu0 %v688, 127
    %v761 = vpop.permute.xlu0 %760
    %762 = vrot.lane.b32.xlu0 %v689, 127
    %v763 = vpop.permute.xlu0 %762
    %764 = vrot.lane.b32.xlu0 %v690, 127
    %v765 = vpop.permute.xlu0 %764
    %766 = vrot.lane.b32.xlu0 %v691, 127
    %v767 = vpop.permute.xlu0 %766
    %768 = vrot.lane.b32.xlu0 %v692, 127
    %v769 = vpop.permute.xlu0 %768
    %770 = vrot.lane.b32.xlu0 %v693, 127
    %v771 = vpop.permute.xlu0 %770
    %772 = vrot.lane.b32.xlu0 %v694, 127
    %v773 = vpop.permute.xlu0 %772
    %774 = vrot.lane.b32.xlu0 %v695, 127
    %v775 = vpop.permute.xlu0 %774
    %776 = vrot.lane.b32.xlu0 %v696, 127
    %v777 = vpop.permute.xlu0 %776
    %778 = vrot.lane.b32.xlu0 %v697, 127
    %v779 = vpop.permute.xlu0 %778
    %780 = vrot.lane.b32.xlu0 %v698, 127
    %v781 = vpop.permute.xlu0 %780
    %782 = vrot.lane.b32.xlu0 %v699, 127
    %v783 = vpop.permute.xlu0 %782
    %784 = vrot.lane.b32.xlu0 %v700, 127
    %v785 = vpop.permute.xlu0 %784
    %786 = vrot.lane.b32.xlu0 %v701, 127
    %v787 = vpop.permute.xlu0 %786
    %788 = vrot.lane.b32.xlu0 %v702, 127
    %v789 = vpop.permute.xlu0 %788
    %790 = vrot.lane.b32.xlu0 %v703, 127
    %v791 = vpop.permute.xlu0 %790
    %792 = vrot.lane.b32.xlu0 %v704, 127
    %v793 = vpop.permute.xlu0 %792
    %794 = vrot.lane.b32.xlu0 %v705, 127
    %v795 = vpop.permute.xlu0 %794
    %vm796 = vcmask 1039360
    %v797 = vsel %vm796, %v737, %v739
    %v798 = vsel %vm796, %v739, %v741
    %v799 = vsel %vm796, %v741, %v743
    %v800 = vsel %vm796, %v743, %v745
    %v801 = vsel %vm796, %v745, %v747
    %v802 = vsel %vm796, %v747, %v749
    %v803 = vsel %vm796, %v749, %v751
    %v804 = vsel %vm796, %v751, %v753
    %v805 = vsel %vm796, %v753, %v755
    %v806 = vsel %vm796, %v755, %v757
    %v807 = vsel %vm796, %v757, %v759
    %v808 = vsel %vm796, %v759, %v761
    %v809 = vsel %vm796, %v761, %v763
    %v810 = vsel %vm796, %v763, %v765
    %v811 = vsel %vm796, %v767, %v769
    %v812 = vsel %vm796, %v769, %v771
    %v813 = vsel %vm796, %v771, %v773
    %v814 = vsel %vm796, %v773, %v775
    %v815 = vsel %vm796, %v775, %v777
    %v816 = vsel %vm796, %v777, %v779
    %v817 = vsel %vm796, %v779, %v781
    %v818 = vsel %vm796, %v781, %v783
    %v819 = vsel %vm796, %v783, %v785
    %v820 = vsel %vm796, %v785, %v787
    %v821 = vsel %vm796, %v787, %v789
    %v822 = vsel %vm796, %v789, %v791
    %v823 = vsel %vm796, %v791, %v793
    %v824 = vsel %vm796, %v793, %v795
    %v855 = vadd.f32 %v638, %v797
    %v856 = vadd.f32 %v639, %v798
    %v857 = vadd.f32 %v640, %v799
    %v858 = vadd.f32 %v641, %v800
    %v859 = vadd.f32 %v642, %v801
    %v860 = vadd.f32 %v643, %v802
    %v861 = vadd.f32 %v644, %v803
    %v862 = vadd.f32 %v645, %v804
    %v863 = vadd.f32 %v646, %v805
    %v864 = vadd.f32 %v647, %v806
    %v865 = vadd.f32 %v648, %v807
    %v866 = vadd.f32 %v649, %v808
    %v867 = vadd.f32 %v650, %v809
    %v868 = vadd.f32 %v651, %v810
    %v869 = vadd.f32 %v652, %v765
    %v870 = vadd.f32 %v653, %v811
    %v871 = vadd.f32 %v654, %v812
    %v872 = vadd.f32 %v655, %v813
    %v873 = vadd.f32 %v656, %v814
    %v874 = vadd.f32 %v657, %v815
    %v875 = vadd.f32 %v658, %v816
    %v876 = vadd.f32 %v659, %v817
    %v877 = vadd.f32 %v660, %v818
    %v878 = vadd.f32 %v661, %v819
    %v879 = vadd.f32 %v662, %v820
    %v880 = vadd.f32 %v663, %v821
    %v881 = vadd.f32 %v664, %v822
    %v882 = vadd.f32 %v665, %v823
    %v883 = vadd.f32 %v666, %v824
    %v884 = vadd.f32 %v667, %v795
    %885 = vset.pattern.permute.xlu0 2
    %886 = vperm.xlu0 %885, %v519
    %v887 = vpop.permute.xlu0 %886
    %889 = vset.pattern.permute.xlu0 2
    %890 = vperm.xlu0 %889, %v520
    %v891 = vpop.permute.xlu0 %890
    %v893 = vmul.f32 %v887, %v536
    %v894 = vmul.f32 %v887, %v540
    %v895 = vmul.f32 %v887, %v544
    %v896 = vmul.f32 %v887, %v548
    %v897 = vmul.f32 %v887, %v552
    %v898 = vmul.f32 %v887, %v556
    %v899 = vmul.f32 %v887, %v560
    %v900 = vmul.f32 %v887, %v564
    %v901 = vmul.f32 %v887, %v568
    %v902 = vmul.f32 %v887, %v572
    %v903 = vmul.f32 %v887, %v576
    %v904 = vmul.f32 %v887, %v580
    %v905 = vmul.f32 %v887, %v584
    %v906 = vmul.f32 %v887, %v588
    %v907 = vmul.f32 %v887, %v592
    %v908 = vmul.f32 %v891, %v536
    %v909 = vmul.f32 %v891, %v540
    %v910 = vmul.f32 %v891, %v544
    %v911 = vmul.f32 %v891, %v548
    %v912 = vmul.f32 %v891, %v552
    %v913 = vmul.f32 %v891, %v556
    %v914 = vmul.f32 %v891, %v560
    %v915 = vmul.f32 %v891, %v564
    %v916 = vmul.f32 %v891, %v568
    %v917 = vmul.f32 %v891, %v572
    %v918 = vmul.f32 %v891, %v576
    %v919 = vmul.f32 %v891, %v580
    %v920 = vmul.f32 %v891, %v584
    %v921 = vmul.f32 %v891, %v588
    %v922 = vmul.f32 %v891, %v592
    %953 = vrot.lane.b32.xlu0 %v893, 126
    %v954 = vpop.permute.xlu0 %953
    %955 = vrot.lane.b32.xlu0 %v894, 126
    %v956 = vpop.permute.xlu0 %955
    %957 = vrot.lane.b32.xlu0 %v895, 126
    %v958 = vpop.permute.xlu0 %957
    %959 = vrot.lane.b32.xlu0 %v896, 126
    %v960 = vpop.permute.xlu0 %959
    %961 = vrot.lane.b32.xlu0 %v897, 126
    %v962 = vpop.permute.xlu0 %961
    %963 = vrot.lane.b32.xlu0 %v898, 126
    %v964 = vpop.permute.xlu0 %963
    %965 = vrot.lane.b32.xlu0 %v899, 126
    %v966 = vpop.permute.xlu0 %965
    %967 = vrot.lane.b32.xlu0 %v900, 126
    %v968 = vpop.permute.xlu0 %967
    %969 = vrot.lane.b32.xlu0 %v901, 126
    %v970 = vpop.permute.xlu0 %969
    %971 = vrot.lane.b32.xlu0 %v902, 126
    %v972 = vpop.permute.xlu0 %971
    %973 = vrot.lane.b32.xlu0 %v903, 126
    %v974 = vpop.permute.xlu0 %973
    %975 = vrot.lane.b32.xlu0 %v904, 126
    %v976 = vpop.permute.xlu0 %975
    %977 = vrot.lane.b32.xlu0 %v905, 126
    %v978 = vpop.permute.xlu0 %977
    %979 = vrot.lane.b32.xlu0 %v906, 126
    %v980 = vpop.permute.xlu0 %979
    %981 = vrot.lane.b32.xlu0 %v907, 126
    %v982 = vpop.permute.xlu0 %981
    %983 = vrot.lane.b32.xlu0 %v908, 126
    %v984 = vpop.permute.xlu0 %983
    %985 = vrot.lane.b32.xlu0 %v909, 126
    %v986 = vpop.permute.xlu0 %985
    %987 = vrot.lane.b32.xlu0 %v910, 126
    %v988 = vpop.permute.xlu0 %987
    %989 = vrot.lane.b32.xlu0 %v911, 126
    %v990 = vpop.permute.xlu0 %989
    %991 = vrot.lane.b32.xlu0 %v912, 126
    %v992 = vpop.permute.xlu0 %991
    %993 = vrot.lane.b32.xlu0 %v913, 126
    %v994 = vpop.permute.xlu0 %993
    %995 = vrot.lane.b32.xlu0 %v914, 126
    %v996 = vpop.permute.xlu0 %995
    %997 = vrot.lane.b32.xlu0 %v915, 126
    %v998 = vpop.permute.xlu0 %997
    %999 = vrot.lane.b32.xlu0 %v916, 126
    %v1000 = vpop.permute.xlu0 %999
    %1001 = vrot.lane.b32.xlu0 %v917, 126
    %v1002 = vpop.permute.xlu0 %1001
    %1003 = vrot.lane.b32.xlu0 %v918, 126
    %v1004 = vpop.permute.xlu0 %1003
    %1005 = vrot.lane.b32.xlu0 %v919, 126
    %v1006 = vpop.permute.xlu0 %1005
    %1007 = vrot.lane.b32.xlu0 %v920, 126
    %v1008 = vpop.permute.xlu0 %1007
    %1009 = vrot.lane.b32.xlu0 %v921, 126
    %v1010 = vpop.permute.xlu0 %1009
    %1011 = vrot.lane.b32.xlu0 %v922, 126
    %v1012 = vpop.permute.xlu0 %1011
    %vm1013 = vcmask 1031168
    %v1014 = vsel %vm1013, %v954, %v956
    %v1015 = vsel %vm1013, %v956, %v958
    %v1016 = vsel %vm1013, %v958, %v960
    %v1017 = vsel %vm1013, %v960, %v962
    %v1018 = vsel %vm1013, %v962, %v964
    %v1019 = vsel %vm1013, %v964, %v966
    %v1020 = vsel %vm1013, %v966, %v968
    %v1021 = vsel %vm1013, %v968, %v970
    %v1022 = vsel %vm1013, %v970, %v972
    %v1023 = vsel %vm1013, %v972, %v974
    %v1024 = vsel %vm1013, %v974, %v976
    %v1025 = vsel %vm1013, %v976, %v978
    %v1026 = vsel %vm1013, %v978, %v980
    %v1027 = vsel %vm1013, %v980, %v982
    %v1028 = vsel %vm1013, %v984, %v986
    %v1029 = vsel %vm1013, %v986, %v988
    %v1030 = vsel %vm1013, %v988, %v990
    %v1031 = vsel %vm1013, %v990, %v992
    %v1032 = vsel %vm1013, %v992, %v994
    %v1033 = vsel %vm1013, %v994, %v996
    %v1034 = vsel %vm1013, %v996, %v998
    %v1035 = vsel %vm1013, %v998, %v1000
    %v1036 = vsel %vm1013, %v1000, %v1002
    %v1037 = vsel %vm1013, %v1002, %v1004
    %v1038 = vsel %vm1013, %v1004, %v1006
    %v1039 = vsel %vm1013, %v1006, %v1008
    %v1040 = vsel %vm1013, %v1008, %v1010
    %v1041 = vsel %vm1013, %v1010, %v1012
    %v1072 = vadd.f32 %v855, %v1014
    %v1073 = vadd.f32 %v856, %v1015
    %v1074 = vadd.f32 %v857, %v1016
    %v1075 = vadd.f32 %v858, %v1017
    %v1076 = vadd.f32 %v859, %v1018
    %v1077 = vadd.f32 %v860, %v1019
    %v1078 = vadd.f32 %v861, %v1020
    %v1079 = vadd.f32 %v862, %v1021
    %v1080 = vadd.f32 %v863, %v1022
    %v1081 = vadd.f32 %v864, %v1023
    %v1082 = vadd.f32 %v865, %v1024
    %v1083 = vadd.f32 %v866, %v1025
    %v1084 = vadd.f32 %v867, %v1026
    %v1085 = vadd.f32 %v868, %v1027
    %v1086 = vadd.f32 %v869, %v982
    %v1087 = vadd.f32 %v870, %v1028
    %v1088 = vadd.f32 %v871, %v1029
    %v1089 = vadd.f32 %v872, %v1030
    %v1090 = vadd.f32 %v873, %v1031
    %v1091 = vadd.f32 %v874, %v1032
    %v1092 = vadd.f32 %v875, %v1033
    %v1093 = vadd.f32 %v876, %v1034
    %v1094 = vadd.f32 %v877, %v1035
    %v1095 = vadd.f32 %v878, %v1036
    %v1096 = vadd.f32 %v879, %v1037
    %v1097 = vadd.f32 %v880, %v1038
    %v1098 = vadd.f32 %v881, %v1039
    %v1099 = vadd.f32 %v882, %v1040
    %v1100 = vadd.f32 %v883, %v1041
    %v1101 = vadd.f32 %v884, %v1012
    %1102 = vset.pattern.permute.xlu0 3
    %1103 = vperm.xlu0 %1102, %v519
    %v1104 = vpop.permute.xlu0 %1103
    %1106 = vset.pattern.permute.xlu0 3
    %1107 = vperm.xlu0 %1106, %v520
    %v1108 = vpop.permute.xlu0 %1107
    %v1110 = vmul.f32 %v1104, %v536
    %v1111 = vmul.f32 %v1104, %v540
    %v1112 = vmul.f32 %v1104, %v544
    %v1113 = vmul.f32 %v1104, %v548
    %v1114 = vmul.f32 %v1104, %v552
    %v1115 = vmul.f32 %v1104, %v556
    %v1116 = vmul.f32 %v1104, %v560
    %v1117 = vmul.f32 %v1104, %v564
    %v1118 = vmul.f32 %v1104, %v568
    %v1119 = vmul.f32 %v1104, %v572
    %v1120 = vmul.f32 %v1104, %v576
    %v1121 = vmul.f32 %v1104, %v580
    %v1122 = vmul.f32 %v1104, %v584
    %v1123 = vmul.f32 %v1104, %v588
    %v1124 = vmul.f32 %v1104, %v592
    %v1125 = vmul.f32 %v1108, %v536
    %v1126 = vmul.f32 %v1108, %v540
    %v1127 = vmul.f32 %v1108, %v544
    %v1128 = vmul.f32 %v1108, %v548
    %v1129 = vmul.f32 %v1108, %v552
    %v1130 = vmul.f32 %v1108, %v556
    %v1131 = vmul.f32 %v1108, %v560
    %v1132 = vmul.f32 %v1108, %v564
    %v1133 = vmul.f32 %v1108, %v568
    %v1134 = vmul.f32 %v1108, %v572
    %v1135 = vmul.f32 %v1108, %v576
    %v1136 = vmul.f32 %v1108, %v580
    %v1137 = vmul.f32 %v1108, %v584
    %v1138 = vmul.f32 %v1108, %v588
    %v1139 = vmul.f32 %v1108, %v592
    %1170 = vrot.lane.b32.xlu0 %v1110, 98
    %v1171 = vpop.permute.xlu0 %1170
    %1172 = vrot.lane.b32.xlu0 %v1111, 98
    %v1173 = vpop.permute.xlu0 %1172
    %1174 = vrot.lane.b32.xlu0 %v1112, 98
    %v1175 = vpop.permute.xlu0 %1174
    %1176 = vrot.lane.b32.xlu0 %v1113, 98
    %v1177 = vpop.permute.xlu0 %1176
    %1178 = vrot.lane.b32.xlu0 %v1114, 98
    %v1179 = vpop.permute.xlu0 %1178
    %1180 = vrot.lane.b32.xlu0 %v1115, 98
    %v1181 = vpop.permute.xlu0 %1180
    %1182 = vrot.lane.b32.xlu0 %v1116, 98
    %v1183 = vpop.permute.xlu0 %1182
    %1184 = vrot.lane.b32.xlu0 %v1117, 98
    %v1185 = vpop.permute.xlu0 %1184
    %1186 = vrot.lane.b32.xlu0 %v1118, 98
    %v1187 = vpop.permute.xlu0 %1186
    %1188 = vrot.lane.b32.xlu0 %v1119, 98
    %v1189 = vpop.permute.xlu0 %1188
    %1190 = vrot.lane.b32.xlu0 %v1120, 98
    %v1191 = vpop.permute.xlu0 %1190
    %1192 = vrot.lane.b32.xlu0 %v1121, 98
    %v1193 = vpop.permute.xlu0 %1192
    %1194 = vrot.lane.b32.xlu0 %v1122, 98
    %v1195 = vpop.permute.xlu0 %1194
    %1196 = vrot.lane.b32.xlu0 %v1123, 98
    %v1197 = vpop.permute.xlu0 %1196
    %1198 = vrot.lane.b32.xlu0 %v1124, 98
    %v1199 = vpop.permute.xlu0 %1198
    %1200 = vrot.lane.b32.xlu0 %v1125, 98
    %v1201 = vpop.permute.xlu0 %1200
    %1202 = vrot.lane.b32.xlu0 %v1126, 98
    %v1203 = vpop.permute.xlu0 %1202
    %1204 = vrot.lane.b32.xlu0 %v1127, 98
    %v1205 = vpop.permute.xlu0 %1204
    %1206 = vrot.lane.b32.xlu0 %v1128, 98
    %v1207 = vpop.permute.xlu0 %1206
    %1208 = vrot.lane.b32.xlu0 %v1129, 98
    %v1209 = vpop.permute.xlu0 %1208
    %1210 = vrot.lane.b32.xlu0 %v1130, 98
    %v1211 = vpop.permute.xlu0 %1210
    %1212 = vrot.lane.b32.xlu0 %v1131, 98
    %v1213 = vpop.permute.xlu0 %1212
    %1214 = vrot.lane.b32.xlu0 %v1132, 98
    %v1215 = vpop.permute.xlu0 %1214
    %1216 = vrot.lane.b32.xlu0 %v1133, 98
    %v1217 = vpop.permute.xlu0 %1216
    %1218 = vrot.lane.b32.xlu0 %v1134, 98
    %v1219 = vpop.permute.xlu0 %1218
    %1220 = vrot.lane.b32.xlu0 %v1135, 98
    %v1221 = vpop.permute.xlu0 %1220
    %1222 = vrot.lane.b32.xlu0 %v1136, 98
    %v1223 = vpop.permute.xlu0 %1222
    %1224 = vrot.lane.b32.xlu0 %v1137, 98
    %v1225 = vpop.permute.xlu0 %1224
    %1226 = vrot.lane.b32.xlu0 %v1138, 98
    %v1227 = vpop.permute.xlu0 %1226
    %1228 = vrot.lane.b32.xlu0 %v1139, 98
    %v1229 = vpop.permute.xlu0 %1228
    %vm1230 = vcmask 801792
    %v1231 = vsel %vm1230, %v1171, %v1173
    %v1232 = vsel %vm1230, %v1173, %v1175
    %v1233 = vsel %vm1230, %v1175, %v1177
    %v1234 = vsel %vm1230, %v1177, %v1179
    %v1235 = vsel %vm1230, %v1179, %v1181
    %v1236 = vsel %vm1230, %v1181, %v1183
    %v1237 = vsel %vm1230, %v1183, %v1185
    %v1238 = vsel %vm1230, %v1185, %v1187
    %v1239 = vsel %vm1230, %v1187, %v1189
    %v1240 = vsel %vm1230, %v1189, %v1191
    %v1241 = vsel %vm1230, %v1191, %v1193
    %v1242 = vsel %vm1230, %v1193, %v1195
    %v1243 = vsel %vm1230, %v1195, %v1197
    %v1244 = vsel %vm1230, %v1197, %v1199
    %v1245 = vsel %vm1230, %v1201, %v1203
    %v1246 = vsel %vm1230, %v1203, %v1205
    %v1247 = vsel %vm1230, %v1205, %v1207
    %v1248 = vsel %vm1230, %v1207, %v1209
    %v1249 = vsel %vm1230, %v1209, %v1211
    %v1250 = vsel %vm1230, %v1211, %v1213
    %v1251 = vsel %vm1230, %v1213, %v1215
    %v1252 = vsel %vm1230, %v1215, %v1217
    %v1253 = vsel %vm1230, %v1217, %v1219
    %v1254 = vsel %vm1230, %v1219, %v1221
    %v1255 = vsel %vm1230, %v1221, %v1223
    %v1256 = vsel %vm1230, %v1223, %v1225
    %v1257 = vsel %vm1230, %v1225, %v1227
    %v1258 = vsel %vm1230, %v1227, %v1229
    %v1289 = vadd.f32 %v1072, %v1231
    %v1290 = vadd.f32 %v1073, %v1232
    %v1291 = vadd.f32 %v1074, %v1233
    %v1292 = vadd.f32 %v1075, %v1234
    %v1293 = vadd.f32 %v1076, %v1235
    %v1294 = vadd.f32 %v1077, %v1236
    %v1295 = vadd.f32 %v1078, %v1237
    %v1296 = vadd.f32 %v1079, %v1238
    %v1297 = vadd.f32 %v1080, %v1239
    %v1298 = vadd.f32 %v1081, %v1240
    %v1299 = vadd.f32 %v1082, %v1241
    %v1300 = vadd.f32 %v1083, %v1242
    %v1301 = vadd.f32 %v1084, %v1243
    %v1302 = vadd.f32 %v1085, %v1244
    %v1303 = vadd.f32 %v1086, %v1199
    %v1304 = vadd.f32 %v1087, %v1245
    %v1305 = vadd.f32 %v1088, %v1246
    %v1306 = vadd.f32 %v1089, %v1247
    %v1307 = vadd.f32 %v1090, %v1248
    %v1308 = vadd.f32 %v1091, %v1249
    %v1309 = vadd.f32 %v1092, %v1250
    %v1310 = vadd.f32 %v1093, %v1251
    %v1311 = vadd.f32 %v1094, %v1252
    %v1312 = vadd.f32 %v1095, %v1253
    %v1313 = vadd.f32 %v1096, %v1254
    %v1314 = vadd.f32 %v1097, %v1255
    %v1315 = vadd.f32 %v1098, %v1256
    %v1316 = vadd.f32 %v1099, %v1257
    %v1317 = vadd.f32 %v1100, %v1258
    %v1318 = vadd.f32 %v1101, %v1229
    %1319 = vset.pattern.permute.xlu0 4
    %1320 = vperm.xlu0 %1319, %v519
    %v1321 = vpop.permute.xlu0 %1320
    %1323 = vset.pattern.permute.xlu0 4
    %1324 = vperm.xlu0 %1323, %v520
    %v1325 = vpop.permute.xlu0 %1324
    %v1327 = vmul.f32 %v1321, %v536
    %v1328 = vmul.f32 %v1321, %v540
    %v1329 = vmul.f32 %v1321, %v544
    %v1330 = vmul.f32 %v1321, %v548
    %v1331 = vmul.f32 %v1321, %v552
    %v1332 = vmul.f32 %v1321, %v556
    %v1333 = vmul.f32 %v1321, %v560
    %v1334 = vmul.f32 %v1321, %v564
    %v1335 = vmul.f32 %v1321, %v568
    %v1336 = vmul.f32 %v1321, %v572
    %v1337 = vmul.f32 %v1321, %v576
    %v1338 = vmul.f32 %v1321, %v580
    %v1339 = vmul.f32 %v1321, %v584
    %v1340 = vmul.f32 %v1321, %v588
    %v1341 = vmul.f32 %v1321, %v592
    %v1342 = vmul.f32 %v1325, %v536
    %v1343 = vmul.f32 %v1325, %v540
    %v1344 = vmul.f32 %v1325, %v544
    %v1345 = vmul.f32 %v1325, %v548
    %v1346 = vmul.f32 %v1325, %v552
    %v1347 = vmul.f32 %v1325, %v556
    %v1348 = vmul.f32 %v1325, %v560
    %v1349 = vmul.f32 %v1325, %v564
    %v1350 = vmul.f32 %v1325, %v568
    %v1351 = vmul.f32 %v1325, %v572
    %v1352 = vmul.f32 %v1325, %v576
    %v1353 = vmul.f32 %v1325, %v580
    %v1354 = vmul.f32 %v1325, %v584
    %v1355 = vmul.f32 %v1325, %v588
    %v1356 = vmul.f32 %v1325, %v592
    %1387 = vrot.lane.b32.xlu0 %v1327, 97
    %v1388 = vpop.permute.xlu0 %1387
    %1389 = vrot.lane.b32.xlu0 %v1328, 97
    %v1390 = vpop.permute.xlu0 %1389
    %1391 = vrot.lane.b32.xlu0 %v1329, 97
    %v1392 = vpop.permute.xlu0 %1391
    %1393 = vrot.lane.b32.xlu0 %v1330, 97
    %v1394 = vpop.permute.xlu0 %1393
    %1395 = vrot.lane.b32.xlu0 %v1331, 97
    %v1396 = vpop.permute.xlu0 %1395
    %1397 = vrot.lane.b32.xlu0 %v1332, 97
    %v1398 = vpop.permute.xlu0 %1397
    %1399 = vrot.lane.b32.xlu0 %v1333, 97
    %v1400 = vpop.permute.xlu0 %1399
    %1401 = vrot.lane.b32.xlu0 %v1334, 97
    %v1402 = vpop.permute.xlu0 %1401
    %1403 = vrot.lane.b32.xlu0 %v1335, 97
    %v1404 = vpop.permute.xlu0 %1403
    %1405 = vrot.lane.b32.xlu0 %v1336, 97
    %v1406 = vpop.permute.xlu0 %1405
    %1407 = vrot.lane.b32.xlu0 %v1337, 97
    %v1408 = vpop.permute.xlu0 %1407
    %1409 = vrot.lane.b32.xlu0 %v1338, 97
    %v1410 = vpop.permute.xlu0 %1409
    %1411 = vrot.lane.b32.xlu0 %v1339, 97
    %v1412 = vpop.permute.xlu0 %1411
    %1413 = vrot.lane.b32.xlu0 %v1340, 97
    %v1414 = vpop.permute.xlu0 %1413
    %1415 = vrot.lane.b32.xlu0 %v1341, 97
    %v1416 = vpop.permute.xlu0 %1415
    %1417 = vrot.lane.b32.xlu0 %v1342, 97
    %v1418 = vpop.permute.xlu0 %1417
    %1419 = vrot.lane.b32.xlu0 %v1343, 97
    %v1420 = vpop.permute.xlu0 %1419
    %1421 = vrot.lane.b32.xlu0 %v1344, 97
    %v1422 = vpop.permute.xlu0 %1421
    %1423 = vrot.lane.b32.xlu0 %v1345, 97
    %v1424 = vpop.permute.xlu0 %1423
    %1425 = vrot.lane.b32.xlu0 %v1346, 97
    %v1426 = vpop.permute.xlu0 %1425
    %1427 = vrot.lane.b32.xlu0 %v1347, 97
    %v1428 = vpop.permute.xlu0 %1427
    %1429 = vrot.lane.b32.xlu0 %v1348, 97
    %v1430 = vpop.permute.xlu0 %1429
    %1431 = vrot.lane.b32.xlu0 %v1349, 97
    %v1432 = vpop.permute.xlu0 %1431
    %1433 = vrot.lane.b32.xlu0 %v1350, 97
    %v1434 = vpop.permute.xlu0 %1433
    %1435 = vrot.lane.b32.xlu0 %v1351, 97
    %v1436 = vpop.permute.xlu0 %1435
    %1437 = vrot.lane.b32.xlu0 %v1352, 97
    %v1438 = vpop.permute.xlu0 %1437
    %1439 = vrot.lane.b32.xlu0 %v1353, 97
    %v1440 = vpop.permute.xlu0 %1439
    %1441 = vrot.lane.b32.xlu0 %v1354, 97
    %v1442 = vpop.permute.xlu0 %1441
    %1443 = vrot.lane.b32.xlu0 %v1355, 97
    %v1444 = vpop.permute.xlu0 %1443
    %1445 = vrot.lane.b32.xlu0 %v1356, 97
    %v1446 = vpop.permute.xlu0 %1445
    %vm1447 = vcmask 793600
    %v1448 = vsel %vm1447, %v1388, %v1390
    %v1449 = vsel %vm1447, %v1390, %v1392
    %v1450 = vsel %vm1447, %v1392, %v1394
    %v1451 = vsel %vm1447, %v1394, %v1396
    %v1452 = vsel %vm1447, %v1396, %v1398
    %v1453 = vsel %vm1447, %v1398, %v1400
    %v1454 = vsel %vm1447, %v1400, %v1402
    %v1455 = vsel %vm1447, %v1402, %v1404
    %v1456 = vsel %vm1447, %v1404, %v1406
    %v1457 = vsel %vm1447, %v1406, %v1408
    %v1458 = vsel %vm1447, %v1408, %v1410
    %v1459 = vsel %vm1447, %v1410, %v1412
    %v1460 = vsel %vm1447, %v1412, %v1414
    %v1461 = vsel %vm1447, %v1414, %v1416
    %v1462 = vsel %vm1447, %v1418, %v1420
    %v1463 = vsel %vm1447, %v1420, %v1422
    %v1464 = vsel %vm1447, %v1422, %v1424
    %v1465 = vsel %vm1447, %v1424, %v1426
    %v1466 = vsel %vm1447, %v1426, %v1428
    %v1467 = vsel %vm1447, %v1428, %v1430
    %v1468 = vsel %vm1447, %v1430, %v1432
    %v1469 = vsel %vm1447, %v1432, %v1434
    %v1470 = vsel %vm1447, %v1434, %v1436
    %v1471 = vsel %vm1447, %v1436, %v1438
    %v1472 = vsel %vm1447, %v1438, %v1440
    %v1473 = vsel %vm1447, %v1440, %v1442
    %v1474 = vsel %vm1447, %v1442, %v1444
    %v1475 = vsel %vm1447, %v1444, %v1446
    %v1506 = vadd.f32 %v1289, %v1448
    %v1507 = vadd.f32 %v1290, %v1449
    %v1508 = vadd.f32 %v1291, %v1450
    %v1509 = vadd.f32 %v1292, %v1451
    %v1510 = vadd.f32 %v1293, %v1452
    %v1511 = vadd.f32 %v1294, %v1453
    %v1512 = vadd.f32 %v1295, %v1454
    %v1513 = vadd.f32 %v1296, %v1455
    %v1514 = vadd.f32 %v1297, %v1456
    %v1515 = vadd.f32 %v1298, %v1457
    %v1516 = vadd.f32 %v1299, %v1458
    %v1517 = vadd.f32 %v1300, %v1459
    %v1518 = vadd.f32 %v1301, %v1460
    %v1519 = vadd.f32 %v1302, %v1461
    %v1520 = vadd.f32 %v1303, %v1416
    %v1521 = vadd.f32 %v1304, %v1462
    %v1522 = vadd.f32 %v1305, %v1463
    %v1523 = vadd.f32 %v1306, %v1464
    %v1524 = vadd.f32 %v1307, %v1465
    %v1525 = vadd.f32 %v1308, %v1466
    %v1526 = vadd.f32 %v1309, %v1467
    %v1527 = vadd.f32 %v1310, %v1468
    %v1528 = vadd.f32 %v1311, %v1469
    %v1529 = vadd.f32 %v1312, %v1470
    %v1530 = vadd.f32 %v1313, %v1471
    %v1531 = vadd.f32 %v1314, %v1472
    %v1532 = vadd.f32 %v1315, %v1473
    %v1533 = vadd.f32 %v1316, %v1474
    %v1534 = vadd.f32 %v1317, %v1475
    %v1535 = vadd.f32 %v1318, %v1446
    %1536 = vset.pattern.permute.xlu0 5
    %1537 = vperm.xlu0 %1536, %v519
    %v1538 = vpop.permute.xlu0 %1537
    %1540 = vset.pattern.permute.xlu0 5
    %1541 = vperm.xlu0 %1540, %v520
    %v1542 = vpop.permute.xlu0 %1541
    %v1544 = vmul.f32 %v1538, %v536
    %v1545 = vmul.f32 %v1538, %v540
    %v1546 = vmul.f32 %v1538, %v544
    %v1547 = vmul.f32 %v1538, %v548
    %v1548 = vmul.f32 %v1538, %v552
    %v1549 = vmul.f32 %v1538, %v556
    %v1550 = vmul.f32 %v1538, %v560
    %v1551 = vmul.f32 %v1538, %v564
    %v1552 = vmul.f32 %v1538, %v568
    %v1553 = vmul.f32 %v1538, %v572
    %v1554 = vmul.f32 %v1538, %v576
    %v1555 = vmul.f32 %v1538, %v580
    %v1556 = vmul.f32 %v1538, %v584
    %v1557 = vmul.f32 %v1538, %v588
    %v1558 = vmul.f32 %v1538, %v592
    %v1559 = vmul.f32 %v1542, %v536
    %v1560 = vmul.f32 %v1542, %v540
    %v1561 = vmul.f32 %v1542, %v544
    %v1562 = vmul.f32 %v1542, %v548
    %v1563 = vmul.f32 %v1542, %v552
    %v1564 = vmul.f32 %v1542, %v556
    %v1565 = vmul.f32 %v1542, %v560
    %v1566 = vmul.f32 %v1542, %v564
    %v1567 = vmul.f32 %v1542, %v568
    %v1568 = vmul.f32 %v1542, %v572
    %v1569 = vmul.f32 %v1542, %v576
    %v1570 = vmul.f32 %v1542, %v580
    %v1571 = vmul.f32 %v1542, %v584
    %v1572 = vmul.f32 %v1542, %v588
    %v1573 = vmul.f32 %v1542, %v592
    %1604 = vrot.lane.b32.xlu0 %v1544, 96
    %v1605 = vpop.permute.xlu0 %1604
    %1606 = vrot.lane.b32.xlu0 %v1545, 96
    %v1607 = vpop.permute.xlu0 %1606
    %1608 = vrot.lane.b32.xlu0 %v1546, 96
    %v1609 = vpop.permute.xlu0 %1608
    %1610 = vrot.lane.b32.xlu0 %v1547, 96
    %v1611 = vpop.permute.xlu0 %1610
    %1612 = vrot.lane.b32.xlu0 %v1548, 96
    %v1613 = vpop.permute.xlu0 %1612
    %1614 = vrot.lane.b32.xlu0 %v1549, 96
    %v1615 = vpop.permute.xlu0 %1614
    %1616 = vrot.lane.b32.xlu0 %v1550, 96
    %v1617 = vpop.permute.xlu0 %1616
    %1618 = vrot.lane.b32.xlu0 %v1551, 96
    %v1619 = vpop.permute.xlu0 %1618
    %1620 = vrot.lane.b32.xlu0 %v1552, 96
    %v1621 = vpop.permute.xlu0 %1620
    %1622 = vrot.lane.b32.xlu0 %v1553, 96
    %v1623 = vpop.permute.xlu0 %1622
    %1624 = vrot.lane.b32.xlu0 %v1554, 96
    %v1625 = vpop.permute.xlu0 %1624
    %1626 = vrot.lane.b32.xlu0 %v1555, 96
    %v1627 = vpop.permute.xlu0 %1626
    %1628 = vrot.lane.b32.xlu0 %v1556, 96
    %v1629 = vpop.permute.xlu0 %1628
    %1630 = vrot.lane.b32.xlu0 %v1557, 96
    %v1631 = vpop.permute.xlu0 %1630
    %1632 = vrot.lane.b32.xlu0 %v1558, 96
    %v1633 = vpop.permute.xlu0 %1632
    %1634 = vrot.lane.b32.xlu0 %v1559, 96
    %v1635 = vpop.permute.xlu0 %1634
    %1636 = vrot.lane.b32.xlu0 %v1560, 96
    %v1637 = vpop.permute.xlu0 %1636
    %1638 = vrot.lane.b32.xlu0 %v1561, 96
    %v1639 = vpop.permute.xlu0 %1638
    %1640 = vrot.lane.b32.xlu0 %v1562, 96
    %v1641 = vpop.permute.xlu0 %1640
    %1642 = vrot.lane.b32.xlu0 %v1563, 96
    %v1643 = vpop.permute.xlu0 %1642
    %1644 = vrot.lane.b32.xlu0 %v1564, 96
    %v1645 = vpop.permute.xlu0 %1644
    %1646 = vrot.lane.b32.xlu0 %v1565, 96
    %v1647 = vpop.permute.xlu0 %1646
    %1648 = vrot.lane.b32.xlu0 %v1566, 96
    %v1649 = vpop.permute.xlu0 %1648
    %1650 = vrot.lane.b32.xlu0 %v1567, 96
    %v1651 = vpop.permute.xlu0 %1650
    %1652 = vrot.lane.b32.xlu0 %v1568, 96
    %v1653 = vpop.permute.xlu0 %1652
    %1654 = vrot.lane.b32.xlu0 %v1569, 96
    %v1655 = vpop.permute.xlu0 %1654
    %1656 = vrot.lane.b32.xlu0 %v1570, 96
    %v1657 = vpop.permute.xlu0 %1656
    %1658 = vrot.lane.b32.xlu0 %v1571, 96
    %v1659 = vpop.permute.xlu0 %1658
    %1660 = vrot.lane.b32.xlu0 %v1572, 96
    %v1661 = vpop.permute.xlu0 %1660
    %1662 = vrot.lane.b32.xlu0 %v1573, 96
    %v1663 = vpop.permute.xlu0 %1662
    %vm1664 = vcmask 785408
    %v1665 = vsel %vm1664, %v1605, %v1607
    %v1666 = vsel %vm1664, %v1607, %v1609
    %v1667 = vsel %vm1664, %v1609, %v1611
    %v1668 = vsel %vm1664, %v1611, %v1613
    %v1669 = vsel %vm1664, %v1613, %v1615
    %v1670 = vsel %vm1664, %v1615, %v1617
    %v1671 = vsel %vm1664, %v1617, %v1619
    %v1672 = vsel %vm1664, %v1619, %v1621
    %v1673 = vsel %vm1664, %v1621, %v1623
    %v1674 = vsel %vm1664, %v1623, %v1625
    %v1675 = vsel %vm1664, %v1625, %v1627
    %v1676 = vsel %vm1664, %v1627, %v1629
    %v1677 = vsel %vm1664, %v1629, %v1631
    %v1678 = vsel %vm1664, %v1631, %v1633
    %v1679 = vsel %vm1664, %v1635, %v1637
    %v1680 = vsel %vm1664, %v1637, %v1639
    %v1681 = vsel %vm1664, %v1639, %v1641
    %v1682 = vsel %vm1664, %v1641, %v1643
    %v1683 = vsel %vm1664, %v1643, %v1645
    %v1684 = vsel %vm1664, %v1645, %v1647
    %v1685 = vsel %vm1664, %v1647, %v1649
    %v1686 = vsel %vm1664, %v1649, %v1651
    %v1687 = vsel %vm1664, %v1651, %v1653
    %v1688 = vsel %vm1664, %v1653, %v1655
    %v1689 = vsel %vm1664, %v1655, %v1657
    %v1690 = vsel %vm1664, %v1657, %v1659
    %v1691 = vsel %vm1664, %v1659, %v1661
    %v1692 = vsel %vm1664, %v1661, %v1663
    %v1723 = vadd.f32 %v1506, %v1665
    %v1724 = vadd.f32 %v1507, %v1666
    %v1725 = vadd.f32 %v1508, %v1667
    %v1726 = vadd.f32 %v1509, %v1668
    %v1727 = vadd.f32 %v1510, %v1669
    %v1728 = vadd.f32 %v1511, %v1670
    %v1729 = vadd.f32 %v1512, %v1671
    %v1730 = vadd.f32 %v1513, %v1672
    %v1731 = vadd.f32 %v1514, %v1673
    %v1732 = vadd.f32 %v1515, %v1674
    %v1733 = vadd.f32 %v1516, %v1675
    %v1734 = vadd.f32 %v1517, %v1676
    %v1735 = vadd.f32 %v1518, %v1677
    %v1736 = vadd.f32 %v1519, %v1678
    %v1737 = vadd.f32 %v1520, %v1633
    %v1738 = vadd.f32 %v1521, %v1679
    %v1739 = vadd.f32 %v1522, %v1680
    %v1740 = vadd.f32 %v1523, %v1681
    %v1741 = vadd.f32 %v1524, %v1682
    %v1742 = vadd.f32 %v1525, %v1683
    %v1743 = vadd.f32 %v1526, %v1684
    %v1744 = vadd.f32 %v1527, %v1685
    %v1745 = vadd.f32 %v1528, %v1686
    %v1746 = vadd.f32 %v1529, %v1687
    %v1747 = vadd.f32 %v1530, %v1688
    %v1748 = vadd.f32 %v1531, %v1689
    %v1749 = vadd.f32 %v1532, %v1690
    %v1750 = vadd.f32 %v1533, %v1691
    %v1751 = vadd.f32 %v1534, %v1692
    %v1752 = vadd.f32 %v1535, %v1663
    %1753 = vset.pattern.permute.xlu0 6
    %1754 = vperm.xlu0 %1753, %v519
    %v1755 = vpop.permute.xlu0 %1754
    %1757 = vset.pattern.permute.xlu0 6
    %1758 = vperm.xlu0 %1757, %v520
    %v1759 = vpop.permute.xlu0 %1758
    %v1761 = vmul.f32 %v1755, %v536
    %v1762 = vmul.f32 %v1755, %v540
    %v1763 = vmul.f32 %v1755, %v544
    %v1764 = vmul.f32 %v1755, %v548
    %v1765 = vmul.f32 %v1755, %v552
    %v1766 = vmul.f32 %v1755, %v556
    %v1767 = vmul.f32 %v1755, %v560
    %v1768 = vmul.f32 %v1755, %v564
    %v1769 = vmul.f32 %v1755, %v568
    %v1770 = vmul.f32 %v1755, %v572
    %v1771 = vmul.f32 %v1755, %v576
    %v1772 = vmul.f32 %v1755, %v580
    %v1773 = vmul.f32 %v1755, %v584
    %v1774 = vmul.f32 %v1755, %v588
    %v1775 = vmul.f32 %v1755, %v592
    %v1776 = vmul.f32 %v1759, %v536
    %v1777 = vmul.f32 %v1759, %v540
    %v1778 = vmul.f32 %v1759, %v544
    %v1779 = vmul.f32 %v1759, %v548
    %v1780 = vmul.f32 %v1759, %v552
    %v1781 = vmul.f32 %v1759, %v556
    %v1782 = vmul.f32 %v1759, %v560
    %v1783 = vmul.f32 %v1759, %v564
    %v1784 = vmul.f32 %v1759, %v568
    %v1785 = vmul.f32 %v1759, %v572
    %v1786 = vmul.f32 %v1759, %v576
    %v1787 = vmul.f32 %v1759, %v580
    %v1788 = vmul.f32 %v1759, %v584
    %v1789 = vmul.f32 %v1759, %v588
    %v1790 = vmul.f32 %v1759, %v592
    %1821 = vrot.lane.b32.xlu0 %v1761, 68
    %v1822 = vpop.permute.xlu0 %1821
    %1823 = vrot.lane.b32.xlu0 %v1762, 68
    %v1824 = vpop.permute.xlu0 %1823
    %1825 = vrot.lane.b32.xlu0 %v1763, 68
    %v1826 = vpop.permute.xlu0 %1825
    %1827 = vrot.lane.b32.xlu0 %v1764, 68
    %v1828 = vpop.permute.xlu0 %1827
    %1829 = vrot.lane.b32.xlu0 %v1765, 68
    %v1830 = vpop.permute.xlu0 %1829
    %1831 = vrot.lane.b32.xlu0 %v1766, 68
    %v1832 = vpop.permute.xlu0 %1831
    %1833 = vrot.lane.b32.xlu0 %v1767, 68
    %v1834 = vpop.permute.xlu0 %1833
    %1835 = vrot.lane.b32.xlu0 %v1768, 68
    %v1836 = vpop.permute.xlu0 %1835
    %1837 = vrot.lane.b32.xlu0 %v1769, 68
    %v1838 = vpop.permute.xlu0 %1837
    %1839 = vrot.lane.b32.xlu0 %v1770, 68
    %v1840 = vpop.permute.xlu0 %1839
    %1841 = vrot.lane.b32.xlu0 %v1771, 68
    %v1842 = vpop.permute.xlu0 %1841
    %1843 = vrot.lane.b32.xlu0 %v1772, 68
    %v1844 = vpop.permute.xlu0 %1843
    %1845 = vrot.lane.b32.xlu0 %v1773, 68
    %v1846 = vpop.permute.xlu0 %1845
    %1847 = vrot.lane.b32.xlu0 %v1774, 68
    %v1848 = vpop.permute.xlu0 %1847
    %1849 = vrot.lane.b32.xlu0 %v1775, 68
    %v1850 = vpop.permute.xlu0 %1849
    %1851 = vrot.lane.b32.xlu0 %v1776, 68
    %v1852 = vpop.permute.xlu0 %1851
    %1853 = vrot.lane.b32.xlu0 %v1777, 68
    %v1854 = vpop.permute.xlu0 %1853
    %1855 = vrot.lane.b32.xlu0 %v1778, 68
    %v1856 = vpop.permute.xlu0 %1855
    %1857 = vrot.lane.b32.xlu0 %v1779, 68
    %v1858 = vpop.permute.xlu0 %1857
    %1859 = vrot.lane.b32.xlu0 %v1780, 68
    %v1860 = vpop.permute.xlu0 %1859
    %1861 = vrot.lane.b32.xlu0 %v1781, 68
    %v1862 = vpop.permute.xlu0 %1861
    %1863 = vrot.lane.b32.xlu0 %v1782, 68
    %v1864 = vpop.permute.xlu0 %1863
    %1865 = vrot.lane.b32.xlu0 %v1783, 68
    %v1866 = vpop.permute.xlu0 %1865
    %1867 = vrot.lane.b32.xlu0 %v1784, 68
    %v1868 = vpop.permute.xlu0 %1867
    %1869 = vrot.lane.b32.xlu0 %v1785, 68
    %v1870 = vpop.permute.xlu0 %1869
    %1871 = vrot.lane.b32.xlu0 %v1786, 68
    %v1872 = vpop.permute.xlu0 %1871
    %1873 = vrot.lane.b32.xlu0 %v1787, 68
    %v1874 = vpop.permute.xlu0 %1873
    %1875 = vrot.lane.b32.xlu0 %v1788, 68
    %v1876 = vpop.permute.xlu0 %1875
    %1877 = vrot.lane.b32.xlu0 %v1789, 68
    %v1878 = vpop.permute.xlu0 %1877
    %1879 = vrot.lane.b32.xlu0 %v1790, 68
    %v1880 = vpop.permute.xlu0 %1879
    %vm1881 = vcmask 556032
    %v1882 = vsel %vm1881, %v1822, %v1824
    %v1883 = vsel %vm1881, %v1824, %v1826
    %v1884 = vsel %vm1881, %v1826, %v1828
    %v1885 = vsel %vm1881, %v1828, %v1830
    %v1886 = vsel %vm1881, %v1830, %v1832
    %v1887 = vsel %vm1881, %v1832, %v1834
    %v1888 = vsel %vm1881, %v1834, %v1836
    %v1889 = vsel %vm1881, %v1836, %v1838
    %v1890 = vsel %vm1881, %v1838, %v1840
    %v1891 = vsel %vm1881, %v1840, %v1842
    %v1892 = vsel %vm1881, %v1842, %v1844
    %v1893 = vsel %vm1881, %v1844, %v1846
    %v1894 = vsel %vm1881, %v1846, %v1848
    %v1895 = vsel %vm1881, %v1848, %v1850
    %v1896 = vsel %vm1881, %v1852, %v1854
    %v1897 = vsel %vm1881, %v1854, %v1856
    %v1898 = vsel %vm1881, %v1856, %v1858
    %v1899 = vsel %vm1881, %v1858, %v1860
    %v1900 = vsel %vm1881, %v1860, %v1862
    %v1901 = vsel %vm1881, %v1862, %v1864
    %v1902 = vsel %vm1881, %v1864, %v1866
    %v1903 = vsel %vm1881, %v1866, %v1868
    %v1904 = vsel %vm1881, %v1868, %v1870
    %v1905 = vsel %vm1881, %v1870, %v1872
    %v1906 = vsel %vm1881, %v1872, %v1874
    %v1907 = vsel %vm1881, %v1874, %v1876
    %v1908 = vsel %vm1881, %v1876, %v1878
    %v1909 = vsel %vm1881, %v1878, %v1880
    %v1940 = vadd.f32 %v1723, %v1882
    %v1941 = vadd.f32 %v1724, %v1883
    %v1942 = vadd.f32 %v1725, %v1884
    %v1943 = vadd.f32 %v1726, %v1885
    %v1944 = vadd.f32 %v1727, %v1886
    %v1945 = vadd.f32 %v1728, %v1887
    %v1946 = vadd.f32 %v1729, %v1888
    %v1947 = vadd.f32 %v1730, %v1889
    %v1948 = vadd.f32 %v1731, %v1890
    %v1949 = vadd.f32 %v1732, %v1891
    %v1950 = vadd.f32 %v1733, %v1892
    %v1951 = vadd.f32 %v1734, %v1893
    %v1952 = vadd.f32 %v1735, %v1894
    %v1953 = vadd.f32 %v1736, %v1895
    %v1954 = vadd.f32 %v1737, %v1850
    %v1955 = vadd.f32 %v1738, %v1896
    %v1956 = vadd.f32 %v1739, %v1897
    %v1957 = vadd.f32 %v1740, %v1898
    %v1958 = vadd.f32 %v1741, %v1899
    %v1959 = vadd.f32 %v1742, %v1900
    %v1960 = vadd.f32 %v1743, %v1901
    %v1961 = vadd.f32 %v1744, %v1902
    %v1962 = vadd.f32 %v1745, %v1903
    %v1963 = vadd.f32 %v1746, %v1904
    %v1964 = vadd.f32 %v1747, %v1905
    %v1965 = vadd.f32 %v1748, %v1906
    %v1966 = vadd.f32 %v1749, %v1907
    %v1967 = vadd.f32 %v1750, %v1908
    %v1968 = vadd.f32 %v1751, %v1909
    %v1969 = vadd.f32 %v1752, %v1880
    %1970 = vset.pattern.permute.xlu0 7
    %1971 = vperm.xlu0 %1970, %v519
    %v1972 = vpop.permute.xlu0 %1971
    %1974 = vset.pattern.permute.xlu0 7
    %1975 = vperm.xlu0 %1974, %v520
    %v1976 = vpop.permute.xlu0 %1975
    %v1978 = vmul.f32 %v1972, %v536
    %v1979 = vmul.f32 %v1972, %v540
    %v1980 = vmul.f32 %v1972, %v544
    %v1981 = vmul.f32 %v1972, %v548
    %v1982 = vmul.f32 %v1972, %v552
    %v1983 = vmul.f32 %v1972, %v556
    %v1984 = vmul.f32 %v1972, %v560
    %v1985 = vmul.f32 %v1972, %v564
    %v1986 = vmul.f32 %v1972, %v568
    %v1987 = vmul.f32 %v1972, %v572
    %v1988 = vmul.f32 %v1972, %v576
    %v1989 = vmul.f32 %v1972, %v580
    %v1990 = vmul.f32 %v1972, %v584
    %v1991 = vmul.f32 %v1972, %v588
    %v1992 = vmul.f32 %v1972, %v592
    %v1993 = vmul.f32 %v1976, %v536
    %v1994 = vmul.f32 %v1976, %v540
    %v1995 = vmul.f32 %v1976, %v544
    %v1996 = vmul.f32 %v1976, %v548
    %v1997 = vmul.f32 %v1976, %v552
    %v1998 = vmul.f32 %v1976, %v556
    %v1999 = vmul.f32 %v1976, %v560
    %v2000 = vmul.f32 %v1976, %v564
    %v2001 = vmul.f32 %v1976, %v568
    %v2002 = vmul.f32 %v1976, %v572
    %v2003 = vmul.f32 %v1976, %v576
    %v2004 = vmul.f32 %v1976, %v580
    %v2005 = vmul.f32 %v1976, %v584
    %v2006 = vmul.f32 %v1976, %v588
    %v2007 = vmul.f32 %v1976, %v592
    %2038 = vrot.lane.b32.xlu0 %v1978, 67
    %v2039 = vpop.permute.xlu0 %2038
    %2040 = vrot.lane.b32.xlu0 %v1979, 67
    %v2041 = vpop.permute.xlu0 %2040
    %2042 = vrot.lane.b32.xlu0 %v1980, 67
    %v2043 = vpop.permute.xlu0 %2042
    %2044 = vrot.lane.b32.xlu0 %v1981, 67
    %v2045 = vpop.permute.xlu0 %2044
    %2046 = vrot.lane.b32.xlu0 %v1982, 67
    %v2047 = vpop.permute.xlu0 %2046
    %2048 = vrot.lane.b32.xlu0 %v1983, 67
    %v2049 = vpop.permute.xlu0 %2048
    %2050 = vrot.lane.b32.xlu0 %v1984, 67
    %v2051 = vpop.permute.xlu0 %2050
    %2052 = vrot.lane.b32.xlu0 %v1985, 67
    %v2053 = vpop.permute.xlu0 %2052
    %2054 = vrot.lane.b32.xlu0 %v1986, 67
    %v2055 = vpop.permute.xlu0 %2054
    %2056 = vrot.lane.b32.xlu0 %v1987, 67
    %v2057 = vpop.permute.xlu0 %2056
    %2058 = vrot.lane.b32.xlu0 %v1988, 67
    %v2059 = vpop.permute.xlu0 %2058
    %2060 = vrot.lane.b32.xlu0 %v1989, 67
    %v2061 = vpop.permute.xlu0 %2060
    %2062 = vrot.lane.b32.xlu0 %v1990, 67
    %v2063 = vpop.permute.xlu0 %2062
    %2064 = vrot.lane.b32.xlu0 %v1991, 67
    %v2065 = vpop.permute.xlu0 %2064
    %2066 = vrot.lane.b32.xlu0 %v1992, 67
    %v2067 = vpop.permute.xlu0 %2066
    %2068 = vrot.lane.b32.xlu0 %v1993, 67
    %v2069 = vpop.permute.xlu0 %2068
    %2070 = vrot.lane.b32.xlu0 %v1994, 67
    %v2071 = vpop.permute.xlu0 %2070
    %2072 = vrot.lane.b32.xlu0 %v1995, 67
    %v2073 = vpop.permute.xlu0 %2072
    %2074 = vrot.lane.b32.xlu0 %v1996, 67
    %v2075 = vpop.permute.xlu0 %2074
    %2076 = vrot.lane.b32.xlu0 %v1997, 67
    %v2077 = vpop.permute.xlu0 %2076
    %2078 = vrot.lane.b32.xlu0 %v1998, 67
    %v2079 = vpop.permute.xlu0 %2078
    %2080 = vrot.lane.b32.xlu0 %v1999, 67
    %v2081 = vpop.permute.xlu0 %2080
    %2082 = vrot.lane.b32.xlu0 %v2000, 67
    %v2083 = vpop.permute.xlu0 %2082
    %2084 = vrot.lane.b32.xlu0 %v2001, 67
    %v2085 = vpop.permute.xlu0 %2084
    %2086 = vrot.lane.b32.xlu0 %v2002, 67
    %v2087 = vpop.permute.xlu0 %2086
    %2088 = vrot.lane.b32.xlu0 %v2003, 67
    %v2089 = vpop.permute.xlu0 %2088
    %2090 = vrot.lane.b32.xlu0 %v2004, 67
    %v2091 = vpop.permute.xlu0 %2090
    %2092 = vrot.lane.b32.xlu0 %v2005, 67
    %v2093 = vpop.permute.xlu0 %2092
    %2094 = vrot.lane.b32.xlu0 %v2006, 67
    %v2095 = vpop.permute.xlu0 %2094
    %2096 = vrot.lane.b32.xlu0 %v2007, 67
    %v2097 = vpop.permute.xlu0 %2096
    %vm2098 = vcmask 547840
    %v2099 = vsel %vm2098, %v2039, %v2041
    %v2100 = vsel %vm2098, %v2041, %v2043
    %v2101 = vsel %vm2098, %v2043, %v2045
    %v2102 = vsel %vm2098, %v2045, %v2047
    %v2103 = vsel %vm2098, %v2047, %v2049
    %v2104 = vsel %vm2098, %v2049, %v2051
    %v2105 = vsel %vm2098, %v2051, %v2053
    %v2106 = vsel %vm2098, %v2053, %v2055
    %v2107 = vsel %vm2098, %v2055, %v2057
    %v2108 = vsel %vm2098, %v2057, %v2059
    %v2109 = vsel %vm2098, %v2059, %v2061
    %v2110 = vsel %vm2098, %v2061, %v2063
    %v2111 = vsel %vm2098, %v2063, %v2065
    %v2112 = vsel %vm2098, %v2065, %v2067
    %v2113 = vsel %vm2098, %v2069, %v2071
    %v2114 = vsel %vm2098, %v2071, %v2073
    %v2115 = vsel %vm2098, %v2073, %v2075
    %v2116 = vsel %vm2098, %v2075, %v2077
    %v2117 = vsel %vm2098, %v2077, %v2079
    %v2118 = vsel %vm2098, %v2079, %v2081
    %v2119 = vsel %vm2098, %v2081, %v2083
    %v2120 = vsel %vm2098, %v2083, %v2085
    %v2121 = vsel %vm2098, %v2085, %v2087
    %v2122 = vsel %vm2098, %v2087, %v2089
    %v2123 = vsel %vm2098, %v2089, %v2091
    %v2124 = vsel %vm2098, %v2091, %v2093
    %v2125 = vsel %vm2098, %v2093, %v2095
    %v2126 = vsel %vm2098, %v2095, %v2097
    %v2157 = vadd.f32 %v1940, %v2099
    %v2158 = vadd.f32 %v1941, %v2100
    %v2159 = vadd.f32 %v1942, %v2101
    %v2160 = vadd.f32 %v1943, %v2102
    %v2161 = vadd.f32 %v1944, %v2103
    %v2162 = vadd.f32 %v1945, %v2104
    %v2163 = vadd.f32 %v1946, %v2105
    %v2164 = vadd.f32 %v1947, %v2106
    %v2165 = vadd.f32 %v1948, %v2107
    %v2166 = vadd.f32 %v1949, %v2108
    %v2167 = vadd.f32 %v1950, %v2109
    %v2168 = vadd.f32 %v1951, %v2110
    %v2169 = vadd.f32 %v1952, %v2111
    %v2170 = vadd.f32 %v1953, %v2112
    %v2171 = vadd.f32 %v1954, %v2067
    %v2172 = vadd.f32 %v1955, %v2113
    %v2173 = vadd.f32 %v1956, %v2114
    %v2174 = vadd.f32 %v1957, %v2115
    %v2175 = vadd.f32 %v1958, %v2116
    %v2176 = vadd.f32 %v1959, %v2117
    %v2177 = vadd.f32 %v1960, %v2118
    %v2178 = vadd.f32 %v1961, %v2119
    %v2179 = vadd.f32 %v1962, %v2120
    %v2180 = vadd.f32 %v1963, %v2121
    %v2181 = vadd.f32 %v1964, %v2122
    %v2182 = vadd.f32 %v1965, %v2123
    %v2183 = vadd.f32 %v1966, %v2124
    %v2184 = vadd.f32 %v1967, %v2125
    %v2185 = vadd.f32 %v1968, %v2126
    %v2186 = vadd.f32 %v1969, %v2097
    %2187 = vset.pattern.permute.xlu0 8
    %2188 = vperm.xlu0 %2187, %v519
    %v2189 = vpop.permute.xlu0 %2188
    %2191 = vset.pattern.permute.xlu0 8
    %2192 = vperm.xlu0 %2191, %v520
    %v2193 = vpop.permute.xlu0 %2192
    %v2195 = vmul.f32 %v2189, %v536
    %v2196 = vmul.f32 %v2189, %v540
    %v2197 = vmul.f32 %v2189, %v544
    %v2198 = vmul.f32 %v2189, %v548
    %v2199 = vmul.f32 %v2189, %v552
    %v2200 = vmul.f32 %v2189, %v556
    %v2201 = vmul.f32 %v2189, %v560
    %v2202 = vmul.f32 %v2189, %v564
    %v2203 = vmul.f32 %v2189, %v568
    %v2204 = vmul.f32 %v2189, %v572
    %v2205 = vmul.f32 %v2189, %v576
    %v2206 = vmul.f32 %v2189, %v580
    %v2207 = vmul.f32 %v2189, %v584
    %v2208 = vmul.f32 %v2189, %v588
    %v2209 = vmul.f32 %v2189, %v592
    %v2210 = vmul.f32 %v2193, %v536
    %v2211 = vmul.f32 %v2193, %v540
    %v2212 = vmul.f32 %v2193, %v544
    %v2213 = vmul.f32 %v2193, %v548
    %v2214 = vmul.f32 %v2193, %v552
    %v2215 = vmul.f32 %v2193, %v556
    %v2216 = vmul.f32 %v2193, %v560
    %v2217 = vmul.f32 %v2193, %v564
    %v2218 = vmul.f32 %v2193, %v568
    %v2219 = vmul.f32 %v2193, %v572
    %v2220 = vmul.f32 %v2193, %v576
    %v2221 = vmul.f32 %v2193, %v580
    %v2222 = vmul.f32 %v2193, %v584
    %v2223 = vmul.f32 %v2193, %v588
    %v2224 = vmul.f32 %v2193, %v592
    %2255 = vrot.lane.b32.xlu0 %v2195, 66
    %v2256 = vpop.permute.xlu0 %2255
    %2257 = vrot.lane.b32.xlu0 %v2196, 66
    %v2258 = vpop.permute.xlu0 %2257
    %2259 = vrot.lane.b32.xlu0 %v2197, 66
    %v2260 = vpop.permute.xlu0 %2259
    %2261 = vrot.lane.b32.xlu0 %v2198, 66
    %v2262 = vpop.permute.xlu0 %2261
    %2263 = vrot.lane.b32.xlu0 %v2199, 66
    %v2264 = vpop.permute.xlu0 %2263
    %2265 = vrot.lane.b32.xlu0 %v2200, 66
    %v2266 = vpop.permute.xlu0 %2265
    %2267 = vrot.lane.b32.xlu0 %v2201, 66
    %v2268 = vpop.permute.xlu0 %2267
    %2269 = vrot.lane.b32.xlu0 %v2202, 66
    %v2270 = vpop.permute.xlu0 %2269
    %2271 = vrot.lane.b32.xlu0 %v2203, 66
    %v2272 = vpop.permute.xlu0 %2271
    %2273 = vrot.lane.b32.xlu0 %v2204, 66
    %v2274 = vpop.permute.xlu0 %2273
    %2275 = vrot.lane.b32.xlu0 %v2205, 66
    %v2276 = vpop.permute.xlu0 %2275
    %2277 = vrot.lane.b32.xlu0 %v2206, 66
    %v2278 = vpop.permute.xlu0 %2277
    %2279 = vrot.lane.b32.xlu0 %v2207, 66
    %v2280 = vpop.permute.xlu0 %2279
    %2281 = vrot.lane.b32.xlu0 %v2208, 66
    %v2282 = vpop.permute.xlu0 %2281
    %2283 = vrot.lane.b32.xlu0 %v2209, 66
    %v2284 = vpop.permute.xlu0 %2283
    %2285 = vrot.lane.b32.xlu0 %v2210, 66
    %v2286 = vpop.permute.xlu0 %2285
    %2287 = vrot.lane.b32.xlu0 %v2211, 66
    %v2288 = vpop.permute.xlu0 %2287
    %2289 = vrot.lane.b32.xlu0 %v2212, 66
    %v2290 = vpop.permute.xlu0 %2289
    %2291 = vrot.lane.b32.xlu0 %v2213, 66
    %v2292 = vpop.permute.xlu0 %2291
    %2293 = vrot.lane.b32.xlu0 %v2214, 66
    %v2294 = vpop.permute.xlu0 %2293
    %2295 = vrot.lane.b32.xlu0 %v2215, 66
    %v2296 = vpop.permute.xlu0 %2295
    %2297 = vrot.lane.b32.xlu0 %v2216, 66
    %v2298 = vpop.permute.xlu0 %2297
    %2299 = vrot.lane.b32.xlu0 %v2217, 66
    %v2300 = vpop.permute.xlu0 %2299
    %2301 = vrot.lane.b32.xlu0 %v2218, 66
    %v2302 = vpop.permute.xlu0 %2301
    %2303 = vrot.lane.b32.xlu0 %v2219, 66
    %v2304 = vpop.permute.xlu0 %2303
    %2305 = vrot.lane.b32.xlu0 %v2220, 66
    %v2306 = vpop.permute.xlu0 %2305
    %2307 = vrot.lane.b32.xlu0 %v2221, 66
    %v2308 = vpop.permute.xlu0 %2307
    %2309 = vrot.lane.b32.xlu0 %v2222, 66
    %v2310 = vpop.permute.xlu0 %2309
    %2311 = vrot.lane.b32.xlu0 %v2223, 66
    %v2312 = vpop.permute.xlu0 %2311
    %2313 = vrot.lane.b32.xlu0 %v2224, 66
    %v2314 = vpop.permute.xlu0 %2313
    %vm2315 = vcmask 539648
    %v2316 = vsel %vm2315, %v2256, %v2258
    %v2317 = vsel %vm2315, %v2258, %v2260
    %v2318 = vsel %vm2315, %v2260, %v2262
    %v2319 = vsel %vm2315, %v2262, %v2264
    %v2320 = vsel %vm2315, %v2264, %v2266
    %v2321 = vsel %vm2315, %v2266, %v2268
    %v2322 = vsel %vm2315, %v2268, %v2270
    %v2323 = vsel %vm2315, %v2270, %v2272
    %v2324 = vsel %vm2315, %v2272, %v2274
    %v2325 = vsel %vm2315, %v2274, %v2276
    %v2326 = vsel %vm2315, %v2276, %v2278
    %v2327 = vsel %vm2315, %v2278, %v2280
    %v2328 = vsel %vm2315, %v2280, %v2282
    %v2329 = vsel %vm2315, %v2282, %v2284
    %v2330 = vsel %vm2315, %v2286, %v2288
    %v2331 = vsel %vm2315, %v2288, %v2290
    %v2332 = vsel %vm2315, %v2290, %v2292
    %v2333 = vsel %vm2315, %v2292, %v2294
    %v2334 = vsel %vm2315, %v2294, %v2296
    %v2335 = vsel %vm2315, %v2296, %v2298
    %v2336 = vsel %vm2315, %v2298, %v2300
    %v2337 = vsel %vm2315, %v2300, %v2302
    %v2338 = vsel %vm2315, %v2302, %v2304
    %v2339 = vsel %vm2315, %v2304, %v2306
    %v2340 = vsel %vm2315, %v2306, %v2308
    %v2341 = vsel %vm2315, %v2308, %v2310
    %v2342 = vsel %vm2315, %v2310, %v2312
    %v2343 = vsel %vm2315, %v2312, %v2314
    %v2374 = vadd.f32 %v2157, %v2316
    %v2375 = vadd.f32 %v2158, %v2317
    %v2376 = vadd.f32 %v2159, %v2318
    %v2377 = vadd.f32 %v2160, %v2319
    %v2378 = vadd.f32 %v2161, %v2320
    %v2379 = vadd.f32 %v2162, %v2321
    %v2380 = vadd.f32 %v2163, %v2322
    %v2381 = vadd.f32 %v2164, %v2323
    %v2382 = vadd.f32 %v2165, %v2324
    %v2383 = vadd.f32 %v2166, %v2325
    %v2384 = vadd.f32 %v2167, %v2326
    %v2385 = vadd.f32 %v2168, %v2327
    %v2386 = vadd.f32 %v2169, %v2328
    %v2387 = vadd.f32 %v2170, %v2329
    %v2388 = vadd.f32 %v2171, %v2284
    %v2389 = vadd.f32 %v2172, %v2330
    %v2390 = vadd.f32 %v2173, %v2331
    %v2391 = vadd.f32 %v2174, %v2332
    %v2392 = vadd.f32 %v2175, %v2333
    %v2393 = vadd.f32 %v2176, %v2334
    %v2394 = vadd.f32 %v2177, %v2335
    %v2395 = vadd.f32 %v2178, %v2336
    %v2396 = vadd.f32 %v2179, %v2337
    %v2397 = vadd.f32 %v2180, %v2338
    %v2398 = vadd.f32 %v2181, %v2339
    %v2399 = vadd.f32 %v2182, %v2340
    %v2400 = vadd.f32 %v2183, %v2341
    %v2401 = vadd.f32 %v2184, %v2342
    %v2402 = vadd.f32 %v2185, %v2343
    %v2403 = vadd.f32 %v2186, %v2314
    %2404 = vset.pattern.permute.xlu0 9
    %2405 = vperm.xlu0 %2404, %v519
    %v2406 = vpop.permute.xlu0 %2405
    %2408 = vset.pattern.permute.xlu0 9
    %2409 = vperm.xlu0 %2408, %v520
    %v2410 = vpop.permute.xlu0 %2409
    %v2412 = vadd.f32 %v2374, %v2406
    %v2413 = vadd.f32 %v2375, %v2406
    %v2414 = vadd.f32 %v2376, %v2406
    %v2415 = vadd.f32 %v2377, %v2406
    %v2416 = vadd.f32 %v2378, %v2406
    %v2417 = vadd.f32 %v2379, %v2406
    %v2418 = vadd.f32 %v2380, %v2406
    %v2419 = vadd.f32 %v2381, %v2406
    %v2420 = vadd.f32 %v2382, %v2406
    %v2421 = vadd.f32 %v2383, %v2406
    %v2422 = vadd.f32 %v2384, %v2406
    %v2423 = vadd.f32 %v2385, %v2406
    %v2424 = vadd.f32 %v2386, %v2406
    %v2425 = vadd.f32 %v2387, %v2406
    %v2426 = vadd.f32 %v2388, %v2406
    %v2427 = vadd.f32 %v2389, %v2410
    %v2428 = vadd.f32 %v2390, %v2410
    %v2429 = vadd.f32 %v2391, %v2410
    %v2430 = vadd.f32 %v2392, %v2410
    %v2431 = vadd.f32 %v2393, %v2410
    %v2432 = vadd.f32 %v2394, %v2410
    %v2433 = vadd.f32 %v2395, %v2410
    %v2434 = vadd.f32 %v2396, %v2410
    %v2435 = vadd.f32 %v2397, %v2410
    %v2436 = vadd.f32 %v2398, %v2410
    %v2437 = vadd.f32 %v2399, %v2410
    %v2438 = vadd.f32 %v2400, %v2410
    %v2439 = vadd.f32 %v2401, %v2410
    %v2440 = vadd.f32 %v2402, %v2410
    %v2441 = vadd.f32 %v2403, %v2410
    %v2442 = vmax.f32 %v2412, 0.0
    %v2443 = vmax.f32 %v2413, 0.0
    %v2444 = vmax.f32 %v2414, 0.0
    %v2445 = vmax.f32 %v2415, 0.0
    %v2446 = vmax.f32 %v2416, 0.0
    %v2447 = vmax.f32 %v2417, 0.0
    %v2448 = vmax.f32 %v2418, 0.0
    %v2449 = vmax.f32 %v2419, 0.0
    %v2450 = vmax.f32 %v2420, 0.0
    %v2451 = vmax.f32 %v2421, 0.0
    %v2452 = vmax.f32 %v2422, 0.0
    %v2453 = vmax.f32 %v2423, 0.0
    %v2454 = vmax.f32 %v2424, 0.0
    %v2455 = vmax.f32 %v2425, 0.0
    %v2456 = vmax.f32 %v2426, 0.0
    %v2457 = vmax.f32 %v2427, 0.0
    %v2458 = vmax.f32 %v2428, 0.0
    %v2459 = vmax.f32 %v2429, 0.0
    %v2460 = vmax.f32 %v2430, 0.0
    %v2461 = vmax.f32 %v2431, 0.0
    %v2462 = vmax.f32 %v2432, 0.0
    %v2463 = vmax.f32 %v2433, 0.0
    %v2464 = vmax.f32 %v2434, 0.0
    %v2465 = vmax.f32 %v2435, 0.0
    %v2466 = vmax.f32 %v2436, 0.0
    %v2467 = vmax.f32 %v2437, 0.0
    %v2468 = vmax.f32 %v2438, 0.0
    %v2469 = vmax.f32 %v2439, 0.0
    %v2470 = vmax.f32 %v2440, 0.0
    %v2471 = vmax.f32 %v2441, 0.0
    %v2474 = vlaneseq
    %v2475 = vshrl.u32 %v2474, 7
    %v2476 = vsub.s32 0, %v2475
    %v2477 = vrot.slane %v515, %v2476
    %v2478 = vlaneseq
    %v2479 = vshrl.u32 %v2478, 7
    %v2480 = vsub.s32 1, %v2479
    %v2481 = vrot.slane %v515, %v2480
    %v2482 = vlaneseq
    %v2483 = vshrl.u32 %v2482, 7
    %v2484 = vsub.s32 2, %v2483
    %v2485 = vrot.slane %v515, %v2484
    %v2486 = vlaneseq
    %v2487 = vshrl.u32 %v2486, 7
    %v2488 = vsub.s32 3, %v2487
    %v2489 = vrot.slane %v515, %v2488
    %v2490 = vlaneseq
    %v2491 = vshrl.u32 %v2490, 7
    %v2492 = vsub.s32 4, %v2491
    %v2493 = vrot.slane %v515, %v2492
    %v2494 = vlaneseq
    %v2495 = vshrl.u32 %v2494, 7
    %v2496 = vsub.s32 5, %v2495
    %v2497 = vrot.slane %v515, %v2496
    %v2498 = vlaneseq
    %v2499 = vshrl.u32 %v2498, 7
    %v2500 = vsub.s32 6, %v2499
    %v2501 = vrot.slane %v515, %v2500
    %v2502 = vlaneseq
    %v2503 = vshrl.u32 %v2502, 7
    %v2504 = vsub.s32 7, %v2503
    %v2505 = vrot.slane %v515, %v2504
    %v2506 = vlaneseq
    %v2507 = vshrl.u32 %v2506, 7
    %v2508 = vsub.s32 0, %v2507
    %v2509 = vrot.slane %v516, %v2508
    %v2510 = vlaneseq
    %v2511 = vshrl.u32 %v2510, 7
    %v2512 = vsub.s32 1, %v2511
    %v2513 = vrot.slane %v516, %v2512
    %v2514 = vlaneseq
    %v2515 = vshrl.u32 %v2514, 7
    %v2516 = vsub.s32 2, %v2515
    %v2517 = vrot.slane %v516, %v2516
    %v2518 = vlaneseq
    %v2519 = vshrl.u32 %v2518, 7
    %v2520 = vsub.s32 3, %v2519
    %v2521 = vrot.slane %v516, %v2520
    %v2522 = vlaneseq
    %v2523 = vshrl.u32 %v2522, 7
    %v2524 = vsub.s32 4, %v2523
    %v2525 = vrot.slane %v516, %v2524
    %v2526 = vlaneseq
    %v2527 = vshrl.u32 %v2526, 7
    %v2528 = vsub.s32 5, %v2527
    %v2529 = vrot.slane %v516, %v2528
    %v2530 = vlaneseq
    %v2531 = vshrl.u32 %v2530, 7
    %v2532 = vsub.s32 6, %v2531
    %v2533 = vrot.slane %v516, %v2532
    %2549 = vrot.lane.b32.xlu0 %v2477, 1
    %v2550 = vpop.permute.xlu0 %2549
    %2551 = vrot.lane.b32.xlu0 %v2481, 1
    %v2552 = vpop.permute.xlu0 %2551
    %2553 = vrot.lane.b32.xlu0 %v2485, 1
    %v2554 = vpop.permute.xlu0 %2553
    %2555 = vrot.lane.b32.xlu0 %v2489, 1
    %v2556 = vpop.permute.xlu0 %2555
    %2557 = vrot.lane.b32.xlu0 %v2493, 1
    %v2558 = vpop.permute.xlu0 %2557
    %2559 = vrot.lane.b32.xlu0 %v2497, 1
    %v2560 = vpop.permute.xlu0 %2559
    %2561 = vrot.lane.b32.xlu0 %v2501, 1
    %v2562 = vpop.permute.xlu0 %2561
    %2563 = vrot.lane.b32.xlu0 %v2505, 1
    %v2564 = vpop.permute.xlu0 %2563
    %2565 = vrot.lane.b32.xlu0 %v2509, 1
    %v2566 = vpop.permute.xlu0 %2565
    %2567 = vrot.lane.b32.xlu0 %v2513, 1
    %v2568 = vpop.permute.xlu0 %2567
    %2569 = vrot.lane.b32.xlu0 %v2517, 1
    %v2570 = vpop.permute.xlu0 %2569
    %2571 = vrot.lane.b32.xlu0 %v2521, 1
    %v2572 = vpop.permute.xlu0 %2571
    %2573 = vrot.lane.b32.xlu0 %v2525, 1
    %v2574 = vpop.permute.xlu0 %2573
    %2575 = vrot.lane.b32.xlu0 %v2529, 1
    %v2576 = vpop.permute.xlu0 %2575
    %2577 = vrot.lane.b32.xlu0 %v2533, 1
    %v2578 = vpop.permute.xlu0 %2577
    %vm2579 = vcmask 7168
    %v2580 = vsel %vm2579, %v2550, %v2552
    %v2581 = vsel %vm2579, %v2552, %v2554
    %v2582 = vsel %vm2579, %v2554, %v2556
    %v2583 = vsel %vm2579, %v2556, %v2558
    %v2584 = vsel %vm2579, %v2558, %v2560
    %v2585 = vsel %vm2579, %v2560, %v2562
    %v2586 = vsel %vm2579, %v2562, %v2564
    %v2587 = vsel %vm2579, %v2564, %v2566
    %v2588 = vsel %vm2579, %v2566, %v2568
    %v2589 = vsel %vm2579, %v2568, %v2570
    %v2590 = vsel %vm2579, %v2570, %v2572
    %v2591 = vsel %vm2579, %v2572, %v2574
    %v2592 = vsel %vm2579, %v2574, %v2576
    %v2593 = vsel %vm2579, %v2576, %v2578
    %v2609 = vmul.f32 %v2442, %v2550
    %v2610 = vmul.f32 %v2443, %v2580
    %v2611 = vmul.f32 %v2444, %v2581
    %v2612 = vmul.f32 %v2445, %v2582
    %v2613 = vmul.f32 %v2446, %v2583
    %v2614 = vmul.f32 %v2447, %v2584
    %v2615 = vmul.f32 %v2448, %v2585
    %v2616 = vmul.f32 %v2449, %v2586
    %v2617 = vmul.f32 %v2450, %v2587
    %v2618 = vmul.f32 %v2451, %v2588
    %v2619 = vmul.f32 %v2452, %v2589
    %v2620 = vmul.f32 %v2453, %v2590
    %v2621 = vmul.f32 %v2454, %v2591
    %v2622 = vmul.f32 %v2455, %v2592
    %v2623 = vmul.f32 %v2456, %v2593
    %v2624 = vmul.f32 %v2457, %v2550
    %v2625 = vmul.f32 %v2458, %v2580
    %v2626 = vmul.f32 %v2459, %v2581
    %v2627 = vmul.f32 %v2460, %v2582
    %v2628 = vmul.f32 %v2461, %v2583
    %v2629 = vmul.f32 %v2462, %v2584
    %v2630 = vmul.f32 %v2463, %v2585
    %v2631 = vmul.f32 %v2464, %v2586
    %v2632 = vmul.f32 %v2465, %v2587
    %v2633 = vmul.f32 %v2466, %v2588
    %v2634 = vmul.f32 %v2467, %v2589
    %v2635 = vmul.f32 %v2468, %v2590
    %v2636 = vmul.f32 %v2469, %v2591
    %v2637 = vmul.f32 %v2470, %v2592
    %v2638 = vmul.f32 %v2471, %v2593
    %2639 = vst [vmem:[#allocation2] sm:$0xff] 0.0
    %2640 = vst [vmem:[#allocation2 + $0x8] sm:$0xff] 0.0
    %2641 = vst [vmem:[#allocation2 + $0x10] sm:$0xff] 0.0
    %2642 = vst [vmem:[#allocation2 + $0x18] sm:$0xff] 0.0
    %2643 = vst [vmem:[#allocation2 + $0x20] sm:$0xff] 0.0
    %2644 = vst [vmem:[#allocation2 + $0x28] sm:$0xff] 0.0
    %2645 = vst [vmem:[#allocation2 + $0x30] sm:$0xff] 0.0
    %2646 = vst [vmem:[#allocation2 + $0x38] sm:$0xff] 0.0
    %2647 = vst [vmem:[#allocation2 + $0x40] sm:$0xff] 0.0
    %2648 = vst [vmem:[#allocation2 + $0x48] sm:$0xff] 0.0
    %2649 = vst [vmem:[#allocation2 + $0x50] sm:$0xff] 0.0
    %2650 = vst [vmem:[#allocation2 + $0x58] sm:$0xff] 0.0
    %2651 = vst [vmem:[#allocation2 + $0x60] sm:$0xff] 0.0
    %2652 = vst [vmem:[#allocation2 + $0x68] sm:$0xff] 0.0
    %2653 = vst [vmem:[#allocation2 + $0x70] sm:$0xff] 0.0
    %2654 = vst [vmem:[#allocation2 + $0x78] sm:$0xff] 0.0
    %2655 = vst [vmem:[#allocation2 + $0x80] sm:$0xff] 0.0
    %2656 = vst [vmem:[#allocation2 + $0x88] sm:$0xff] 0.0
    %2657 = vst [vmem:[#allocation2 + $0x90] sm:$0xff] 0.0
    %2658 = vst [vmem:[#allocation2 + $0x98] sm:$0xff] 0.0
    %2659 = vst [vmem:[#allocation2 + $0xa0] sm:$0xff] 0.0
    %2660 = vst [vmem:[#allocation2 + $0xa8] sm:$0xff] 0.0
    %2661 = vst [vmem:[#allocation2 + $0xb0] sm:$0xff] 0.0
    %2662 = vst [vmem:[#allocation2 + $0xb8] sm:$0xff] 0.0
    %2663 = vst [vmem:[#allocation2 + $0xc0] sm:$0xff] 0.0
    %2664 = vst [vmem:[#allocation2 + $0xc8] sm:$0xff] 0.0
    %2665 = vst [vmem:[#allocation2 + $0xd0] sm:$0xff] 0.0
    %2666 = vst [vmem:[#allocation2 + $0xd8] sm:$0xff] 0.0
    %2667 = vst [vmem:[#allocation2 + $0xe0] sm:$0xff] 0.0
    %2668 = vst [vmem:[#allocation2 + $0xe8] sm:$0xff] 0.0
    %2699 = vrot.lane.b32.xlu0 %v2609, 31
    %v2700 = vpop.permute.xlu0 %2699
    %2701 = vrot.lane.b32.xlu0 %v2610, 31
    %v2702 = vpop.permute.xlu0 %2701
    %2703 = vrot.lane.b32.xlu0 %v2611, 31
    %v2704 = vpop.permute.xlu0 %2703
    %2705 = vrot.lane.b32.xlu0 %v2612, 31
    %v2706 = vpop.permute.xlu0 %2705
    %2707 = vrot.lane.b32.xlu0 %v2613, 31
    %v2708 = vpop.permute.xlu0 %2707
    %2709 = vrot.lane.b32.xlu0 %v2614, 31
    %v2710 = vpop.permute.xlu0 %2709
    %2711 = vrot.lane.b32.xlu0 %v2615, 31
    %v2712 = vpop.permute.xlu0 %2711
    %2713 = vrot.lane.b32.xlu0 %v2616, 31
    %v2714 = vpop.permute.xlu0 %2713
    %2715 = vrot.lane.b32.xlu0 %v2617, 31
    %v2716 = vpop.permute.xlu0 %2715
    %2717 = vrot.lane.b32.xlu0 %v2618, 31
    %v2718 = vpop.permute.xlu0 %2717
    %2719 = vrot.lane.b32.xlu0 %v2619, 31
    %v2720 = vpop.permute.xlu0 %2719
    %2721 = vrot.lane.b32.xlu0 %v2620, 31
    %v2722 = vpop.permute.xlu0 %2721
    %2723 = vrot.lane.b32.xlu0 %v2621, 31
    %v2724 = vpop.permute.xlu0 %2723
    %2725 = vrot.lane.b32.xlu0 %v2622, 31
    %v2726 = vpop.permute.xlu0 %2725
    %2727 = vrot.lane.b32.xlu0 %v2623, 31
    %v2728 = vpop.permute.xlu0 %2727
    %2729 = vrot.lane.b32.xlu0 %v2624, 31
    %v2730 = vpop.permute.xlu0 %2729
    %2731 = vrot.lane.b32.xlu0 %v2625, 31
    %v2732 = vpop.permute.xlu0 %2731
    %2733 = vrot.lane.b32.xlu0 %v2626, 31
    %v2734 = vpop.permute.xlu0 %2733
    %2735 = vrot.lane.b32.xlu0 %v2627, 31
    %v2736 = vpop.permute.xlu0 %2735
    %2737 = vrot.lane.b32.xlu0 %v2628, 31
    %v2738 = vpop.permute.xlu0 %2737
    %2739 = vrot.lane.b32.xlu0 %v2629, 31
    %v2740 = vpop.permute.xlu0 %2739
    %2741 = vrot.lane.b32.xlu0 %v2630, 31
    %v2742 = vpop.permute.xlu0 %2741
    %2743 = vrot.lane.b32.xlu0 %v2631, 31
    %v2744 = vpop.permute.xlu0 %2743
    %2745 = vrot.lane.b32.xlu0 %v2632, 31
    %v2746 = vpop.permute.xlu0 %2745
    %2747 = vrot.lane.b32.xlu0 %v2633, 31
    %v2748 = vpop.permute.xlu0 %2747
    %2749 = vrot.lane.b32.xlu0 %v2634, 31
    %v2750 = vpop.permute.xlu0 %2749
    %2751 = vrot.lane.b32.xlu0 %v2635, 31
    %v2752 = vpop.permute.xlu0 %2751
    %2753 = vrot.lane.b32.xlu0 %v2636, 31
    %v2754 = vpop.permute.xlu0 %2753
    %2755 = vrot.lane.b32.xlu0 %v2637, 31
    %v2756 = vpop.permute.xlu0 %2755
    %2757 = vrot.lane.b32.xlu0 %v2638, 31
    %v2758 = vpop.permute.xlu0 %2757
    %vm2759 = vcmask 252928
    %v2760 = vsel %vm2759, %v2700, %v2702
    %v2761 = vsel %vm2759, %v2702, %v2704
    %v2762 = vsel %vm2759, %v2704, %v2706
    %v2763 = vsel %vm2759, %v2706, %v2708
    %v2764 = vsel %vm2759, %v2708, %v2710
    %v2765 = vsel %vm2759, %v2710, %v2712
    %v2766 = vsel %vm2759, %v2712, %v2714
    %v2767 = vsel %vm2759, %v2714, %v2716
    %v2768 = vsel %vm2759, %v2716, %v2718
    %v2769 = vsel %vm2759, %v2718, %v2720
    %v2770 = vsel %vm2759, %v2720, %v2722
    %v2771 = vsel %vm2759, %v2722, %v2724
    %v2772 = vsel %vm2759, %v2724, %v2726
    %v2773 = vsel %vm2759, %v2726, %v2728
    %v2774 = vsel %vm2759, %v2730, %v2732
    %v2775 = vsel %vm2759, %v2732, %v2734
    %v2776 = vsel %vm2759, %v2734, %v2736
    %v2777 = vsel %vm2759, %v2736, %v2738
    %v2778 = vsel %vm2759, %v2738, %v2740
    %v2779 = vsel %vm2759, %v2740, %v2742
    %v2780 = vsel %vm2759, %v2742, %v2744
    %v2781 = vsel %vm2759, %v2744, %v2746
    %v2782 = vsel %vm2759, %v2746, %v2748
    %v2783 = vsel %vm2759, %v2748, %v2750
    %v2784 = vsel %vm2759, %v2750, %v2752
    %v2785 = vsel %vm2759, %v2752, %v2754
    %v2786 = vsel %vm2759, %v2754, %v2756
    %v2787 = vsel %vm2759, %v2756, %v2758
    %vm2818 = vcmask 1047808
    %2819 = vst.msk [vmem:[#allocation2] sm:$0xff] %vm2818, %v2700
    %2820 = vst [vmem:[#allocation2 + $0x8] sm:$0xff] %v2760
    %2821 = vst [vmem:[#allocation2 + $0x10] sm:$0xff] %v2761
    %2822 = vst [vmem:[#allocation2 + $0x18] sm:$0xff] %v2762
    %2823 = vst [vmem:[#allocation2 + $0x20] sm:$0xff] %v2763
    %2824 = vst [vmem:[#allocation2 + $0x28] sm:$0xff] %v2764
    %2825 = vst [vmem:[#allocation2 + $0x30] sm:$0xff] %v2765
    %2826 = vst [vmem:[#allocation2 + $0x38] sm:$0xff] %v2766
    %2827 = vst [vmem:[#allocation2 + $0x40] sm:$0xff] %v2767
    %2828 = vst [vmem:[#allocation2 + $0x48] sm:$0xff] %v2768
    %2829 = vst [vmem:[#allocation2 + $0x50] sm:$0xff] %v2769
    %2830 = vst [vmem:[#allocation2 + $0x58] sm:$0xff] %v2770
    %2831 = vst [vmem:[#allocation2 + $0x60] sm:$0xff] %v2771
    %2832 = vst [vmem:[#allocation2 + $0x68] sm:$0xff] %v2772
    %vm2833 = vcmask 326656
    %2834 = vst.msk [vmem:[#allocation2 + $0x70] sm:$0xff] %vm2833, %v2773
    %2835 = vst.msk [vmem:[#allocation2 + $0x78] sm:$0xff] %vm2818, %v2730
    %2836 = vst [vmem:[#allocation2 + $0x80] sm:$0xff] %v2774
    %2837 = vst [vmem:[#allocation2 + $0x88] sm:$0xff] %v2775
    %2838 = vst [vmem:[#allocation2 + $0x90] sm:$0xff] %v2776
    %2839 = vst [vmem:[#allocation2 + $0x98] sm:$0xff] %v2777
    %2840 = vst [vmem:[#allocation2 + $0xa0] sm:$0xff] %v2778
    %2841 = vst [vmem:[#allocation2 + $0xa8] sm:$0xff] %v2779
    %2842 = vst [vmem:[#allocation2 + $0xb0] sm:$0xff] %v2780
    %2843 = vst [vmem:[#allocation2 + $0xb8] sm:$0xff] %v2781
    %2844 = vst [vmem:[#allocation2 + $0xc0] sm:$0xff] %v2782
    %2845 = vst [vmem:[#allocation2 + $0xc8] sm:$0xff] %v2783
    %2846 = vst [vmem:[#allocation2 + $0xd0] sm:$0xff] %v2784
    %2847 = vst [vmem:[#allocation2 + $0xd8] sm:$0xff] %v2785
    %2848 = vst [vmem:[#allocation2 + $0xe0] sm:$0xff] %v2786
    %2849 = vst.msk [vmem:[#allocation2 + $0xe8] sm:$0xff] %vm2833, %v2787
    %v2850 = vld [vmem:[#allocation2] sm:$0xff]
    %v2851 = vld [vmem:[#allocation2 + $0x8] sm:$0xff]
    %v2852 = vld [vmem:[#allocation2 + $0x10] sm:$0xff]
    %v2853 = vld [vmem:[#allocation2 + $0x18] sm:$0xff]
    %v2854 = vld [vmem:[#allocation2 + $0x20] sm:$0xff]
    %v2855 = vld [vmem:[#allocation2 + $0x28] sm:$0xff]
    %v2856 = vld [vmem:[#allocation2 + $0x30] sm:$0xff]
    %v2857 = vld [vmem:[#allocation2 + $0x38] sm:$0xff]
    %v2858 = vld [vmem:[#allocation2 + $0x40] sm:$0xff]
    %v2859 = vld [vmem:[#allocation2 + $0x48] sm:$0xff]
    %v2860 = vld [vmem:[#allocation2 + $0x50] sm:$0xff]
    %v2861 = vld [vmem:[#allocation2 + $0x58] sm:$0xff]
    %v2862 = vld [vmem:[#allocation2 + $0x60] sm:$0xff]
    %v2863 = vld [vmem:[#allocation2 + $0x68] sm:$0xff]
    %v2864 = vld [vmem:[#allocation2 + $0x70] sm:$0xff]
    %v2865 = vld [vmem:[#allocation2 + $0x78] sm:$0xff]
    %v2866 = vld [vmem:[#allocation2 + $0x80] sm:$0xff]
    %v2867 = vld [vmem:[#allocation2 + $0x88] sm:$0xff]
    %v2868 = vld [vmem:[#allocation2 + $0x90] sm:$0xff]
    %v2869 = vld [vmem:[#allocation2 + $0x98] sm:$0xff]
    %v2870 = vld [vmem:[#allocation2 + $0xa0] sm:$0xff]
    %v2871 = vld [vmem:[#allocation2 + $0xa8] sm:$0xff]
    %v2872 = vld [vmem:[#allocation2 + $0xb0] sm:$0xff]
    %v2873 = vld [vmem:[#allocation2 + $0xb8] sm:$0xff]
    %v2874 = vld [vmem:[#allocation2 + $0xc0] sm:$0xff]
    %v2875 = vld [vmem:[#allocation2 + $0xc8] sm:$0xff]
    %v2876 = vld [vmem:[#allocation2 + $0xd0] sm:$0xff]
    %v2877 = vld [vmem:[#allocation2 + $0xd8] sm:$0xff]
    %v2878 = vld [vmem:[#allocation2 + $0xe0] sm:$0xff]
    %v2879 = vld [vmem:[#allocation2 + $0xe8] sm:$0xff]
    %v2880 = vld [vmem:[%s3] sm:$0xff]
    %v2881 = vld [vmem:[%s3 + $0x8] sm:$0xff]
    %s2882 = scalar_lea.vmem %s3, 16
    %v2883 = vld [vmem:[%s2882] sm:$0xff]
    %v2884 = vld [vmem:[%s2882 + $0x8] sm:$0xff]
    %2915 = vrot.lane.b32.xlu0 %v2850, 126
    %v2916 = vpop.permute.xlu0 %2915
    %2917 = vrot.lane.b32.xlu0 %v2851, 126
    %v2918 = vpop.permute.xlu0 %2917
    %2919 = vrot.lane.b32.xlu0 %v2852, 126
    %v2920 = vpop.permute.xlu0 %2919
    %2921 = vrot.lane.b32.xlu0 %v2853, 126
    %v2922 = vpop.permute.xlu0 %2921
    %2923 = vrot.lane.b32.xlu0 %v2854, 126
    %v2924 = vpop.permute.xlu0 %2923
    %2925 = vrot.lane.b32.xlu0 %v2855, 126
    %v2926 = vpop.permute.xlu0 %2925
    %2927 = vrot.lane.b32.xlu0 %v2856, 126
    %v2928 = vpop.permute.xlu0 %2927
    %2929 = vrot.lane.b32.xlu0 %v2857, 126
    %v2930 = vpop.permute.xlu0 %2929
    %2931 = vrot.lane.b32.xlu0 %v2858, 126
    %v2932 = vpop.permute.xlu0 %2931
    %2933 = vrot.lane.b32.xlu0 %v2859, 126
    %v2934 = vpop.permute.xlu0 %2933
    %2935 = vrot.lane.b32.xlu0 %v2860, 126
    %v2936 = vpop.permute.xlu0 %2935
    %2937 = vrot.lane.b32.xlu0 %v2861, 126
    %v2938 = vpop.permute.xlu0 %2937
    %2939 = vrot.lane.b32.xlu0 %v2862, 126
    %v2940 = vpop.permute.xlu0 %2939
    %2941 = vrot.lane.b32.xlu0 %v2863, 126
    %v2942 = vpop.permute.xlu0 %2941
    %2943 = vrot.lane.b32.xlu0 %v2864, 126
    %v2944 = vpop.permute.xlu0 %2943
    %2945 = vrot.lane.b32.xlu0 %v2865, 126
    %v2946 = vpop.permute.xlu0 %2945
    %2947 = vrot.lane.b32.xlu0 %v2866, 126
    %v2948 = vpop.permute.xlu0 %2947
    %2949 = vrot.lane.b32.xlu0 %v2867, 126
    %v2950 = vpop.permute.xlu0 %2949
    %2951 = vrot.lane.b32.xlu0 %v2868, 126
    %v2952 = vpop.permute.xlu0 %2951
    %2953 = vrot.lane.b32.xlu0 %v2869, 126
    %v2954 = vpop.permute.xlu0 %2953
    %2955 = vrot.lane.b32.xlu0 %v2870, 126
    %v2956 = vpop.permute.xlu0 %2955
    %2957 = vrot.lane.b32.xlu0 %v2871, 126
    %v2958 = vpop.permute.xlu0 %2957
    %2959 = vrot.lane.b32.xlu0 %v2872, 126
    %v2960 = vpop.permute.xlu0 %2959
    %2961 = vrot.lane.b32.xlu0 %v2873, 126
    %v2962 = vpop.permute.xlu0 %2961
    %2963 = vrot.lane.b32.xlu0 %v2874, 126
    %v2964 = vpop.permute.xlu0 %2963
    %2965 = vrot.lane.b32.xlu0 %v2875, 126
    %v2966 = vpop.permute.xlu0 %2965
    %2967 = vrot.lane.b32.xlu0 %v2876, 126
    %v2968 = vpop.permute.xlu0 %2967
    %2969 = vrot.lane.b32.xlu0 %v2877, 126
    %v2970 = vpop.permute.xlu0 %2969
    %2971 = vrot.lane.b32.xlu0 %v2878, 126
    %v2972 = vpop.permute.xlu0 %2971
    %2973 = vrot.lane.b32.xlu0 %v2879, 126
    %v2974 = vpop.permute.xlu0 %2973
    %v2975 = vsel %vm1013, %v2916, %v2918
    %v2976 = vsel %vm1013, %v2918, %v2920
    %v2977 = vsel %vm1013, %v2920, %v2922
    %v2978 = vsel %vm1013, %v2922, %v2924
    %v2979 = vsel %vm1013, %v2924, %v2926
    %v2980 = vsel %vm1013, %v2926, %v2928
    %v2981 = vsel %vm1013, %v2928, %v2930
    %v2982 = vsel %vm1013, %v2930, %v2932
    %v2983 = vsel %vm1013, %v2932, %v2934
    %v2984 = vsel %vm1013, %v2934, %v2936
    %v2985 = vsel %vm1013, %v2936, %v2938
    %v2986 = vsel %vm1013, %v2938, %v2940
    %v2987 = vsel %vm1013, %v2940, %v2942
    %v2988 = vsel %vm1013, %v2942, %v2944
    %v2989 = vsel %vm1013, %v2946, %v2948
    %v2990 = vsel %vm1013, %v2948, %v2950
    %v2991 = vsel %vm1013, %v2950, %v2952
    %v2992 = vsel %vm1013, %v2952, %v2954
    %v2993 = vsel %vm1013, %v2954, %v2956
    %v2994 = vsel %vm1013, %v2956, %v2958
    %v2995 = vsel %vm1013, %v2958, %v2960
    %v2996 = vsel %vm1013, %v2960, %v2962
    %v2997 = vsel %vm1013, %v2962, %v2964
    %v2998 = vsel %vm1013, %v2964, %v2966
    %v2999 = vsel %vm1013, %v2966, %v2968
    %v3000 = vsel %vm1013, %v2968, %v2970
    %v3001 = vsel %vm1013, %v2970, %v2972
    %v3002 = vsel %vm1013, %v2972, %v2974
    %vm3033 = vcmask 130048
    %v3035 = vsel %vm3033, %v2883, 0
    %v3038 = vsel %vm3033, %v2884, 0
    %3040 = vmatprep.subr.mxu0 0.0
    %3041 = vmatpush1.msra.mxu0 0.0
    %3042 = vmatprep.subr.mxu0 0.0
    %3043 = vmatpush1.msra.mxu0 0.0
    %3044 = vmatprep.subr.mxu0 0.0
    %3045 = vmatpush1.msra.mxu0 0.0
    %3046 = vmatprep.subr.mxu0 0.0
    %3047 = vmatpush1.msra.mxu0 0.0
    %3048 = vmatprep.subr.mxu0 0.0
    %3049 = vmatpush1.msra.mxu0 0.0
    %3050 = vmatprep.subr.mxu0 0.0
    %3051 = vmatpush1.msra.mxu0 0.0
    %3052 = vmatprep.subr.mxu0 0.0
    %3053 = vmatpush1.msra.mxu0 0.0
    %3054 = vmatprep.subr.mxu0 0.0
    %3055 = vmatpush1.msra.mxu0 0.0
    %3056 = vmatprep.subr.mxu0 0.0
    %3057 = vmatpush1.msra.mxu0 0.0
    %3058 = vmatprep.subr.mxu0 0.0
    %3059 = vmatpush1.msra.mxu0 0.0
    %3060 = vmatprep.subr.mxu0 0.0
    %3061 = vmatpush1.msra.mxu0 0.0
    %3062 = vmatprep.subr.mxu0 0.0
    %3063 = vmatpush1.msra.mxu0 0.0
    %3064 = vmatprep.subr.mxu0 0.0
    %3065 = vmatpush1.msra.mxu0 0.0
    %3066 = vmatprep.subr.mxu0 0.0
    %3067 = vmatpush1.msra.mxu0 0.0
    %3068 = vmatprep.subr.mxu0 %v2990
    %3069 = vmatpush1.msra.mxu0 %v2989
    %3070 = vmatprep.subr.mxu0 %v2976
    %3071 = vmatpush1.msra.mxu0 %v2975
    %3072 = vmatprep.subr.mxu0 0.0
    %3073 = vmatpush2.msra.mxu0 0.0
    %3074 = vmatprep.subr.mxu0 0.0
    %3075 = vmatpush2.msra.mxu0 0.0
    %3076 = vmatprep.subr.mxu0 0.0
    %3077 = vmatpush2.msra.mxu0 0.0
    %3078 = vmatprep.subr.mxu0 0.0
    %3079 = vmatpush2.msra.mxu0 0.0
    %3080 = vmatprep.subr.mxu0 0.0
    %3081 = vmatpush2.msra.mxu0 0.0
    %3082 = vmatprep.subr.mxu0 0.0
    %3083 = vmatpush2.msra.mxu0 0.0
    %3084 = vmatprep.subr.mxu0 0.0
    %3085 = vmatpush2.msra.mxu0 0.0
    %3086 = vmatprep.subr.mxu0 0.0
    %3087 = vmatpush2.msra.mxu0 0.0
    %3088 = vmatprep.subr.mxu0 0.0
    %3089 = vmatpush2.msra.mxu0 0.0
    %3090 = vmatprep.subr.mxu0 0.0
    %3091 = vmatpush2.msra.mxu0 0.0
    %3092 = vmatprep.subr.mxu0 0.0
    %3093 = vmatpush2.msra.mxu0 0.0
    %3094 = vmatprep.subr.mxu0 0.0
    %3095 = vmatpush2.msra.mxu0 0.0
    %3096 = vmatprep.subr.mxu0 0.0
    %3097 = vmatpush2.msra.mxu0 0.0
    %3098 = vmatprep.subr.mxu0 0.0
    %3099 = vmatpush2.msra.mxu0 0.0
    %3100 = vmatprep.subr.mxu0 0.0
    %3101 = vmatpush2.msra.mxu0 0.0
    %3102 = vmatprep.subr.mxu0 0.0
    %3103 = vmatpush2.msra.mxu0 0.0
    %3104 = vmatprep.mubr.f32.mxu0 0.0
    %3105 = vmatmul.mubr.f32.gmra.mxu0 %v3035
    %v3106 = vpop.f32.mrf.mxu0
    %v3107 = vadd.f32 0.0, %v3106
    %v3108 = vpop.f32.mrf.mxu0
    %v3109 = vadd.f32 0.0, %v3108
    %3110 = vmatprep.mubr.f32.mxu0 0.0
    %3111 = vmatmul.mubr.f32.gmra.mxu0 %v3038
    %v3112 = vpop.f32.mrf.mxu0
    %v3113 = vadd.f32 0.0, %v3112
    %v3114 = vpop.f32.mrf.mxu0
    %v3115 = vadd.f32 0.0, %v3114
    %3116 = vdwg.mxu0
    %3117 = vmatprep.subr.mxu0 0.0
    %3118 = vmatpush1.msra.mxu0 0.0
    %3119 = vmatprep.subr.mxu0 0.0
    %3120 = vmatpush1.msra.mxu0 0.0
    %3121 = vmatprep.subr.mxu0 0.0
    %3122 = vmatpush1.msra.mxu0 0.0
    %3123 = vmatprep.subr.mxu0 0.0
    %3124 = vmatpush1.msra.mxu0 0.0
    %3125 = vmatprep.subr.mxu0 0.0
    %3126 = vmatpush1.msra.mxu0 0.0
    %3127 = vmatprep.subr.mxu0 0.0
    %3128 = vmatpush1.msra.mxu0 0.0
    %3129 = vmatprep.subr.mxu0 0.0
    %3130 = vmatpush1.msra.mxu0 0.0
    %3131 = vmatprep.subr.mxu0 0.0
    %3132 = vmatpush1.msra.mxu0 0.0
    %3133 = vmatprep.subr.mxu0 0.0
    %3134 = vmatpush1.msra.mxu0 0.0
    %3135 = vmatprep.subr.mxu0 0.0
    %3136 = vmatpush1.msra.mxu0 0.0
    %3137 = vmatprep.subr.mxu0 0.0
    %3138 = vmatpush1.msra.mxu0 0.0
    %3139 = vmatprep.subr.mxu0 0.0
    %3140 = vmatpush1.msra.mxu0 0.0
    %3141 = vmatprep.subr.mxu0 0.0
    %3142 = vmatpush1.msra.mxu0 0.0
    %3143 = vmatprep.subr.mxu0 0.0
    %3144 = vmatpush1.msra.mxu0 0.0
    %3145 = vmatprep.subr.mxu0 %v2992
    %3146 = vmatpush1.msra.mxu0 %v2991
    %3147 = vmatprep.subr.mxu0 %v2978
    %3148 = vmatpush1.msra.mxu0 %v2977
    %3149 = vmatprep.subr.mxu0 0.0
    %3150 = vmatpush2.msra.mxu0 0.0
    %3151 = vmatprep.subr.mxu0 0.0
    %3152 = vmatpush2.msra.mxu0 0.0
    %3153 = vmatprep.subr.mxu0 0.0
    %3154 = vmatpush2.msra.mxu0 0.0
    %3155 = vmatprep.subr.mxu0 0.0
    %3156 = vmatpush2.msra.mxu0 0.0
    %3157 = vmatprep.subr.mxu0 0.0
    %3158 = vmatpush2.msra.mxu0 0.0
    %3159 = vmatprep.subr.mxu0 0.0
    %3160 = vmatpush2.msra.mxu0 0.0
    %3161 = vmatprep.subr.mxu0 0.0
    %3162 = vmatpush2.msra.mxu0 0.0
    %3163 = vmatprep.subr.mxu0 0.0
    %3164 = vmatpush2.msra.mxu0 0.0
    %3165 = vmatprep.subr.mxu0 0.0
    %3166 = vmatpush2.msra.mxu0 0.0
    %3167 = vmatprep.subr.mxu0 0.0
    %3168 = vmatpush2.msra.mxu0 0.0
    %3169 = vmatprep.subr.mxu0 0.0
    %3170 = vmatpush2.msra.mxu0 0.0
    %3171 = vmatprep.subr.mxu0 0.0
    %3172 = vmatpush2.msra.mxu0 0.0
    %3173 = vmatprep.subr.mxu0 0.0
    %3174 = vmatpush2.msra.mxu0 0.0
    %3175 = vmatprep.subr.mxu0 0.0
    %3176 = vmatpush2.msra.mxu0 0.0
    %3177 = vmatprep.subr.mxu0 0.0
    %3178 = vmatpush2.msra.mxu0 0.0
    %3179 = vmatprep.subr.mxu0 0.0
    %3180 = vmatpush2.msra.mxu0 0.0
    %3181 = vmatprep.mubr.f32.mxu0 0.0
    %3182 = vmatmul.mubr.f32.gmra.mxu0 %v3035
    %v3183 = vpop.f32.mrf.mxu0
    %v3184 = vadd.f32 0.0, %v3183
    %v3185 = vpop.f32.mrf.mxu0
    %v3186 = vadd.f32 0.0, %v3185
    %3187 = vmatprep.mubr.f32.mxu0 0.0
    %3188 = vmatmul.mubr.f32.gmra.mxu0 %v3038
    %v3189 = vpop.f32.mrf.mxu0
    %v3190 = vadd.f32 0.0, %v3189
    %v3191 = vpop.f32.mrf.mxu0
    %v3192 = vadd.f32 0.0, %v3191
    %3193 = vdwg.mxu0
    %3194 = vmatprep.subr.mxu0 0.0
    %3195 = vmatpush1.msra.mxu0 0.0
    %3196 = vmatprep.subr.mxu0 0.0
    %3197 = vmatpush1.msra.mxu0 0.0
    %3198 = vmatprep.subr.mxu0 0.0
    %3199 = vmatpush1.msra.mxu0 0.0
    %3200 = vmatprep.subr.mxu0 0.0
    %3201 = vmatpush1.msra.mxu0 0.0
    %3202 = vmatprep.subr.mxu0 0.0
    %3203 = vmatpush1.msra.mxu0 0.0
    %3204 = vmatprep.subr.mxu0 0.0
    %3205 = vmatpush1.msra.mxu0 0.0
    %3206 = vmatprep.subr.mxu0 0.0
    %3207 = vmatpush1.msra.mxu0 0.0
    %3208 = vmatprep.subr.mxu0 0.0
    %3209 = vmatpush1.msra.mxu0 0.0
    %3210 = vmatprep.subr.mxu0 0.0
    %3211 = vmatpush1.msra.mxu0 0.0
    %3212 = vmatprep.subr.mxu0 0.0
    %3213 = vmatpush1.msra.mxu0 0.0
    %3214 = vmatprep.subr.mxu0 0.0
    %3215 = vmatpush1.msra.mxu0 0.0
    %3216 = vmatprep.subr.mxu0 0.0
    %3217 = vmatpush1.msra.mxu0 0.0
    %3218 = vmatprep.subr.mxu0 0.0
    %3219 = vmatpush1.msra.mxu0 0.0
    %3220 = vmatprep.subr.mxu0 0.0
    %3221 = vmatpush1.msra.mxu0 0.0
    %3222 = vmatprep.subr.mxu0 %v2994
    %3223 = vmatpush1.msra.mxu0 %v2993
    %3224 = vmatprep.subr.mxu0 %v2980
    %3225 = vmatpush1.msra.mxu0 %v2979
    %3226 = vmatprep.subr.mxu0 0.0
    %3227 = vmatpush2.msra.mxu0 0.0
    %3228 = vmatprep.subr.mxu0 0.0
    %3229 = vmatpush2.msra.mxu0 0.0
    %3230 = vmatprep.subr.mxu0 0.0
    %3231 = vmatpush2.msra.mxu0 0.0
    %3232 = vmatprep.subr.mxu0 0.0
    %3233 = vmatpush2.msra.mxu0 0.0
    %3234 = vmatprep.subr.mxu0 0.0
    %3235 = vmatpush2.msra.mxu0 0.0
    %3236 = vmatprep.subr.mxu0 0.0
    %3237 = vmatpush2.msra.mxu0 0.0
    %3238 = vmatprep.subr.mxu0 0.0
    %3239 = vmatpush2.msra.mxu0 0.0
    %3240 = vmatprep.subr.mxu0 0.0
    %3241 = vmatpush2.msra.mxu0 0.0
    %3242 = vmatprep.subr.mxu0 0.0
    %3243 = vmatpush2.msra.mxu0 0.0
    %3244 = vmatprep.subr.mxu0 0.0
    %3245 = vmatpush2.msra.mxu0 0.0
    %3246 = vmatprep.subr.mxu0 0.0
    %3247 = vmatpush2.msra.mxu0 0.0
    %3248 = vmatprep.subr.mxu0 0.0
    %3249 = vmatpush2.msra.mxu0 0.0
    %3250 = vmatprep.subr.mxu0 0.0
    %3251 = vmatpush2.msra.mxu0 0.0
    %3252 = vmatprep.subr.mxu0 0.0
    %3253 = vmatpush2.msra.mxu0 0.0
    %3254 = vmatprep.subr.mxu0 0.0
    %3255 = vmatpush2.msra.mxu0 0.0
    %3256 = vmatprep.subr.mxu0 0.0
    %3257 = vmatpush2.msra.mxu0 0.0
    %3258 = vmatprep.mubr.f32.mxu0 0.0
    %3259 = vmatmul.mubr.f32.gmra.mxu0 %v3035
    %v3260 = vpop.f32.mrf.mxu0
    %v3261 = vadd.f32 0.0, %v3260
    %v3262 = vpop.f32.mrf.mxu0
    %v3263 = vadd.f32 0.0, %v3262
    %3264 = vmatprep.mubr.f32.mxu0 0.0
    %3265 = vmatmul.mubr.f32.gmra.mxu0 %v3038
    %v3266 = vpop.f32.mrf.mxu0
    %v3267 = vadd.f32 0.0, %v3266
    %v3268 = vpop.f32.mrf.mxu0
    %v3269 = vadd.f32 0.0, %v3268
    %3270 = vdwg.mxu0
    %3271 = vmatprep.subr.mxu0 0.0
    %3272 = vmatpush1.msra.mxu0 0.0
    %3273 = vmatprep.subr.mxu0 0.0
    %3274 = vmatpush1.msra.mxu0 0.0
    %3275 = vmatprep.subr.mxu0 0.0
    %3276 = vmatpush1.msra.mxu0 0.0
    %3277 = vmatprep.subr.mxu0 0.0
    %3278 = vmatpush1.msra.mxu0 0.0
    %3279 = vmatprep.subr.mxu0 0.0
    %3280 = vmatpush1.msra.mxu0 0.0
    %3281 = vmatprep.subr.mxu0 0.0
    %3282 = vmatpush1.msra.mxu0 0.0
    %3283 = vmatprep.subr.mxu0 0.0
    %3284 = vmatpush1.msra.mxu0 0.0
    %3285 = vmatprep.subr.mxu0 0.0
    %3286 = vmatpush1.msra.mxu0 0.0
    %3287 = vmatprep.subr.mxu0 0.0
    %3288 = vmatpush1.msra.mxu0 0.0
    %3289 = vmatprep.subr.mxu0 0.0
    %3290 = vmatpush1.msra.mxu0 0.0
    %3291 = vmatprep.subr.mxu0 0.0
    %3292 = vmatpush1.msra.mxu0 0.0
    %3293 = vmatprep.subr.mxu0 0.0
    %3294 = vmatpush1.msra.mxu0 0.0
    %3295 = vmatprep.subr.mxu0 0.0
    %3296 = vmatpush1.msra.mxu0 0.0
    %3297 = vmatprep.subr.mxu0 0.0
    %3298 = vmatpush1.msra.mxu0 0.0
    %3299 = vmatprep.subr.mxu0 %v2996
    %3300 = vmatpush1.msra.mxu0 %v2995
    %3301 = vmatprep.subr.mxu0 %v2982
    %3302 = vmatpush1.msra.mxu0 %v2981
    %3303 = vmatprep.subr.mxu0 0.0
    %3304 = vmatpush2.msra.mxu0 0.0
    %3305 = vmatprep.subr.mxu0 0.0
    %3306 = vmatpush2.msra.mxu0 0.0
    %3307 = vmatprep.subr.mxu0 0.0
    %3308 = vmatpush2.msra.mxu0 0.0
    %3309 = vmatprep.subr.mxu0 0.0
    %3310 = vmatpush2.msra.mxu0 0.0
    %3311 = vmatprep.subr.mxu0 0.0
    %3312 = vmatpush2.msra.mxu0 0.0
    %3313 = vmatprep.subr.mxu0 0.0
    %3314 = vmatpush2.msra.mxu0 0.0
    %3315 = vmatprep.subr.mxu0 0.0
    %3316 = vmatpush2.msra.mxu0 0.0
    %3317 = vmatprep.subr.mxu0 0.0
    %3318 = vmatpush2.msra.mxu0 0.0
    %3319 = vmatprep.subr.mxu0 0.0
    %3320 = vmatpush2.msra.mxu0 0.0
    %3321 = vmatprep.subr.mxu0 0.0
    %3322 = vmatpush2.msra.mxu0 0.0
    %3323 = vmatprep.subr.mxu0 0.0
    %3324 = vmatpush2.msra.mxu0 0.0
    %3325 = vmatprep.subr.mxu0 0.0
    %3326 = vmatpush2.msra.mxu0 0.0
    %3327 = vmatprep.subr.mxu0 0.0
    %3328 = vmatpush2.msra.mxu0 0.0
    %3329 = vmatprep.subr.mxu0 0.0
    %3330 = vmatpush2.msra.mxu0 0.0
    %3331 = vmatprep.subr.mxu0 0.0
    %3332 = vmatpush2.msra.mxu0 0.0
    %3333 = vmatprep.subr.mxu0 0.0
    %3334 = vmatpush2.msra.mxu0 0.0
    %3335 = vmatprep.mubr.f32.mxu0 0.0
    %3336 = vmatmul.mubr.f32.gmra.mxu0 %v3035
    %v3337 = vpop.f32.mrf.mxu0
    %v3338 = vadd.f32 0.0, %v3337
    %v3339 = vpop.f32.mrf.mxu0
    %v3340 = vadd.f32 0.0, %v3339
    %3341 = vmatprep.mubr.f32.mxu0 0.0
    %3342 = vmatmul.mubr.f32.gmra.mxu0 %v3038
    %v3343 = vpop.f32.mrf.mxu0
    %v3344 = vadd.f32 0.0, %v3343
    %v3345 = vpop.f32.mrf.mxu0
    %v3346 = vadd.f32 0.0, %v3345
    %3347 = vdwg.mxu0
    %3348 = vmatprep.subr.mxu0 0.0
    %3349 = vmatpush1.msra.mxu0 0.0
    %3350 = vmatprep.subr.mxu0 0.0
    %3351 = vmatpush1.msra.mxu0 0.0
    %3352 = vmatprep.subr.mxu0 0.0
    %3353 = vmatpush1.msra.mxu0 0.0
    %3354 = vmatprep.subr.mxu0 0.0
    %3355 = vmatpush1.msra.mxu0 0.0
    %3356 = vmatprep.subr.mxu0 0.0
    %3357 = vmatpush1.msra.mxu0 0.0
    %3358 = vmatprep.subr.mxu0 0.0
    %3359 = vmatpush1.msra.mxu0 0.0
    %3360 = vmatprep.subr.mxu0 0.0
    %3361 = vmatpush1.msra.mxu0 0.0
    %3362 = vmatprep.subr.mxu0 0.0
    %3363 = vmatpush1.msra.mxu0 0.0
    %3364 = vmatprep.subr.mxu0 0.0
    %3365 = vmatpush1.msra.mxu0 0.0
    %3366 = vmatprep.subr.mxu0 0.0
    %3367 = vmatpush1.msra.mxu0 0.0
    %3368 = vmatprep.subr.mxu0 0.0
    %3369 = vmatpush1.msra.mxu0 0.0
    %3370 = vmatprep.subr.mxu0 0.0
    %3371 = vmatpush1.msra.mxu0 0.0
    %3372 = vmatprep.subr.mxu0 0.0
    %3373 = vmatpush1.msra.mxu0 0.0
    %3374 = vmatprep.subr.mxu0 0.0
    %3375 = vmatpush1.msra.mxu0 0.0
    %3376 = vmatprep.subr.mxu0 %v2998
    %3377 = vmatpush1.msra.mxu0 %v2997
    %3378 = vmatprep.subr.mxu0 %v2984
    %3379 = vmatpush1.msra.mxu0 %v2983
    %3380 = vmatprep.subr.mxu0 0.0
    %3381 = vmatpush2.msra.mxu0 0.0
    %3382 = vmatprep.subr.mxu0 0.0
    %3383 = vmatpush2.msra.mxu0 0.0
    %3384 = vmatprep.subr.mxu0 0.0
    %3385 = vmatpush2.msra.mxu0 0.0
    %3386 = vmatprep.subr.mxu0 0.0
    %3387 = vmatpush2.msra.mxu0 0.0
    %3388 = vmatprep.subr.mxu0 0.0
    %3389 = vmatpush2.msra.mxu0 0.0
    %3390 = vmatprep.subr.mxu0 0.0
    %3391 = vmatpush2.msra.mxu0 0.0
    %3392 = vmatprep.subr.mxu0 0.0
    %3393 = vmatpush2.msra.mxu0 0.0
    %3394 = vmatprep.subr.mxu0 0.0
    %3395 = vmatpush2.msra.mxu0 0.0
    %3396 = vmatprep.subr.mxu0 0.0
    %3397 = vmatpush2.msra.mxu0 0.0
    %3398 = vmatprep.subr.mxu0 0.0
    %3399 = vmatpush2.msra.mxu0 0.0
    %3400 = vmatprep.subr.mxu0 0.0
    %3401 = vmatpush2.msra.mxu0 0.0
    %3402 = vmatprep.subr.mxu0 0.0
    %3403 = vmatpush2.msra.mxu0 0.0
    %3404 = vmatprep.subr.mxu0 0.0
    %3405 = vmatpush2.msra.mxu0 0.0
    %3406 = vmatprep.subr.mxu0 0.0
    %3407 = vmatpush2.msra.mxu0 0.0
    %3408 = vmatprep.subr.mxu0 0.0
    %3409 = vmatpush2.msra.mxu0 0.0
    %3410 = vmatprep.subr.mxu0 0.0
    %3411 = vmatpush2.msra.mxu0 0.0
    %3412 = vmatprep.mubr.f32.mxu0 0.0
    %3413 = vmatmul.mubr.f32.gmra.mxu0 %v3035
    %v3414 = vpop.f32.mrf.mxu0
    %v3415 = vadd.f32 0.0, %v3414
    %v3416 = vpop.f32.mrf.mxu0
    %v3417 = vadd.f32 0.0, %v3416
    %3418 = vmatprep.mubr.f32.mxu0 0.0
    %3419 = vmatmul.mubr.f32.gmra.mxu0 %v3038
    %v3420 = vpop.f32.mrf.mxu0
    %v3421 = vadd.f32 0.0, %v3420
    %v3422 = vpop.f32.mrf.mxu0
    %v3423 = vadd.f32 0.0, %v3422
    %3424 = vdwg.mxu0
    %3425 = vmatprep.subr.mxu0 0.0
    %3426 = vmatpush1.msra.mxu0 0.0
    %3427 = vmatprep.subr.mxu0 0.0
    %3428 = vmatpush1.msra.mxu0 0.0
    %3429 = vmatprep.subr.mxu0 0.0
    %3430 = vmatpush1.msra.mxu0 0.0
    %3431 = vmatprep.subr.mxu0 0.0
    %3432 = vmatpush1.msra.mxu0 0.0
    %3433 = vmatprep.subr.mxu0 0.0
    %3434 = vmatpush1.msra.mxu0 0.0
    %3435 = vmatprep.subr.mxu0 0.0
    %3436 = vmatpush1.msra.mxu0 0.0
    %3437 = vmatprep.subr.mxu0 0.0
    %3438 = vmatpush1.msra.mxu0 0.0
    %3439 = vmatprep.subr.mxu0 0.0
    %3440 = vmatpush1.msra.mxu0 0.0
    %3441 = vmatprep.subr.mxu0 0.0
    %3442 = vmatpush1.msra.mxu0 0.0
    %3443 = vmatprep.subr.mxu0 0.0
    %3444 = vmatpush1.msra.mxu0 0.0
    %3445 = vmatprep.subr.mxu0 0.0
    %3446 = vmatpush1.msra.mxu0 0.0
    %3447 = vmatprep.subr.mxu0 0.0
    %3448 = vmatpush1.msra.mxu0 0.0
    %3449 = vmatprep.subr.mxu0 0.0
    %3450 = vmatpush1.msra.mxu0 0.0
    %3451 = vmatprep.subr.mxu0 0.0
    %3452 = vmatpush1.msra.mxu0 0.0
    %3453 = vmatprep.subr.mxu0 %v3000
    %3454 = vmatpush1.msra.mxu0 %v2999
    %3455 = vmatprep.subr.mxu0 %v2986
    %3456 = vmatpush1.msra.mxu0 %v2985
    %3457 = vmatprep.subr.mxu0 0.0
    %3458 = vmatpush2.msra.mxu0 0.0
    %3459 = vmatprep.subr.mxu0 0.0
    %3460 = vmatpush2.msra.mxu0 0.0
    %3461 = vmatprep.subr.mxu0 0.0
    %3462 = vmatpush2.msra.mxu0 0.0
    %3463 = vmatprep.subr.mxu0 0.0
    %3464 = vmatpush2.msra.mxu0 0.0
    %3465 = vmatprep.subr.mxu0 0.0
    %3466 = vmatpush2.msra.mxu0 0.0
    %3467 = vmatprep.subr.mxu0 0.0
    %3468 = vmatpush2.msra.mxu0 0.0
    %3469 = vmatprep.subr.mxu0 0.0
    %3470 = vmatpush2.msra.mxu0 0.0
    %3471 = vmatprep.subr.mxu0 0.0
    %3472 = vmatpush2.msra.mxu0 0.0
    %3473 = vmatprep.subr.mxu0 0.0
    %3474 = vmatpush2.msra.mxu0 0.0
    %3475 = vmatprep.subr.mxu0 0.0
    %3476 = vmatpush2.msra.mxu0 0.0
    %3477 = vmatprep.subr.mxu0 0.0
    %3478 = vmatpush2.msra.mxu0 0.0
    %3479 = vmatprep.subr.mxu0 0.0
    %3480 = vmatpush2.msra.mxu0 0.0
    %3481 = vmatprep.subr.mxu0 0.0
    %3482 = vmatpush2.msra.mxu0 0.0
    %3483 = vmatprep.subr.mxu0 0.0
    %3484 = vmatpush2.msra.mxu0 0.0
    %3485 = vmatprep.subr.mxu0 0.0
    %3486 = vmatpush2.msra.mxu0 0.0
    %3487 = vmatprep.subr.mxu0 0.0
    %3488 = vmatpush2.msra.mxu0 0.0
    %3489 = vmatprep.mubr.f32.mxu0 0.0
    %3490 = vmatmul.mubr.f32.gmra.mxu0 %v3035
    %v3491 = vpop.f32.mrf.mxu0
    %v3492 = vadd.f32 0.0, %v3491
    %v3493 = vpop.f32.mrf.mxu0
    %v3494 = vadd.f32 0.0, %v3493
    %3495 = vmatprep.mubr.f32.mxu0 0.0
    %3496 = vmatmul.mubr.f32.gmra.mxu0 %v3038
    %v3497 = vpop.f32.mrf.mxu0
    %v3498 = vadd.f32 0.0, %v3497
    %v3499 = vpop.f32.mrf.mxu0
    %v3500 = vadd.f32 0.0, %v3499
    %3501 = vdwg.mxu0
    %3502 = vmatprep.subr.mxu0 0.0
    %3503 = vmatpush1.msra.mxu0 0.0
    %3504 = vmatprep.subr.mxu0 0.0
    %3505 = vmatpush1.msra.mxu0 0.0
    %3506 = vmatprep.subr.mxu0 0.0
    %3507 = vmatpush1.msra.mxu0 0.0
    %3508 = vmatprep.subr.mxu0 0.0
    %3509 = vmatpush1.msra.mxu0 0.0
    %3510 = vmatprep.subr.mxu0 0.0
    %3511 = vmatpush1.msra.mxu0 0.0
    %3512 = vmatprep.subr.mxu0 0.0
    %3513 = vmatpush1.msra.mxu0 0.0
    %3514 = vmatprep.subr.mxu0 0.0
    %3515 = vmatpush1.msra.mxu0 0.0
    %3516 = vmatprep.subr.mxu0 0.0
    %3517 = vmatpush1.msra.mxu0 0.0
    %3518 = vmatprep.subr.mxu0 0.0
    %3519 = vmatpush1.msra.mxu0 0.0
    %3520 = vmatprep.subr.mxu0 0.0
    %3521 = vmatpush1.msra.mxu0 0.0
    %3522 = vmatprep.subr.mxu0 0.0
    %3523 = vmatpush1.msra.mxu0 0.0
    %3524 = vmatprep.subr.mxu0 0.0
    %3525 = vmatpush1.msra.mxu0 0.0
    %3526 = vmatprep.subr.mxu0 0.0
    %3527 = vmatpush1.msra.mxu0 0.0
    %3528 = vmatprep.subr.mxu0 0.0
    %3529 = vmatpush1.msra.mxu0 0.0
    %3530 = vmatprep.subr.mxu0 %v3002
    %3531 = vmatpush1.msra.mxu0 %v3001
    %3532 = vmatprep.subr.mxu0 %v2988
    %3533 = vmatpush1.msra.mxu0 %v2987
    %3534 = vmatprep.subr.mxu0 0.0
    %3535 = vmatpush2.msra.mxu0 0.0
    %3536 = vmatprep.subr.mxu0 0.0
    %3537 = vmatpush2.msra.mxu0 0.0
    %3538 = vmatprep.subr.mxu0 0.0
    %3539 = vmatpush2.msra.mxu0 0.0
    %3540 = vmatprep.subr.mxu0 0.0
    %3541 = vmatpush2.msra.mxu0 0.0
    %3542 = vmatprep.subr.mxu0 0.0
    %3543 = vmatpush2.msra.mxu0 0.0
    %3544 = vmatprep.subr.mxu0 0.0
    %3545 = vmatpush2.msra.mxu0 0.0
    %3546 = vmatprep.subr.mxu0 0.0
    %3547 = vmatpush2.msra.mxu0 0.0
    %3548 = vmatprep.subr.mxu0 0.0
    %3549 = vmatpush2.msra.mxu0 0.0
    %3550 = vmatprep.subr.mxu0 0.0
    %3551 = vmatpush2.msra.mxu0 0.0
    %3552 = vmatprep.subr.mxu0 0.0
    %3553 = vmatpush2.msra.mxu0 0.0
    %3554 = vmatprep.subr.mxu0 0.0
    %3555 = vmatpush2.msra.mxu0 0.0
    %3556 = vmatprep.subr.mxu0 0.0
    %3557 = vmatpush2.msra.mxu0 0.0
    %3558 = vmatprep.subr.mxu0 0.0
    %3559 = vmatpush2.msra.mxu0 0.0
    %3560 = vmatprep.subr.mxu0 0.0
    %3561 = vmatpush2.msra.mxu0 0.0
    %3562 = vmatprep.subr.mxu0 0.0
    %3563 = vmatpush2.msra.mxu0 0.0
    %3564 = vmatprep.subr.mxu0 0.0
    %3565 = vmatpush2.msra.mxu0 0.0
    %3566 = vmatprep.mubr.f32.mxu0 0.0
    %3567 = vmatmul.mubr.f32.gmra.mxu0 %v3035
    %v3568 = vpop.f32.mrf.mxu0
    %v3569 = vadd.f32 0.0, %v3568
    %v3570 = vpop.f32.mrf.mxu0
    %v3571 = vadd.f32 0.0, %v3570
    %3572 = vmatprep.mubr.f32.mxu0 0.0
    %3573 = vmatmul.mubr.f32.gmra.mxu0 %v3038
    %v3574 = vpop.f32.mrf.mxu0
    %v3575 = vadd.f32 0.0, %v3574
    %v3576 = vpop.f32.mrf.mxu0
    %v3577 = vadd.f32 0.0, %v3576
    %3578 = vdwg.mxu0
    %3579 = vmatprep.subr.mxu0 0.0
    %3580 = vmatpush1.msra.mxu0 0.0
    %3581 = vmatprep.subr.mxu0 0.0
    %3582 = vmatpush1.msra.mxu0 0.0
    %3583 = vmatprep.subr.mxu0 0.0
    %3584 = vmatpush1.msra.mxu0 0.0
    %3585 = vmatprep.subr.mxu0 0.0
    %3586 = vmatpush1.msra.mxu0 0.0
    %3587 = vmatprep.subr.mxu0 0.0
    %3588 = vmatpush1.msra.mxu0 0.0
    %3589 = vmatprep.subr.mxu0 0.0
    %3590 = vmatpush1.msra.mxu0 0.0
    %3591 = vmatprep.subr.mxu0 0.0
    %3592 = vmatpush1.msra.mxu0 0.0
    %3593 = vmatprep.subr.mxu0 0.0
    %3594 = vmatpush1.msra.mxu0 0.0
    %3595 = vmatprep.subr.mxu0 0.0
    %3596 = vmatpush1.msra.mxu0 0.0
    %3597 = vmatprep.subr.mxu0 0.0
    %3598 = vmatpush1.msra.mxu0 0.0
    %3599 = vmatprep.subr.mxu0 0.0
    %3600 = vmatpush1.msra.mxu0 0.0
    %3601 = vmatprep.subr.mxu0 0.0
    %3602 = vmatpush1.msra.mxu0 0.0
    %3603 = vmatprep.subr.mxu0 0.0
    %3604 = vmatpush1.msra.mxu0 0.0
    %3605 = vmatprep.subr.mxu0 0.0
    %3606 = vmatpush1.msra.mxu0 0.0
    %3607 = vmatprep.subr.mxu0 0.0
    %3608 = vmatpush1.msra.mxu0 %v2974
    %3609 = vmatprep.subr.mxu0 0.0
    %3610 = vmatpush1.msra.mxu0 %v2944
    %3611 = vmatprep.subr.mxu0 0.0
    %3612 = vmatpush2.msra.mxu0 0.0
    %3613 = vmatprep.subr.mxu0 0.0
    %3614 = vmatpush2.msra.mxu0 0.0
    %3615 = vmatprep.subr.mxu0 0.0
    %3616 = vmatpush2.msra.mxu0 0.0
    %3617 = vmatprep.subr.mxu0 0.0
    %3618 = vmatpush2.msra.mxu0 0.0
    %3619 = vmatprep.subr.mxu0 0.0
    %3620 = vmatpush2.msra.mxu0 0.0
    %3621 = vmatprep.subr.mxu0 0.0
    %3622 = vmatpush2.msra.mxu0 0.0
    %3623 = vmatprep.subr.mxu0 0.0
    %3624 = vmatpush2.msra.mxu0 0.0
    %3625 = vmatprep.subr.mxu0 0.0
    %3626 = vmatpush2.msra.mxu0 0.0
    %3627 = vmatprep.subr.mxu0 0.0
    %3628 = vmatpush2.msra.mxu0 0.0
    %3629 = vmatprep.subr.mxu0 0.0
    %3630 = vmatpush2.msra.mxu0 0.0
    %3631 = vmatprep.subr.mxu0 0.0
    %3632 = vmatpush2.msra.mxu0 0.0
    %3633 = vmatprep.subr.mxu0 0.0
    %3634 = vmatpush2.msra.mxu0 0.0
    %3635 = vmatprep.subr.mxu0 0.0
    %3636 = vmatpush2.msra.mxu0 0.0
    %3637 = vmatprep.subr.mxu0 0.0
    %3638 = vmatpush2.msra.mxu0 0.0
    %3639 = vmatprep.subr.mxu0 0.0
    %3640 = vmatpush2.msra.mxu0 0.0
    %3641 = vmatprep.subr.mxu0 0.0
    %3642 = vmatpush2.msra.mxu0 0.0
    %3643 = vmatprep.mubr.f32.mxu0 0.0
    %3644 = vmatmul.mubr.f32.gmra.mxu0 %v3035
    %v3645 = vpop.f32.mrf.mxu0
    %v3646 = vadd.f32 0.0, %v3645
    %v3647 = vpop.f32.mrf.mxu0
    %3648 = vmatprep.mubr.f32.mxu0 0.0
    %3649 = vmatmul.mubr.f32.gmra.mxu0 %v3038
    %v3650 = vpop.f32.mrf.mxu0
    %v3651 = vadd.f32 0.0, %v3650
    %v3652 = vpop.f32.mrf.mxu0
    %3653 = vdwg.mxu0
    %3654 = vrot.lane.b32.xlu0 %v2850, 127
    %v3655 = vpop.permute.xlu0 %3654
    %3656 = vrot.lane.b32.xlu0 %v2851, 127
    %v3657 = vpop.permute.xlu0 %3656
    %3658 = vrot.lane.b32.xlu0 %v2852, 127
    %v3659 = vpop.permute.xlu0 %3658
    %3660 = vrot.lane.b32.xlu0 %v2853, 127
    %v3661 = vpop.permute.xlu0 %3660
    %3662 = vrot.lane.b32.xlu0 %v2854, 127
    %v3663 = vpop.permute.xlu0 %3662
    %3664 = vrot.lane.b32.xlu0 %v2855, 127
    %v3665 = vpop.permute.xlu0 %3664
    %3666 = vrot.lane.b32.xlu0 %v2856, 127
    %v3667 = vpop.permute.xlu0 %3666
    %3668 = vrot.lane.b32.xlu0 %v2857, 127
    %v3669 = vpop.permute.xlu0 %3668
    %3670 = vrot.lane.b32.xlu0 %v2858, 127
    %v3671 = vpop.permute.xlu0 %3670
    %3672 = vrot.lane.b32.xlu0 %v2859, 127
    %v3673 = vpop.permute.xlu0 %3672
    %3674 = vrot.lane.b32.xlu0 %v2860, 127
    %v3675 = vpop.permute.xlu0 %3674
    %3676 = vrot.lane.b32.xlu0 %v2861, 127
    %v3677 = vpop.permute.xlu0 %3676
    %3678 = vrot.lane.b32.xlu0 %v2862, 127
    %v3679 = vpop.permute.xlu0 %3678
    %3680 = vrot.lane.b32.xlu0 %v2863, 127
    %v3681 = vpop.permute.xlu0 %3680
    %3682 = vrot.lane.b32.xlu0 %v2864, 127
    %v3683 = vpop.permute.xlu0 %3682
    %3684 = vrot.lane.b32.xlu0 %v2865, 127
    %v3685 = vpop.permute.xlu0 %3684
    %3686 = vrot.lane.b32.xlu0 %v2866, 127
    %v3687 = vpop.permute.xlu0 %3686
    %3688 = vrot.lane.b32.xlu0 %v2867, 127
    %v3689 = vpop.permute.xlu0 %3688
    %3690 = vrot.lane.b32.xlu0 %v2868, 127
    %v3691 = vpop.permute.xlu0 %3690
    %3692 = vrot.lane.b32.xlu0 %v2869, 127
    %v3693 = vpop.permute.xlu0 %3692
    %3694 = vrot.lane.b32.xlu0 %v2870, 127
    %v3695 = vpop.permute.xlu0 %3694
    %3696 = vrot.lane.b32.xlu0 %v2871, 127
    %v3697 = vpop.permute.xlu0 %3696
    %3698 = vrot.lane.b32.xlu0 %v2872, 127
    %v3699 = vpop.permute.xlu0 %3698
    %3700 = vrot.lane.b32.xlu0 %v2873, 127
    %v3701 = vpop.permute.xlu0 %3700
    %3702 = vrot.lane.b32.xlu0 %v2874, 127
    %v3703 = vpop.permute.xlu0 %3702
    %3704 = vrot.lane.b32.xlu0 %v2875, 127
    %v3705 = vpop.permute.xlu0 %3704
    %3706 = vrot.lane.b32.xlu0 %v2876, 127
    %v3707 = vpop.permute.xlu0 %3706
    %3708 = vrot.lane.b32.xlu0 %v2877, 127
    %v3709 = vpop.permute.xlu0 %3708
    %3710 = vrot.lane.b32.xlu0 %v2878, 127
    %v3711 = vpop.permute.xlu0 %3710
    %3712 = vrot.lane.b32.xlu0 %v2879, 127
    %v3713 = vpop.permute.xlu0 %3712
    %v3714 = vsel %vm796, %v3655, %v3657
    %v3715 = vsel %vm796, %v3657, %v3659
    %v3716 = vsel %vm796, %v3659, %v3661
    %v3717 = vsel %vm796, %v3661, %v3663
    %v3718 = vsel %vm796, %v3663, %v3665
    %v3719 = vsel %vm796, %v3665, %v3667
    %v3720 = vsel %vm796, %v3667, %v3669
    %v3721 = vsel %vm796, %v3669, %v3671
    %v3722 = vsel %vm796, %v3671, %v3673
    %v3723 = vsel %vm796, %v3673, %v3675
    %v3724 = vsel %vm796, %v3675, %v3677
    %v3725 = vsel %vm796, %v3677, %v3679
    %v3726 = vsel %vm796, %v3679, %v3681
    %v3727 = vsel %vm796, %v3681, %v3683
    %v3728 = vsel %vm796, %v3685, %v3687
    %v3729 = vsel %vm796, %v3687, %v3689
    %v3730 = vsel %vm796, %v3689, %v3691
    %v3731 = vsel %vm796, %v3691, %v3693
    %v3732 = vsel %vm796, %v3693, %v3695
    %v3733 = vsel %vm796, %v3695, %v3697
    %v3734 = vsel %vm796, %v3697, %v3699
    %v3735 = vsel %vm796, %v3699, %v3701
    %v3736 = vsel %vm796, %v3701, %v3703
    %v3737 = vsel %vm796, %v3703, %v3705
    %v3738 = vsel %vm796, %v3705, %v3707
    %v3739 = vsel %vm796, %v3707, %v3709
    %v3740 = vsel %vm796, %v3709, %v3711
    %v3741 = vsel %vm796, %v3711, %v3713
    %v3773 = vsel %vm3033, %v2880, 0
    %v3776 = vsel %vm3033, %v2881, 0
    %3778 = vmatprep.subr.mxu0 0.0
    %3779 = vmatpush1.msra.mxu0 0.0
    %3780 = vmatprep.subr.mxu0 0.0
    %3781 = vmatpush1.msra.mxu0 0.0
    %3782 = vmatprep.subr.mxu0 0.0
    %3783 = vmatpush1.msra.mxu0 0.0
    %3784 = vmatprep.subr.mxu0 0.0
    %3785 = vmatpush1.msra.mxu0 0.0
    %3786 = vmatprep.subr.mxu0 0.0
    %3787 = vmatpush1.msra.mxu0 0.0
    %3788 = vmatprep.subr.mxu0 0.0
    %3789 = vmatpush1.msra.mxu0 0.0
    %3790 = vmatprep.subr.mxu0 0.0
    %3791 = vmatpush1.msra.mxu0 0.0
    %3792 = vmatprep.subr.mxu0 0.0
    %3793 = vmatpush1.msra.mxu0 0.0
    %3794 = vmatprep.subr.mxu0 0.0
    %3795 = vmatpush1.msra.mxu0 0.0
    %3796 = vmatprep.subr.mxu0 0.0
    %3797 = vmatpush1.msra.mxu0 0.0
    %3798 = vmatprep.subr.mxu0 0.0
    %3799 = vmatpush1.msra.mxu0 0.0
    %3800 = vmatprep.subr.mxu0 0.0
    %3801 = vmatpush1.msra.mxu0 0.0
    %3802 = vmatprep.subr.mxu0 0.0
    %3803 = vmatpush1.msra.mxu0 0.0
    %3804 = vmatprep.subr.mxu0 0.0
    %3805 = vmatpush1.msra.mxu0 0.0
    %3806 = vmatprep.subr.mxu0 %v3729
    %3807 = vmatpush1.msra.mxu0 %v3728
    %3808 = vmatprep.subr.mxu0 %v3715
    %3809 = vmatpush1.msra.mxu0 %v3714
    %3810 = vmatprep.subr.mxu0 0.0
    %3811 = vmatpush2.msra.mxu0 0.0
    %3812 = vmatprep.subr.mxu0 0.0
    %3813 = vmatpush2.msra.mxu0 0.0
    %3814 = vmatprep.subr.mxu0 0.0
    %3815 = vmatpush2.msra.mxu0 0.0
    %3816 = vmatprep.subr.mxu0 0.0
    %3817 = vmatpush2.msra.mxu0 0.0
    %3818 = vmatprep.subr.mxu0 0.0
    %3819 = vmatpush2.msra.mxu0 0.0
    %3820 = vmatprep.subr.mxu0 0.0
    %3821 = vmatpush2.msra.mxu0 0.0
    %3822 = vmatprep.subr.mxu0 0.0
    %3823 = vmatpush2.msra.mxu0 0.0
    %3824 = vmatprep.subr.mxu0 0.0
    %3825 = vmatpush2.msra.mxu0 0.0
    %3826 = vmatprep.subr.mxu0 0.0
    %3827 = vmatpush2.msra.mxu0 0.0
    %3828 = vmatprep.subr.mxu0 0.0
    %3829 = vmatpush2.msra.mxu0 0.0
    %3830 = vmatprep.subr.mxu0 0.0
    %3831 = vmatpush2.msra.mxu0 0.0
    %3832 = vmatprep.subr.mxu0 0.0
    %3833 = vmatpush2.msra.mxu0 0.0
    %3834 = vmatprep.subr.mxu0 0.0
    %3835 = vmatpush2.msra.mxu0 0.0
    %3836 = vmatprep.subr.mxu0 0.0
    %3837 = vmatpush2.msra.mxu0 0.0
    %3838 = vmatprep.subr.mxu0 0.0
    %3839 = vmatpush2.msra.mxu0 0.0
    %3840 = vmatprep.subr.mxu0 0.0
    %3841 = vmatpush2.msra.mxu0 0.0
    %3842 = vmatprep.mubr.f32.mxu0 0.0
    %3843 = vmatmul.mubr.f32.gmra.mxu0 %v3773
    %v3844 = vpop.f32.mrf.mxu0
    %v3845 = vadd.f32 %v3107, %v3844
    %v3846 = vpop.f32.mrf.mxu0
    %v3847 = vadd.f32 %v3109, %v3846
    %3848 = vmatprep.mubr.f32.mxu0 0.0
    %3849 = vmatmul.mubr.f32.gmra.mxu0 %v3776
    %v3850 = vpop.f32.mrf.mxu0
    %v3851 = vadd.f32 %v3113, %v3850
    %v3852 = vpop.f32.mrf.mxu0
    %v3853 = vadd.f32 %v3115, %v3852
    %3854 = vdwg.mxu0
    %3855 = vmatprep.subr.mxu0 0.0
    %3856 = vmatpush1.msra.mxu0 0.0
    %3857 = vmatprep.subr.mxu0 0.0
    %3858 = vmatpush1.msra.mxu0 0.0
    %3859 = vmatprep.subr.mxu0 0.0
    %3860 = vmatpush1.msra.mxu0 0.0
    %3861 = vmatprep.subr.mxu0 0.0
    %3862 = vmatpush1.msra.mxu0 0.0
    %3863 = vmatprep.subr.mxu0 0.0
    %3864 = vmatpush1.msra.mxu0 0.0
    %3865 = vmatprep.subr.mxu0 0.0
    %3866 = vmatpush1.msra.mxu0 0.0
    %3867 = vmatprep.subr.mxu0 0.0
    %3868 = vmatpush1.msra.mxu0 0.0
    %3869 = vmatprep.subr.mxu0 0.0
    %3870 = vmatpush1.msra.mxu0 0.0
    %3871 = vmatprep.subr.mxu0 0.0
    %3872 = vmatpush1.msra.mxu0 0.0
    %3873 = vmatprep.subr.mxu0 0.0
    %3874 = vmatpush1.msra.mxu0 0.0
    %3875 = vmatprep.subr.mxu0 0.0
    %3876 = vmatpush1.msra.mxu0 0.0
    %3877 = vmatprep.subr.mxu0 0.0
    %3878 = vmatpush1.msra.mxu0 0.0
    %3879 = vmatprep.subr.mxu0 0.0
    %3880 = vmatpush1.msra.mxu0 0.0
    %3881 = vmatprep.subr.mxu0 0.0
    %3882 = vmatpush1.msra.mxu0 0.0
    %3883 = vmatprep.subr.mxu0 %v3731
    %3884 = vmatpush1.msra.mxu0 %v3730
    %3885 = vmatprep.subr.mxu0 %v3717
    %3886 = vmatpush1.msra.mxu0 %v3716
    %3887 = vmatprep.subr.mxu0 0.0
    %3888 = vmatpush2.msra.mxu0 0.0
    %3889 = vmatprep.subr.mxu0 0.0
    %3890 = vmatpush2.msra.mxu0 0.0
    %3891 = vmatprep.subr.mxu0 0.0
    %3892 = vmatpush2.msra.mxu0 0.0
    %3893 = vmatprep.subr.mxu0 0.0
    %3894 = vmatpush2.msra.mxu0 0.0
    %3895 = vmatprep.subr.mxu0 0.0
    %3896 = vmatpush2.msra.mxu0 0.0
    %3897 = vmatprep.subr.mxu0 0.0
    %3898 = vmatpush2.msra.mxu0 0.0
    %3899 = vmatprep.subr.mxu0 0.0
    %3900 = vmatpush2.msra.mxu0 0.0
    %3901 = vmatprep.subr.mxu0 0.0
    %3902 = vmatpush2.msra.mxu0 0.0
    %3903 = vmatprep.subr.mxu0 0.0
    %3904 = vmatpush2.msra.mxu0 0.0
    %3905 = vmatprep.subr.mxu0 0.0
    %3906 = vmatpush2.msra.mxu0 0.0
    %3907 = vmatprep.subr.mxu0 0.0
    %3908 = vmatpush2.msra.mxu0 0.0
    %3909 = vmatprep.subr.mxu0 0.0
    %3910 = vmatpush2.msra.mxu0 0.0
    %3911 = vmatprep.subr.mxu0 0.0
    %3912 = vmatpush2.msra.mxu0 0.0
    %3913 = vmatprep.subr.mxu0 0.0
    %3914 = vmatpush2.msra.mxu0 0.0
    %3915 = vmatprep.subr.mxu0 0.0
    %3916 = vmatpush2.msra.mxu0 0.0
    %3917 = vmatprep.subr.mxu0 0.0
    %3918 = vmatpush2.msra.mxu0 0.0
    %3919 = vmatprep.mubr.f32.mxu0 0.0
    %3920 = vmatmul.mubr.f32.gmra.mxu0 %v3773
    %v3921 = vpop.f32.mrf.mxu0
    %v3922 = vadd.f32 %v3184, %v3921
    %v3923 = vpop.f32.mrf.mxu0
    %v3924 = vadd.f32 %v3186, %v3923
    %3925 = vmatprep.mubr.f32.mxu0 0.0
    %3926 = vmatmul.mubr.f32.gmra.mxu0 %v3776
    %v3927 = vpop.f32.mrf.mxu0
    %v3928 = vadd.f32 %v3190, %v3927
    %v3929 = vpop.f32.mrf.mxu0
    %v3930 = vadd.f32 %v3192, %v3929
    %3931 = vdwg.mxu0
    %3932 = vmatprep.subr.mxu0 0.0
    %3933 = vmatpush1.msra.mxu0 0.0
    %3934 = vmatprep.subr.mxu0 0.0
    %3935 = vmatpush1.msra.mxu0 0.0
    %3936 = vmatprep.subr.mxu0 0.0
    %3937 = vmatpush1.msra.mxu0 0.0
    %3938 = vmatprep.subr.mxu0 0.0
    %3939 = vmatpush1.msra.mxu0 0.0
    %3940 = vmatprep.subr.mxu0 0.0
    %3941 = vmatpush1.msra.mxu0 0.0
    %3942 = vmatprep.subr.mxu0 0.0
    %3943 = vmatpush1.msra.mxu0 0.0
    %3944 = vmatprep.subr.mxu0 0.0
    %3945 = vmatpush1.msra.mxu0 0.0
    %3946 = vmatprep.subr.mxu0 0.0
    %3947 = vmatpush1.msra.mxu0 0.0
    %3948 = vmatprep.subr.mxu0 0.0
    %3949 = vmatpush1.msra.mxu0 0.0
    %3950 = vmatprep.subr.mxu0 0.0
    %3951 = vmatpush1.msra.mxu0 0.0
    %3952 = vmatprep.subr.mxu0 0.0
    %3953 = vmatpush1.msra.mxu0 0.0
    %3954 = vmatprep.subr.mxu0 0.0
    %3955 = vmatpush1.msra.mxu0 0.0
    %3956 = vmatprep.subr.mxu0 0.0
    %3957 = vmatpush1.msra.mxu0 0.0
    %3958 = vmatprep.subr.mxu0 0.0
    %3959 = vmatpush1.msra.mxu0 0.0
    %3960 = vmatprep.subr.mxu0 %v3733
    %3961 = vmatpush1.msra.mxu0 %v3732
    %3962 = vmatprep.subr.mxu0 %v3719
    %3963 = vmatpush1.msra.mxu0 %v3718
    %3964 = vmatprep.subr.mxu0 0.0
    %3965 = vmatpush2.msra.mxu0 0.0
    %3966 = vmatprep.subr.mxu0 0.0
    %3967 = vmatpush2.msra.mxu0 0.0
    %3968 = vmatprep.subr.mxu0 0.0
    %3969 = vmatpush2.msra.mxu0 0.0
    %3970 = vmatprep.subr.mxu0 0.0
    %3971 = vmatpush2.msra.mxu0 0.0
    %3972 = vmatprep.subr.mxu0 0.0
    %3973 = vmatpush2.msra.mxu0 0.0
    %3974 = vmatprep.subr.mxu0 0.0
    %3975 = vmatpush2.msra.mxu0 0.0
    %3976 = vmatprep.subr.mxu0 0.0
    %3977 = vmatpush2.msra.mxu0 0.0
    %3978 = vmatprep.subr.mxu0 0.0
    %3979 = vmatpush2.msra.mxu0 0.0
    %3980 = vmatprep.subr.mxu0 0.0
    %3981 = vmatpush2.msra.mxu0 0.0
    %3982 = vmatprep.subr.mxu0 0.0
    %3983 = vmatpush2.msra.mxu0 0.0
    %3984 = vmatprep.subr.mxu0 0.0
    %3985 = vmatpush2.msra.mxu0 0.0
    %3986 = vmatprep.subr.mxu0 0.0
    %3987 = vmatpush2.msra.mxu0 0.0
    %3988 = vmatprep.subr.mxu0 0.0
    %3989 = vmatpush2.msra.mxu0 0.0
    %3990 = vmatprep.subr.mxu0 0.0
    %3991 = vmatpush2.msra.mxu0 0.0
    %3992 = vmatprep.subr.mxu0 0.0
    %3993 = vmatpush2.msra.mxu0 0.0
    %3994 = vmatprep.subr.mxu0 0.0
    %3995 = vmatpush2.msra.mxu0 0.0
    %3996 = vmatprep.mubr.f32.mxu0 0.0
    %3997 = vmatmul.mubr.f32.gmra.mxu0 %v3773
    %v3998 = vpop.f32.mrf.mxu0
    %v3999 = vadd.f32 %v3261, %v3998
    %v4000 = vpop.f32.mrf.mxu0
    %v4001 = vadd.f32 %v3263, %v4000
    %4002 = vmatprep.mubr.f32.mxu0 0.0
    %4003 = vmatmul.mubr.f32.gmra.mxu0 %v3776
    %v4004 = vpop.f32.mrf.mxu0
    %v4005 = vadd.f32 %v3267, %v4004
    %v4006 = vpop.f32.mrf.mxu0
    %v4007 = vadd.f32 %v3269, %v4006
    %4008 = vdwg.mxu0
    %4009 = vmatprep.subr.mxu0 0.0
    %4010 = vmatpush1.msra.mxu0 0.0
    %4011 = vmatprep.subr.mxu0 0.0
    %4012 = vmatpush1.msra.mxu0 0.0
    %4013 = vmatprep.subr.mxu0 0.0
    %4014 = vmatpush1.msra.mxu0 0.0
    %4015 = vmatprep.subr.mxu0 0.0
    %4016 = vmatpush1.msra.mxu0 0.0
    %4017 = vmatprep.subr.mxu0 0.0
    %4018 = vmatpush1.msra.mxu0 0.0
    %4019 = vmatprep.subr.mxu0 0.0
    %4020 = vmatpush1.msra.mxu0 0.0
    %4021 = vmatprep.subr.mxu0 0.0
    %4022 = vmatpush1.msra.mxu0 0.0
    %4023 = vmatprep.subr.mxu0 0.0
    %4024 = vmatpush1.msra.mxu0 0.0
    %4025 = vmatprep.subr.mxu0 0.0
    %4026 = vmatpush1.msra.mxu0 0.0
    %4027 = vmatprep.subr.mxu0 0.0
    %4028 = vmatpush1.msra.mxu0 0.0
    %4029 = vmatprep.subr.mxu0 0.0
    %4030 = vmatpush1.msra.mxu0 0.0
    %4031 = vmatprep.subr.mxu0 0.0
    %4032 = vmatpush1.msra.mxu0 0.0
    %4033 = vmatprep.subr.mxu0 0.0
    %4034 = vmatpush1.msra.mxu0 0.0
    %4035 = vmatprep.subr.mxu0 0.0
    %4036 = vmatpush1.msra.mxu0 0.0
    %4037 = vmatprep.subr.mxu0 %v3735
    %4038 = vmatpush1.msra.mxu0 %v3734
    %4039 = vmatprep.subr.mxu0 %v3721
    %4040 = vmatpush1.msra.mxu0 %v3720
    %4041 = vmatprep.subr.mxu0 0.0
    %4042 = vmatpush2.msra.mxu0 0.0
    %4043 = vmatprep.subr.mxu0 0.0
    %4044 = vmatpush2.msra.mxu0 0.0
    %4045 = vmatprep.subr.mxu0 0.0
    %4046 = vmatpush2.msra.mxu0 0.0
    %4047 = vmatprep.subr.mxu0 0.0
    %4048 = vmatpush2.msra.mxu0 0.0
    %4049 = vmatprep.subr.mxu0 0.0
    %4050 = vmatpush2.msra.mxu0 0.0
    %4051 = vmatprep.subr.mxu0 0.0
    %4052 = vmatpush2.msra.mxu0 0.0
    %4053 = vmatprep.subr.mxu0 0.0
    %4054 = vmatpush2.msra.mxu0 0.0
    %4055 = vmatprep.subr.mxu0 0.0
    %4056 = vmatpush2.msra.mxu0 0.0
    %4057 = vmatprep.subr.mxu0 0.0
    %4058 = vmatpush2.msra.mxu0 0.0
    %4059 = vmatprep.subr.mxu0 0.0
    %4060 = vmatpush2.msra.mxu0 0.0
    %4061 = vmatprep.subr.mxu0 0.0
    %4062 = vmatpush2.msra.mxu0 0.0
    %4063 = vmatprep.subr.mxu0 0.0
    %4064 = vmatpush2.msra.mxu0 0.0
    %4065 = vmatprep.subr.mxu0 0.0
    %4066 = vmatpush2.msra.mxu0 0.0
    %4067 = vmatprep.subr.mxu0 0.0
    %4068 = vmatpush2.msra.mxu0 0.0
    %4069 = vmatprep.subr.mxu0 0.0
    %4070 = vmatpush2.msra.mxu0 0.0
    %4071 = vmatprep.subr.mxu0 0.0
    %4072 = vmatpush2.msra.mxu0 0.0
    %4073 = vmatprep.mubr.f32.mxu0 0.0
    %4074 = vmatmul.mubr.f32.gmra.mxu0 %v3773
    %v4075 = vpop.f32.mrf.mxu0
    %v4076 = vadd.f32 %v3338, %v4075
    %v4077 = vpop.f32.mrf.mxu0
    %v4078 = vadd.f32 %v3340, %v4077
    %4079 = vmatprep.mubr.f32.mxu0 0.0
    %4080 = vmatmul.mubr.f32.gmra.mxu0 %v3776
    %v4081 = vpop.f32.mrf.mxu0
    %v4082 = vadd.f32 %v3344, %v4081
    %v4083 = vpop.f32.mrf.mxu0
    %v4084 = vadd.f32 %v3346, %v4083
    %4085 = vdwg.mxu0
    %4086 = vmatprep.subr.mxu0 0.0
    %4087 = vmatpush1.msra.mxu0 0.0
    %4088 = vmatprep.subr.mxu0 0.0
    %4089 = vmatpush1.msra.mxu0 0.0
    %4090 = vmatprep.subr.mxu0 0.0
    %4091 = vmatpush1.msra.mxu0 0.0
    %4092 = vmatprep.subr.mxu0 0.0
    %4093 = vmatpush1.msra.mxu0 0.0
    %4094 = vmatprep.subr.mxu0 0.0
    %4095 = vmatpush1.msra.mxu0 0.0
    %4096 = vmatprep.subr.mxu0 0.0
    %4097 = vmatpush1.msra.mxu0 0.0
    %4098 = vmatprep.subr.mxu0 0.0
    %4099 = vmatpush1.msra.mxu0 0.0
    %4100 = vmatprep.subr.mxu0 0.0
    %4101 = vmatpush1.msra.mxu0 0.0
    %4102 = vmatprep.subr.mxu0 0.0
    %4103 = vmatpush1.msra.mxu0 0.0
    %4104 = vmatprep.subr.mxu0 0.0
    %4105 = vmatpush1.msra.mxu0 0.0
    %4106 = vmatprep.subr.mxu0 0.0
    %4107 = vmatpush1.msra.mxu0 0.0
    %4108 = vmatprep.subr.mxu0 0.0
    %4109 = vmatpush1.msra.mxu0 0.0
    %4110 = vmatprep.subr.mxu0 0.0
    %4111 = vmatpush1.msra.mxu0 0.0
    %4112 = vmatprep.subr.mxu0 0.0
    %4113 = vmatpush1.msra.mxu0 0.0
    %4114 = vmatprep.subr.mxu0 %v3737
    %4115 = vmatpush1.msra.mxu0 %v3736
    %4116 = vmatprep.subr.mxu0 %v3723
    %4117 = vmatpush1.msra.mxu0 %v3722
    %4118 = vmatprep.subr.mxu0 0.0
    %4119 = vmatpush2.msra.mxu0 0.0
    %4120 = vmatprep.subr.mxu0 0.0
    %4121 = vmatpush2.msra.mxu0 0.0
    %4122 = vmatprep.subr.mxu0 0.0
    %4123 = vmatpush2.msra.mxu0 0.0
    %4124 = vmatprep.subr.mxu0 0.0
    %4125 = vmatpush2.msra.mxu0 0.0
    %4126 = vmatprep.subr.mxu0 0.0
    %4127 = vmatpush2.msra.mxu0 0.0
    %4128 = vmatprep.subr.mxu0 0.0
    %4129 = vmatpush2.msra.mxu0 0.0
    %4130 = vmatprep.subr.mxu0 0.0
    %4131 = vmatpush2.msra.mxu0 0.0
    %4132 = vmatprep.subr.mxu0 0.0
    %4133 = vmatpush2.msra.mxu0 0.0
    %4134 = vmatprep.subr.mxu0 0.0
    %4135 = vmatpush2.msra.mxu0 0.0
    %4136 = vmatprep.subr.mxu0 0.0
    %4137 = vmatpush2.msra.mxu0 0.0
    %4138 = vmatprep.subr.mxu0 0.0
    %4139 = vmatpush2.msra.mxu0 0.0
    %4140 = vmatprep.subr.mxu0 0.0
    %4141 = vmatpush2.msra.mxu0 0.0
    %4142 = vmatprep.subr.mxu0 0.0
    %4143 = vmatpush2.msra.mxu0 0.0
    %4144 = vmatprep.subr.mxu0 0.0
    %4145 = vmatpush2.msra.mxu0 0.0
    %4146 = vmatprep.subr.mxu0 0.0
    %4147 = vmatpush2.msra.mxu0 0.0
    %4148 = vmatprep.subr.mxu0 0.0
    %4149 = vmatpush2.msra.mxu0 0.0
    %4150 = vmatprep.mubr.f32.mxu0 0.0
    %4151 = vmatmul.mubr.f32.gmra.mxu0 %v3773
    %v4152 = vpop.f32.mrf.mxu0
    %v4153 = vadd.f32 %v3415, %v4152
    %v4154 = vpop.f32.mrf.mxu0
    %v4155 = vadd.f32 %v3417, %v4154
    %4156 = vmatprep.mubr.f32.mxu0 0.0
    %4157 = vmatmul.mubr.f32.gmra.mxu0 %v3776
    %v4158 = vpop.f32.mrf.mxu0
    %v4159 = vadd.f32 %v3421, %v4158
    %v4160 = vpop.f32.mrf.mxu0
    %v4161 = vadd.f32 %v3423, %v4160
    %4162 = vdwg.mxu0
    %4163 = vmatprep.subr.mxu0 0.0
    %4164 = vmatpush1.msra.mxu0 0.0
    %4165 = vmatprep.subr.mxu0 0.0
    %4166 = vmatpush1.msra.mxu0 0.0
    %4167 = vmatprep.subr.mxu0 0.0
    %4168 = vmatpush1.msra.mxu0 0.0
    %4169 = vmatprep.subr.mxu0 0.0
    %4170 = vmatpush1.msra.mxu0 0.0
    %4171 = vmatprep.subr.mxu0 0.0
    %4172 = vmatpush1.msra.mxu0 0.0
    %4173 = vmatprep.subr.mxu0 0.0
    %4174 = vmatpush1.msra.mxu0 0.0
    %4175 = vmatprep.subr.mxu0 0.0
    %4176 = vmatpush1.msra.mxu0 0.0
    %4177 = vmatprep.subr.mxu0 0.0
    %4178 = vmatpush1.msra.mxu0 0.0
    %4179 = vmatprep.subr.mxu0 0.0
    %4180 = vmatpush1.msra.mxu0 0.0
    %4181 = vmatprep.subr.mxu0 0.0
    %4182 = vmatpush1.msra.mxu0 0.0
    %4183 = vmatprep.subr.mxu0 0.0
    %4184 = vmatpush1.msra.mxu0 0.0
    %4185 = vmatprep.subr.mxu0 0.0
    %4186 = vmatpush1.msra.mxu0 0.0
    %4187 = vmatprep.subr.mxu0 0.0
    %4188 = vmatpush1.msra.mxu0 0.0
    %4189 = vmatprep.subr.mxu0 0.0
    %4190 = vmatpush1.msra.mxu0 0.0
    %4191 = vmatprep.subr.mxu0 %v3739
    %4192 = vmatpush1.msra.mxu0 %v3738
    %4193 = vmatprep.subr.mxu0 %v3725
    %4194 = vmatpush1.msra.mxu0 %v3724
    %4195 = vmatprep.subr.mxu0 0.0
    %4196 = vmatpush2.msra.mxu0 0.0
    %4197 = vmatprep.subr.mxu0 0.0
    %4198 = vmatpush2.msra.mxu0 0.0
    %4199 = vmatprep.subr.mxu0 0.0
    %4200 = vmatpush2.msra.mxu0 0.0
    %4201 = vmatprep.subr.mxu0 0.0
    %4202 = vmatpush2.msra.mxu0 0.0
    %4203 = vmatprep.subr.mxu0 0.0
    %4204 = vmatpush2.msra.mxu0 0.0
    %4205 = vmatprep.subr.mxu0 0.0
    %4206 = vmatpush2.msra.mxu0 0.0
    %4207 = vmatprep.subr.mxu0 0.0
    %4208 = vmatpush2.msra.mxu0 0.0
    %4209 = vmatprep.subr.mxu0 0.0
    %4210 = vmatpush2.msra.mxu0 0.0
    %4211 = vmatprep.subr.mxu0 0.0
    %4212 = vmatpush2.msra.mxu0 0.0
    %4213 = vmatprep.subr.mxu0 0.0
    %4214 = vmatpush2.msra.mxu0 0.0
    %4215 = vmatprep.subr.mxu0 0.0
    %4216 = vmatpush2.msra.mxu0 0.0
    %4217 = vmatprep.subr.mxu0 0.0
    %4218 = vmatpush2.msra.mxu0 0.0
    %4219 = vmatprep.subr.mxu0 0.0
    %4220 = vmatpush2.msra.mxu0 0.0
    %4221 = vmatprep.subr.mxu0 0.0
    %4222 = vmatpush2.msra.mxu0 0.0
    %4223 = vmatprep.subr.mxu0 0.0
    %4224 = vmatpush2.msra.mxu0 0.0
    %4225 = vmatprep.subr.mxu0 0.0
    %4226 = vmatpush2.msra.mxu0 0.0
    %4227 = vmatprep.mubr.f32.mxu0 0.0
    %4228 = vmatmul.mubr.f32.gmra.mxu0 %v3773
    %v4229 = vpop.f32.mrf.mxu0
    %v4230 = vadd.f32 %v3492, %v4229
    %v4231 = vpop.f32.mrf.mxu0
    %v4232 = vadd.f32 %v3494, %v4231
    %4233 = vmatprep.mubr.f32.mxu0 0.0
    %4234 = vmatmul.mubr.f32.gmra.mxu0 %v3776
    %v4235 = vpop.f32.mrf.mxu0
    %v4236 = vadd.f32 %v3498, %v4235
    %v4237 = vpop.f32.mrf.mxu0
    %v4238 = vadd.f32 %v3500, %v4237
    %4239 = vdwg.mxu0
    %4240 = vmatprep.subr.mxu0 0.0
    %4241 = vmatpush1.msra.mxu0 0.0
    %4242 = vmatprep.subr.mxu0 0.0
    %4243 = vmatpush1.msra.mxu0 0.0
    %4244 = vmatprep.subr.mxu0 0.0
    %4245 = vmatpush1.msra.mxu0 0.0
    %4246 = vmatprep.subr.mxu0 0.0
    %4247 = vmatpush1.msra.mxu0 0.0
    %4248 = vmatprep.subr.mxu0 0.0
    %4249 = vmatpush1.msra.mxu0 0.0
    %4250 = vmatprep.subr.mxu0 0.0
    %4251 = vmatpush1.msra.mxu0 0.0
    %4252 = vmatprep.subr.mxu0 0.0
    %4253 = vmatpush1.msra.mxu0 0.0
    %4254 = vmatprep.subr.mxu0 0.0
    %4255 = vmatpush1.msra.mxu0 0.0
    %4256 = vmatprep.subr.mxu0 0.0
    %4257 = vmatpush1.msra.mxu0 0.0
    %4258 = vmatprep.subr.mxu0 0.0
    %4259 = vmatpush1.msra.mxu0 0.0
    %4260 = vmatprep.subr.mxu0 0.0
    %4261 = vmatpush1.msra.mxu0 0.0
    %4262 = vmatprep.subr.mxu0 0.0
    %4263 = vmatpush1.msra.mxu0 0.0
    %4264 = vmatprep.subr.mxu0 0.0
    %4265 = vmatpush1.msra.mxu0 0.0
    %4266 = vmatprep.subr.mxu0 0.0
    %4267 = vmatpush1.msra.mxu0 0.0
    %4268 = vmatprep.subr.mxu0 %v3741
    %4269 = vmatpush1.msra.mxu0 %v3740
    %4270 = vmatprep.subr.mxu0 %v3727
    %4271 = vmatpush1.msra.mxu0 %v3726
    %4272 = vmatprep.subr.mxu0 0.0
    %4273 = vmatpush2.msra.mxu0 0.0
    %4274 = vmatprep.subr.mxu0 0.0
    %4275 = vmatpush2.msra.mxu0 0.0
    %4276 = vmatprep.subr.mxu0 0.0
    %4277 = vmatpush2.msra.mxu0 0.0
    %4278 = vmatprep.subr.mxu0 0.0
    %4279 = vmatpush2.msra.mxu0 0.0
    %4280 = vmatprep.subr.mxu0 0.0
    %4281 = vmatpush2.msra.mxu0 0.0
    %4282 = vmatprep.subr.mxu0 0.0
    %4283 = vmatpush2.msra.mxu0 0.0
    %4284 = vmatprep.subr.mxu0 0.0
    %4285 = vmatpush2.msra.mxu0 0.0
    %4286 = vmatprep.subr.mxu0 0.0
    %4287 = vmatpush2.msra.mxu0 0.0
    %4288 = vmatprep.subr.mxu0 0.0
    %4289 = vmatpush2.msra.mxu0 0.0
    %4290 = vmatprep.subr.mxu0 0.0
    %4291 = vmatpush2.msra.mxu0 0.0
    %4292 = vmatprep.subr.mxu0 0.0
    %4293 = vmatpush2.msra.mxu0 0.0
    %4294 = vmatprep.subr.mxu0 0.0
    %4295 = vmatpush2.msra.mxu0 0.0
    %4296 = vmatprep.subr.mxu0 0.0
    %4297 = vmatpush2.msra.mxu0 0.0
    %4298 = vmatprep.subr.mxu0 0.0
    %4299 = vmatpush2.msra.mxu0 0.0
    %4300 = vmatprep.subr.mxu0 0.0
    %4301 = vmatpush2.msra.mxu0 0.0
    %4302 = vmatprep.subr.mxu0 0.0
    %4303 = vmatpush2.msra.mxu0 0.0
    %4304 = vmatprep.mubr.f32.mxu0 0.0
    %4305 = vmatmul.mubr.f32.gmra.mxu0 %v3773
    %v4306 = vpop.f32.mrf.mxu0
    %v4307 = vadd.f32 %v3569, %v4306
    %v4308 = vpop.f32.mrf.mxu0
    %v4309 = vadd.f32 %v3571, %v4308
    %4310 = vmatprep.mubr.f32.mxu0 0.0
    %4311 = vmatmul.mubr.f32.gmra.mxu0 %v3776
    %v4312 = vpop.f32.mrf.mxu0
    %v4313 = vadd.f32 %v3575, %v4312
    %v4314 = vpop.f32.mrf.mxu0
    %v4315 = vadd.f32 %v3577, %v4314
    %4316 = vdwg.mxu0
    %4317 = vmatprep.subr.mxu0 0.0
    %4318 = vmatpush1.msra.mxu0 0.0
    %4319 = vmatprep.subr.mxu0 0.0
    %4320 = vmatpush1.msra.mxu0 0.0
    %4321 = vmatprep.subr.mxu0 0.0
    %4322 = vmatpush1.msra.mxu0 0.0
    %4323 = vmatprep.subr.mxu0 0.0
    %4324 = vmatpush1.msra.mxu0 0.0
    %4325 = vmatprep.subr.mxu0 0.0
    %4326 = vmatpush1.msra.mxu0 0.0
    %4327 = vmatprep.subr.mxu0 0.0
    %4328 = vmatpush1.msra.mxu0 0.0
    %4329 = vmatprep.subr.mxu0 0.0
    %4330 = vmatpush1.msra.mxu0 0.0
    %4331 = vmatprep.subr.mxu0 0.0
    %4332 = vmatpush1.msra.mxu0 0.0
    %4333 = vmatprep.subr.mxu0 0.0
    %4334 = vmatpush1.msra.mxu0 0.0
    %4335 = vmatprep.subr.mxu0 0.0
    %4336 = vmatpush1.msra.mxu0 0.0
    %4337 = vmatprep.subr.mxu0 0.0
    %4338 = vmatpush1.msra.mxu0 0.0
    %4339 = vmatprep.subr.mxu0 0.0
    %4340 = vmatpush1.msra.mxu0 0.0
    %4341 = vmatprep.subr.mxu0 0.0
    %4342 = vmatpush1.msra.mxu0 0.0
    %4343 = vmatprep.subr.mxu0 0.0
    %4344 = vmatpush1.msra.mxu0 0.0
    %4345 = vmatprep.subr.mxu0 0.0
    %4346 = vmatpush1.msra.mxu0 %v3713
    %4347 = vmatprep.subr.mxu0 0.0
    %4348 = vmatpush1.msra.mxu0 %v3683
    %4349 = vmatprep.subr.mxu0 0.0
    %4350 = vmatpush2.msra.mxu0 0.0
    %4351 = vmatprep.subr.mxu0 0.0
    %4352 = vmatpush2.msra.mxu0 0.0
    %4353 = vmatprep.subr.mxu0 0.0
    %4354 = vmatpush2.msra.mxu0 0.0
    %4355 = vmatprep.subr.mxu0 0.0
    %4356 = vmatpush2.msra.mxu0 0.0
    %4357 = vmatprep.subr.mxu0 0.0
    %4358 = vmatpush2.msra.mxu0 0.0
    %4359 = vmatprep.subr.mxu0 0.0
    %4360 = vmatpush2.msra.mxu0 0.0
    %4361 = vmatprep.subr.mxu0 0.0
    %4362 = vmatpush2.msra.mxu0 0.0
    %4363 = vmatprep.subr.mxu0 0.0
    %4364 = vmatpush2.msra.mxu0 0.0
    %4365 = vmatprep.subr.mxu0 0.0
    %4366 = vmatpush2.msra.mxu0 0.0
    %4367 = vmatprep.subr.mxu0 0.0
    %4368 = vmatpush2.msra.mxu0 0.0
    %4369 = vmatprep.subr.mxu0 0.0
    %4370 = vmatpush2.msra.mxu0 0.0
    %4371 = vmatprep.subr.mxu0 0.0
    %4372 = vmatpush2.msra.mxu0 0.0
    %4373 = vmatprep.subr.mxu0 0.0
    %4374 = vmatpush2.msra.mxu0 0.0
    %4375 = vmatprep.subr.mxu0 0.0
    %4376 = vmatpush2.msra.mxu0 0.0
    %4377 = vmatprep.subr.mxu0 0.0
    %4378 = vmatpush2.msra.mxu0 0.0
    %4379 = vmatprep.subr.mxu0 0.0
    %4380 = vmatpush2.msra.mxu0 0.0
    %4381 = vmatprep.mubr.f32.mxu0 0.0
    %4382 = vmatmul.mubr.f32.gmra.mxu0 %v3773
    %v4383 = vpop.f32.mrf.mxu0
    %v4384 = vadd.f32 %v3646, %v4383
    %v4385 = vpop.f32.mrf.mxu0
    %4386 = vmatprep.mubr.f32.mxu0 0.0
    %4387 = vmatmul.mubr.f32.gmra.mxu0 %v3776
    %v4388 = vpop.f32.mrf.mxu0
    %v4389 = vadd.f32 %v3651, %v4388
    %v4390 = vpop.f32.mrf.mxu0
    %4391 = vdwg.mxu0
    %s4392 = scalar_lea.vmem %s3, 32
    %v4393 = vld [vmem:[%s4392] sm:$0xff]
    %v4394 = vld [vmem:[%s4392 + $0x8] sm:$0xff]
    %4395 = vrot.lane.b32.xlu0 %v2850, 125
    %v4396 = vpop.permute.xlu0 %4395
    %4397 = vrot.lane.b32.xlu0 %v2851, 125
    %v4398 = vpop.permute.xlu0 %4397
    %4399 = vrot.lane.b32.xlu0 %v2852, 125
    %v4400 = vpop.permute.xlu0 %4399
    %4401 = vrot.lane.b32.xlu0 %v2853, 125
    %v4402 = vpop.permute.xlu0 %4401
    %4403 = vrot.lane.b32.xlu0 %v2854, 125
    %v4404 = vpop.permute.xlu0 %4403
    %4405 = vrot.lane.b32.xlu0 %v2855, 125
    %v4406 = vpop.permute.xlu0 %4405
    %4407 = vrot.lane.b32.xlu0 %v2856, 125
    %v4408 = vpop.permute.xlu0 %4407
    %4409 = vrot.lane.b32.xlu0 %v2857, 125
    %v4410 = vpop.permute.xlu0 %4409
    %4411 = vrot.lane.b32.xlu0 %v2858, 125
    %v4412 = vpop.permute.xlu0 %4411
    %4413 = vrot.lane.b32.xlu0 %v2859, 125
    %v4414 = vpop.permute.xlu0 %4413
    %4415 = vrot.lane.b32.xlu0 %v2860, 125
    %v4416 = vpop.permute.xlu0 %4415
    %4417 = vrot.lane.b32.xlu0 %v2861, 125
    %v4418 = vpop.permute.xlu0 %4417
    %4419 = vrot.lane.b32.xlu0 %v2862, 125
    %v4420 = vpop.permute.xlu0 %4419
    %4421 = vrot.lane.b32.xlu0 %v2863, 125
    %v4422 = vpop.permute.xlu0 %4421
    %4423 = vrot.lane.b32.xlu0 %v2864, 125
    %v4424 = vpop.permute.xlu0 %4423
    %4425 = vrot.lane.b32.xlu0 %v2865, 125
    %v4426 = vpop.permute.xlu0 %4425
    %4427 = vrot.lane.b32.xlu0 %v2866, 125
    %v4428 = vpop.permute.xlu0 %4427
    %4429 = vrot.lane.b32.xlu0 %v2867, 125
    %v4430 = vpop.permute.xlu0 %4429
    %4431 = vrot.lane.b32.xlu0 %v2868, 125
    %v4432 = vpop.permute.xlu0 %4431
    %4433 = vrot.lane.b32.xlu0 %v2869, 125
    %v4434 = vpop.permute.xlu0 %4433
    %4435 = vrot.lane.b32.xlu0 %v2870, 125
    %v4436 = vpop.permute.xlu0 %4435
    %4437 = vrot.lane.b32.xlu0 %v2871, 125
    %v4438 = vpop.permute.xlu0 %4437
    %4439 = vrot.lane.b32.xlu0 %v2872, 125
    %v4440 = vpop.permute.xlu0 %4439
    %4441 = vrot.lane.b32.xlu0 %v2873, 125
    %v4442 = vpop.permute.xlu0 %4441
    %4443 = vrot.lane.b32.xlu0 %v2874, 125
    %v4444 = vpop.permute.xlu0 %4443
    %4445 = vrot.lane.b32.xlu0 %v2875, 125
    %v4446 = vpop.permute.xlu0 %4445
    %4447 = vrot.lane.b32.xlu0 %v2876, 125
    %v4448 = vpop.permute.xlu0 %4447
    %4449 = vrot.lane.b32.xlu0 %v2877, 125
    %v4450 = vpop.permute.xlu0 %4449
    %4451 = vrot.lane.b32.xlu0 %v2878, 125
    %v4452 = vpop.permute.xlu0 %4451
    %4453 = vrot.lane.b32.xlu0 %v2879, 125
    %v4454 = vpop.permute.xlu0 %4453
    %vm4455 = vcmask 1022976
    %v4456 = vsel %vm4455, %v4396, %v4398
    %v4457 = vsel %vm4455, %v4398, %v4400
    %v4458 = vsel %vm4455, %v4400, %v4402
    %v4459 = vsel %vm4455, %v4402, %v4404
    %v4460 = vsel %vm4455, %v4404, %v4406
    %v4461 = vsel %vm4455, %v4406, %v4408
    %v4462 = vsel %vm4455, %v4408, %v4410
    %v4463 = vsel %vm4455, %v4410, %v4412
    %v4464 = vsel %vm4455, %v4412, %v4414
    %v4465 = vsel %vm4455, %v4414, %v4416
    %v4466 = vsel %vm4455, %v4416, %v4418
    %v4467 = vsel %vm4455, %v4418, %v4420
    %v4468 = vsel %vm4455, %v4420, %v4422
    %v4469 = vsel %vm4455, %v4422, %v4424
    %v4470 = vsel %vm4455, %v4426, %v4428
    %v4471 = vsel %vm4455, %v4428, %v4430
    %v4472 = vsel %vm4455, %v4430, %v4432
    %v4473 = vsel %vm4455, %v4432, %v4434
    %v4474 = vsel %vm4455, %v4434, %v4436
    %v4475 = vsel %vm4455, %v4436, %v4438
    %v4476 = vsel %vm4455, %v4438, %v4440
    %v4477 = vsel %vm4455, %v4440, %v4442
    %v4478 = vsel %vm4455, %v4442, %v4444
    %v4479 = vsel %vm4455, %v4444, %v4446
    %v4480 = vsel %vm4455, %v4446, %v4448
    %v4481 = vsel %vm4455, %v4448, %v4450
    %v4482 = vsel %vm4455, %v4450, %v4452
    %v4483 = vsel %vm4455, %v4452, %v4454
    %v4515 = vsel %vm3033, %v4393, 0
    %v4518 = vsel %vm3033, %v4394, 0
    %4520 = vmatprep.subr.mxu0 0.0
    %4521 = vmatpush1.msra.mxu0 0.0
    %4522 = vmatprep.subr.mxu0 0.0
    %4523 = vmatpush1.msra.mxu0 0.0
    %4524 = vmatprep.subr.mxu0 0.0
    %4525 = vmatpush1.msra.mxu0 0.0
    %4526 = vmatprep.subr.mxu0 0.0
    %4527 = vmatpush1.msra.mxu0 0.0
    %4528 = vmatprep.subr.mxu0 0.0
    %4529 = vmatpush1.msra.mxu0 0.0
    %4530 = vmatprep.subr.mxu0 0.0
    %4531 = vmatpush1.msra.mxu0 0.0
    %4532 = vmatprep.subr.mxu0 0.0
    %4533 = vmatpush1.msra.mxu0 0.0
    %4534 = vmatprep.subr.mxu0 0.0
    %4535 = vmatpush1.msra.mxu0 0.0
    %4536 = vmatprep.subr.mxu0 0.0
    %4537 = vmatpush1.msra.mxu0 0.0
    %4538 = vmatprep.subr.mxu0 0.0
    %4539 = vmatpush1.msra.mxu0 0.0
    %4540 = vmatprep.subr.mxu0 0.0
    %4541 = vmatpush1.msra.mxu0 0.0
    %4542 = vmatprep.subr.mxu0 0.0
    %4543 = vmatpush1.msra.mxu0 0.0
    %4544 = vmatprep.subr.mxu0 0.0
    %4545 = vmatpush1.msra.mxu0 0.0
    %4546 = vmatprep.subr.mxu0 0.0
    %4547 = vmatpush1.msra.mxu0 0.0
    %4548 = vmatprep.subr.mxu0 %v4471
    %4549 = vmatpush1.msra.mxu0 %v4470
    %4550 = vmatprep.subr.mxu0 %v4457
    %4551 = vmatpush1.msra.mxu0 %v4456
    %4552 = vmatprep.subr.mxu0 0.0
    %4553 = vmatpush2.msra.mxu0 0.0
    %4554 = vmatprep.subr.mxu0 0.0
    %4555 = vmatpush2.msra.mxu0 0.0
    %4556 = vmatprep.subr.mxu0 0.0
    %4557 = vmatpush2.msra.mxu0 0.0
    %4558 = vmatprep.subr.mxu0 0.0
    %4559 = vmatpush2.msra.mxu0 0.0
    %4560 = vmatprep.subr.mxu0 0.0
    %4561 = vmatpush2.msra.mxu0 0.0
    %4562 = vmatprep.subr.mxu0 0.0
    %4563 = vmatpush2.msra.mxu0 0.0
    %4564 = vmatprep.subr.mxu0 0.0
    %4565 = vmatpush2.msra.mxu0 0.0
    %4566 = vmatprep.subr.mxu0 0.0
    %4567 = vmatpush2.msra.mxu0 0.0
    %4568 = vmatprep.subr.mxu0 0.0
    %4569 = vmatpush2.msra.mxu0 0.0
    %4570 = vmatprep.subr.mxu0 0.0
    %4571 = vmatpush2.msra.mxu0 0.0
    %4572 = vmatprep.subr.mxu0 0.0
    %4573 = vmatpush2.msra.mxu0 0.0
    %4574 = vmatprep.subr.mxu0 0.0
    %4575 = vmatpush2.msra.mxu0 0.0
    %4576 = vmatprep.subr.mxu0 0.0
    %4577 = vmatpush2.msra.mxu0 0.0
    %4578 = vmatprep.subr.mxu0 0.0
    %4579 = vmatpush2.msra.mxu0 0.0
    %4580 = vmatprep.subr.mxu0 0.0
    %4581 = vmatpush2.msra.mxu0 0.0
    %4582 = vmatprep.subr.mxu0 0.0
    %4583 = vmatpush2.msra.mxu0 0.0
    %4584 = vmatprep.mubr.f32.mxu0 0.0
    %4585 = vmatmul.mubr.f32.gmra.mxu0 %v4515
    %v4586 = vpop.f32.mrf.mxu0
    %v4587 = vadd.f32 0.0, %v4586
    %v4588 = vpop.f32.mrf.mxu0
    %v4589 = vadd.f32 0.0, %v4588
    %4590 = vmatprep.mubr.f32.mxu0 0.0
    %4591 = vmatmul.mubr.f32.gmra.mxu0 %v4518
    %v4592 = vpop.f32.mrf.mxu0
    %v4593 = vadd.f32 0.0, %v4592
    %v4594 = vpop.f32.mrf.mxu0
    %v4595 = vadd.f32 0.0, %v4594
    %4596 = vdwg.mxu0
    %4597 = vmatprep.subr.mxu0 0.0
    %4598 = vmatpush1.msra.mxu0 0.0
    %4599 = vmatprep.subr.mxu0 0.0
    %4600 = vmatpush1.msra.mxu0 0.0
    %4601 = vmatprep.subr.mxu0 0.0
    %4602 = vmatpush1.msra.mxu0 0.0
    %4603 = vmatprep.subr.mxu0 0.0
    %4604 = vmatpush1.msra.mxu0 0.0
    %4605 = vmatprep.subr.mxu0 0.0
    %4606 = vmatpush1.msra.mxu0 0.0
    %4607 = vmatprep.subr.mxu0 0.0
    %4608 = vmatpush1.msra.mxu0 0.0
    %4609 = vmatprep.subr.mxu0 0.0
    %4610 = vmatpush1.msra.mxu0 0.0
    %4611 = vmatprep.subr.mxu0 0.0
    %4612 = vmatpush1.msra.mxu0 0.0
    %4613 = vmatprep.subr.mxu0 0.0
    %4614 = vmatpush1.msra.mxu0 0.0
    %4615 = vmatprep.subr.mxu0 0.0
    %4616 = vmatpush1.msra.mxu0 0.0
    %4617 = vmatprep.subr.mxu0 0.0
    %4618 = vmatpush1.msra.mxu0 0.0
    %4619 = vmatprep.subr.mxu0 0.0
    %4620 = vmatpush1.msra.mxu0 0.0
    %4621 = vmatprep.subr.mxu0 0.0
    %4622 = vmatpush1.msra.mxu0 0.0
    %4623 = vmatprep.subr.mxu0 0.0
    %4624 = vmatpush1.msra.mxu0 0.0
    %4625 = vmatprep.subr.mxu0 %v4473
    %4626 = vmatpush1.msra.mxu0 %v4472
    %4627 = vmatprep.subr.mxu0 %v4459
    %4628 = vmatpush1.msra.mxu0 %v4458
    %4629 = vmatprep.subr.mxu0 0.0
    %4630 = vmatpush2.msra.mxu0 0.0
    %4631 = vmatprep.subr.mxu0 0.0
    %4632 = vmatpush2.msra.mxu0 0.0
    %4633 = vmatprep.subr.mxu0 0.0
    %4634 = vmatpush2.msra.mxu0 0.0
    %4635 = vmatprep.subr.mxu0 0.0
    %4636 = vmatpush2.msra.mxu0 0.0
    %4637 = vmatprep.subr.mxu0 0.0
    %4638 = vmatpush2.msra.mxu0 0.0
    %4639 = vmatprep.subr.mxu0 0.0
    %4640 = vmatpush2.msra.mxu0 0.0
    %4641 = vmatprep.subr.mxu0 0.0
    %4642 = vmatpush2.msra.mxu0 0.0
    %4643 = vmatprep.subr.mxu0 0.0
    %4644 = vmatpush2.msra.mxu0 0.0
    %4645 = vmatprep.subr.mxu0 0.0
    %4646 = vmatpush2.msra.mxu0 0.0
    %4647 = vmatprep.subr.mxu0 0.0
    %4648 = vmatpush2.msra.mxu0 0.0
    %4649 = vmatprep.subr.mxu0 0.0
    %4650 = vmatpush2.msra.mxu0 0.0
    %4651 = vmatprep.subr.mxu0 0.0
    %4652 = vmatpush2.msra.mxu0 0.0
    %4653 = vmatprep.subr.mxu0 0.0
    %4654 = vmatpush2.msra.mxu0 0.0
    %4655 = vmatprep.subr.mxu0 0.0
    %4656 = vmatpush2.msra.mxu0 0.0
    %4657 = vmatprep.subr.mxu0 0.0
    %4658 = vmatpush2.msra.mxu0 0.0
    %4659 = vmatprep.subr.mxu0 0.0
    %4660 = vmatpush2.msra.mxu0 0.0
    %4661 = vmatprep.mubr.f32.mxu0 0.0
    %4662 = vmatmul.mubr.f32.gmra.mxu0 %v4515
    %v4663 = vpop.f32.mrf.mxu0
    %v4664 = vadd.f32 0.0, %v4663
    %v4665 = vpop.f32.mrf.mxu0
    %v4666 = vadd.f32 0.0, %v4665
    %4667 = vmatprep.mubr.f32.mxu0 0.0
    %4668 = vmatmul.mubr.f32.gmra.mxu0 %v4518
    %v4669 = vpop.f32.mrf.mxu0
    %v4670 = vadd.f32 0.0, %v4669
    %v4671 = vpop.f32.mrf.mxu0
    %v4672 = vadd.f32 0.0, %v4671
    %4673 = vdwg.mxu0
    %4674 = vmatprep.subr.mxu0 0.0
    %4675 = vmatpush1.msra.mxu0 0.0
    %4676 = vmatprep.subr.mxu0 0.0
    %4677 = vmatpush1.msra.mxu0 0.0
    %4678 = vmatprep.subr.mxu0 0.0
    %4679 = vmatpush1.msra.mxu0 0.0
    %4680 = vmatprep.subr.mxu0 0.0
    %4681 = vmatpush1.msra.mxu0 0.0
    %4682 = vmatprep.subr.mxu0 0.0
    %4683 = vmatpush1.msra.mxu0 0.0
    %4684 = vmatprep.subr.mxu0 0.0
    %4685 = vmatpush1.msra.mxu0 0.0
    %4686 = vmatprep.subr.mxu0 0.0
    %4687 = vmatpush1.msra.mxu0 0.0
    %4688 = vmatprep.subr.mxu0 0.0
    %4689 = vmatpush1.msra.mxu0 0.0
    %4690 = vmatprep.subr.mxu0 0.0
    %4691 = vmatpush1.msra.mxu0 0.0
    %4692 = vmatprep.subr.mxu0 0.0
    %4693 = vmatpush1.msra.mxu0 0.0
    %4694 = vmatprep.subr.mxu0 0.0
    %4695 = vmatpush1.msra.mxu0 0.0
    %4696 = vmatprep.subr.mxu0 0.0
    %4697 = vmatpush1.msra.mxu0 0.0
    %4698 = vmatprep.subr.mxu0 0.0
    %4699 = vmatpush1.msra.mxu0 0.0
    %4700 = vmatprep.subr.mxu0 0.0
    %4701 = vmatpush1.msra.mxu0 0.0
    %4702 = vmatprep.subr.mxu0 %v4475
    %4703 = vmatpush1.msra.mxu0 %v4474
    %4704 = vmatprep.subr.mxu0 %v4461
    %4705 = vmatpush1.msra.mxu0 %v4460
    %4706 = vmatprep.subr.mxu0 0.0
    %4707 = vmatpush2.msra.mxu0 0.0
    %4708 = vmatprep.subr.mxu0 0.0
    %4709 = vmatpush2.msra.mxu0 0.0
    %4710 = vmatprep.subr.mxu0 0.0
    %4711 = vmatpush2.msra.mxu0 0.0
    %4712 = vmatprep.subr.mxu0 0.0
    %4713 = vmatpush2.msra.mxu0 0.0
    %4714 = vmatprep.subr.mxu0 0.0
    %4715 = vmatpush2.msra.mxu0 0.0
    %4716 = vmatprep.subr.mxu0 0.0
    %4717 = vmatpush2.msra.mxu0 0.0
    %4718 = vmatprep.subr.mxu0 0.0
    %4719 = vmatpush2.msra.mxu0 0.0
    %4720 = vmatprep.subr.mxu0 0.0
    %4721 = vmatpush2.msra.mxu0 0.0
    %4722 = vmatprep.subr.mxu0 0.0
    %4723 = vmatpush2.msra.mxu0 0.0
    %4724 = vmatprep.subr.mxu0 0.0
    %4725 = vmatpush2.msra.mxu0 0.0
    %4726 = vmatprep.subr.mxu0 0.0
    %4727 = vmatpush2.msra.mxu0 0.0
    %4728 = vmatprep.subr.mxu0 0.0
    %4729 = vmatpush2.msra.mxu0 0.0
    %4730 = vmatprep.subr.mxu0 0.0
    %4731 = vmatpush2.msra.mxu0 0.0
    %4732 = vmatprep.subr.mxu0 0.0
    %4733 = vmatpush2.msra.mxu0 0.0
    %4734 = vmatprep.subr.mxu0 0.0
    %4735 = vmatpush2.msra.mxu0 0.0
    %4736 = vmatprep.subr.mxu0 0.0
    %4737 = vmatpush2.msra.mxu0 0.0
    %4738 = vmatprep.mubr.f32.mxu0 0.0
    %4739 = vmatmul.mubr.f32.gmra.mxu0 %v4515
    %v4740 = vpop.f32.mrf.mxu0
    %v4741 = vadd.f32 0.0, %v4740
    %v4742 = vpop.f32.mrf.mxu0
    %v4743 = vadd.f32 0.0, %v4742
    %4744 = vmatprep.mubr.f32.mxu0 0.0
    %4745 = vmatmul.mubr.f32.gmra.mxu0 %v4518
    %v4746 = vpop.f32.mrf.mxu0
    %v4747 = vadd.f32 0.0, %v4746
    %v4748 = vpop.f32.mrf.mxu0
    %v4749 = vadd.f32 0.0, %v4748
    %4750 = vdwg.mxu0
    %4751 = vmatprep.subr.mxu0 0.0
    %4752 = vmatpush1.msra.mxu0 0.0
    %4753 = vmatprep.subr.mxu0 0.0
    %4754 = vmatpush1.msra.mxu0 0.0
    %4755 = vmatprep.subr.mxu0 0.0
    %4756 = vmatpush1.msra.mxu0 0.0
    %4757 = vmatprep.subr.mxu0 0.0
    %4758 = vmatpush1.msra.mxu0 0.0
    %4759 = vmatprep.subr.mxu0 0.0
    %4760 = vmatpush1.msra.mxu0 0.0
    %4761 = vmatprep.subr.mxu0 0.0
    %4762 = vmatpush1.msra.mxu0 0.0
    %4763 = vmatprep.subr.mxu0 0.0
    %4764 = vmatpush1.msra.mxu0 0.0
    %4765 = vmatprep.subr.mxu0 0.0
    %4766 = vmatpush1.msra.mxu0 0.0
    %4767 = vmatprep.subr.mxu0 0.0
    %4768 = vmatpush1.msra.mxu0 0.0
    %4769 = vmatprep.subr.mxu0 0.0
    %4770 = vmatpush1.msra.mxu0 0.0
    %4771 = vmatprep.subr.mxu0 0.0
    %4772 = vmatpush1.msra.mxu0 0.0
    %4773 = vmatprep.subr.mxu0 0.0
    %4774 = vmatpush1.msra.mxu0 0.0
    %4775 = vmatprep.subr.mxu0 0.0
    %4776 = vmatpush1.msra.mxu0 0.0
    %4777 = vmatprep.subr.mxu0 0.0
    %4778 = vmatpush1.msra.mxu0 0.0
    %4779 = vmatprep.subr.mxu0 %v4477
    %4780 = vmatpush1.msra.mxu0 %v4476
    %4781 = vmatprep.subr.mxu0 %v4463
    %4782 = vmatpush1.msra.mxu0 %v4462
    %4783 = vmatprep.subr.mxu0 0.0
    %4784 = vmatpush2.msra.mxu0 0.0
    %4785 = vmatprep.subr.mxu0 0.0
    %4786 = vmatpush2.msra.mxu0 0.0
    %4787 = vmatprep.subr.mxu0 0.0
    %4788 = vmatpush2.msra.mxu0 0.0
    %4789 = vmatprep.subr.mxu0 0.0
    %4790 = vmatpush2.msra.mxu0 0.0
    %4791 = vmatprep.subr.mxu0 0.0
    %4792 = vmatpush2.msra.mxu0 0.0
    %4793 = vmatprep.subr.mxu0 0.0
    %4794 = vmatpush2.msra.mxu0 0.0
    %4795 = vmatprep.subr.mxu0 0.0
    %4796 = vmatpush2.msra.mxu0 0.0
    %4797 = vmatprep.subr.mxu0 0.0
    %4798 = vmatpush2.msra.mxu0 0.0
    %4799 = vmatprep.subr.mxu0 0.0
    %4800 = vmatpush2.msra.mxu0 0.0
    %4801 = vmatprep.subr.mxu0 0.0
    %4802 = vmatpush2.msra.mxu0 0.0
    %4803 = vmatprep.subr.mxu0 0.0
    %4804 = vmatpush2.msra.mxu0 0.0
    %4805 = vmatprep.subr.mxu0 0.0
    %4806 = vmatpush2.msra.mxu0 0.0
    %4807 = vmatprep.subr.mxu0 0.0
    %4808 = vmatpush2.msra.mxu0 0.0
    %4809 = vmatprep.subr.mxu0 0.0
    %4810 = vmatpush2.msra.mxu0 0.0
    %4811 = vmatprep.subr.mxu0 0.0
    %4812 = vmatpush2.msra.mxu0 0.0
    %4813 = vmatprep.subr.mxu0 0.0
    %4814 = vmatpush2.msra.mxu0 0.0
    %4815 = vmatprep.mubr.f32.mxu0 0.0
    %4816 = vmatmul.mubr.f32.gmra.mxu0 %v4515
    %v4817 = vpop.f32.mrf.mxu0
    %v4818 = vadd.f32 0.0, %v4817
    %v4819 = vpop.f32.mrf.mxu0
    %v4820 = vadd.f32 0.0, %v4819
    %4821 = vmatprep.mubr.f32.mxu0 0.0
    %4822 = vmatmul.mubr.f32.gmra.mxu0 %v4518
    %v4823 = vpop.f32.mrf.mxu0
    %v4824 = vadd.f32 0.0, %v4823
    %v4825 = vpop.f32.mrf.mxu0
    %v4826 = vadd.f32 0.0, %v4825
    %4827 = vdwg.mxu0
    %4828 = vmatprep.subr.mxu0 0.0
    %4829 = vmatpush1.msra.mxu0 0.0
    %4830 = vmatprep.subr.mxu0 0.0
    %4831 = vmatpush1.msra.mxu0 0.0
    %4832 = vmatprep.subr.mxu0 0.0
    %4833 = vmatpush1.msra.mxu0 0.0
    %4834 = vmatprep.subr.mxu0 0.0
    %4835 = vmatpush1.msra.mxu0 0.0
    %4836 = vmatprep.subr.mxu0 0.0
    %4837 = vmatpush1.msra.mxu0 0.0
    %4838 = vmatprep.subr.mxu0 0.0
    %4839 = vmatpush1.msra.mxu0 0.0
    %4840 = vmatprep.subr.mxu0 0.0
    %4841 = vmatpush1.msra.mxu0 0.0
    %4842 = vmatprep.subr.mxu0 0.0
    %4843 = vmatpush1.msra.mxu0 0.0
    %4844 = vmatprep.subr.mxu0 0.0
    %4845 = vmatpush1.msra.mxu0 0.0
    %4846 = vmatprep.subr.mxu0 0.0
    %4847 = vmatpush1.msra.mxu0 0.0
    %4848 = vmatprep.subr.mxu0 0.0
    %4849 = vmatpush1.msra.mxu0 0.0
    %4850 = vmatprep.subr.mxu0 0.0
    %4851 = vmatpush1.msra.mxu0 0.0
    %4852 = vmatprep.subr.mxu0 0.0
    %4853 = vmatpush1.msra.mxu0 0.0
    %4854 = vmatprep.subr.mxu0 0.0
    %4855 = vmatpush1.msra.mxu0 0.0
    %4856 = vmatprep.subr.mxu0 %v4479
    %4857 = vmatpush1.msra.mxu0 %v4478
    %4858 = vmatprep.subr.mxu0 %v4465
    %4859 = vmatpush1.msra.mxu0 %v4464
    %4860 = vmatprep.subr.mxu0 0.0
    %4861 = vmatpush2.msra.mxu0 0.0
    %4862 = vmatprep.subr.mxu0 0.0
    %4863 = vmatpush2.msra.mxu0 0.0
    %4864 = vmatprep.subr.mxu0 0.0
    %4865 = vmatpush2.msra.mxu0 0.0
    %4866 = vmatprep.subr.mxu0 0.0
    %4867 = vmatpush2.msra.mxu0 0.0
    %4868 = vmatprep.subr.mxu0 0.0
    %4869 = vmatpush2.msra.mxu0 0.0
    %4870 = vmatprep.subr.mxu0 0.0
    %4871 = vmatpush2.msra.mxu0 0.0
    %4872 = vmatprep.subr.mxu0 0.0
    %4873 = vmatpush2.msra.mxu0 0.0
    %4874 = vmatprep.subr.mxu0 0.0
    %4875 = vmatpush2.msra.mxu0 0.0
    %4876 = vmatprep.subr.mxu0 0.0
    %4877 = vmatpush2.msra.mxu0 0.0
    %4878 = vmatprep.subr.mxu0 0.0
    %4879 = vmatpush2.msra.mxu0 0.0
    %4880 = vmatprep.subr.mxu0 0.0
    %4881 = vmatpush2.msra.mxu0 0.0
    %4882 = vmatprep.subr.mxu0 0.0
    %4883 = vmatpush2.msra.mxu0 0.0
    %4884 = vmatprep.subr.mxu0 0.0
    %4885 = vmatpush2.msra.mxu0 0.0
    %4886 = vmatprep.subr.mxu0 0.0
    %4887 = vmatpush2.msra.mxu0 0.0
    %4888 = vmatprep.subr.mxu0 0.0
    %4889 = vmatpush2.msra.mxu0 0.0
    %4890 = vmatprep.subr.mxu0 0.0
    %4891 = vmatpush2.msra.mxu0 0.0
    %4892 = vmatprep.mubr.f32.mxu0 0.0
    %4893 = vmatmul.mubr.f32.gmra.mxu0 %v4515
    %v4894 = vpop.f32.mrf.mxu0
    %v4895 = vadd.f32 0.0, %v4894
    %v4896 = vpop.f32.mrf.mxu0
    %v4897 = vadd.f32 0.0, %v4896
    %4898 = vmatprep.mubr.f32.mxu0 0.0
    %4899 = vmatmul.mubr.f32.gmra.mxu0 %v4518
    %v4900 = vpop.f32.mrf.mxu0
    %v4901 = vadd.f32 0.0, %v4900
    %v4902 = vpop.f32.mrf.mxu0
    %v4903 = vadd.f32 0.0, %v4902
    %4904 = vdwg.mxu0
    %4905 = vmatprep.subr.mxu0 0.0
    %4906 = vmatpush1.msra.mxu0 0.0
    %4907 = vmatprep.subr.mxu0 0.0
    %4908 = vmatpush1.msra.mxu0 0.0
    %4909 = vmatprep.subr.mxu0 0.0
    %4910 = vmatpush1.msra.mxu0 0.0
    %4911 = vmatprep.subr.mxu0 0.0
    %4912 = vmatpush1.msra.mxu0 0.0
    %4913 = vmatprep.subr.mxu0 0.0
    %4914 = vmatpush1.msra.mxu0 0.0
    %4915 = vmatprep.subr.mxu0 0.0
    %4916 = vmatpush1.msra.mxu0 0.0
    %4917 = vmatprep.subr.mxu0 0.0
    %4918 = vmatpush1.msra.mxu0 0.0
    %4919 = vmatprep.subr.mxu0 0.0
    %4920 = vmatpush1.msra.mxu0 0.0
    %4921 = vmatprep.subr.mxu0 0.0
    %4922 = vmatpush1.msra.mxu0 0.0
    %4923 = vmatprep.subr.mxu0 0.0
    %4924 = vmatpush1.msra.mxu0 0.0
    %4925 = vmatprep.subr.mxu0 0.0
    %4926 = vmatpush1.msra.mxu0 0.0
    %4927 = vmatprep.subr.mxu0 0.0
    %4928 = vmatpush1.msra.mxu0 0.0
    %4929 = vmatprep.subr.mxu0 0.0
    %4930 = vmatpush1.msra.mxu0 0.0
    %4931 = vmatprep.subr.mxu0 0.0
    %4932 = vmatpush1.msra.mxu0 0.0
    %4933 = vmatprep.subr.mxu0 %v4481
    %4934 = vmatpush1.msra.mxu0 %v4480
    %4935 = vmatprep.subr.mxu0 %v4467
    %4936 = vmatpush1.msra.mxu0 %v4466
    %4937 = vmatprep.subr.mxu0 0.0
    %4938 = vmatpush2.msra.mxu0 0.0
    %4939 = vmatprep.subr.mxu0 0.0
    %4940 = vmatpush2.msra.mxu0 0.0
    %4941 = vmatprep.subr.mxu0 0.0
    %4942 = vmatpush2.msra.mxu0 0.0
    %4943 = vmatprep.subr.mxu0 0.0
    %4944 = vmatpush2.msra.mxu0 0.0
    %4945 = vmatprep.subr.mxu0 0.0
    %4946 = vmatpush2.msra.mxu0 0.0
    %4947 = vmatprep.subr.mxu0 0.0
    %4948 = vmatpush2.msra.mxu0 0.0
    %4949 = vmatprep.subr.mxu0 0.0
    %4950 = vmatpush2.msra.mxu0 0.0
    %4951 = vmatprep.subr.mxu0 0.0
    %4952 = vmatpush2.msra.mxu0 0.0
    %4953 = vmatprep.subr.mxu0 0.0
    %4954 = vmatpush2.msra.mxu0 0.0
    %4955 = vmatprep.subr.mxu0 0.0
    %4956 = vmatpush2.msra.mxu0 0.0
    %4957 = vmatprep.subr.mxu0 0.0
    %4958 = vmatpush2.msra.mxu0 0.0
    %4959 = vmatprep.subr.mxu0 0.0
    %4960 = vmatpush2.msra.mxu0 0.0
    %4961 = vmatprep.subr.mxu0 0.0
    %4962 = vmatpush2.msra.mxu0 0.0
    %4963 = vmatprep.subr.mxu0 0.0
    %4964 = vmatpush2.msra.mxu0 0.0
    %4965 = vmatprep.subr.mxu0 0.0
    %4966 = vmatpush2.msra.mxu0 0.0
    %4967 = vmatprep.subr.mxu0 0.0
    %4968 = vmatpush2.msra.mxu0 0.0
    %4969 = vmatprep.mubr.f32.mxu0 0.0
    %4970 = vmatmul.mubr.f32.gmra.mxu0 %v4515
    %v4971 = vpop.f32.mrf.mxu0
    %v4972 = vadd.f32 0.0, %v4971
    %v4973 = vpop.f32.mrf.mxu0
    %v4974 = vadd.f32 0.0, %v4973
    %4975 = vmatprep.mubr.f32.mxu0 0.0
    %4976 = vmatmul.mubr.f32.gmra.mxu0 %v4518
    %v4977 = vpop.f32.mrf.mxu0
    %v4978 = vadd.f32 0.0, %v4977
    %v4979 = vpop.f32.mrf.mxu0
    %v4980 = vadd.f32 0.0, %v4979
    %4981 = vdwg.mxu0
    %4982 = vmatprep.subr.mxu0 0.0
    %4983 = vmatpush1.msra.mxu0 0.0
    %4984 = vmatprep.subr.mxu0 0.0
    %4985 = vmatpush1.msra.mxu0 0.0
    %4986 = vmatprep.subr.mxu0 0.0
    %4987 = vmatpush1.msra.mxu0 0.0
    %4988 = vmatprep.subr.mxu0 0.0
    %4989 = vmatpush1.msra.mxu0 0.0
    %4990 = vmatprep.subr.mxu0 0.0
    %4991 = vmatpush1.msra.mxu0 0.0
    %4992 = vmatprep.subr.mxu0 0.0
    %4993 = vmatpush1.msra.mxu0 0.0
    %4994 = vmatprep.subr.mxu0 0.0
    %4995 = vmatpush1.msra.mxu0 0.0
    %4996 = vmatprep.subr.mxu0 0.0
    %4997 = vmatpush1.msra.mxu0 0.0
    %4998 = vmatprep.subr.mxu0 0.0
    %4999 = vmatpush1.msra.mxu0 0.0
    %5000 = vmatprep.subr.mxu0 0.0
    %5001 = vmatpush1.msra.mxu0 0.0
    %5002 = vmatprep.subr.mxu0 0.0
    %5003 = vmatpush1.msra.mxu0 0.0
    %5004 = vmatprep.subr.mxu0 0.0
    %5005 = vmatpush1.msra.mxu0 0.0
    %5006 = vmatprep.subr.mxu0 0.0
    %5007 = vmatpush1.msra.mxu0 0.0
    %5008 = vmatprep.subr.mxu0 0.0
    %5009 = vmatpush1.msra.mxu0 0.0
    %5010 = vmatprep.subr.mxu0 %v4483
    %5011 = vmatpush1.msra.mxu0 %v4482
    %5012 = vmatprep.subr.mxu0 %v4469
    %5013 = vmatpush1.msra.mxu0 %v4468
    %5014 = vmatprep.subr.mxu0 0.0
    %5015 = vmatpush2.msra.mxu0 0.0
    %5016 = vmatprep.subr.mxu0 0.0
    %5017 = vmatpush2.msra.mxu0 0.0
    %5018 = vmatprep.subr.mxu0 0.0
    %5019 = vmatpush2.msra.mxu0 0.0
    %5020 = vmatprep.subr.mxu0 0.0
    %5021 = vmatpush2.msra.mxu0 0.0
    %5022 = vmatprep.subr.mxu0 0.0
    %5023 = vmatpush2.msra.mxu0 0.0
    %5024 = vmatprep.subr.mxu0 0.0
    %5025 = vmatpush2.msra.mxu0 0.0
    %5026 = vmatprep.subr.mxu0 0.0
    %5027 = vmatpush2.msra.mxu0 0.0
    %5028 = vmatprep.subr.mxu0 0.0
    %5029 = vmatpush2.msra.mxu0 0.0
    %5030 = vmatprep.subr.mxu0 0.0
    %5031 = vmatpush2.msra.mxu0 0.0
    %5032 = vmatprep.subr.mxu0 0.0
    %5033 = vmatpush2.msra.mxu0 0.0
    %5034 = vmatprep.subr.mxu0 0.0
    %5035 = vmatpush2.msra.mxu0 0.0
    %5036 = vmatprep.subr.mxu0 0.0
    %5037 = vmatpush2.msra.mxu0 0.0
    %5038 = vmatprep.subr.mxu0 0.0
    %5039 = vmatpush2.msra.mxu0 0.0
    %5040 = vmatprep.subr.mxu0 0.0
    %5041 = vmatpush2.msra.mxu0 0.0
    %5042 = vmatprep.subr.mxu0 0.0
    %5043 = vmatpush2.msra.mxu0 0.0
    %5044 = vmatprep.subr.mxu0 0.0
    %5045 = vmatpush2.msra.mxu0 0.0
    %5046 = vmatprep.mubr.f32.mxu0 0.0
    %5047 = vmatmul.mubr.f32.gmra.mxu0 %v4515
    %v5048 = vpop.f32.mrf.mxu0
    %v5049 = vadd.f32 0.0, %v5048
    %v5050 = vpop.f32.mrf.mxu0
    %v5051 = vadd.f32 0.0, %v5050
    %5052 = vmatprep.mubr.f32.mxu0 0.0
    %5053 = vmatmul.mubr.f32.gmra.mxu0 %v4518
    %v5054 = vpop.f32.mrf.mxu0
    %v5055 = vadd.f32 0.0, %v5054
    %v5056 = vpop.f32.mrf.mxu0
    %v5057 = vadd.f32 0.0, %v5056
    %5058 = vdwg.mxu0
    %5059 = vmatprep.subr.mxu0 0.0
    %5060 = vmatpush1.msra.mxu0 0.0
    %5061 = vmatprep.subr.mxu0 0.0
    %5062 = vmatpush1.msra.mxu0 0.0
    %5063 = vmatprep.subr.mxu0 0.0
    %5064 = vmatpush1.msra.mxu0 0.0
    %5065 = vmatprep.subr.mxu0 0.0
    %5066 = vmatpush1.msra.mxu0 0.0
    %5067 = vmatprep.subr.mxu0 0.0
    %5068 = vmatpush1.msra.mxu0 0.0
    %5069 = vmatprep.subr.mxu0 0.0
    %5070 = vmatpush1.msra.mxu0 0.0
    %5071 = vmatprep.subr.mxu0 0.0
    %5072 = vmatpush1.msra.mxu0 0.0
    %5073 = vmatprep.subr.mxu0 0.0
    %5074 = vmatpush1.msra.mxu0 0.0
    %5075 = vmatprep.subr.mxu0 0.0
    %5076 = vmatpush1.msra.mxu0 0.0
    %5077 = vmatprep.subr.mxu0 0.0
    %5078 = vmatpush1.msra.mxu0 0.0
    %5079 = vmatprep.subr.mxu0 0.0
    %5080 = vmatpush1.msra.mxu0 0.0
    %5081 = vmatprep.subr.mxu0 0.0
    %5082 = vmatpush1.msra.mxu0 0.0
    %5083 = vmatprep.subr.mxu0 0.0
    %5084 = vmatpush1.msra.mxu0 0.0
    %5085 = vmatprep.subr.mxu0 0.0
    %5086 = vmatpush1.msra.mxu0 0.0
    %5087 = vmatprep.subr.mxu0 0.0
    %5088 = vmatpush1.msra.mxu0 %v4454
    %5089 = vmatprep.subr.mxu0 0.0
    %5090 = vmatpush1.msra.mxu0 %v4424
    %5091 = vmatprep.subr.mxu0 0.0
    %5092 = vmatpush2.msra.mxu0 0.0
    %5093 = vmatprep.subr.mxu0 0.0
    %5094 = vmatpush2.msra.mxu0 0.0
    %5095 = vmatprep.subr.mxu0 0.0
    %5096 = vmatpush2.msra.mxu0 0.0
    %5097 = vmatprep.subr.mxu0 0.0
    %5098 = vmatpush2.msra.mxu0 0.0
    %5099 = vmatprep.subr.mxu0 0.0
    %5100 = vmatpush2.msra.mxu0 0.0
    %5101 = vmatprep.subr.mxu0 0.0
    %5102 = vmatpush2.msra.mxu0 0.0
    %5103 = vmatprep.subr.mxu0 0.0
    %5104 = vmatpush2.msra.mxu0 0.0
    %5105 = vmatprep.subr.mxu0 0.0
    %5106 = vmatpush2.msra.mxu0 0.0
    %5107 = vmatprep.subr.mxu0 0.0
    %5108 = vmatpush2.msra.mxu0 0.0
    %5109 = vmatprep.subr.mxu0 0.0
    %5110 = vmatpush2.msra.mxu0 0.0
    %5111 = vmatprep.subr.mxu0 0.0
    %5112 = vmatpush2.msra.mxu0 0.0
    %5113 = vmatprep.subr.mxu0 0.0
    %5114 = vmatpush2.msra.mxu0 0.0
    %5115 = vmatprep.subr.mxu0 0.0
    %5116 = vmatpush2.msra.mxu0 0.0
    %5117 = vmatprep.subr.mxu0 0.0
    %5118 = vmatpush2.msra.mxu0 0.0
    %5119 = vmatprep.subr.mxu0 0.0
    %5120 = vmatpush2.msra.mxu0 0.0
    %5121 = vmatprep.subr.mxu0 0.0
    %5122 = vmatpush2.msra.mxu0 0.0
    %5123 = vmatprep.mubr.f32.mxu0 0.0
    %5124 = vmatmul.mubr.f32.gmra.mxu0 %v4515
    %v5125 = vpop.f32.mrf.mxu0
    %v5126 = vadd.f32 0.0, %v5125
    %v5127 = vpop.f32.mrf.mxu0
    %5128 = vmatprep.mubr.f32.mxu0 0.0
    %5129 = vmatmul.mubr.f32.gmra.mxu0 %v4518
    %v5130 = vpop.f32.mrf.mxu0
    %v5131 = vadd.f32 0.0, %v5130
    %v5132 = vpop.f32.mrf.mxu0
    %5133 = vdwg.mxu0
    %v5134 = vadd.f32 %v3845, %v4587
    %v5135 = vadd.f32 %v3847, %v4589
    %v5136 = vadd.f32 %v3922, %v4664
    %v5137 = vadd.f32 %v3924, %v4666
    %v5138 = vadd.f32 %v3999, %v4741
    %v5139 = vadd.f32 %v4001, %v4743
    %v5140 = vadd.f32 %v4076, %v4818
    %v5141 = vadd.f32 %v4078, %v4820
    %v5142 = vadd.f32 %v4153, %v4895
    %v5143 = vadd.f32 %v4155, %v4897
    %v5144 = vadd.f32 %v4230, %v4972
    %v5145 = vadd.f32 %v4232, %v4974
    %v5146 = vadd.f32 %v4307, %v5049
    %v5147 = vadd.f32 %v4309, %v5051
    %v5148 = vadd.f32 %v4384, %v5126
    %v5149 = vadd.f32 %v3851, %v4593
    %v5150 = vadd.f32 %v3853, %v4595
    %v5151 = vadd.f32 %v3928, %v4670
    %v5152 = vadd.f32 %v3930, %v4672
    %v5153 = vadd.f32 %v4005, %v4747
    %v5154 = vadd.f32 %v4007, %v4749
    %v5155 = vadd.f32 %v4082, %v4824
    %v5156 = vadd.f32 %v4084, %v4826
    %v5157 = vadd.f32 %v4159, %v4901
    %v5158 = vadd.f32 %v4161, %v4903
    %v5159 = vadd.f32 %v4236, %v4978
    %v5160 = vadd.f32 %v4238, %v4980
    %v5161 = vadd.f32 %v4313, %v5055
    %v5162 = vadd.f32 %v4315, %v5057
    %v5163 = vadd.f32 %v4389, %v5131
    %s5164 = scalar_lea.vmem %s3, 48
    %v5165 = vld [vmem:[%s5164] sm:$0xff]
    %v5166 = vld [vmem:[%s5164 + $0x8] sm:$0xff]
    %5167 = vrot.lane.b32.xlu0 %v2850, 97
    %v5168 = vpop.permute.xlu0 %5167
    %5169 = vrot.lane.b32.xlu0 %v2851, 97
    %v5170 = vpop.permute.xlu0 %5169
    %5171 = vrot.lane.b32.xlu0 %v2852, 97
    %v5172 = vpop.permute.xlu0 %5171
    %5173 = vrot.lane.b32.xlu0 %v2853, 97
    %v5174 = vpop.permute.xlu0 %5173
    %5175 = vrot.lane.b32.xlu0 %v2854, 97
    %v5176 = vpop.permute.xlu0 %5175
    %5177 = vrot.lane.b32.xlu0 %v2855, 97
    %v5178 = vpop.permute.xlu0 %5177
    %5179 = vrot.lane.b32.xlu0 %v2856, 97
    %v5180 = vpop.permute.xlu0 %5179
    %5181 = vrot.lane.b32.xlu0 %v2857, 97
    %v5182 = vpop.permute.xlu0 %5181
    %5183 = vrot.lane.b32.xlu0 %v2858, 97
    %v5184 = vpop.permute.xlu0 %5183
    %5185 = vrot.lane.b32.xlu0 %v2859, 97
    %v5186 = vpop.permute.xlu0 %5185
    %5187 = vrot.lane.b32.xlu0 %v2860, 97
    %v5188 = vpop.permute.xlu0 %5187
    %5189 = vrot.lane.b32.xlu0 %v2861, 97
    %v5190 = vpop.permute.xlu0 %5189
    %5191 = vrot.lane.b32.xlu0 %v2862, 97
    %v5192 = vpop.permute.xlu0 %5191
    %5193 = vrot.lane.b32.xlu0 %v2863, 97
    %v5194 = vpop.permute.xlu0 %5193
    %5195 = vrot.lane.b32.xlu0 %v2864, 97
    %v5196 = vpop.permute.xlu0 %5195
    %5197 = vrot.lane.b32.xlu0 %v2865, 97
    %v5198 = vpop.permute.xlu0 %5197
    %5199 = vrot.lane.b32.xlu0 %v2866, 97
    %v5200 = vpop.permute.xlu0 %5199
    %5201 = vrot.lane.b32.xlu0 %v2867, 97
    %v5202 = vpop.permute.xlu0 %5201
    %5203 = vrot.lane.b32.xlu0 %v2868, 97
    %v5204 = vpop.permute.xlu0 %5203
    %5205 = vrot.lane.b32.xlu0 %v2869, 97
    %v5206 = vpop.permute.xlu0 %5205
    %5207 = vrot.lane.b32.xlu0 %v2870, 97
    %v5208 = vpop.permute.xlu0 %5207
    %5209 = vrot.lane.b32.xlu0 %v2871, 97
    %v5210 = vpop.permute.xlu0 %5209
    %5211 = vrot.lane.b32.xlu0 %v2872, 97
    %v5212 = vpop.permute.xlu0 %5211
    %5213 = vrot.lane.b32.xlu0 %v2873, 97
    %v5214 = vpop.permute.xlu0 %5213
    %5215 = vrot.lane.b32.xlu0 %v2874, 97
    %v5216 = vpop.permute.xlu0 %5215
    %5217 = vrot.lane.b32.xlu0 %v2875, 97
    %v5218 = vpop.permute.xlu0 %5217
    %5219 = vrot.lane.b32.xlu0 %v2876, 97
    %v5220 = vpop.permute.xlu0 %5219
    %5221 = vrot.lane.b32.xlu0 %v2877, 97
    %v5222 = vpop.permute.xlu0 %5221
    %5223 = vrot.lane.b32.xlu0 %v2878, 97
    %v5224 = vpop.permute.xlu0 %5223
    %5225 = vrot.lane.b32.xlu0 %v2879, 97
    %v5226 = vpop.permute.xlu0 %5225
    %v5227 = vsel %vm1447, %v5168, %v5170
    %v5228 = vsel %vm1447, %v5170, %v5172
    %v5229 = vsel %vm1447, %v5172, %v5174
    %v5230 = vsel %vm1447, %v5174, %v5176
    %v5231 = vsel %vm1447, %v5176, %v5178
    %v5232 = vsel %vm1447, %v5178, %v5180
    %v5233 = vsel %vm1447, %v5180, %v5182
    %v5234 = vsel %vm1447, %v5182, %v5184
    %v5235 = vsel %vm1447, %v5184, %v5186
    %v5236 = vsel %vm1447, %v5186, %v5188
    %v5237 = vsel %vm1447, %v5188, %v5190
    %v5238 = vsel %vm1447, %v5190, %v5192
    %v5239 = vsel %vm1447, %v5192, %v5194
    %v5240 = vsel %vm1447, %v5194, %v5196
    %v5241 = vsel %vm1447, %v5198, %v5200
    %v5242 = vsel %vm1447, %v5200, %v5202
    %v5243 = vsel %vm1447, %v5202, %v5204
    %v5244 = vsel %vm1447, %v5204, %v5206
    %v5245 = vsel %vm1447, %v5206, %v5208
    %v5246 = vsel %vm1447, %v5208, %v5210
    %v5247 = vsel %vm1447, %v5210, %v5212
    %v5248 = vsel %vm1447, %v5212, %v5214
    %v5249 = vsel %vm1447, %v5214, %v5216
    %v5250 = vsel %vm1447, %v5216, %v5218
    %v5251 = vsel %vm1447, %v5218, %v5220
    %v5252 = vsel %vm1447, %v5220, %v5222
    %v5253 = vsel %vm1447, %v5222, %v5224
    %v5254 = vsel %vm1447, %v5224, %v5226
    %v5286 = vsel %vm3033, %v5165, 0
    %v5289 = vsel %vm3033, %v5166, 0
    %5291 = vmatprep.subr.mxu0 0.0
    %5292 = vmatpush1.msra.mxu0 0.0
    %5293 = vmatprep.subr.mxu0 0.0
    %5294 = vmatpush1.msra.mxu0 0.0
    %5295 = vmatprep.subr.mxu0 0.0
    %5296 = vmatpush1.msra.mxu0 0.0
    %5297 = vmatprep.subr.mxu0 0.0
    %5298 = vmatpush1.msra.mxu0 0.0
    %5299 = vmatprep.subr.mxu0 0.0
    %5300 = vmatpush1.msra.mxu0 0.0
    %5301 = vmatprep.subr.mxu0 0.0
    %5302 = vmatpush1.msra.mxu0 0.0
    %5303 = vmatprep.subr.mxu0 0.0
    %5304 = vmatpush1.msra.mxu0 0.0
    %5305 = vmatprep.subr.mxu0 0.0
    %5306 = vmatpush1.msra.mxu0 0.0
    %5307 = vmatprep.subr.mxu0 0.0
    %5308 = vmatpush1.msra.mxu0 0.0
    %5309 = vmatprep.subr.mxu0 0.0
    %5310 = vmatpush1.msra.mxu0 0.0
    %5311 = vmatprep.subr.mxu0 0.0
    %5312 = vmatpush1.msra.mxu0 0.0
    %5313 = vmatprep.subr.mxu0 0.0
    %5314 = vmatpush1.msra.mxu0 0.0
    %5315 = vmatprep.subr.mxu0 0.0
    %5316 = vmatpush1.msra.mxu0 0.0
    %5317 = vmatprep.subr.mxu0 0.0
    %5318 = vmatpush1.msra.mxu0 0.0
    %5319 = vmatprep.subr.mxu0 %v5242
    %5320 = vmatpush1.msra.mxu0 %v5241
    %5321 = vmatprep.subr.mxu0 %v5228
    %5322 = vmatpush1.msra.mxu0 %v5227
    %5323 = vmatprep.subr.mxu0 0.0
    %5324 = vmatpush2.msra.mxu0 0.0
    %5325 = vmatprep.subr.mxu0 0.0
    %5326 = vmatpush2.msra.mxu0 0.0
    %5327 = vmatprep.subr.mxu0 0.0
    %5328 = vmatpush2.msra.mxu0 0.0
    %5329 = vmatprep.subr.mxu0 0.0
    %5330 = vmatpush2.msra.mxu0 0.0
    %5331 = vmatprep.subr.mxu0 0.0
    %5332 = vmatpush2.msra.mxu0 0.0
    %5333 = vmatprep.subr.mxu0 0.0
    %5334 = vmatpush2.msra.mxu0 0.0
    %5335 = vmatprep.subr.mxu0 0.0
    %5336 = vmatpush2.msra.mxu0 0.0
    %5337 = vmatprep.subr.mxu0 0.0
    %5338 = vmatpush2.msra.mxu0 0.0
    %5339 = vmatprep.subr.mxu0 0.0
    %5340 = vmatpush2.msra.mxu0 0.0
    %5341 = vmatprep.subr.mxu0 0.0
    %5342 = vmatpush2.msra.mxu0 0.0
    %5343 = vmatprep.subr.mxu0 0.0
    %5344 = vmatpush2.msra.mxu0 0.0
    %5345 = vmatprep.subr.mxu0 0.0
    %5346 = vmatpush2.msra.mxu0 0.0
    %5347 = vmatprep.subr.mxu0 0.0
    %5348 = vmatpush2.msra.mxu0 0.0
    %5349 = vmatprep.subr.mxu0 0.0
    %5350 = vmatpush2.msra.mxu0 0.0
    %5351 = vmatprep.subr.mxu0 0.0
    %5352 = vmatpush2.msra.mxu0 0.0
    %5353 = vmatprep.subr.mxu0 0.0
    %5354 = vmatpush2.msra.mxu0 0.0
    %5355 = vmatprep.mubr.f32.mxu0 0.0
    %5356 = vmatmul.mubr.f32.gmra.mxu0 %v5286
    %v5357 = vpop.f32.mrf.mxu0
    %v5358 = vadd.f32 0.0, %v5357
    %v5359 = vpop.f32.mrf.mxu0
    %v5360 = vadd.f32 0.0, %v5359
    %5361 = vmatprep.mubr.f32.mxu0 0.0
    %5362 = vmatmul.mubr.f32.gmra.mxu0 %v5289
    %v5363 = vpop.f32.mrf.mxu0
    %v5364 = vadd.f32 0.0, %v5363
    %v5365 = vpop.f32.mrf.mxu0
    %v5366 = vadd.f32 0.0, %v5365
    %5367 = vdwg.mxu0
    %5368 = vmatprep.subr.mxu0 0.0
    %5369 = vmatpush1.msra.mxu0 0.0
    %5370 = vmatprep.subr.mxu0 0.0
    %5371 = vmatpush1.msra.mxu0 0.0
    %5372 = vmatprep.subr.mxu0 0.0
    %5373 = vmatpush1.msra.mxu0 0.0
    %5374 = vmatprep.subr.mxu0 0.0
    %5375 = vmatpush1.msra.mxu0 0.0
    %5376 = vmatprep.subr.mxu0 0.0
    %5377 = vmatpush1.msra.mxu0 0.0
    %5378 = vmatprep.subr.mxu0 0.0
    %5379 = vmatpush1.msra.mxu0 0.0
    %5380 = vmatprep.subr.mxu0 0.0
    %5381 = vmatpush1.msra.mxu0 0.0
    %5382 = vmatprep.subr.mxu0 0.0
    %5383 = vmatpush1.msra.mxu0 0.0
    %5384 = vmatprep.subr.mxu0 0.0
    %5385 = vmatpush1.msra.mxu0 0.0
    %5386 = vmatprep.subr.mxu0 0.0
    %5387 = vmatpush1.msra.mxu0 0.0
    %5388 = vmatprep.subr.mxu0 0.0
    %5389 = vmatpush1.msra.mxu0 0.0
    %5390 = vmatprep.subr.mxu0 0.0
    %5391 = vmatpush1.msra.mxu0 0.0
    %5392 = vmatprep.subr.mxu0 0.0
    %5393 = vmatpush1.msra.mxu0 0.0
    %5394 = vmatprep.subr.mxu0 0.0
    %5395 = vmatpush1.msra.mxu0 0.0
    %5396 = vmatprep.subr.mxu0 %v5244
    %5397 = vmatpush1.msra.mxu0 %v5243
    %5398 = vmatprep.subr.mxu0 %v5230
    %5399 = vmatpush1.msra.mxu0 %v5229
    %5400 = vmatprep.subr.mxu0 0.0
    %5401 = vmatpush2.msra.mxu0 0.0
    %5402 = vmatprep.subr.mxu0 0.0
    %5403 = vmatpush2.msra.mxu0 0.0
    %5404 = vmatprep.subr.mxu0 0.0
    %5405 = vmatpush2.msra.mxu0 0.0
    %5406 = vmatprep.subr.mxu0 0.0
    %5407 = vmatpush2.msra.mxu0 0.0
    %5408 = vmatprep.subr.mxu0 0.0
    %5409 = vmatpush2.msra.mxu0 0.0
    %5410 = vmatprep.subr.mxu0 0.0
    %5411 = vmatpush2.msra.mxu0 0.0
    %5412 = vmatprep.subr.mxu0 0.0
    %5413 = vmatpush2.msra.mxu0 0.0
    %5414 = vmatprep.subr.mxu0 0.0
    %5415 = vmatpush2.msra.mxu0 0.0
    %5416 = vmatprep.subr.mxu0 0.0
    %5417 = vmatpush2.msra.mxu0 0.0
    %5418 = vmatprep.subr.mxu0 0.0
    %5419 = vmatpush2.msra.mxu0 0.0
    %5420 = vmatprep.subr.mxu0 0.0
    %5421 = vmatpush2.msra.mxu0 0.0
    %5422 = vmatprep.subr.mxu0 0.0
    %5423 = vmatpush2.msra.mxu0 0.0
    %5424 = vmatprep.subr.mxu0 0.0
    %5425 = vmatpush2.msra.mxu0 0.0
    %5426 = vmatprep.subr.mxu0 0.0
    %5427 = vmatpush2.msra.mxu0 0.0
    %5428 = vmatprep.subr.mxu0 0.0
    %5429 = vmatpush2.msra.mxu0 0.0
    %5430 = vmatprep.subr.mxu0 0.0
    %5431 = vmatpush2.msra.mxu0 0.0
    %5432 = vmatprep.mubr.f32.mxu0 0.0
    %5433 = vmatmul.mubr.f32.gmra.mxu0 %v5286
    %v5434 = vpop.f32.mrf.mxu0
    %v5435 = vadd.f32 0.0, %v5434
    %v5436 = vpop.f32.mrf.mxu0
    %v5437 = vadd.f32 0.0, %v5436
    %5438 = vmatprep.mubr.f32.mxu0 0.0
    %5439 = vmatmul.mubr.f32.gmra.mxu0 %v5289
    %v5440 = vpop.f32.mrf.mxu0
    %v5441 = vadd.f32 0.0, %v5440
    %v5442 = vpop.f32.mrf.mxu0
    %v5443 = vadd.f32 0.0, %v5442
    %5444 = vdwg.mxu0
    %5445 = vmatprep.subr.mxu0 0.0
    %5446 = vmatpush1.msra.mxu0 0.0
    %5447 = vmatprep.subr.mxu0 0.0
    %5448 = vmatpush1.msra.mxu0 0.0
    %5449 = vmatprep.subr.mxu0 0.0
    %5450 = vmatpush1.msra.mxu0 0.0
    %5451 = vmatprep.subr.mxu0 0.0
    %5452 = vmatpush1.msra.mxu0 0.0
    %5453 = vmatprep.subr.mxu0 0.0
    %5454 = vmatpush1.msra.mxu0 0.0
    %5455 = vmatprep.subr.mxu0 0.0
    %5456 = vmatpush1.msra.mxu0 0.0
    %5457 = vmatprep.subr.mxu0 0.0
    %5458 = vmatpush1.msra.mxu0 0.0
    %5459 = vmatprep.subr.mxu0 0.0
    %5460 = vmatpush1.msra.mxu0 0.0
    %5461 = vmatprep.subr.mxu0 0.0
    %5462 = vmatpush1.msra.mxu0 0.0
    %5463 = vmatprep.subr.mxu0 0.0
    %5464 = vmatpush1.msra.mxu0 0.0
    %5465 = vmatprep.subr.mxu0 0.0
    %5466 = vmatpush1.msra.mxu0 0.0
    %5467 = vmatprep.subr.mxu0 0.0
    %5468 = vmatpush1.msra.mxu0 0.0
    %5469 = vmatprep.subr.mxu0 0.0
    %5470 = vmatpush1.msra.mxu0 0.0
    %5471 = vmatprep.subr.mxu0 0.0
    %5472 = vmatpush1.msra.mxu0 0.0
    %5473 = vmatprep.subr.mxu0 %v5246
    %5474 = vmatpush1.msra.mxu0 %v5245
    %5475 = vmatprep.subr.mxu0 %v5232
    %5476 = vmatpush1.msra.mxu0 %v5231
    %5477 = vmatprep.subr.mxu0 0.0
    %5478 = vmatpush2.msra.mxu0 0.0
    %5479 = vmatprep.subr.mxu0 0.0
    %5480 = vmatpush2.msra.mxu0 0.0
    %5481 = vmatprep.subr.mxu0 0.0
    %5482 = vmatpush2.msra.mxu0 0.0
    %5483 = vmatprep.subr.mxu0 0.0
    %5484 = vmatpush2.msra.mxu0 0.0
    %5485 = vmatprep.subr.mxu0 0.0
    %5486 = vmatpush2.msra.mxu0 0.0
    %5487 = vmatprep.subr.mxu0 0.0
    %5488 = vmatpush2.msra.mxu0 0.0
    %5489 = vmatprep.subr.mxu0 0.0
    %5490 = vmatpush2.msra.mxu0 0.0
    %5491 = vmatprep.subr.mxu0 0.0
    %5492 = vmatpush2.msra.mxu0 0.0
    %5493 = vmatprep.subr.mxu0 0.0
    %5494 = vmatpush2.msra.mxu0 0.0
    %5495 = vmatprep.subr.mxu0 0.0
    %5496 = vmatpush2.msra.mxu0 0.0
    %5497 = vmatprep.subr.mxu0 0.0
    %5498 = vmatpush2.msra.mxu0 0.0
    %5499 = vmatprep.subr.mxu0 0.0
    %5500 = vmatpush2.msra.mxu0 0.0
    %5501 = vmatprep.subr.mxu0 0.0
    %5502 = vmatpush2.msra.mxu0 0.0
    %5503 = vmatprep.subr.mxu0 0.0
    %5504 = vmatpush2.msra.mxu0 0.0
    %5505 = vmatprep.subr.mxu0 0.0
    %5506 = vmatpush2.msra.mxu0 0.0
    %5507 = vmatprep.subr.mxu0 0.0
    %5508 = vmatpush2.msra.mxu0 0.0
    %5509 = vmatprep.mubr.f32.mxu0 0.0
    %5510 = vmatmul.mubr.f32.gmra.mxu0 %v5286
    %v5511 = vpop.f32.mrf.mxu0
    %v5512 = vadd.f32 0.0, %v5511
    %v5513 = vpop.f32.mrf.mxu0
    %v5514 = vadd.f32 0.0, %v5513
    %5515 = vmatprep.mubr.f32.mxu0 0.0
    %5516 = vmatmul.mubr.f32.gmra.mxu0 %v5289
    %v5517 = vpop.f32.mrf.mxu0
    %v5518 = vadd.f32 0.0, %v5517
    %v5519 = vpop.f32.mrf.mxu0
    %v5520 = vadd.f32 0.0, %v5519
    %5521 = vdwg.mxu0
    %5522 = vmatprep.subr.mxu0 0.0
    %5523 = vmatpush1.msra.mxu0 0.0
    %5524 = vmatprep.subr.mxu0 0.0
    %5525 = vmatpush1.msra.mxu0 0.0
    %5526 = vmatprep.subr.mxu0 0.0
    %5527 = vmatpush1.msra.mxu0 0.0
    %5528 = vmatprep.subr.mxu0 0.0
    %5529 = vmatpush1.msra.mxu0 0.0
    %5530 = vmatprep.subr.mxu0 0.0
    %5531 = vmatpush1.msra.mxu0 0.0
    %5532 = vmatprep.subr.mxu0 0.0
    %5533 = vmatpush1.msra.mxu0 0.0
    %5534 = vmatprep.subr.mxu0 0.0
    %5535 = vmatpush1.msra.mxu0 0.0
    %5536 = vmatprep.subr.mxu0 0.0
    %5537 = vmatpush1.msra.mxu0 0.0
    %5538 = vmatprep.subr.mxu0 0.0
    %5539 = vmatpush1.msra.mxu0 0.0
    %5540 = vmatprep.subr.mxu0 0.0
    %5541 = vmatpush1.msra.mxu0 0.0
    %5542 = vmatprep.subr.mxu0 0.0
    %5543 = vmatpush1.msra.mxu0 0.0
    %5544 = vmatprep.subr.mxu0 0.0
    %5545 = vmatpush1.msra.mxu0 0.0
    %5546 = vmatprep.subr.mxu0 0.0
    %5547 = vmatpush1.msra.mxu0 0.0
    %5548 = vmatprep.subr.mxu0 0.0
    %5549 = vmatpush1.msra.mxu0 0.0
    %5550 = vmatprep.subr.mxu0 %v5248
    %5551 = vmatpush1.msra.mxu0 %v5247
    %5552 = vmatprep.subr.mxu0 %v5234
    %5553 = vmatpush1.msra.mxu0 %v5233
    %5554 = vmatprep.subr.mxu0 0.0
    %5555 = vmatpush2.msra.mxu0 0.0
    %5556 = vmatprep.subr.mxu0 0.0
    %5557 = vmatpush2.msra.mxu0 0.0
    %5558 = vmatprep.subr.mxu0 0.0
    %5559 = vmatpush2.msra.mxu0 0.0
    %5560 = vmatprep.subr.mxu0 0.0
    %5561 = vmatpush2.msra.mxu0 0.0
    %5562 = vmatprep.subr.mxu0 0.0
    %5563 = vmatpush2.msra.mxu0 0.0
    %5564 = vmatprep.subr.mxu0 0.0
    %5565 = vmatpush2.msra.mxu0 0.0
    %5566 = vmatprep.subr.mxu0 0.0
    %5567 = vmatpush2.msra.mxu0 0.0
    %5568 = vmatprep.subr.mxu0 0.0
    %5569 = vmatpush2.msra.mxu0 0.0
    %5570 = vmatprep.subr.mxu0 0.0
    %5571 = vmatpush2.msra.mxu0 0.0
    %5572 = vmatprep.subr.mxu0 0.0
    %5573 = vmatpush2.msra.mxu0 0.0
    %5574 = vmatprep.subr.mxu0 0.0
    %5575 = vmatpush2.msra.mxu0 0.0
    %5576 = vmatprep.subr.mxu0 0.0
    %5577 = vmatpush2.msra.mxu0 0.0
    %5578 = vmatprep.subr.mxu0 0.0
    %5579 = vmatpush2.msra.mxu0 0.0
    %5580 = vmatprep.subr.mxu0 0.0
    %5581 = vmatpush2.msra.mxu0 0.0
    %5582 = vmatprep.subr.mxu0 0.0
    %5583 = vmatpush2.msra.mxu0 0.0
    %5584 = vmatprep.subr.mxu0 0.0
    %5585 = vmatpush2.msra.mxu0 0.0
    %5586 = vmatprep.mubr.f32.mxu0 0.0
    %5587 = vmatmul.mubr.f32.gmra.mxu0 %v5286
    %v5588 = vpop.f32.mrf.mxu0
    %v5589 = vadd.f32 0.0, %v5588
    %v5590 = vpop.f32.mrf.mxu0
    %v5591 = vadd.f32 0.0, %v5590
    %5592 = vmatprep.mubr.f32.mxu0 0.0
    %5593 = vmatmul.mubr.f32.gmra.mxu0 %v5289
    %v5594 = vpop.f32.mrf.mxu0
    %v5595 = vadd.f32 0.0, %v5594
    %v5596 = vpop.f32.mrf.mxu0
    %v5597 = vadd.f32 0.0, %v5596
    %5598 = vdwg.mxu0
    %5599 = vmatprep.subr.mxu0 0.0
    %5600 = vmatpush1.msra.mxu0 0.0
    %5601 = vmatprep.subr.mxu0 0.0
    %5602 = vmatpush1.msra.mxu0 0.0
    %5603 = vmatprep.subr.mxu0 0.0
    %5604 = vmatpush1.msra.mxu0 0.0
    %5605 = vmatprep.subr.mxu0 0.0
    %5606 = vmatpush1.msra.mxu0 0.0
    %5607 = vmatprep.subr.mxu0 0.0
    %5608 = vmatpush1.msra.mxu0 0.0
    %5609 = vmatprep.subr.mxu0 0.0
    %5610 = vmatpush1.msra.mxu0 0.0
    %5611 = vmatprep.subr.mxu0 0.0
    %5612 = vmatpush1.msra.mxu0 0.0
    %5613 = vmatprep.subr.mxu0 0.0
    %5614 = vmatpush1.msra.mxu0 0.0
    %5615 = vmatprep.subr.mxu0 0.0
    %5616 = vmatpush1.msra.mxu0 0.0
    %5617 = vmatprep.subr.mxu0 0.0
    %5618 = vmatpush1.msra.mxu0 0.0
    %5619 = vmatprep.subr.mxu0 0.0
    %5620 = vmatpush1.msra.mxu0 0.0
    %5621 = vmatprep.subr.mxu0 0.0
    %5622 = vmatpush1.msra.mxu0 0.0
    %5623 = vmatprep.subr.mxu0 0.0
    %5624 = vmatpush1.msra.mxu0 0.0
    %5625 = vmatprep.subr.mxu0 0.0
    %5626 = vmatpush1.msra.mxu0 0.0
    %5627 = vmatprep.subr.mxu0 %v5250
    %5628 = vmatpush1.msra.mxu0 %v5249
    %5629 = vmatprep.subr.mxu0 %v5236
    %5630 = vmatpush1.msra.mxu0 %v5235
    %5631 = vmatprep.subr.mxu0 0.0
    %5632 = vmatpush2.msra.mxu0 0.0
    %5633 = vmatprep.subr.mxu0 0.0
    %5634 = vmatpush2.msra.mxu0 0.0
    %5635 = vmatprep.subr.mxu0 0.0
    %5636 = vmatpush2.msra.mxu0 0.0
    %5637 = vmatprep.subr.mxu0 0.0
    %5638 = vmatpush2.msra.mxu0 0.0
    %5639 = vmatprep.subr.mxu0 0.0
    %5640 = vmatpush2.msra.mxu0 0.0
    %5641 = vmatprep.subr.mxu0 0.0
    %5642 = vmatpush2.msra.mxu0 0.0
    %5643 = vmatprep.subr.mxu0 0.0
    %5644 = vmatpush2.msra.mxu0 0.0
    %5645 = vmatprep.subr.mxu0 0.0
    %5646 = vmatpush2.msra.mxu0 0.0
    %5647 = vmatprep.subr.mxu0 0.0
    %5648 = vmatpush2.msra.mxu0 0.0
    %5649 = vmatprep.subr.mxu0 0.0
    %5650 = vmatpush2.msra.mxu0 0.0
    %5651 = vmatprep.subr.mxu0 0.0
    %5652 = vmatpush2.msra.mxu0 0.0
    %5653 = vmatprep.subr.mxu0 0.0
    %5654 = vmatpush2.msra.mxu0 0.0
    %5655 = vmatprep.subr.mxu0 0.0
    %5656 = vmatpush2.msra.mxu0 0.0
    %5657 = vmatprep.subr.mxu0 0.0
    %5658 = vmatpush2.msra.mxu0 0.0
    %5659 = vmatprep.subr.mxu0 0.0
    %5660 = vmatpush2.msra.mxu0 0.0
    %5661 = vmatprep.subr.mxu0 0.0
    %5662 = vmatpush2.msra.mxu0 0.0
    %5663 = vmatprep.mubr.f32.mxu0 0.0
    %5664 = vmatmul.mubr.f32.gmra.mxu0 %v5286
    %v5665 = vpop.f32.mrf.mxu0
    %v5666 = vadd.f32 0.0, %v5665
    %v5667 = vpop.f32.mrf.mxu0
    %v5668 = vadd.f32 0.0, %v5667
    %5669 = vmatprep.mubr.f32.mxu0 0.0
    %5670 = vmatmul.mubr.f32.gmra.mxu0 %v5289
    %v5671 = vpop.f32.mrf.mxu0
    %v5672 = vadd.f32 0.0, %v5671
    %v5673 = vpop.f32.mrf.mxu0
    %v5674 = vadd.f32 0.0, %v5673
    %5675 = vdwg.mxu0
    %5676 = vmatprep.subr.mxu0 0.0
    %5677 = vmatpush1.msra.mxu0 0.0
    %5678 = vmatprep.subr.mxu0 0.0
    %5679 = vmatpush1.msra.mxu0 0.0
    %5680 = vmatprep.subr.mxu0 0.0
    %5681 = vmatpush1.msra.mxu0 0.0
    %5682 = vmatprep.subr.mxu0 0.0
    %5683 = vmatpush1.msra.mxu0 0.0
    %5684 = vmatprep.subr.mxu0 0.0
    %5685 = vmatpush1.msra.mxu0 0.0
    %5686 = vmatprep.subr.mxu0 0.0
    %5687 = vmatpush1.msra.mxu0 0.0
    %5688 = vmatprep.subr.mxu0 0.0
    %5689 = vmatpush1.msra.mxu0 0.0
    %5690 = vmatprep.subr.mxu0 0.0
    %5691 = vmatpush1.msra.mxu0 0.0
    %5692 = vmatprep.subr.mxu0 0.0
    %5693 = vmatpush1.msra.mxu0 0.0
    %5694 = vmatprep.subr.mxu0 0.0
    %5695 = vmatpush1.msra.mxu0 0.0
    %5696 = vmatprep.subr.mxu0 0.0
    %5697 = vmatpush1.msra.mxu0 0.0
    %5698 = vmatprep.subr.mxu0 0.0
    %5699 = vmatpush1.msra.mxu0 0.0
    %5700 = vmatprep.subr.mxu0 0.0
    %5701 = vmatpush1.msra.mxu0 0.0
    %5702 = vmatprep.subr.mxu0 0.0
    %5703 = vmatpush1.msra.mxu0 0.0
    %5704 = vmatprep.subr.mxu0 %v5252
    %5705 = vmatpush1.msra.mxu0 %v5251
    %5706 = vmatprep.subr.mxu0 %v5238
    %5707 = vmatpush1.msra.mxu0 %v5237
    %5708 = vmatprep.subr.mxu0 0.0
    %5709 = vmatpush2.msra.mxu0 0.0
    %5710 = vmatprep.subr.mxu0 0.0
    %5711 = vmatpush2.msra.mxu0 0.0
    %5712 = vmatprep.subr.mxu0 0.0
    %5713 = vmatpush2.msra.mxu0 0.0
    %5714 = vmatprep.subr.mxu0 0.0
    %5715 = vmatpush2.msra.mxu0 0.0
    %5716 = vmatprep.subr.mxu0 0.0
    %5717 = vmatpush2.msra.mxu0 0.0
    %5718 = vmatprep.subr.mxu0 0.0
    %5719 = vmatpush2.msra.mxu0 0.0
    %5720 = vmatprep.subr.mxu0 0.0
    %5721 = vmatpush2.msra.mxu0 0.0
    %5722 = vmatprep.subr.mxu0 0.0
    %5723 = vmatpush2.msra.mxu0 0.0
    %5724 = vmatprep.subr.mxu0 0.0
    %5725 = vmatpush2.msra.mxu0 0.0
    %5726 = vmatprep.subr.mxu0 0.0
    %5727 = vmatpush2.msra.mxu0 0.0
    %5728 = vmatprep.subr.mxu0 0.0
    %5729 = vmatpush2.msra.mxu0 0.0
    %5730 = vmatprep.subr.mxu0 0.0
    %5731 = vmatpush2.msra.mxu0 0.0
    %5732 = vmatprep.subr.mxu0 0.0
    %5733 = vmatpush2.msra.mxu0 0.0
    %5734 = vmatprep.subr.mxu0 0.0
    %5735 = vmatpush2.msra.mxu0 0.0
    %5736 = vmatprep.subr.mxu0 0.0
    %5737 = vmatpush2.msra.mxu0 0.0
    %5738 = vmatprep.subr.mxu0 0.0
    %5739 = vmatpush2.msra.mxu0 0.0
    %5740 = vmatprep.mubr.f32.mxu0 0.0
    %5741 = vmatmul.mubr.f32.gmra.mxu0 %v5286
    %v5742 = vpop.f32.mrf.mxu0
    %v5743 = vadd.f32 0.0, %v5742
    %v5744 = vpop.f32.mrf.mxu0
    %v5745 = vadd.f32 0.0, %v5744
    %5746 = vmatprep.mubr.f32.mxu0 0.0
    %5747 = vmatmul.mubr.f32.gmra.mxu0 %v5289
    %v5748 = vpop.f32.mrf.mxu0
    %v5749 = vadd.f32 0.0, %v5748
    %v5750 = vpop.f32.mrf.mxu0
    %v5751 = vadd.f32 0.0, %v5750
    %5752 = vdwg.mxu0
    %5753 = vmatprep.subr.mxu0 0.0
    %5754 = vmatpush1.msra.mxu0 0.0
    %5755 = vmatprep.subr.mxu0 0.0
    %5756 = vmatpush1.msra.mxu0 0.0
    %5757 = vmatprep.subr.mxu0 0.0
    %5758 = vmatpush1.msra.mxu0 0.0
    %5759 = vmatprep.subr.mxu0 0.0
    %5760 = vmatpush1.msra.mxu0 0.0
    %5761 = vmatprep.subr.mxu0 0.0
    %5762 = vmatpush1.msra.mxu0 0.0
    %5763 = vmatprep.subr.mxu0 0.0
    %5764 = vmatpush1.msra.mxu0 0.0
    %5765 = vmatprep.subr.mxu0 0.0
    %5766 = vmatpush1.msra.mxu0 0.0
    %5767 = vmatprep.subr.mxu0 0.0
    %5768 = vmatpush1.msra.mxu0 0.0
    %5769 = vmatprep.subr.mxu0 0.0
    %5770 = vmatpush1.msra.mxu0 0.0
    %5771 = vmatprep.subr.mxu0 0.0
    %5772 = vmatpush1.msra.mxu0 0.0
    %5773 = vmatprep.subr.mxu0 0.0
    %5774 = vmatpush1.msra.mxu0 0.0
    %5775 = vmatprep.subr.mxu0 0.0
    %5776 = vmatpush1.msra.mxu0 0.0
    %5777 = vmatprep.subr.mxu0 0.0
    %5778 = vmatpush1.msra.mxu0 0.0
    %5779 = vmatprep.subr.mxu0 0.0
    %5780 = vmatpush1.msra.mxu0 0.0
    %5781 = vmatprep.subr.mxu0 %v5254
    %5782 = vmatpush1.msra.mxu0 %v5253
    %5783 = vmatprep.subr.mxu0 %v5240
    %5784 = vmatpush1.msra.mxu0 %v5239
    %5785 = vmatprep.subr.mxu0 0.0
    %5786 = vmatpush2.msra.mxu0 0.0
    %5787 = vmatprep.subr.mxu0 0.0
    %5788 = vmatpush2.msra.mxu0 0.0
    %5789 = vmatprep.subr.mxu0 0.0
    %5790 = vmatpush2.msra.mxu0 0.0
    %5791 = vmatprep.subr.mxu0 0.0
    %5792 = vmatpush2.msra.mxu0 0.0
    %5793 = vmatprep.subr.mxu0 0.0
    %5794 = vmatpush2.msra.mxu0 0.0
    %5795 = vmatprep.subr.mxu0 0.0
    %5796 = vmatpush2.msra.mxu0 0.0
    %5797 = vmatprep.subr.mxu0 0.0
    %5798 = vmatpush2.msra.mxu0 0.0
    %5799 = vmatprep.subr.mxu0 0.0
    %5800 = vmatpush2.msra.mxu0 0.0
    %5801 = vmatprep.subr.mxu0 0.0
    %5802 = vmatpush2.msra.mxu0 0.0
    %5803 = vmatprep.subr.mxu0 0.0
    %5804 = vmatpush2.msra.mxu0 0.0
    %5805 = vmatprep.subr.mxu0 0.0
    %5806 = vmatpush2.msra.mxu0 0.0
    %5807 = vmatprep.subr.mxu0 0.0
    %5808 = vmatpush2.msra.mxu0 0.0
    %5809 = vmatprep.subr.mxu0 0.0
    %5810 = vmatpush2.msra.mxu0 0.0
    %5811 = vmatprep.subr.mxu0 0.0
    %5812 = vmatpush2.msra.mxu0 0.0
    %5813 = vmatprep.subr.mxu0 0.0
    %5814 = vmatpush2.msra.mxu0 0.0
    %5815 = vmatprep.subr.mxu0 0.0
    %5816 = vmatpush2.msra.mxu0 0.0
    %5817 = vmatprep.mubr.f32.mxu0 0.0
    %5818 = vmatmul.mubr.f32.gmra.mxu0 %v5286
    %v5819 = vpop.f32.mrf.mxu0
    %v5820 = vadd.f32 0.0, %v5819
    %v5821 = vpop.f32.mrf.mxu0
    %v5822 = vadd.f32 0.0, %v5821
    %5823 = vmatprep.mubr.f32.mxu0 0.0
    %5824 = vmatmul.mubr.f32.gmra.mxu0 %v5289
    %v5825 = vpop.f32.mrf.mxu0
    %v5826 = vadd.f32 0.0, %v5825
    %v5827 = vpop.f32.mrf.mxu0
    %v5828 = vadd.f32 0.0, %v5827
    %5829 = vdwg.mxu0
    %5830 = vmatprep.subr.mxu0 0.0
    %5831 = vmatpush1.msra.mxu0 0.0
    %5832 = vmatprep.subr.mxu0 0.0
    %5833 = vmatpush1.msra.mxu0 0.0
    %5834 = vmatprep.subr.mxu0 0.0
    %5835 = vmatpush1.msra.mxu0 0.0
    %5836 = vmatprep.subr.mxu0 0.0
    %5837 = vmatpush1.msra.mxu0 0.0
    %5838 = vmatprep.subr.mxu0 0.0
    %5839 = vmatpush1.msra.mxu0 0.0
    %5840 = vmatprep.subr.mxu0 0.0
    %5841 = vmatpush1.msra.mxu0 0.0
    %5842 = vmatprep.subr.mxu0 0.0
    %5843 = vmatpush1.msra.mxu0 0.0
    %5844 = vmatprep.subr.mxu0 0.0
    %5845 = vmatpush1.msra.mxu0 0.0
    %5846 = vmatprep.subr.mxu0 0.0
    %5847 = vmatpush1.msra.mxu0 0.0
    %5848 = vmatprep.subr.mxu0 0.0
    %5849 = vmatpush1.msra.mxu0 0.0
    %5850 = vmatprep.subr.mxu0 0.0
    %5851 = vmatpush1.msra.mxu0 0.0
    %5852 = vmatprep.subr.mxu0 0.0
    %5853 = vmatpush1.msra.mxu0 0.0
    %5854 = vmatprep.subr.mxu0 0.0
    %5855 = vmatpush1.msra.mxu0 0.0
    %5856 = vmatprep.subr.mxu0 0.0
    %5857 = vmatpush1.msra.mxu0 0.0
    %5858 = vmatprep.subr.mxu0 0.0
    %5859 = vmatpush1.msra.mxu0 %v5226
    %5860 = vmatprep.subr.mxu0 0.0
    %5861 = vmatpush1.msra.mxu0 %v5196
    %5862 = vmatprep.subr.mxu0 0.0
    %5863 = vmatpush2.msra.mxu0 0.0
    %5864 = vmatprep.subr.mxu0 0.0
    %5865 = vmatpush2.msra.mxu0 0.0
    %5866 = vmatprep.subr.mxu0 0.0
    %5867 = vmatpush2.msra.mxu0 0.0
    %5868 = vmatprep.subr.mxu0 0.0
    %5869 = vmatpush2.msra.mxu0 0.0
    %5870 = vmatprep.subr.mxu0 0.0
    %5871 = vmatpush2.msra.mxu0 0.0
    %5872 = vmatprep.subr.mxu0 0.0
    %5873 = vmatpush2.msra.mxu0 0.0
    %5874 = vmatprep.subr.mxu0 0.0
    %5875 = vmatpush2.msra.mxu0 0.0
    %5876 = vmatprep.subr.mxu0 0.0
    %5877 = vmatpush2.msra.mxu0 0.0
    %5878 = vmatprep.subr.mxu0 0.0
    %5879 = vmatpush2.msra.mxu0 0.0
    %5880 = vmatprep.subr.mxu0 0.0
    %5881 = vmatpush2.msra.mxu0 0.0
    %5882 = vmatprep.subr.mxu0 0.0
    %5883 = vmatpush2.msra.mxu0 0.0
    %5884 = vmatprep.subr.mxu0 0.0
    %5885 = vmatpush2.msra.mxu0 0.0
    %5886 = vmatprep.subr.mxu0 0.0
    %5887 = vmatpush2.msra.mxu0 0.0
    %5888 = vmatprep.subr.mxu0 0.0
    %5889 = vmatpush2.msra.mxu0 0.0
    %5890 = vmatprep.subr.mxu0 0.0
    %5891 = vmatpush2.msra.mxu0 0.0
    %5892 = vmatprep.subr.mxu0 0.0
    %5893 = vmatpush2.msra.mxu0 0.0
    %5894 = vmatprep.mubr.f32.mxu0 0.0
    %5895 = vmatmul.mubr.f32.gmra.mxu0 %v5286
    %v5896 = vpop.f32.mrf.mxu0
    %v5897 = vadd.f32 0.0, %v5896
    %v5898 = vpop.f32.mrf.mxu0
    %5899 = vmatprep.mubr.f32.mxu0 0.0
    %5900 = vmatmul.mubr.f32.gmra.mxu0 %v5289
    %v5901 = vpop.f32.mrf.mxu0
    %v5902 = vadd.f32 0.0, %v5901
    %v5903 = vpop.f32.mrf.mxu0
    %5904 = vdwg.mxu0
    %v5905 = vadd.f32 %v5134, %v5358
    %v5906 = vadd.f32 %v5135, %v5360
    %v5907 = vadd.f32 %v5136, %v5435
    %v5908 = vadd.f32 %v5137, %v5437
    %v5909 = vadd.f32 %v5138, %v5512
    %v5910 = vadd.f32 %v5139, %v5514
    %v5911 = vadd.f32 %v5140, %v5589
    %v5912 = vadd.f32 %v5141, %v5591
    %v5913 = vadd.f32 %v5142, %v5666
    %v5914 = vadd.f32 %v5143, %v5668
    %v5915 = vadd.f32 %v5144, %v5743
    %v5916 = vadd.f32 %v5145, %v5745
    %v5917 = vadd.f32 %v5146, %v5820
    %v5918 = vadd.f32 %v5147, %v5822
    %v5919 = vadd.f32 %v5148, %v5897
    %v5920 = vadd.f32 %v5149, %v5364
    %v5921 = vadd.f32 %v5150, %v5366
    %v5922 = vadd.f32 %v5151, %v5441
    %v5923 = vadd.f32 %v5152, %v5443
    %v5924 = vadd.f32 %v5153, %v5518
    %v5925 = vadd.f32 %v5154, %v5520
    %v5926 = vadd.f32 %v5155, %v5595
    %v5927 = vadd.f32 %v5156, %v5597
    %v5928 = vadd.f32 %v5157, %v5672
    %v5929 = vadd.f32 %v5158, %v5674
    %v5930 = vadd.f32 %v5159, %v5749
    %v5931 = vadd.f32 %v5160, %v5751
    %v5932 = vadd.f32 %v5161, %v5826
    %v5933 = vadd.f32 %v5162, %v5828
    %v5934 = vadd.f32 %v5163, %v5902
    %s5935 = scalar_lea.vmem %s3, 64
    %v5936 = vld [vmem:[%s5935] sm:$0xff]
    %v5937 = vld [vmem:[%s5935 + $0x8] sm:$0xff]
    %5938 = vrot.lane.b32.xlu0 %v2850, 96
    %v5939 = vpop.permute.xlu0 %5938
    %5940 = vrot.lane.b32.xlu0 %v2851, 96
    %v5941 = vpop.permute.xlu0 %5940
    %5942 = vrot.lane.b32.xlu0 %v2852, 96
    %v5943 = vpop.permute.xlu0 %5942
    %5944 = vrot.lane.b32.xlu0 %v2853, 96
    %v5945 = vpop.permute.xlu0 %5944
    %5946 = vrot.lane.b32.xlu0 %v2854, 96
    %v5947 = vpop.permute.xlu0 %5946
    %5948 = vrot.lane.b32.xlu0 %v2855, 96
    %v5949 = vpop.permute.xlu0 %5948
    %5950 = vrot.lane.b32.xlu0 %v2856, 96
    %v5951 = vpop.permute.xlu0 %5950
    %5952 = vrot.lane.b32.xlu0 %v2857, 96
    %v5953 = vpop.permute.xlu0 %5952
    %5954 = vrot.lane.b32.xlu0 %v2858, 96
    %v5955 = vpop.permute.xlu0 %5954
    %5956 = vrot.lane.b32.xlu0 %v2859, 96
    %v5957 = vpop.permute.xlu0 %5956
    %5958 = vrot.lane.b32.xlu0 %v2860, 96
    %v5959 = vpop.permute.xlu0 %5958
    %5960 = vrot.lane.b32.xlu0 %v2861, 96
    %v5961 = vpop.permute.xlu0 %5960
    %5962 = vrot.lane.b32.xlu0 %v2862, 96
    %v5963 = vpop.permute.xlu0 %5962
    %5964 = vrot.lane.b32.xlu0 %v2863, 96
    %v5965 = vpop.permute.xlu0 %5964
    %5966 = vrot.lane.b32.xlu0 %v2864, 96
    %v5967 = vpop.permute.xlu0 %5966
    %5968 = vrot.lane.b32.xlu0 %v2865, 96
    %v5969 = vpop.permute.xlu0 %5968
    %5970 = vrot.lane.b32.xlu0 %v2866, 96
    %v5971 = vpop.permute.xlu0 %5970
    %5972 = vrot.lane.b32.xlu0 %v2867, 96
    %v5973 = vpop.permute.xlu0 %5972
    %5974 = vrot.lane.b32.xlu0 %v2868, 96
    %v5975 = vpop.permute.xlu0 %5974
    %5976 = vrot.lane.b32.xlu0 %v2869, 96
    %v5977 = vpop.permute.xlu0 %5976
    %5978 = vrot.lane.b32.xlu0 %v2870, 96
    %v5979 = vpop.permute.xlu0 %5978
    %5980 = vrot.lane.b32.xlu0 %v2871, 96
    %v5981 = vpop.permute.xlu0 %5980
    %5982 = vrot.lane.b32.xlu0 %v2872, 96
    %v5983 = vpop.permute.xlu0 %5982
    %5984 = vrot.lane.b32.xlu0 %v2873, 96
    %v5985 = vpop.permute.xlu0 %5984
    %5986 = vrot.lane.b32.xlu0 %v2874, 96
    %v5987 = vpop.permute.xlu0 %5986
    %5988 = vrot.lane.b32.xlu0 %v2875, 96
    %v5989 = vpop.permute.xlu0 %5988
    %5990 = vrot.lane.b32.xlu0 %v2876, 96
    %v5991 = vpop.permute.xlu0 %5990
    %5992 = vrot.lane.b32.xlu0 %v2877, 96
    %v5993 = vpop.permute.xlu0 %5992
    %5994 = vrot.lane.b32.xlu0 %v2878, 96
    %v5995 = vpop.permute.xlu0 %5994
    %5996 = vrot.lane.b32.xlu0 %v2879, 96
    %v5997 = vpop.permute.xlu0 %5996
    %v5998 = vsel %vm1664, %v5939, %v5941
    %v5999 = vsel %vm1664, %v5941, %v5943
    %v6000 = vsel %vm1664, %v5943, %v5945
    %v6001 = vsel %vm1664, %v5945, %v5947
    %v6002 = vsel %vm1664, %v5947, %v5949
    %v6003 = vsel %vm1664, %v5949, %v5951
    %v6004 = vsel %vm1664, %v5951, %v5953
    %v6005 = vsel %vm1664, %v5953, %v5955
    %v6006 = vsel %vm1664, %v5955, %v5957
    %v6007 = vsel %vm1664, %v5957, %v5959
    %v6008 = vsel %vm1664, %v5959, %v5961
    %v6009 = vsel %vm1664, %v5961, %v5963
    %v6010 = vsel %vm1664, %v5963, %v5965
    %v6011 = vsel %vm1664, %v5965, %v5967
    %v6012 = vsel %vm1664, %v5969, %v5971
    %v6013 = vsel %vm1664, %v5971, %v5973
    %v6014 = vsel %vm1664, %v5973, %v5975
    %v6015 = vsel %vm1664, %v5975, %v5977
    %v6016 = vsel %vm1664, %v5977, %v5979
    %v6017 = vsel %vm1664, %v5979, %v5981
    %v6018 = vsel %vm1664, %v5981, %v5983
    %v6019 = vsel %vm1664, %v5983, %v5985
    %v6020 = vsel %vm1664, %v5985, %v5987
    %v6021 = vsel %vm1664, %v5987, %v5989
    %v6022 = vsel %vm1664, %v5989, %v5991
    %v6023 = vsel %vm1664, %v5991, %v5993
    %v6024 = vsel %vm1664, %v5993, %v5995
    %v6025 = vsel %vm1664, %v5995, %v5997
    %v6057 = vsel %vm3033, %v5936, 0
    %v6060 = vsel %vm3033, %v5937, 0
    %6062 = vmatprep.subr.mxu0 0.0
    %6063 = vmatpush1.msra.mxu0 0.0
    %6064 = vmatprep.subr.mxu0 0.0
    %6065 = vmatpush1.msra.mxu0 0.0
    %6066 = vmatprep.subr.mxu0 0.0
    %6067 = vmatpush1.msra.mxu0 0.0
    %6068 = vmatprep.subr.mxu0 0.0
    %6069 = vmatpush1.msra.mxu0 0.0
    %6070 = vmatprep.subr.mxu0 0.0
    %6071 = vmatpush1.msra.mxu0 0.0
    %6072 = vmatprep.subr.mxu0 0.0
    %6073 = vmatpush1.msra.mxu0 0.0
    %6074 = vmatprep.subr.mxu0 0.0
    %6075 = vmatpush1.msra.mxu0 0.0
    %6076 = vmatprep.subr.mxu0 0.0
    %6077 = vmatpush1.msra.mxu0 0.0
    %6078 = vmatprep.subr.mxu0 0.0
    %6079 = vmatpush1.msra.mxu0 0.0
    %6080 = vmatprep.subr.mxu0 0.0
    %6081 = vmatpush1.msra.mxu0 0.0
    %6082 = vmatprep.subr.mxu0 0.0
    %6083 = vmatpush1.msra.mxu0 0.0
    %6084 = vmatprep.subr.mxu0 0.0
    %6085 = vmatpush1.msra.mxu0 0.0
    %6086 = vmatprep.subr.mxu0 0.0
    %6087 = vmatpush1.msra.mxu0 0.0
    %6088 = vmatprep.subr.mxu0 0.0
    %6089 = vmatpush1.msra.mxu0 0.0
    %6090 = vmatprep.subr.mxu0 %v6013
    %6091 = vmatpush1.msra.mxu0 %v6012
    %6092 = vmatprep.subr.mxu0 %v5999
    %6093 = vmatpush1.msra.mxu0 %v5998
    %6094 = vmatprep.subr.mxu0 0.0
    %6095 = vmatpush2.msra.mxu0 0.0
    %6096 = vmatprep.subr.mxu0 0.0
    %6097 = vmatpush2.msra.mxu0 0.0
    %6098 = vmatprep.subr.mxu0 0.0
    %6099 = vmatpush2.msra.mxu0 0.0
    %6100 = vmatprep.subr.mxu0 0.0
    %6101 = vmatpush2.msra.mxu0 0.0
    %6102 = vmatprep.subr.mxu0 0.0
    %6103 = vmatpush2.msra.mxu0 0.0
    %6104 = vmatprep.subr.mxu0 0.0
    %6105 = vmatpush2.msra.mxu0 0.0
    %6106 = vmatprep.subr.mxu0 0.0
    %6107 = vmatpush2.msra.mxu0 0.0
    %6108 = vmatprep.subr.mxu0 0.0
    %6109 = vmatpush2.msra.mxu0 0.0
    %6110 = vmatprep.subr.mxu0 0.0
    %6111 = vmatpush2.msra.mxu0 0.0
    %6112 = vmatprep.subr.mxu0 0.0
    %6113 = vmatpush2.msra.mxu0 0.0
    %6114 = vmatprep.subr.mxu0 0.0
    %6115 = vmatpush2.msra.mxu0 0.0
    %6116 = vmatprep.subr.mxu0 0.0
    %6117 = vmatpush2.msra.mxu0 0.0
    %6118 = vmatprep.subr.mxu0 0.0
    %6119 = vmatpush2.msra.mxu0 0.0
    %6120 = vmatprep.subr.mxu0 0.0
    %6121 = vmatpush2.msra.mxu0 0.0
    %6122 = vmatprep.subr.mxu0 0.0
    %6123 = vmatpush2.msra.mxu0 0.0
    %6124 = vmatprep.subr.mxu0 0.0
    %6125 = vmatpush2.msra.mxu0 0.0
    %6126 = vmatprep.mubr.f32.mxu0 0.0
    %6127 = vmatmul.mubr.f32.gmra.mxu0 %v6057
    %v6128 = vpop.f32.mrf.mxu0
    %v6129 = vadd.f32 0.0, %v6128
    %v6130 = vpop.f32.mrf.mxu0
    %v6131 = vadd.f32 0.0, %v6130
    %6132 = vmatprep.mubr.f32.mxu0 0.0
    %6133 = vmatmul.mubr.f32.gmra.mxu0 %v6060
    %v6134 = vpop.f32.mrf.mxu0
    %v6135 = vadd.f32 0.0, %v6134
    %v6136 = vpop.f32.mrf.mxu0
    %v6137 = vadd.f32 0.0, %v6136
    %6138 = vdwg.mxu0
    %6139 = vmatprep.subr.mxu0 0.0
    %6140 = vmatpush1.msra.mxu0 0.0
    %6141 = vmatprep.subr.mxu0 0.0
    %6142 = vmatpush1.msra.mxu0 0.0
    %6143 = vmatprep.subr.mxu0 0.0
    %6144 = vmatpush1.msra.mxu0 0.0
    %6145 = vmatprep.subr.mxu0 0.0
    %6146 = vmatpush1.msra.mxu0 0.0
    %6147 = vmatprep.subr.mxu0 0.0
    %6148 = vmatpush1.msra.mxu0 0.0
    %6149 = vmatprep.subr.mxu0 0.0
    %6150 = vmatpush1.msra.mxu0 0.0
    %6151 = vmatprep.subr.mxu0 0.0
    %6152 = vmatpush1.msra.mxu0 0.0
    %6153 = vmatprep.subr.mxu0 0.0
    %6154 = vmatpush1.msra.mxu0 0.0
    %6155 = vmatprep.subr.mxu0 0.0
    %6156 = vmatpush1.msra.mxu0 0.0
    %6157 = vmatprep.subr.mxu0 0.0
    %6158 = vmatpush1.msra.mxu0 0.0
    %6159 = vmatprep.subr.mxu0 0.0
    %6160 = vmatpush1.msra.mxu0 0.0
    %6161 = vmatprep.subr.mxu0 0.0
    %6162 = vmatpush1.msra.mxu0 0.0
    %6163 = vmatprep.subr.mxu0 0.0
    %6164 = vmatpush1.msra.mxu0 0.0
    %6165 = vmatprep.subr.mxu0 0.0
    %6166 = vmatpush1.msra.mxu0 0.0
    %6167 = vmatprep.subr.mxu0 %v6015
    %6168 = vmatpush1.msra.mxu0 %v6014
    %6169 = vmatprep.subr.mxu0 %v6001
    %6170 = vmatpush1.msra.mxu0 %v6000
    %6171 = vmatprep.subr.mxu0 0.0
    %6172 = vmatpush2.msra.mxu0 0.0
    %6173 = vmatprep.subr.mxu0 0.0
    %6174 = vmatpush2.msra.mxu0 0.0
    %6175 = vmatprep.subr.mxu0 0.0
    %6176 = vmatpush2.msra.mxu0 0.0
    %6177 = vmatprep.subr.mxu0 0.0
    %6178 = vmatpush2.msra.mxu0 0.0
    %6179 = vmatprep.subr.mxu0 0.0
    %6180 = vmatpush2.msra.mxu0 0.0
    %6181 = vmatprep.subr.mxu0 0.0
    %6182 = vmatpush2.msra.mxu0 0.0
    %6183 = vmatprep.subr.mxu0 0.0
    %6184 = vmatpush2.msra.mxu0 0.0
    %6185 = vmatprep.subr.mxu0 0.0
    %6186 = vmatpush2.msra.mxu0 0.0
    %6187 = vmatprep.subr.mxu0 0.0
    %6188 = vmatpush2.msra.mxu0 0.0
    %6189 = vmatprep.subr.mxu0 0.0
    %6190 = vmatpush2.msra.mxu0 0.0
    %6191 = vmatprep.subr.mxu0 0.0
    %6192 = vmatpush2.msra.mxu0 0.0
    %6193 = vmatprep.subr.mxu0 0.0
    %6194 = vmatpush2.msra.mxu0 0.0
    %6195 = vmatprep.subr.mxu0 0.0
    %6196 = vmatpush2.msra.mxu0 0.0
    %6197 = vmatprep.subr.mxu0 0.0
    %6198 = vmatpush2.msra.mxu0 0.0
    %6199 = vmatprep.subr.mxu0 0.0
    %6200 = vmatpush2.msra.mxu0 0.0
    %6201 = vmatprep.subr.mxu0 0.0
    %6202 = vmatpush2.msra.mxu0 0.0
    %6203 = vmatprep.mubr.f32.mxu0 0.0
    %6204 = vmatmul.mubr.f32.gmra.mxu0 %v6057
    %v6205 = vpop.f32.mrf.mxu0
    %v6206 = vadd.f32 0.0, %v6205
    %v6207 = vpop.f32.mrf.mxu0
    %v6208 = vadd.f32 0.0, %v6207
    %6209 = vmatprep.mubr.f32.mxu0 0.0
    %6210 = vmatmul.mubr.f32.gmra.mxu0 %v6060
    %v6211 = vpop.f32.mrf.mxu0
    %v6212 = vadd.f32 0.0, %v6211
    %v6213 = vpop.f32.mrf.mxu0
    %v6214 = vadd.f32 0.0, %v6213
    %6215 = vdwg.mxu0
    %6216 = vmatprep.subr.mxu0 0.0
    %6217 = vmatpush1.msra.mxu0 0.0
    %6218 = vmatprep.subr.mxu0 0.0
    %6219 = vmatpush1.msra.mxu0 0.0
    %6220 = vmatprep.subr.mxu0 0.0
    %6221 = vmatpush1.msra.mxu0 0.0
    %6222 = vmatprep.subr.mxu0 0.0
    %6223 = vmatpush1.msra.mxu0 0.0
    %6224 = vmatprep.subr.mxu0 0.0
    %6225 = vmatpush1.msra.mxu0 0.0
    %6226 = vmatprep.subr.mxu0 0.0
    %6227 = vmatpush1.msra.mxu0 0.0
    %6228 = vmatprep.subr.mxu0 0.0
    %6229 = vmatpush1.msra.mxu0 0.0
    %6230 = vmatprep.subr.mxu0 0.0
    %6231 = vmatpush1.msra.mxu0 0.0
    %6232 = vmatprep.subr.mxu0 0.0
    %6233 = vmatpush1.msra.mxu0 0.0
    %6234 = vmatprep.subr.mxu0 0.0
    %6235 = vmatpush1.msra.mxu0 0.0
    %6236 = vmatprep.subr.mxu0 0.0
    %6237 = vmatpush1.msra.mxu0 0.0
    %6238 = vmatprep.subr.mxu0 0.0
    %6239 = vmatpush1.msra.mxu0 0.0
    %6240 = vmatprep.subr.mxu0 0.0
    %6241 = vmatpush1.msra.mxu0 0.0
    %6242 = vmatprep.subr.mxu0 0.0
    %6243 = vmatpush1.msra.mxu0 0.0
    %6244 = vmatprep.subr.mxu0 %v6017
    %6245 = vmatpush1.msra.mxu0 %v6016
    %6246 = vmatprep.subr.mxu0 %v6003
    %6247 = vmatpush1.msra.mxu0 %v6002
    %6248 = vmatprep.subr.mxu0 0.0
    %6249 = vmatpush2.msra.mxu0 0.0
    %6250 = vmatprep.subr.mxu0 0.0
    %6251 = vmatpush2.msra.mxu0 0.0
    %6252 = vmatprep.subr.mxu0 0.0
    %6253 = vmatpush2.msra.mxu0 0.0
    %6254 = vmatprep.subr.mxu0 0.0
    %6255 = vmatpush2.msra.mxu0 0.0
    %6256 = vmatprep.subr.mxu0 0.0
    %6257 = vmatpush2.msra.mxu0 0.0
    %6258 = vmatprep.subr.mxu0 0.0
    %6259 = vmatpush2.msra.mxu0 0.0
    %6260 = vmatprep.subr.mxu0 0.0
    %6261 = vmatpush2.msra.mxu0 0.0
    %6262 = vmatprep.subr.mxu0 0.0
    %6263 = vmatpush2.msra.mxu0 0.0
    %6264 = vmatprep.subr.mxu0 0.0
    %6265 = vmatpush2.msra.mxu0 0.0
    %6266 = vmatprep.subr.mxu0 0.0
    %6267 = vmatpush2.msra.mxu0 0.0
    %6268 = vmatprep.subr.mxu0 0.0
    %6269 = vmatpush2.msra.mxu0 0.0
    %6270 = vmatprep.subr.mxu0 0.0
    %6271 = vmatpush2.msra.mxu0 0.0
    %6272 = vmatprep.subr.mxu0 0.0
    %6273 = vmatpush2.msra.mxu0 0.0
    %6274 = vmatprep.subr.mxu0 0.0
    %6275 = vmatpush2.msra.mxu0 0.0
    %6276 = vmatprep.subr.mxu0 0.0
    %6277 = vmatpush2.msra.mxu0 0.0
    %6278 = vmatprep.subr.mxu0 0.0
    %6279 = vmatpush2.msra.mxu0 0.0
    %6280 = vmatprep.mubr.f32.mxu0 0.0
    %6281 = vmatmul.mubr.f32.gmra.mxu0 %v6057
    %v6282 = vpop.f32.mrf.mxu0
    %v6283 = vadd.f32 0.0, %v6282
    %v6284 = vpop.f32.mrf.mxu0
    %v6285 = vadd.f32 0.0, %v6284
    %6286 = vmatprep.mubr.f32.mxu0 0.0
    %6287 = vmatmul.mubr.f32.gmra.mxu0 %v6060
    %v6288 = vpop.f32.mrf.mxu0
    %v6289 = vadd.f32 0.0, %v6288
    %v6290 = vpop.f32.mrf.mxu0
    %v6291 = vadd.f32 0.0, %v6290
    %6292 = vdwg.mxu0
    %6293 = vmatprep.subr.mxu0 0.0
    %6294 = vmatpush1.msra.mxu0 0.0
    %6295 = vmatprep.subr.mxu0 0.0
    %6296 = vmatpush1.msra.mxu0 0.0
    %6297 = vmatprep.subr.mxu0 0.0
    %6298 = vmatpush1.msra.mxu0 0.0
    %6299 = vmatprep.subr.mxu0 0.0
    %6300 = vmatpush1.msra.mxu0 0.0
    %6301 = vmatprep.subr.mxu0 0.0
    %6302 = vmatpush1.msra.mxu0 0.0
    %6303 = vmatprep.subr.mxu0 0.0
    %6304 = vmatpush1.msra.mxu0 0.0
    %6305 = vmatprep.subr.mxu0 0.0
    %6306 = vmatpush1.msra.mxu0 0.0
    %6307 = vmatprep.subr.mxu0 0.0
    %6308 = vmatpush1.msra.mxu0 0.0
    %6309 = vmatprep.subr.mxu0 0.0
    %6310 = vmatpush1.msra.mxu0 0.0
    %6311 = vmatprep.subr.mxu0 0.0
    %6312 = vmatpush1.msra.mxu0 0.0
    %6313 = vmatprep.subr.mxu0 0.0
    %6314 = vmatpush1.msra.mxu0 0.0
    %6315 = vmatprep.subr.mxu0 0.0
    %6316 = vmatpush1.msra.mxu0 0.0
    %6317 = vmatprep.subr.mxu0 0.0
    %6318 = vmatpush1.msra.mxu0 0.0
    %6319 = vmatprep.subr.mxu0 0.0
    %6320 = vmatpush1.msra.mxu0 0.0
    %6321 = vmatprep.subr.mxu0 %v6019
    %6322 = vmatpush1.msra.mxu0 %v6018
    %6323 = vmatprep.subr.mxu0 %v6005
    %6324 = vmatpush1.msra.mxu0 %v6004
    %6325 = vmatprep.subr.mxu0 0.0
    %6326 = vmatpush2.msra.mxu0 0.0
    %6327 = vmatprep.subr.mxu0 0.0
    %6328 = vmatpush2.msra.mxu0 0.0
    %6329 = vmatprep.subr.mxu0 0.0
    %6330 = vmatpush2.msra.mxu0 0.0
    %6331 = vmatprep.subr.mxu0 0.0
    %6332 = vmatpush2.msra.mxu0 0.0
    %6333 = vmatprep.subr.mxu0 0.0
    %6334 = vmatpush2.msra.mxu0 0.0
    %6335 = vmatprep.subr.mxu0 0.0
    %6336 = vmatpush2.msra.mxu0 0.0
    %6337 = vmatprep.subr.mxu0 0.0
    %6338 = vmatpush2.msra.mxu0 0.0
    %6339 = vmatprep.subr.mxu0 0.0
    %6340 = vmatpush2.msra.mxu0 0.0
    %6341 = vmatprep.subr.mxu0 0.0
    %6342 = vmatpush2.msra.mxu0 0.0
    %6343 = vmatprep.subr.mxu0 0.0
    %6344 = vmatpush2.msra.mxu0 0.0
    %6345 = vmatprep.subr.mxu0 0.0
    %6346 = vmatpush2.msra.mxu0 0.0
    %6347 = vmatprep.subr.mxu0 0.0
    %6348 = vmatpush2.msra.mxu0 0.0
    %6349 = vmatprep.subr.mxu0 0.0
    %6350 = vmatpush2.msra.mxu0 0.0
    %6351 = vmatprep.subr.mxu0 0.0
    %6352 = vmatpush2.msra.mxu0 0.0
    %6353 = vmatprep.subr.mxu0 0.0
    %6354 = vmatpush2.msra.mxu0 0.0
    %6355 = vmatprep.subr.mxu0 0.0
    %6356 = vmatpush2.msra.mxu0 0.0
    %6357 = vmatprep.mubr.f32.mxu0 0.0
    %6358 = vmatmul.mubr.f32.gmra.mxu0 %v6057
    %v6359 = vpop.f32.mrf.mxu0
    %v6360 = vadd.f32 0.0, %v6359
    %v6361 = vpop.f32.mrf.mxu0
    %v6362 = vadd.f32 0.0, %v6361
    %6363 = vmatprep.mubr.f32.mxu0 0.0
    %6364 = vmatmul.mubr.f32.gmra.mxu0 %v6060
    %v6365 = vpop.f32.mrf.mxu0
    %v6366 = vadd.f32 0.0, %v6365
    %v6367 = vpop.f32.mrf.mxu0
    %v6368 = vadd.f32 0.0, %v6367
    %6369 = vdwg.mxu0
    %6370 = vmatprep.subr.mxu0 0.0
    %6371 = vmatpush1.msra.mxu0 0.0
    %6372 = vmatprep.subr.mxu0 0.0
    %6373 = vmatpush1.msra.mxu0 0.0
    %6374 = vmatprep.subr.mxu0 0.0
    %6375 = vmatpush1.msra.mxu0 0.0
    %6376 = vmatprep.subr.mxu0 0.0
    %6377 = vmatpush1.msra.mxu0 0.0
    %6378 = vmatprep.subr.mxu0 0.0
    %6379 = vmatpush1.msra.mxu0 0.0
    %6380 = vmatprep.subr.mxu0 0.0
    %6381 = vmatpush1.msra.mxu0 0.0
    %6382 = vmatprep.subr.mxu0 0.0
    %6383 = vmatpush1.msra.mxu0 0.0
    %6384 = vmatprep.subr.mxu0 0.0
    %6385 = vmatpush1.msra.mxu0 0.0
    %6386 = vmatprep.subr.mxu0 0.0
    %6387 = vmatpush1.msra.mxu0 0.0
    %6388 = vmatprep.subr.mxu0 0.0
    %6389 = vmatpush1.msra.mxu0 0.0
    %6390 = vmatprep.subr.mxu0 0.0
    %6391 = vmatpush1.msra.mxu0 0.0
    %6392 = vmatprep.subr.mxu0 0.0
    %6393 = vmatpush1.msra.mxu0 0.0
    %6394 = vmatprep.subr.mxu0 0.0
    %6395 = vmatpush1.msra.mxu0 0.0
    %6396 = vmatprep.subr.mxu0 0.0
    %6397 = vmatpush1.msra.mxu0 0.0
    %6398 = vmatprep.subr.mxu0 %v6021
    %6399 = vmatpush1.msra.mxu0 %v6020
    %6400 = vmatprep.subr.mxu0 %v6007
    %6401 = vmatpush1.msra.mxu0 %v6006
    %6402 = vmatprep.subr.mxu0 0.0
    %6403 = vmatpush2.msra.mxu0 0.0
    %6404 = vmatprep.subr.mxu0 0.0
    %6405 = vmatpush2.msra.mxu0 0.0
    %6406 = vmatprep.subr.mxu0 0.0
    %6407 = vmatpush2.msra.mxu0 0.0
    %6408 = vmatprep.subr.mxu0 0.0
    %6409 = vmatpush2.msra.mxu0 0.0
    %6410 = vmatprep.subr.mxu0 0.0
    %6411 = vmatpush2.msra.mxu0 0.0
    %6412 = vmatprep.subr.mxu0 0.0
    %6413 = vmatpush2.msra.mxu0 0.0
    %6414 = vmatprep.subr.mxu0 0.0
    %6415 = vmatpush2.msra.mxu0 0.0
    %6416 = vmatprep.subr.mxu0 0.0
    %6417 = vmatpush2.msra.mxu0 0.0
    %6418 = vmatprep.subr.mxu0 0.0
    %6419 = vmatpush2.msra.mxu0 0.0
    %6420 = vmatprep.subr.mxu0 0.0
    %6421 = vmatpush2.msra.mxu0 0.0
    %6422 = vmatprep.subr.mxu0 0.0
    %6423 = vmatpush2.msra.mxu0 0.0
    %6424 = vmatprep.subr.mxu0 0.0
    %6425 = vmatpush2.msra.mxu0 0.0
    %6426 = vmatprep.subr.mxu0 0.0
    %6427 = vmatpush2.msra.mxu0 0.0
    %6428 = vmatprep.subr.mxu0 0.0
    %6429 = vmatpush2.msra.mxu0 0.0
    %6430 = vmatprep.subr.mxu0 0.0
    %6431 = vmatpush2.msra.mxu0 0.0
    %6432 = vmatprep.subr.mxu0 0.0
    %6433 = vmatpush2.msra.mxu0 0.0
    %6434 = vmatprep.mubr.f32.mxu0 0.0
    %6435 = vmatmul.mubr.f32.gmra.mxu0 %v6057
    %v6436 = vpop.f32.mrf.mxu0
    %v6437 = vadd.f32 0.0, %v6436
    %v6438 = vpop.f32.mrf.mxu0
    %v6439 = vadd.f32 0.0, %v6438
    %6440 = vmatprep.mubr.f32.mxu0 0.0
    %6441 = vmatmul.mubr.f32.gmra.mxu0 %v6060
    %v6442 = vpop.f32.mrf.mxu0
    %v6443 = vadd.f32 0.0, %v6442
    %v6444 = vpop.f32.mrf.mxu0
    %v6445 = vadd.f32 0.0, %v6444
    %6446 = vdwg.mxu0
    %6447 = vmatprep.subr.mxu0 0.0
    %6448 = vmatpush1.msra.mxu0 0.0
    %6449 = vmatprep.subr.mxu0 0.0
    %6450 = vmatpush1.msra.mxu0 0.0
    %6451 = vmatprep.subr.mxu0 0.0
    %6452 = vmatpush1.msra.mxu0 0.0
    %6453 = vmatprep.subr.mxu0 0.0
    %6454 = vmatpush1.msra.mxu0 0.0
    %6455 = vmatprep.subr.mxu0 0.0
    %6456 = vmatpush1.msra.mxu0 0.0
    %6457 = vmatprep.subr.mxu0 0.0
    %6458 = vmatpush1.msra.mxu0 0.0
    %6459 = vmatprep.subr.mxu0 0.0
    %6460 = vmatpush1.msra.mxu0 0.0
    %6461 = vmatprep.subr.mxu0 0.0
    %6462 = vmatpush1.msra.mxu0 0.0
    %6463 = vmatprep.subr.mxu0 0.0
    %6464 = vmatpush1.msra.mxu0 0.0
    %6465 = vmatprep.subr.mxu0 0.0
    %6466 = vmatpush1.msra.mxu0 0.0
    %6467 = vmatprep.subr.mxu0 0.0
    %6468 = vmatpush1.msra.mxu0 0.0
    %6469 = vmatprep.subr.mxu0 0.0
    %6470 = vmatpush1.msra.mxu0 0.0
    %6471 = vmatprep.subr.mxu0 0.0
    %6472 = vmatpush1.msra.mxu0 0.0
    %6473 = vmatprep.subr.mxu0 0.0
    %6474 = vmatpush1.msra.mxu0 0.0
    %6475 = vmatprep.subr.mxu0 %v6023
    %6476 = vmatpush1.msra.mxu0 %v6022
    %6477 = vmatprep.subr.mxu0 %v6009
    %6478 = vmatpush1.msra.mxu0 %v6008
    %6479 = vmatprep.subr.mxu0 0.0
    %6480 = vmatpush2.msra.mxu0 0.0
    %6481 = vmatprep.subr.mxu0 0.0
    %6482 = vmatpush2.msra.mxu0 0.0
    %6483 = vmatprep.subr.mxu0 0.0
    %6484 = vmatpush2.msra.mxu0 0.0
    %6485 = vmatprep.subr.mxu0 0.0
    %6486 = vmatpush2.msra.mxu0 0.0
    %6487 = vmatprep.subr.mxu0 0.0
    %6488 = vmatpush2.msra.mxu0 0.0
    %6489 = vmatprep.subr.mxu0 0.0
    %6490 = vmatpush2.msra.mxu0 0.0
    %6491 = vmatprep.subr.mxu0 0.0
    %6492 = vmatpush2.msra.mxu0 0.0
    %6493 = vmatprep.subr.mxu0 0.0
    %6494 = vmatpush2.msra.mxu0 0.0
    %6495 = vmatprep.subr.mxu0 0.0
    %6496 = vmatpush2.msra.mxu0 0.0
    %6497 = vmatprep.subr.mxu0 0.0
    %6498 = vmatpush2.msra.mxu0 0.0
    %6499 = vmatprep.subr.mxu0 0.0
    %6500 = vmatpush2.msra.mxu0 0.0
    %6501 = vmatprep.subr.mxu0 0.0
    %6502 = vmatpush2.msra.mxu0 0.0
    %6503 = vmatprep.subr.mxu0 0.0
    %6504 = vmatpush2.msra.mxu0 0.0
    %6505 = vmatprep.subr.mxu0 0.0
    %6506 = vmatpush2.msra.mxu0 0.0
    %6507 = vmatprep.subr.mxu0 0.0
    %6508 = vmatpush2.msra.mxu0 0.0
    %6509 = vmatprep.subr.mxu0 0.0
    %6510 = vmatpush2.msra.mxu0 0.0
    %6511 = vmatprep.mubr.f32.mxu0 0.0
    %6512 = vmatmul.mubr.f32.gmra.mxu0 %v6057
    %v6513 = vpop.f32.mrf.mxu0
    %v6514 = vadd.f32 0.0, %v6513
    %v6515 = vpop.f32.mrf.mxu0
    %v6516 = vadd.f32 0.0, %v6515
    %6517 = vmatprep.mubr.f32.mxu0 0.0
    %6518 = vmatmul.mubr.f32.gmra.mxu0 %v6060
    %v6519 = vpop.f32.mrf.mxu0
    %v6520 = vadd.f32 0.0, %v6519
    %v6521 = vpop.f32.mrf.mxu0
    %v6522 = vadd.f32 0.0, %v6521
    %6523 = vdwg.mxu0
    %6524 = vmatprep.subr.mxu0 0.0
    %6525 = vmatpush1.msra.mxu0 0.0
    %6526 = vmatprep.subr.mxu0 0.0
    %6527 = vmatpush1.msra.mxu0 0.0
    %6528 = vmatprep.subr.mxu0 0.0
    %6529 = vmatpush1.msra.mxu0 0.0
    %6530 = vmatprep.subr.mxu0 0.0
    %6531 = vmatpush1.msra.mxu0 0.0
    %6532 = vmatprep.subr.mxu0 0.0
    %6533 = vmatpush1.msra.mxu0 0.0
    %6534 = vmatprep.subr.mxu0 0.0
    %6535 = vmatpush1.msra.mxu0 0.0
    %6536 = vmatprep.subr.mxu0 0.0
    %6537 = vmatpush1.msra.mxu0 0.0
    %6538 = vmatprep.subr.mxu0 0.0
    %6539 = vmatpush1.msra.mxu0 0.0
    %6540 = vmatprep.subr.mxu0 0.0
    %6541 = vmatpush1.msra.mxu0 0.0
    %6542 = vmatprep.subr.mxu0 0.0
    %6543 = vmatpush1.msra.mxu0 0.0
    %6544 = vmatprep.subr.mxu0 0.0
    %6545 = vmatpush1.msra.mxu0 0.0
    %6546 = vmatprep.subr.mxu0 0.0
    %6547 = vmatpush1.msra.mxu0 0.0
    %6548 = vmatprep.subr.mxu0 0.0
    %6549 = vmatpush1.msra.mxu0 0.0
    %6550 = vmatprep.subr.mxu0 0.0
    %6551 = vmatpush1.msra.mxu0 0.0
    %6552 = vmatprep.subr.mxu0 %v6025
    %6553 = vmatpush1.msra.mxu0 %v6024
    %6554 = vmatprep.subr.mxu0 %v6011
    %6555 = vmatpush1.msra.mxu0 %v6010
    %6556 = vmatprep.subr.mxu0 0.0
    %6557 = vmatpush2.msra.mxu0 0.0
    %6558 = vmatprep.subr.mxu0 0.0
    %6559 = vmatpush2.msra.mxu0 0.0
    %6560 = vmatprep.subr.mxu0 0.0
    %6561 = vmatpush2.msra.mxu0 0.0
    %6562 = vmatprep.subr.mxu0 0.0
    %6563 = vmatpush2.msra.mxu0 0.0
    %6564 = vmatprep.subr.mxu0 0.0
    %6565 = vmatpush2.msra.mxu0 0.0
    %6566 = vmatprep.subr.mxu0 0.0
    %6567 = vmatpush2.msra.mxu0 0.0
    %6568 = vmatprep.subr.mxu0 0.0
    %6569 = vmatpush2.msra.mxu0 0.0
    %6570 = vmatprep.subr.mxu0 0.0
    %6571 = vmatpush2.msra.mxu0 0.0
    %6572 = vmatprep.subr.mxu0 0.0
    %6573 = vmatpush2.msra.mxu0 0.0
    %6574 = vmatprep.subr.mxu0 0.0
    %6575 = vmatpush2.msra.mxu0 0.0
    %6576 = vmatprep.subr.mxu0 0.0
    %6577 = vmatpush2.msra.mxu0 0.0
    %6578 = vmatprep.subr.mxu0 0.0
    %6579 = vmatpush2.msra.mxu0 0.0
    %6580 = vmatprep.subr.mxu0 0.0
    %6581 = vmatpush2.msra.mxu0 0.0
    %6582 = vmatprep.subr.mxu0 0.0
    %6583 = vmatpush2.msra.mxu0 0.0
    %6584 = vmatprep.subr.mxu0 0.0
    %6585 = vmatpush2.msra.mxu0 0.0
    %6586 = vmatprep.subr.mxu0 0.0
    %6587 = vmatpush2.msra.mxu0 0.0
    %6588 = vmatprep.mubr.f32.mxu0 0.0
    %6589 = vmatmul.mubr.f32.gmra.mxu0 %v6057
    %v6590 = vpop.f32.mrf.mxu0
    %v6591 = vadd.f32 0.0, %v6590
    %v6592 = vpop.f32.mrf.mxu0
    %v6593 = vadd.f32 0.0, %v6592
    %6594 = vmatprep.mubr.f32.mxu0 0.0
    %6595 = vmatmul.mubr.f32.gmra.mxu0 %v6060
    %v6596 = vpop.f32.mrf.mxu0
    %v6597 = vadd.f32 0.0, %v6596
    %v6598 = vpop.f32.mrf.mxu0
    %v6599 = vadd.f32 0.0, %v6598
    %6600 = vdwg.mxu0
    %6601 = vmatprep.subr.mxu0 0.0
    %6602 = vmatpush1.msra.mxu0 0.0
    %6603 = vmatprep.subr.mxu0 0.0
    %6604 = vmatpush1.msra.mxu0 0.0
    %6605 = vmatprep.subr.mxu0 0.0
    %6606 = vmatpush1.msra.mxu0 0.0
    %6607 = vmatprep.subr.mxu0 0.0
    %6608 = vmatpush1.msra.mxu0 0.0
    %6609 = vmatprep.subr.mxu0 0.0
    %6610 = vmatpush1.msra.mxu0 0.0
    %6611 = vmatprep.subr.mxu0 0.0
    %6612 = vmatpush1.msra.mxu0 0.0
    %6613 = vmatprep.subr.mxu0 0.0
    %6614 = vmatpush1.msra.mxu0 0.0
    %6615 = vmatprep.subr.mxu0 0.0
    %6616 = vmatpush1.msra.mxu0 0.0
    %6617 = vmatprep.subr.mxu0 0.0
    %6618 = vmatpush1.msra.mxu0 0.0
    %6619 = vmatprep.subr.mxu0 0.0
    %6620 = vmatpush1.msra.mxu0 0.0
    %6621 = vmatprep.subr.mxu0 0.0
    %6622 = vmatpush1.msra.mxu0 0.0
    %6623 = vmatprep.subr.mxu0 0.0
    %6624 = vmatpush1.msra.mxu0 0.0
    %6625 = vmatprep.subr.mxu0 0.0
    %6626 = vmatpush1.msra.mxu0 0.0
    %6627 = vmatprep.subr.mxu0 0.0
    %6628 = vmatpush1.msra.mxu0 0.0
    %6629 = vmatprep.subr.mxu0 0.0
    %6630 = vmatpush1.msra.mxu0 %v5997
    %6631 = vmatprep.subr.mxu0 0.0
    %6632 = vmatpush1.msra.mxu0 %v5967
    %6633 = vmatprep.subr.mxu0 0.0
    %6634 = vmatpush2.msra.mxu0 0.0
    %6635 = vmatprep.subr.mxu0 0.0
    %6636 = vmatpush2.msra.mxu0 0.0
    %6637 = vmatprep.subr.mxu0 0.0
    %6638 = vmatpush2.msra.mxu0 0.0
    %6639 = vmatprep.subr.mxu0 0.0
    %6640 = vmatpush2.msra.mxu0 0.0
    %6641 = vmatprep.subr.mxu0 0.0
    %6642 = vmatpush2.msra.mxu0 0.0
    %6643 = vmatprep.subr.mxu0 0.0
    %6644 = vmatpush2.msra.mxu0 0.0
    %6645 = vmatprep.subr.mxu0 0.0
    %6646 = vmatpush2.msra.mxu0 0.0
    %6647 = vmatprep.subr.mxu0 0.0
    %6648 = vmatpush2.msra.mxu0 0.0
    %6649 = vmatprep.subr.mxu0 0.0
    %6650 = vmatpush2.msra.mxu0 0.0
    %6651 = vmatprep.subr.mxu0 0.0
    %6652 = vmatpush2.msra.mxu0 0.0
    %6653 = vmatprep.subr.mxu0 0.0
    %6654 = vmatpush2.msra.mxu0 0.0
    %6655 = vmatprep.subr.mxu0 0.0
    %6656 = vmatpush2.msra.mxu0 0.0
    %6657 = vmatprep.subr.mxu0 0.0
    %6658 = vmatpush2.msra.mxu0 0.0
    %6659 = vmatprep.subr.mxu0 0.0
    %6660 = vmatpush2.msra.mxu0 0.0
    %6661 = vmatprep.subr.mxu0 0.0
    %6662 = vmatpush2.msra.mxu0 0.0
    %6663 = vmatprep.subr.mxu0 0.0
    %6664 = vmatpush2.msra.mxu0 0.0
    %6665 = vmatprep.mubr.f32.mxu0 0.0
    %6666 = vmatmul.mubr.f32.gmra.mxu0 %v6057
    %v6667 = vpop.f32.mrf.mxu0
    %v6668 = vadd.f32 0.0, %v6667
    %v6669 = vpop.f32.mrf.mxu0
    %6670 = vmatprep.mubr.f32.mxu0 0.0
    %6671 = vmatmul.mubr.f32.gmra.mxu0 %v6060
    %v6672 = vpop.f32.mrf.mxu0
    %v6673 = vadd.f32 0.0, %v6672
    %v6674 = vpop.f32.mrf.mxu0
    %6675 = vdwg.mxu0
    %v6676 = vadd.f32 %v5905, %v6129
    %v6677 = vadd.f32 %v5906, %v6131
    %v6678 = vadd.f32 %v5907, %v6206
    %v6679 = vadd.f32 %v5908, %v6208
    %v6680 = vadd.f32 %v5909, %v6283
    %v6681 = vadd.f32 %v5910, %v6285
    %v6682 = vadd.f32 %v5911, %v6360
    %v6683 = vadd.f32 %v5912, %v6362
    %v6684 = vadd.f32 %v5913, %v6437
    %v6685 = vadd.f32 %v5914, %v6439
    %v6686 = vadd.f32 %v5915, %v6514
    %v6687 = vadd.f32 %v5916, %v6516
    %v6688 = vadd.f32 %v5917, %v6591
    %v6689 = vadd.f32 %v5918, %v6593
    %v6690 = vadd.f32 %v5919, %v6668
    %v6691 = vadd.f32 %v5920, %v6135
    %v6692 = vadd.f32 %v5921, %v6137
    %v6693 = vadd.f32 %v5922, %v6212
    %v6694 = vadd.f32 %v5923, %v6214
    %v6695 = vadd.f32 %v5924, %v6289
    %v6696 = vadd.f32 %v5925, %v6291
    %v6697 = vadd.f32 %v5926, %v6366
    %v6698 = vadd.f32 %v5927, %v6368
    %v6699 = vadd.f32 %v5928, %v6443
    %v6700 = vadd.f32 %v5929, %v6445
    %v6701 = vadd.f32 %v5930, %v6520
    %v6702 = vadd.f32 %v5931, %v6522
    %v6703 = vadd.f32 %v5932, %v6597
    %v6704 = vadd.f32 %v5933, %v6599
    %v6705 = vadd.f32 %v5934, %v6673
    %s6706 = scalar_lea.vmem %s3, 80
    %v6707 = vld [vmem:[%s6706] sm:$0xff]
    %v6708 = vld [vmem:[%s6706 + $0x8] sm:$0xff]
    %6709 = vrot.lane.b32.xlu0 %v2850, 95
    %v6710 = vpop.permute.xlu0 %6709
    %6711 = vrot.lane.b32.xlu0 %v2851, 95
    %v6712 = vpop.permute.xlu0 %6711
    %6713 = vrot.lane.b32.xlu0 %v2852, 95
    %v6714 = vpop.permute.xlu0 %6713
    %6715 = vrot.lane.b32.xlu0 %v2853, 95
    %v6716 = vpop.permute.xlu0 %6715
    %6717 = vrot.lane.b32.xlu0 %v2854, 95
    %v6718 = vpop.permute.xlu0 %6717
    %6719 = vrot.lane.b32.xlu0 %v2855, 95
    %v6720 = vpop.permute.xlu0 %6719
    %6721 = vrot.lane.b32.xlu0 %v2856, 95
    %v6722 = vpop.permute.xlu0 %6721
    %6723 = vrot.lane.b32.xlu0 %v2857, 95
    %v6724 = vpop.permute.xlu0 %6723
    %6725 = vrot.lane.b32.xlu0 %v2858, 95
    %v6726 = vpop.permute.xlu0 %6725
    %6727 = vrot.lane.b32.xlu0 %v2859, 95
    %v6728 = vpop.permute.xlu0 %6727
    %6729 = vrot.lane.b32.xlu0 %v2860, 95
    %v6730 = vpop.permute.xlu0 %6729
    %6731 = vrot.lane.b32.xlu0 %v2861, 95
    %v6732 = vpop.permute.xlu0 %6731
    %6733 = vrot.lane.b32.xlu0 %v2862, 95
    %v6734 = vpop.permute.xlu0 %6733
    %6735 = vrot.lane.b32.xlu0 %v2863, 95
    %v6736 = vpop.permute.xlu0 %6735
    %6737 = vrot.lane.b32.xlu0 %v2864, 95
    %v6738 = vpop.permute.xlu0 %6737
    %6739 = vrot.lane.b32.xlu0 %v2865, 95
    %v6740 = vpop.permute.xlu0 %6739
    %6741 = vrot.lane.b32.xlu0 %v2866, 95
    %v6742 = vpop.permute.xlu0 %6741
    %6743 = vrot.lane.b32.xlu0 %v2867, 95
    %v6744 = vpop.permute.xlu0 %6743
    %6745 = vrot.lane.b32.xlu0 %v2868, 95
    %v6746 = vpop.permute.xlu0 %6745
    %6747 = vrot.lane.b32.xlu0 %v2869, 95
    %v6748 = vpop.permute.xlu0 %6747
    %6749 = vrot.lane.b32.xlu0 %v2870, 95
    %v6750 = vpop.permute.xlu0 %6749
    %6751 = vrot.lane.b32.xlu0 %v2871, 95
    %v6752 = vpop.permute.xlu0 %6751
    %6753 = vrot.lane.b32.xlu0 %v2872, 95
    %v6754 = vpop.permute.xlu0 %6753
    %6755 = vrot.lane.b32.xlu0 %v2873, 95
    %v6756 = vpop.permute.xlu0 %6755
    %6757 = vrot.lane.b32.xlu0 %v2874, 95
    %v6758 = vpop.permute.xlu0 %6757
    %6759 = vrot.lane.b32.xlu0 %v2875, 95
    %v6760 = vpop.permute.xlu0 %6759
    %6761 = vrot.lane.b32.xlu0 %v2876, 95
    %v6762 = vpop.permute.xlu0 %6761
    %6763 = vrot.lane.b32.xlu0 %v2877, 95
    %v6764 = vpop.permute.xlu0 %6763
    %6765 = vrot.lane.b32.xlu0 %v2878, 95
    %v6766 = vpop.permute.xlu0 %6765
    %6767 = vrot.lane.b32.xlu0 %v2879, 95
    %v6768 = vpop.permute.xlu0 %6767
    %vm6769 = vcmask 777216
    %v6770 = vsel %vm6769, %v6710, %v6712
    %v6771 = vsel %vm6769, %v6712, %v6714
    %v6772 = vsel %vm6769, %v6714, %v6716
    %v6773 = vsel %vm6769, %v6716, %v6718
    %v6774 = vsel %vm6769, %v6718, %v6720
    %v6775 = vsel %vm6769, %v6720, %v6722
    %v6776 = vsel %vm6769, %v6722, %v6724
    %v6777 = vsel %vm6769, %v6724, %v6726
    %v6778 = vsel %vm6769, %v6726, %v6728
    %v6779 = vsel %vm6769, %v6728, %v6730
    %v6780 = vsel %vm6769, %v6730, %v6732
    %v6781 = vsel %vm6769, %v6732, %v6734
    %v6782 = vsel %vm6769, %v6734, %v6736
    %v6783 = vsel %vm6769, %v6736, %v6738
    %v6784 = vsel %vm6769, %v6740, %v6742
    %v6785 = vsel %vm6769, %v6742, %v6744
    %v6786 = vsel %vm6769, %v6744, %v6746
    %v6787 = vsel %vm6769, %v6746, %v6748
    %v6788 = vsel %vm6769, %v6748, %v6750
    %v6789 = vsel %vm6769, %v6750, %v6752
    %v6790 = vsel %vm6769, %v6752, %v6754
    %v6791 = vsel %vm6769, %v6754, %v6756
    %v6792 = vsel %vm6769, %v6756, %v6758
    %v6793 = vsel %vm6769, %v6758, %v6760
    %v6794 = vsel %vm6769, %v6760, %v6762
    %v6795 = vsel %vm6769, %v6762, %v6764
    %v6796 = vsel %vm6769, %v6764, %v6766
    %v6797 = vsel %vm6769, %v6766, %v6768
    %v6829 = vsel %vm3033, %v6707, 0
    %v6832 = vsel %vm3033, %v6708, 0
    %6834 = vmatprep.subr.mxu0 0.0
    %6835 = vmatpush1.msra.mxu0 0.0
    %6836 = vmatprep.subr.mxu0 0.0
    %6837 = vmatpush1.msra.mxu0 0.0
    %6838 = vmatprep.subr.mxu0 0.0
    %6839 = vmatpush1.msra.mxu0 0.0
    %6840 = vmatprep.subr.mxu0 0.0
    %6841 = vmatpush1.msra.mxu0 0.0
    %6842 = vmatprep.subr.mxu0 0.0
    %6843 = vmatpush1.msra.mxu0 0.0
    %6844 = vmatprep.subr.mxu0 0.0
    %6845 = vmatpush1.msra.mxu0 0.0
    %6846 = vmatprep.subr.mxu0 0.0
    %6847 = vmatpush1.msra.mxu0 0.0
    %6848 = vmatprep.subr.mxu0 0.0
    %6849 = vmatpush1.msra.mxu0 0.0
    %6850 = vmatprep.subr.mxu0 0.0
    %6851 = vmatpush1.msra.mxu0 0.0
    %6852 = vmatprep.subr.mxu0 0.0
    %6853 = vmatpush1.msra.mxu0 0.0
    %6854 = vmatprep.subr.mxu0 0.0
    %6855 = vmatpush1.msra.mxu0 0.0
    %6856 = vmatprep.subr.mxu0 0.0
    %6857 = vmatpush1.msra.mxu0 0.0
    %6858 = vmatprep.subr.mxu0 0.0
    %6859 = vmatpush1.msra.mxu0 0.0
    %6860 = vmatprep.subr.mxu0 0.0
    %6861 = vmatpush1.msra.mxu0 0.0
    %6862 = vmatprep.subr.mxu0 %v6785
    %6863 = vmatpush1.msra.mxu0 %v6784
    %6864 = vmatprep.subr.mxu0 %v6771
    %6865 = vmatpush1.msra.mxu0 %v6770
    %6866 = vmatprep.subr.mxu0 0.0
    %6867 = vmatpush2.msra.mxu0 0.0
    %6868 = vmatprep.subr.mxu0 0.0
    %6869 = vmatpush2.msra.mxu0 0.0
    %6870 = vmatprep.subr.mxu0 0.0
    %6871 = vmatpush2.msra.mxu0 0.0
    %6872 = vmatprep.subr.mxu0 0.0
    %6873 = vmatpush2.msra.mxu0 0.0
    %6874 = vmatprep.subr.mxu0 0.0
    %6875 = vmatpush2.msra.mxu0 0.0
    %6876 = vmatprep.subr.mxu0 0.0
    %6877 = vmatpush2.msra.mxu0 0.0
    %6878 = vmatprep.subr.mxu0 0.0
    %6879 = vmatpush2.msra.mxu0 0.0
    %6880 = vmatprep.subr.mxu0 0.0
    %6881 = vmatpush2.msra.mxu0 0.0
    %6882 = vmatprep.subr.mxu0 0.0
    %6883 = vmatpush2.msra.mxu0 0.0
    %6884 = vmatprep.subr.mxu0 0.0
    %6885 = vmatpush2.msra.mxu0 0.0
    %6886 = vmatprep.subr.mxu0 0.0
    %6887 = vmatpush2.msra.mxu0 0.0
    %6888 = vmatprep.subr.mxu0 0.0
    %6889 = vmatpush2.msra.mxu0 0.0
    %6890 = vmatprep.subr.mxu0 0.0
    %6891 = vmatpush2.msra.mxu0 0.0
    %6892 = vmatprep.subr.mxu0 0.0
    %6893 = vmatpush2.msra.mxu0 0.0
    %6894 = vmatprep.subr.mxu0 0.0
    %6895 = vmatpush2.msra.mxu0 0.0
    %6896 = vmatprep.subr.mxu0 0.0
    %6897 = vmatpush2.msra.mxu0 0.0
    %6898 = vmatprep.mubr.f32.mxu0 0.0
    %6899 = vmatmul.mubr.f32.gmra.mxu0 %v6829
    %v6900 = vpop.f32.mrf.mxu0
    %v6901 = vadd.f32 0.0, %v6900
    %v6902 = vpop.f32.mrf.mxu0
    %v6903 = vadd.f32 0.0, %v6902
    %6904 = vmatprep.mubr.f32.mxu0 0.0
    %6905 = vmatmul.mubr.f32.gmra.mxu0 %v6832
    %v6906 = vpop.f32.mrf.mxu0
    %v6907 = vadd.f32 0.0, %v6906
    %v6908 = vpop.f32.mrf.mxu0
    %v6909 = vadd.f32 0.0, %v6908
    %6910 = vdwg.mxu0
    %6911 = vmatprep.subr.mxu0 0.0
    %6912 = vmatpush1.msra.mxu0 0.0
    %6913 = vmatprep.subr.mxu0 0.0
    %6914 = vmatpush1.msra.mxu0 0.0
    %6915 = vmatprep.subr.mxu0 0.0
    %6916 = vmatpush1.msra.mxu0 0.0
    %6917 = vmatprep.subr.mxu0 0.0
    %6918 = vmatpush1.msra.mxu0 0.0
    %6919 = vmatprep.subr.mxu0 0.0
    %6920 = vmatpush1.msra.mxu0 0.0
    %6921 = vmatprep.subr.mxu0 0.0
    %6922 = vmatpush1.msra.mxu0 0.0
    %6923 = vmatprep.subr.mxu0 0.0
    %6924 = vmatpush1.msra.mxu0 0.0
    %6925 = vmatprep.subr.mxu0 0.0
    %6926 = vmatpush1.msra.mxu0 0.0
    %6927 = vmatprep.subr.mxu0 0.0
    %6928 = vmatpush1.msra.mxu0 0.0
    %6929 = vmatprep.subr.mxu0 0.0
    %6930 = vmatpush1.msra.mxu0 0.0
    %6931 = vmatprep.subr.mxu0 0.0
    %6932 = vmatpush1.msra.mxu0 0.0
    %6933 = vmatprep.subr.mxu0 0.0
    %6934 = vmatpush1.msra.mxu0 0.0
    %6935 = vmatprep.subr.mxu0 0.0
    %6936 = vmatpush1.msra.mxu0 0.0
    %6937 = vmatprep.subr.mxu0 0.0
    %6938 = vmatpush1.msra.mxu0 0.0
    %6939 = vmatprep.subr.mxu0 %v6787
    %6940 = vmatpush1.msra.mxu0 %v6786
    %6941 = vmatprep.subr.mxu0 %v6773
    %6942 = vmatpush1.msra.mxu0 %v6772
    %6943 = vmatprep.subr.mxu0 0.0
    %6944 = vmatpush2.msra.mxu0 0.0
    %6945 = vmatprep.subr.mxu0 0.0
    %6946 = vmatpush2.msra.mxu0 0.0
    %6947 = vmatprep.subr.mxu0 0.0
    %6948 = vmatpush2.msra.mxu0 0.0
    %6949 = vmatprep.subr.mxu0 0.0
    %6950 = vmatpush2.msra.mxu0 0.0
    %6951 = vmatprep.subr.mxu0 0.0
    %6952 = vmatpush2.msra.mxu0 0.0
    %6953 = vmatprep.subr.mxu0 0.0
    %6954 = vmatpush2.msra.mxu0 0.0
    %6955 = vmatprep.subr.mxu0 0.0
    %6956 = vmatpush2.msra.mxu0 0.0
    %6957 = vmatprep.subr.mxu0 0.0
    %6958 = vmatpush2.msra.mxu0 0.0
    %6959 = vmatprep.subr.mxu0 0.0
    %6960 = vmatpush2.msra.mxu0 0.0
    %6961 = vmatprep.subr.mxu0 0.0
    %6962 = vmatpush2.msra.mxu0 0.0
    %6963 = vmatprep.subr.mxu0 0.0
    %6964 = vmatpush2.msra.mxu0 0.0
    %6965 = vmatprep.subr.mxu0 0.0
    %6966 = vmatpush2.msra.mxu0 0.0
    %6967 = vmatprep.subr.mxu0 0.0
    %6968 = vmatpush2.msra.mxu0 0.0
    %6969 = vmatprep.subr.mxu0 0.0
    %6970 = vmatpush2.msra.mxu0 0.0
    %6971 = vmatprep.subr.mxu0 0.0
    %6972 = vmatpush2.msra.mxu0 0.0
    %6973 = vmatprep.subr.mxu0 0.0
    %6974 = vmatpush2.msra.mxu0 0.0
    %6975 = vmatprep.mubr.f32.mxu0 0.0
    %6976 = vmatmul.mubr.f32.gmra.mxu0 %v6829
    %v6977 = vpop.f32.mrf.mxu0
    %v6978 = vadd.f32 0.0, %v6977
    %v6979 = vpop.f32.mrf.mxu0
    %v6980 = vadd.f32 0.0, %v6979
    %6981 = vmatprep.mubr.f32.mxu0 0.0
    %6982 = vmatmul.mubr.f32.gmra.mxu0 %v6832
    %v6983 = vpop.f32.mrf.mxu0
    %v6984 = vadd.f32 0.0, %v6983
    %v6985 = vpop.f32.mrf.mxu0
    %v6986 = vadd.f32 0.0, %v6985
    %6987 = vdwg.mxu0
    %6988 = vmatprep.subr.mxu0 0.0
    %6989 = vmatpush1.msra.mxu0 0.0
    %6990 = vmatprep.subr.mxu0 0.0
    %6991 = vmatpush1.msra.mxu0 0.0
    %6992 = vmatprep.subr.mxu0 0.0
    %6993 = vmatpush1.msra.mxu0 0.0
    %6994 = vmatprep.subr.mxu0 0.0
    %6995 = vmatpush1.msra.mxu0 0.0
    %6996 = vmatprep.subr.mxu0 0.0
    %6997 = vmatpush1.msra.mxu0 0.0
    %6998 = vmatprep.subr.mxu0 0.0
    %6999 = vmatpush1.msra.mxu0 0.0
    %7000 = vmatprep.subr.mxu0 0.0
    %7001 = vmatpush1.msra.mxu0 0.0
    %7002 = vmatprep.subr.mxu0 0.0
    %7003 = vmatpush1.msra.mxu0 0.0
    %7004 = vmatprep.subr.mxu0 0.0
    %7005 = vmatpush1.msra.mxu0 0.0
    %7006 = vmatprep.subr.mxu0 0.0
    %7007 = vmatpush1.msra.mxu0 0.0
    %7008 = vmatprep.subr.mxu0 0.0
    %7009 = vmatpush1.msra.mxu0 0.0
    %7010 = vmatprep.subr.mxu0 0.0
    %7011 = vmatpush1.msra.mxu0 0.0
    %7012 = vmatprep.subr.mxu0 0.0
    %7013 = vmatpush1.msra.mxu0 0.0
    %7014 = vmatprep.subr.mxu0 0.0
    %7015 = vmatpush1.msra.mxu0 0.0
    %7016 = vmatprep.subr.mxu0 %v6789
    %7017 = vmatpush1.msra.mxu0 %v6788
    %7018 = vmatprep.subr.mxu0 %v6775
    %7019 = vmatpush1.msra.mxu0 %v6774
    %7020 = vmatprep.subr.mxu0 0.0
    %7021 = vmatpush2.msra.mxu0 0.0
    %7022 = vmatprep.subr.mxu0 0.0
    %7023 = vmatpush2.msra.mxu0 0.0
    %7024 = vmatprep.subr.mxu0 0.0
    %7025 = vmatpush2.msra.mxu0 0.0
    %7026 = vmatprep.subr.mxu0 0.0
    %7027 = vmatpush2.msra.mxu0 0.0
    %7028 = vmatprep.subr.mxu0 0.0
    %7029 = vmatpush2.msra.mxu0 0.0
    %7030 = vmatprep.subr.mxu0 0.0
    %7031 = vmatpush2.msra.mxu0 0.0
    %7032 = vmatprep.subr.mxu0 0.0
    %7033 = vmatpush2.msra.mxu0 0.0
    %7034 = vmatprep.subr.mxu0 0.0
    %7035 = vmatpush2.msra.mxu0 0.0
    %7036 = vmatprep.subr.mxu0 0.0
    %7037 = vmatpush2.msra.mxu0 0.0
    %7038 = vmatprep.subr.mxu0 0.0
    %7039 = vmatpush2.msra.mxu0 0.0
    %7040 = vmatprep.subr.mxu0 0.0
    %7041 = vmatpush2.msra.mxu0 0.0
    %7042 = vmatprep.subr.mxu0 0.0
    %7043 = vmatpush2.msra.mxu0 0.0
    %7044 = vmatprep.subr.mxu0 0.0
    %7045 = vmatpush2.msra.mxu0 0.0
    %7046 = vmatprep.subr.mxu0 0.0
    %7047 = vmatpush2.msra.mxu0 0.0
    %7048 = vmatprep.subr.mxu0 0.0
    %7049 = vmatpush2.msra.mxu0 0.0
    %7050 = vmatprep.subr.mxu0 0.0
    %7051 = vmatpush2.msra.mxu0 0.0
    %7052 = vmatprep.mubr.f32.mxu0 0.0
    %7053 = vmatmul.mubr.f32.gmra.mxu0 %v6829
    %v7054 = vpop.f32.mrf.mxu0
    %v7055 = vadd.f32 0.0, %v7054
    %v7056 = vpop.f32.mrf.mxu0
    %v7057 = vadd.f32 0.0, %v7056
    %7058 = vmatprep.mubr.f32.mxu0 0.0
    %7059 = vmatmul.mubr.f32.gmra.mxu0 %v6832
    %v7060 = vpop.f32.mrf.mxu0
    %v7061 = vadd.f32 0.0, %v7060
    %v7062 = vpop.f32.mrf.mxu0
    %v7063 = vadd.f32 0.0, %v7062
    %7064 = vdwg.mxu0
    %7065 = vmatprep.subr.mxu0 0.0
    %7066 = vmatpush1.msra.mxu0 0.0
    %7067 = vmatprep.subr.mxu0 0.0
    %7068 = vmatpush1.msra.mxu0 0.0
    %7069 = vmatprep.subr.mxu0 0.0
    %7070 = vmatpush1.msra.mxu0 0.0
    %7071 = vmatprep.subr.mxu0 0.0
    %7072 = vmatpush1.msra.mxu0 0.0
    %7073 = vmatprep.subr.mxu0 0.0
    %7074 = vmatpush1.msra.mxu0 0.0
    %7075 = vmatprep.subr.mxu0 0.0
    %7076 = vmatpush1.msra.mxu0 0.0
    %7077 = vmatprep.subr.mxu0 0.0
    %7078 = vmatpush1.msra.mxu0 0.0
    %7079 = vmatprep.subr.mxu0 0.0
    %7080 = vmatpush1.msra.mxu0 0.0
    %7081 = vmatprep.subr.mxu0 0.0
    %7082 = vmatpush1.msra.mxu0 0.0
    %7083 = vmatprep.subr.mxu0 0.0
    %7084 = vmatpush1.msra.mxu0 0.0
    %7085 = vmatprep.subr.mxu0 0.0
    %7086 = vmatpush1.msra.mxu0 0.0
    %7087 = vmatprep.subr.mxu0 0.0
    %7088 = vmatpush1.msra.mxu0 0.0
    %7089 = vmatprep.subr.mxu0 0.0
    %7090 = vmatpush1.msra.mxu0 0.0
    %7091 = vmatprep.subr.mxu0 0.0
    %7092 = vmatpush1.msra.mxu0 0.0
    %7093 = vmatprep.subr.mxu0 %v6791
    %7094 = vmatpush1.msra.mxu0 %v6790
    %7095 = vmatprep.subr.mxu0 %v6777
    %7096 = vmatpush1.msra.mxu0 %v6776
    %7097 = vmatprep.subr.mxu0 0.0
    %7098 = vmatpush2.msra.mxu0 0.0
    %7099 = vmatprep.subr.mxu0 0.0
    %7100 = vmatpush2.msra.mxu0 0.0
    %7101 = vmatprep.subr.mxu0 0.0
    %7102 = vmatpush2.msra.mxu0 0.0
    %7103 = vmatprep.subr.mxu0 0.0
    %7104 = vmatpush2.msra.mxu0 0.0
    %7105 = vmatprep.subr.mxu0 0.0
    %7106 = vmatpush2.msra.mxu0 0.0
    %7107 = vmatprep.subr.mxu0 0.0
    %7108 = vmatpush2.msra.mxu0 0.0
    %7109 = vmatprep.subr.mxu0 0.0
    %7110 = vmatpush2.msra.mxu0 0.0
    %7111 = vmatprep.subr.mxu0 0.0
    %7112 = vmatpush2.msra.mxu0 0.0
    %7113 = vmatprep.subr.mxu0 0.0
    %7114 = vmatpush2.msra.mxu0 0.0
    %7115 = vmatprep.subr.mxu0 0.0
    %7116 = vmatpush2.msra.mxu0 0.0
    %7117 = vmatprep.subr.mxu0 0.0
    %7118 = vmatpush2.msra.mxu0 0.0
    %7119 = vmatprep.subr.mxu0 0.0
    %7120 = vmatpush2.msra.mxu0 0.0
    %7121 = vmatprep.subr.mxu0 0.0
    %7122 = vmatpush2.msra.mxu0 0.0
    %7123 = vmatprep.subr.mxu0 0.0
    %7124 = vmatpush2.msra.mxu0 0.0
    %7125 = vmatprep.subr.mxu0 0.0
    %7126 = vmatpush2.msra.mxu0 0.0
    %7127 = vmatprep.subr.mxu0 0.0
    %7128 = vmatpush2.msra.mxu0 0.0
    %7129 = vmatprep.mubr.f32.mxu0 0.0
    %7130 = vmatmul.mubr.f32.gmra.mxu0 %v6829
    %v7131 = vpop.f32.mrf.mxu0
    %v7132 = vadd.f32 0.0, %v7131
    %v7133 = vpop.f32.mrf.mxu0
    %v7134 = vadd.f32 0.0, %v7133
    %7135 = vmatprep.mubr.f32.mxu0 0.0
    %7136 = vmatmul.mubr.f32.gmra.mxu0 %v6832
    %v7137 = vpop.f32.mrf.mxu0
    %v7138 = vadd.f32 0.0, %v7137
    %v7139 = vpop.f32.mrf.mxu0
    %v7140 = vadd.f32 0.0, %v7139
    %7141 = vdwg.mxu0
    %7142 = vmatprep.subr.mxu0 0.0
    %7143 = vmatpush1.msra.mxu0 0.0
    %7144 = vmatprep.subr.mxu0 0.0
    %7145 = vmatpush1.msra.mxu0 0.0
    %7146 = vmatprep.subr.mxu0 0.0
    %7147 = vmatpush1.msra.mxu0 0.0
    %7148 = vmatprep.subr.mxu0 0.0
    %7149 = vmatpush1.msra.mxu0 0.0
    %7150 = vmatprep.subr.mxu0 0.0
    %7151 = vmatpush1.msra.mxu0 0.0
    %7152 = vmatprep.subr.mxu0 0.0
    %7153 = vmatpush1.msra.mxu0 0.0
    %7154 = vmatprep.subr.mxu0 0.0
    %7155 = vmatpush1.msra.mxu0 0.0
    %7156 = vmatprep.subr.mxu0 0.0
    %7157 = vmatpush1.msra.mxu0 0.0
    %7158 = vmatprep.subr.mxu0 0.0
    %7159 = vmatpush1.msra.mxu0 0.0
    %7160 = vmatprep.subr.mxu0 0.0
    %7161 = vmatpush1.msra.mxu0 0.0
    %7162 = vmatprep.subr.mxu0 0.0
    %7163 = vmatpush1.msra.mxu0 0.0
    %7164 = vmatprep.subr.mxu0 0.0
    %7165 = vmatpush1.msra.mxu0 0.0
    %7166 = vmatprep.subr.mxu0 0.0
    %7167 = vmatpush1.msra.mxu0 0.0
    %7168 = vmatprep.subr.mxu0 0.0
    %7169 = vmatpush1.msra.mxu0 0.0
    %7170 = vmatprep.subr.mxu0 %v6793
    %7171 = vmatpush1.msra.mxu0 %v6792
    %7172 = vmatprep.subr.mxu0 %v6779
    %7173 = vmatpush1.msra.mxu0 %v6778
    %7174 = vmatprep.subr.mxu0 0.0
    %7175 = vmatpush2.msra.mxu0 0.0
    %7176 = vmatprep.subr.mxu0 0.0
    %7177 = vmatpush2.msra.mxu0 0.0
    %7178 = vmatprep.subr.mxu0 0.0
    %7179 = vmatpush2.msra.mxu0 0.0
    %7180 = vmatprep.subr.mxu0 0.0
    %7181 = vmatpush2.msra.mxu0 0.0
    %7182 = vmatprep.subr.mxu0 0.0
    %7183 = vmatpush2.msra.mxu0 0.0
    %7184 = vmatprep.subr.mxu0 0.0
    %7185 = vmatpush2.msra.mxu0 0.0
    %7186 = vmatprep.subr.mxu0 0.0
    %7187 = vmatpush2.msra.mxu0 0.0
    %7188 = vmatprep.subr.mxu0 0.0
    %7189 = vmatpush2.msra.mxu0 0.0
    %7190 = vmatprep.subr.mxu0 0.0
    %7191 = vmatpush2.msra.mxu0 0.0
    %7192 = vmatprep.subr.mxu0 0.0
    %7193 = vmatpush2.msra.mxu0 0.0
    %7194 = vmatprep.subr.mxu0 0.0
    %7195 = vmatpush2.msra.mxu0 0.0
    %7196 = vmatprep.subr.mxu0 0.0
    %7197 = vmatpush2.msra.mxu0 0.0
    %7198 = vmatprep.subr.mxu0 0.0
    %7199 = vmatpush2.msra.mxu0 0.0
    %7200 = vmatprep.subr.mxu0 0.0
    %7201 = vmatpush2.msra.mxu0 0.0
    %7202 = vmatprep.subr.mxu0 0.0
    %7203 = vmatpush2.msra.mxu0 0.0
    %7204 = vmatprep.subr.mxu0 0.0
    %7205 = vmatpush2.msra.mxu0 0.0
    %7206 = vmatprep.mubr.f32.mxu0 0.0
    %7207 = vmatmul.mubr.f32.gmra.mxu0 %v6829
    %v7208 = vpop.f32.mrf.mxu0
    %v7209 = vadd.f32 0.0, %v7208
    %v7210 = vpop.f32.mrf.mxu0
    %v7211 = vadd.f32 0.0, %v7210
    %7212 = vmatprep.mubr.f32.mxu0 0.0
    %7213 = vmatmul.mubr.f32.gmra.mxu0 %v6832
    %v7214 = vpop.f32.mrf.mxu0
    %v7215 = vadd.f32 0.0, %v7214
    %v7216 = vpop.f32.mrf.mxu0
    %v7217 = vadd.f32 0.0, %v7216
    %7218 = vdwg.mxu0
    %7219 = vmatprep.subr.mxu0 0.0
    %7220 = vmatpush1.msra.mxu0 0.0
    %7221 = vmatprep.subr.mxu0 0.0
    %7222 = vmatpush1.msra.mxu0 0.0
    %7223 = vmatprep.subr.mxu0 0.0
    %7224 = vmatpush1.msra.mxu0 0.0
    %7225 = vmatprep.subr.mxu0 0.0
    %7226 = vmatpush1.msra.mxu0 0.0
    %7227 = vmatprep.subr.mxu0 0.0
    %7228 = vmatpush1.msra.mxu0 0.0
    %7229 = vmatprep.subr.mxu0 0.0
    %7230 = vmatpush1.msra.mxu0 0.0
    %7231 = vmatprep.subr.mxu0 0.0
    %7232 = vmatpush1.msra.mxu0 0.0
    %7233 = vmatprep.subr.mxu0 0.0
    %7234 = vmatpush1.msra.mxu0 0.0
    %7235 = vmatprep.subr.mxu0 0.0
    %7236 = vmatpush1.msra.mxu0 0.0
    %7237 = vmatprep.subr.mxu0 0.0
    %7238 = vmatpush1.msra.mxu0 0.0
    %7239 = vmatprep.subr.mxu0 0.0
    %7240 = vmatpush1.msra.mxu0 0.0
    %7241 = vmatprep.subr.mxu0 0.0
    %7242 = vmatpush1.msra.mxu0 0.0
    %7243 = vmatprep.subr.mxu0 0.0
    %7244 = vmatpush1.msra.mxu0 0.0
    %7245 = vmatprep.subr.mxu0 0.0
    %7246 = vmatpush1.msra.mxu0 0.0
    %7247 = vmatprep.subr.mxu0 %v6795
    %7248 = vmatpush1.msra.mxu0 %v6794
    %7249 = vmatprep.subr.mxu0 %v6781
    %7250 = vmatpush1.msra.mxu0 %v6780
    %7251 = vmatprep.subr.mxu0 0.0
    %7252 = vmatpush2.msra.mxu0 0.0
    %7253 = vmatprep.subr.mxu0 0.0
    %7254 = vmatpush2.msra.mxu0 0.0
    %7255 = vmatprep.subr.mxu0 0.0
    %7256 = vmatpush2.msra.mxu0 0.0
    %7257 = vmatprep.subr.mxu0 0.0
    %7258 = vmatpush2.msra.mxu0 0.0
    %7259 = vmatprep.subr.mxu0 0.0
    %7260 = vmatpush2.msra.mxu0 0.0
    %7261 = vmatprep.subr.mxu0 0.0
    %7262 = vmatpush2.msra.mxu0 0.0
    %7263 = vmatprep.subr.mxu0 0.0
    %7264 = vmatpush2.msra.mxu0 0.0
    %7265 = vmatprep.subr.mxu0 0.0
    %7266 = vmatpush2.msra.mxu0 0.0
    %7267 = vmatprep.subr.mxu0 0.0
    %7268 = vmatpush2.msra.mxu0 0.0
    %7269 = vmatprep.subr.mxu0 0.0
    %7270 = vmatpush2.msra.mxu0 0.0
    %7271 = vmatprep.subr.mxu0 0.0
    %7272 = vmatpush2.msra.mxu0 0.0
    %7273 = vmatprep.subr.mxu0 0.0
    %7274 = vmatpush2.msra.mxu0 0.0
    %7275 = vmatprep.subr.mxu0 0.0
    %7276 = vmatpush2.msra.mxu0 0.0
    %7277 = vmatprep.subr.mxu0 0.0
    %7278 = vmatpush2.msra.mxu0 0.0
    %7279 = vmatprep.subr.mxu0 0.0
    %7280 = vmatpush2.msra.mxu0 0.0
    %7281 = vmatprep.subr.mxu0 0.0
    %7282 = vmatpush2.msra.mxu0 0.0
    %7283 = vmatprep.mubr.f32.mxu0 0.0
    %7284 = vmatmul.mubr.f32.gmra.mxu0 %v6829
    %v7285 = vpop.f32.mrf.mxu0
    %v7286 = vadd.f32 0.0, %v7285
    %v7287 = vpop.f32.mrf.mxu0
    %v7288 = vadd.f32 0.0, %v7287
    %7289 = vmatprep.mubr.f32.mxu0 0.0
    %7290 = vmatmul.mubr.f32.gmra.mxu0 %v6832
    %v7291 = vpop.f32.mrf.mxu0
    %v7292 = vadd.f32 0.0, %v7291
    %v7293 = vpop.f32.mrf.mxu0
    %v7294 = vadd.f32 0.0, %v7293
    %7295 = vdwg.mxu0
    %7296 = vmatprep.subr.mxu0 0.0
    %7297 = vmatpush1.msra.mxu0 0.0
    %7298 = vmatprep.subr.mxu0 0.0
    %7299 = vmatpush1.msra.mxu0 0.0
    %7300 = vmatprep.subr.mxu0 0.0
    %7301 = vmatpush1.msra.mxu0 0.0
    %7302 = vmatprep.subr.mxu0 0.0
    %7303 = vmatpush1.msra.mxu0 0.0
    %7304 = vmatprep.subr.mxu0 0.0
    %7305 = vmatpush1.msra.mxu0 0.0
    %7306 = vmatprep.subr.mxu0 0.0
    %7307 = vmatpush1.msra.mxu0 0.0
    %7308 = vmatprep.subr.mxu0 0.0
    %7309 = vmatpush1.msra.mxu0 0.0
    %7310 = vmatprep.subr.mxu0 0.0
    %7311 = vmatpush1.msra.mxu0 0.0
    %7312 = vmatprep.subr.mxu0 0.0
    %7313 = vmatpush1.msra.mxu0 0.0
    %7314 = vmatprep.subr.mxu0 0.0
    %7315 = vmatpush1.msra.mxu0 0.0
    %7316 = vmatprep.subr.mxu0 0.0
    %7317 = vmatpush1.msra.mxu0 0.0
    %7318 = vmatprep.subr.mxu0 0.0
    %7319 = vmatpush1.msra.mxu0 0.0
    %7320 = vmatprep.subr.mxu0 0.0
    %7321 = vmatpush1.msra.mxu0 0.0
    %7322 = vmatprep.subr.mxu0 0.0
    %7323 = vmatpush1.msra.mxu0 0.0
    %7324 = vmatprep.subr.mxu0 %v6797
    %7325 = vmatpush1.msra.mxu0 %v6796
    %7326 = vmatprep.subr.mxu0 %v6783
    %7327 = vmatpush1.msra.mxu0 %v6782
    %7328 = vmatprep.subr.mxu0 0.0
    %7329 = vmatpush2.msra.mxu0 0.0
    %7330 = vmatprep.subr.mxu0 0.0
    %7331 = vmatpush2.msra.mxu0 0.0
    %7332 = vmatprep.subr.mxu0 0.0
    %7333 = vmatpush2.msra.mxu0 0.0
    %7334 = vmatprep.subr.mxu0 0.0
    %7335 = vmatpush2.msra.mxu0 0.0
    %7336 = vmatprep.subr.mxu0 0.0
    %7337 = vmatpush2.msra.mxu0 0.0
    %7338 = vmatprep.subr.mxu0 0.0
    %7339 = vmatpush2.msra.mxu0 0.0
    %7340 = vmatprep.subr.mxu0 0.0
    %7341 = vmatpush2.msra.mxu0 0.0
    %7342 = vmatprep.subr.mxu0 0.0
    %7343 = vmatpush2.msra.mxu0 0.0
    %7344 = vmatprep.subr.mxu0 0.0
    %7345 = vmatpush2.msra.mxu0 0.0
    %7346 = vmatprep.subr.mxu0 0.0
    %7347 = vmatpush2.msra.mxu0 0.0
    %7348 = vmatprep.subr.mxu0 0.0
    %7349 = vmatpush2.msra.mxu0 0.0
    %7350 = vmatprep.subr.mxu0 0.0
    %7351 = vmatpush2.msra.mxu0 0.0
    %7352 = vmatprep.subr.mxu0 0.0
    %7353 = vmatpush2.msra.mxu0 0.0
    %7354 = vmatprep.subr.mxu0 0.0
    %7355 = vmatpush2.msra.mxu0 0.0
    %7356 = vmatprep.subr.mxu0 0.0
    %7357 = vmatpush2.msra.mxu0 0.0
    %7358 = vmatprep.subr.mxu0 0.0
    %7359 = vmatpush2.msra.mxu0 0.0
    %7360 = vmatprep.mubr.f32.mxu0 0.0
    %7361 = vmatmul.mubr.f32.gmra.mxu0 %v6829
    %v7362 = vpop.f32.mrf.mxu0
    %v7363 = vadd.f32 0.0, %v7362
    %v7364 = vpop.f32.mrf.mxu0
    %v7365 = vadd.f32 0.0, %v7364
    %7366 = vmatprep.mubr.f32.mxu0 0.0
    %7367 = vmatmul.mubr.f32.gmra.mxu0 %v6832
    %v7368 = vpop.f32.mrf.mxu0
    %v7369 = vadd.f32 0.0, %v7368
    %v7370 = vpop.f32.mrf.mxu0
    %v7371 = vadd.f32 0.0, %v7370
    %7372 = vdwg.mxu0
    %7373 = vmatprep.subr.mxu0 0.0
    %7374 = vmatpush1.msra.mxu0 0.0
    %7375 = vmatprep.subr.mxu0 0.0
    %7376 = vmatpush1.msra.mxu0 0.0
    %7377 = vmatprep.subr.mxu0 0.0
    %7378 = vmatpush1.msra.mxu0 0.0
    %7379 = vmatprep.subr.mxu0 0.0
    %7380 = vmatpush1.msra.mxu0 0.0
    %7381 = vmatprep.subr.mxu0 0.0
    %7382 = vmatpush1.msra.mxu0 0.0
    %7383 = vmatprep.subr.mxu0 0.0
    %7384 = vmatpush1.msra.mxu0 0.0
    %7385 = vmatprep.subr.mxu0 0.0
    %7386 = vmatpush1.msra.mxu0 0.0
    %7387 = vmatprep.subr.mxu0 0.0
    %7388 = vmatpush1.msra.mxu0 0.0
    %7389 = vmatprep.subr.mxu0 0.0
    %7390 = vmatpush1.msra.mxu0 0.0
    %7391 = vmatprep.subr.mxu0 0.0
    %7392 = vmatpush1.msra.mxu0 0.0
    %7393 = vmatprep.subr.mxu0 0.0
    %7394 = vmatpush1.msra.mxu0 0.0
    %7395 = vmatprep.subr.mxu0 0.0
    %7396 = vmatpush1.msra.mxu0 0.0
    %7397 = vmatprep.subr.mxu0 0.0
    %7398 = vmatpush1.msra.mxu0 0.0
    %7399 = vmatprep.subr.mxu0 0.0
    %7400 = vmatpush1.msra.mxu0 0.0
    %7401 = vmatprep.subr.mxu0 0.0
    %7402 = vmatpush1.msra.mxu0 %v6768
    %7403 = vmatprep.subr.mxu0 0.0
    %7404 = vmatpush1.msra.mxu0 %v6738
    %7405 = vmatprep.subr.mxu0 0.0
    %7406 = vmatpush2.msra.mxu0 0.0
    %7407 = vmatprep.subr.mxu0 0.0
    %7408 = vmatpush2.msra.mxu0 0.0
    %7409 = vmatprep.subr.mxu0 0.0
    %7410 = vmatpush2.msra.mxu0 0.0
    %7411 = vmatprep.subr.mxu0 0.0
    %7412 = vmatpush2.msra.mxu0 0.0
    %7413 = vmatprep.subr.mxu0 0.0
    %7414 = vmatpush2.msra.mxu0 0.0
    %7415 = vmatprep.subr.mxu0 0.0
    %7416 = vmatpush2.msra.mxu0 0.0
    %7417 = vmatprep.subr.mxu0 0.0
    %7418 = vmatpush2.msra.mxu0 0.0
    %7419 = vmatprep.subr.mxu0 0.0
    %7420 = vmatpush2.msra.mxu0 0.0
    %7421 = vmatprep.subr.mxu0 0.0
    %7422 = vmatpush2.msra.mxu0 0.0
    %7423 = vmatprep.subr.mxu0 0.0
    %7424 = vmatpush2.msra.mxu0 0.0
    %7425 = vmatprep.subr.mxu0 0.0
    %7426 = vmatpush2.msra.mxu0 0.0
    %7427 = vmatprep.subr.mxu0 0.0
    %7428 = vmatpush2.msra.mxu0 0.0
    %7429 = vmatprep.subr.mxu0 0.0
    %7430 = vmatpush2.msra.mxu0 0.0
    %7431 = vmatprep.subr.mxu0 0.0
    %7432 = vmatpush2.msra.mxu0 0.0
    %7433 = vmatprep.subr.mxu0 0.0
    %7434 = vmatpush2.msra.mxu0 0.0
    %7435 = vmatprep.subr.mxu0 0.0
    %7436 = vmatpush2.msra.mxu0 0.0
    %7437 = vmatprep.mubr.f32.mxu0 0.0
    %7438 = vmatmul.mubr.f32.gmra.mxu0 %v6829
    %v7439 = vpop.f32.mrf.mxu0
    %v7440 = vadd.f32 0.0, %v7439
    %v7441 = vpop.f32.mrf.mxu0
    %7442 = vmatprep.mubr.f32.mxu0 0.0
    %7443 = vmatmul.mubr.f32.gmra.mxu0 %v6832
    %v7444 = vpop.f32.mrf.mxu0
    %v7445 = vadd.f32 0.0, %v7444
    %v7446 = vpop.f32.mrf.mxu0
    %7447 = vdwg.mxu0
    %v7448 = vadd.f32 %v6676, %v6901
    %v7449 = vadd.f32 %v6677, %v6903
    %v7450 = vadd.f32 %v6678, %v6978
    %v7451 = vadd.f32 %v6679, %v6980
    %v7452 = vadd.f32 %v6680, %v7055
    %v7453 = vadd.f32 %v6681, %v7057
    %v7454 = vadd.f32 %v6682, %v7132
    %v7455 = vadd.f32 %v6683, %v7134
    %v7456 = vadd.f32 %v6684, %v7209
    %v7457 = vadd.f32 %v6685, %v7211
    %v7458 = vadd.f32 %v6686, %v7286
    %v7459 = vadd.f32 %v6687, %v7288
    %v7460 = vadd.f32 %v6688, %v7363
    %v7461 = vadd.f32 %v6689, %v7365
    %v7462 = vadd.f32 %v6690, %v7440
    %v7463 = vadd.f32 %v6691, %v6907
    %v7464 = vadd.f32 %v6692, %v6909
    %v7465 = vadd.f32 %v6693, %v6984
    %v7466 = vadd.f32 %v6694, %v6986
    %v7467 = vadd.f32 %v6695, %v7061
    %v7468 = vadd.f32 %v6696, %v7063
    %v7469 = vadd.f32 %v6697, %v7138
    %v7470 = vadd.f32 %v6698, %v7140
    %v7471 = vadd.f32 %v6699, %v7215
    %v7472 = vadd.f32 %v6700, %v7217
    %v7473 = vadd.f32 %v6701, %v7292
    %v7474 = vadd.f32 %v6702, %v7294
    %v7475 = vadd.f32 %v6703, %v7369
    %v7476 = vadd.f32 %v6704, %v7371
    %v7477 = vadd.f32 %v6705, %v7445
    %s7478 = scalar_lea.vmem %s3, 96
    %v7479 = vld [vmem:[%s7478] sm:$0xff]
    %v7480 = vld [vmem:[%s7478 + $0x8] sm:$0xff]
    %7481 = vrot.lane.b32.xlu0 %v2850, 67
    %v7482 = vpop.permute.xlu0 %7481
    %7483 = vrot.lane.b32.xlu0 %v2851, 67
    %v7484 = vpop.permute.xlu0 %7483
    %7485 = vrot.lane.b32.xlu0 %v2852, 67
    %v7486 = vpop.permute.xlu0 %7485
    %7487 = vrot.lane.b32.xlu0 %v2853, 67
    %v7488 = vpop.permute.xlu0 %7487
    %7489 = vrot.lane.b32.xlu0 %v2854, 67
    %v7490 = vpop.permute.xlu0 %7489
    %7491 = vrot.lane.b32.xlu0 %v2855, 67
    %v7492 = vpop.permute.xlu0 %7491
    %7493 = vrot.lane.b32.xlu0 %v2856, 67
    %v7494 = vpop.permute.xlu0 %7493
    %7495 = vrot.lane.b32.xlu0 %v2857, 67
    %v7496 = vpop.permute.xlu0 %7495
    %7497 = vrot.lane.b32.xlu0 %v2858, 67
    %v7498 = vpop.permute.xlu0 %7497
    %7499 = vrot.lane.b32.xlu0 %v2859, 67
    %v7500 = vpop.permute.xlu0 %7499
    %7501 = vrot.lane.b32.xlu0 %v2860, 67
    %v7502 = vpop.permute.xlu0 %7501
    %7503 = vrot.lane.b32.xlu0 %v2861, 67
    %v7504 = vpop.permute.xlu0 %7503
    %7505 = vrot.lane.b32.xlu0 %v2862, 67
    %v7506 = vpop.permute.xlu0 %7505
    %7507 = vrot.lane.b32.xlu0 %v2863, 67
    %v7508 = vpop.permute.xlu0 %7507
    %7509 = vrot.lane.b32.xlu0 %v2864, 67
    %v7510 = vpop.permute.xlu0 %7509
    %7511 = vrot.lane.b32.xlu0 %v2865, 67
    %v7512 = vpop.permute.xlu0 %7511
    %7513 = vrot.lane.b32.xlu0 %v2866, 67
    %v7514 = vpop.permute.xlu0 %7513
    %7515 = vrot.lane.b32.xlu0 %v2867, 67
    %v7516 = vpop.permute.xlu0 %7515
    %7517 = vrot.lane.b32.xlu0 %v2868, 67
    %v7518 = vpop.permute.xlu0 %7517
    %7519 = vrot.lane.b32.xlu0 %v2869, 67
    %v7520 = vpop.permute.xlu0 %7519
    %7521 = vrot.lane.b32.xlu0 %v2870, 67
    %v7522 = vpop.permute.xlu0 %7521
    %7523 = vrot.lane.b32.xlu0 %v2871, 67
    %v7524 = vpop.permute.xlu0 %7523
    %7525 = vrot.lane.b32.xlu0 %v2872, 67
    %v7526 = vpop.permute.xlu0 %7525
    %7527 = vrot.lane.b32.xlu0 %v2873, 67
    %v7528 = vpop.permute.xlu0 %7527
    %7529 = vrot.lane.b32.xlu0 %v2874, 67
    %v7530 = vpop.permute.xlu0 %7529
    %7531 = vrot.lane.b32.xlu0 %v2875, 67
    %v7532 = vpop.permute.xlu0 %7531
    %7533 = vrot.lane.b32.xlu0 %v2876, 67
    %v7534 = vpop.permute.xlu0 %7533
    %7535 = vrot.lane.b32.xlu0 %v2877, 67
    %v7536 = vpop.permute.xlu0 %7535
    %7537 = vrot.lane.b32.xlu0 %v2878, 67
    %v7538 = vpop.permute.xlu0 %7537
    %7539 = vrot.lane.b32.xlu0 %v2879, 67
    %v7540 = vpop.permute.xlu0 %7539
    %v7541 = vsel %vm2098, %v7482, %v7484
    %v7542 = vsel %vm2098, %v7484, %v7486
    %v7543 = vsel %vm2098, %v7486, %v7488
    %v7544 = vsel %vm2098, %v7488, %v7490
    %v7545 = vsel %vm2098, %v7490, %v7492
    %v7546 = vsel %vm2098, %v7492, %v7494
    %v7547 = vsel %vm2098, %v7494, %v7496
    %v7548 = vsel %vm2098, %v7496, %v7498
    %v7549 = vsel %vm2098, %v7498, %v7500
    %v7550 = vsel %vm2098, %v7500, %v7502
    %v7551 = vsel %vm2098, %v7502, %v7504
    %v7552 = vsel %vm2098, %v7504, %v7506
    %v7553 = vsel %vm2098, %v7506, %v7508
    %v7554 = vsel %vm2098, %v7508, %v7510
    %v7555 = vsel %vm2098, %v7512, %v7514
    %v7556 = vsel %vm2098, %v7514, %v7516
    %v7557 = vsel %vm2098, %v7516, %v7518
    %v7558 = vsel %vm2098, %v7518, %v7520
    %v7559 = vsel %vm2098, %v7520, %v7522
    %v7560 = vsel %vm2098, %v7522, %v7524
    %v7561 = vsel %vm2098, %v7524, %v7526
    %v7562 = vsel %vm2098, %v7526, %v7528
    %v7563 = vsel %vm2098, %v7528, %v7530
    %v7564 = vsel %vm2098, %v7530, %v7532
    %v7565 = vsel %vm2098, %v7532, %v7534
    %v7566 = vsel %vm2098, %v7534, %v7536
    %v7567 = vsel %vm2098, %v7536, %v7538
    %v7568 = vsel %vm2098, %v7538, %v7540
    %v7600 = vsel %vm3033, %v7479, 0
    %v7603 = vsel %vm3033, %v7480, 0
    %7605 = vmatprep.subr.mxu0 0.0
    %7606 = vmatpush1.msra.mxu0 0.0
    %7607 = vmatprep.subr.mxu0 0.0
    %7608 = vmatpush1.msra.mxu0 0.0
    %7609 = vmatprep.subr.mxu0 0.0
    %7610 = vmatpush1.msra.mxu0 0.0
    %7611 = vmatprep.subr.mxu0 0.0
    %7612 = vmatpush1.msra.mxu0 0.0
    %7613 = vmatprep.subr.mxu0 0.0
    %7614 = vmatpush1.msra.mxu0 0.0
    %7615 = vmatprep.subr.mxu0 0.0
    %7616 = vmatpush1.msra.mxu0 0.0
    %7617 = vmatprep.subr.mxu0 0.0
    %7618 = vmatpush1.msra.mxu0 0.0
    %7619 = vmatprep.subr.mxu0 0.0
    %7620 = vmatpush1.msra.mxu0 0.0
    %7621 = vmatprep.subr.mxu0 0.0
    %7622 = vmatpush1.msra.mxu0 0.0
    %7623 = vmatprep.subr.mxu0 0.0
    %7624 = vmatpush1.msra.mxu0 0.0
    %7625 = vmatprep.subr.mxu0 0.0
    %7626 = vmatpush1.msra.mxu0 0.0
    %7627 = vmatprep.subr.mxu0 0.0
    %7628 = vmatpush1.msra.mxu0 0.0
    %7629 = vmatprep.subr.mxu0 0.0
    %7630 = vmatpush1.msra.mxu0 0.0
    %7631 = vmatprep.subr.mxu0 0.0
    %7632 = vmatpush1.msra.mxu0 0.0
    %7633 = vmatprep.subr.mxu0 %v7556
    %7634 = vmatpush1.msra.mxu0 %v7555
    %7635 = vmatprep.subr.mxu0 %v7542
    %7636 = vmatpush1.msra.mxu0 %v7541
    %7637 = vmatprep.subr.mxu0 0.0
    %7638 = vmatpush2.msra.mxu0 0.0
    %7639 = vmatprep.subr.mxu0 0.0
    %7640 = vmatpush2.msra.mxu0 0.0
    %7641 = vmatprep.subr.mxu0 0.0
    %7642 = vmatpush2.msra.mxu0 0.0
    %7643 = vmatprep.subr.mxu0 0.0
    %7644 = vmatpush2.msra.mxu0 0.0
    %7645 = vmatprep.subr.mxu0 0.0
    %7646 = vmatpush2.msra.mxu0 0.0
    %7647 = vmatprep.subr.mxu0 0.0
    %7648 = vmatpush2.msra.mxu0 0.0
    %7649 = vmatprep.subr.mxu0 0.0
    %7650 = vmatpush2.msra.mxu0 0.0
    %7651 = vmatprep.subr.mxu0 0.0
    %7652 = vmatpush2.msra.mxu0 0.0
    %7653 = vmatprep.subr.mxu0 0.0
    %7654 = vmatpush2.msra.mxu0 0.0
    %7655 = vmatprep.subr.mxu0 0.0
    %7656 = vmatpush2.msra.mxu0 0.0
    %7657 = vmatprep.subr.mxu0 0.0
    %7658 = vmatpush2.msra.mxu0 0.0
    %7659 = vmatprep.subr.mxu0 0.0
    %7660 = vmatpush2.msra.mxu0 0.0
    %7661 = vmatprep.subr.mxu0 0.0
    %7662 = vmatpush2.msra.mxu0 0.0
    %7663 = vmatprep.subr.mxu0 0.0
    %7664 = vmatpush2.msra.mxu0 0.0
    %7665 = vmatprep.subr.mxu0 0.0
    %7666 = vmatpush2.msra.mxu0 0.0
    %7667 = vmatprep.subr.mxu0 0.0
    %7668 = vmatpush2.msra.mxu0 0.0
    %7669 = vmatprep.mubr.f32.mxu0 0.0
    %7670 = vmatmul.mubr.f32.gmra.mxu0 %v7600
    %v7671 = vpop.f32.mrf.mxu0
    %v7672 = vadd.f32 0.0, %v7671
    %v7673 = vpop.f32.mrf.mxu0
    %v7674 = vadd.f32 0.0, %v7673
    %7675 = vmatprep.mubr.f32.mxu0 0.0
    %7676 = vmatmul.mubr.f32.gmra.mxu0 %v7603
    %v7677 = vpop.f32.mrf.mxu0
    %v7678 = vadd.f32 0.0, %v7677
    %v7679 = vpop.f32.mrf.mxu0
    %v7680 = vadd.f32 0.0, %v7679
    %7681 = vdwg.mxu0
    %7682 = vmatprep.subr.mxu0 0.0
    %7683 = vmatpush1.msra.mxu0 0.0
    %7684 = vmatprep.subr.mxu0 0.0
    %7685 = vmatpush1.msra.mxu0 0.0
    %7686 = vmatprep.subr.mxu0 0.0
    %7687 = vmatpush1.msra.mxu0 0.0
    %7688 = vmatprep.subr.mxu0 0.0
    %7689 = vmatpush1.msra.mxu0 0.0
    %7690 = vmatprep.subr.mxu0 0.0
    %7691 = vmatpush1.msra.mxu0 0.0
    %7692 = vmatprep.subr.mxu0 0.0
    %7693 = vmatpush1.msra.mxu0 0.0
    %7694 = vmatprep.subr.mxu0 0.0
    %7695 = vmatpush1.msra.mxu0 0.0
    %7696 = vmatprep.subr.mxu0 0.0
    %7697 = vmatpush1.msra.mxu0 0.0
    %7698 = vmatprep.subr.mxu0 0.0
    %7699 = vmatpush1.msra.mxu0 0.0
    %7700 = vmatprep.subr.mxu0 0.0
    %7701 = vmatpush1.msra.mxu0 0.0
    %7702 = vmatprep.subr.mxu0 0.0
    %7703 = vmatpush1.msra.mxu0 0.0
    %7704 = vmatprep.subr.mxu0 0.0
    %7705 = vmatpush1.msra.mxu0 0.0
    %7706 = vmatprep.subr.mxu0 0.0
    %7707 = vmatpush1.msra.mxu0 0.0
    %7708 = vmatprep.subr.mxu0 0.0
    %7709 = vmatpush1.msra.mxu0 0.0
    %7710 = vmatprep.subr.mxu0 %v7558
    %7711 = vmatpush1.msra.mxu0 %v7557
    %7712 = vmatprep.subr.mxu0 %v7544
    %7713 = vmatpush1.msra.mxu0 %v7543
    %7714 = vmatprep.subr.mxu0 0.0
    %7715 = vmatpush2.msra.mxu0 0.0
    %7716 = vmatprep.subr.mxu0 0.0
    %7717 = vmatpush2.msra.mxu0 0.0
    %7718 = vmatprep.subr.mxu0 0.0
    %7719 = vmatpush2.msra.mxu0 0.0
    %7720 = vmatprep.subr.mxu0 0.0
    %7721 = vmatpush2.msra.mxu0 0.0
    %7722 = vmatprep.subr.mxu0 0.0
    %7723 = vmatpush2.msra.mxu0 0.0
    %7724 = vmatprep.subr.mxu0 0.0
    %7725 = vmatpush2.msra.mxu0 0.0
    %7726 = vmatprep.subr.mxu0 0.0
    %7727 = vmatpush2.msra.mxu0 0.0
    %7728 = vmatprep.subr.mxu0 0.0
    %7729 = vmatpush2.msra.mxu0 0.0
    %7730 = vmatprep.subr.mxu0 0.0
    %7731 = vmatpush2.msra.mxu0 0.0
    %7732 = vmatprep.subr.mxu0 0.0
    %7733 = vmatpush2.msra.mxu0 0.0
    %7734 = vmatprep.subr.mxu0 0.0
    %7735 = vmatpush2.msra.mxu0 0.0
    %7736 = vmatprep.subr.mxu0 0.0
    %7737 = vmatpush2.msra.mxu0 0.0
    %7738 = vmatprep.subr.mxu0 0.0
    %7739 = vmatpush2.msra.mxu0 0.0
    %7740 = vmatprep.subr.mxu0 0.0
    %7741 = vmatpush2.msra.mxu0 0.0
    %7742 = vmatprep.subr.mxu0 0.0
    %7743 = vmatpush2.msra.mxu0 0.0
    %7744 = vmatprep.subr.mxu0 0.0
    %7745 = vmatpush2.msra.mxu0 0.0
    %7746 = vmatprep.mubr.f32.mxu0 0.0
    %7747 = vmatmul.mubr.f32.gmra.mxu0 %v7600
    %v7748 = vpop.f32.mrf.mxu0
    %v7749 = vadd.f32 0.0, %v7748
    %v7750 = vpop.f32.mrf.mxu0
    %v7751 = vadd.f32 0.0, %v7750
    %7752 = vmatprep.mubr.f32.mxu0 0.0
    %7753 = vmatmul.mubr.f32.gmra.mxu0 %v7603
    %v7754 = vpop.f32.mrf.mxu0
    %v7755 = vadd.f32 0.0, %v7754
    %v7756 = vpop.f32.mrf.mxu0
    %v7757 = vadd.f32 0.0, %v7756
    %7758 = vdwg.mxu0
    %7759 = vmatprep.subr.mxu0 0.0
    %7760 = vmatpush1.msra.mxu0 0.0
    %7761 = vmatprep.subr.mxu0 0.0
    %7762 = vmatpush1.msra.mxu0 0.0
    %7763 = vmatprep.subr.mxu0 0.0
    %7764 = vmatpush1.msra.mxu0 0.0
    %7765 = vmatprep.subr.mxu0 0.0
    %7766 = vmatpush1.msra.mxu0 0.0
    %7767 = vmatprep.subr.mxu0 0.0
    %7768 = vmatpush1.msra.mxu0 0.0
    %7769 = vmatprep.subr.mxu0 0.0
    %7770 = vmatpush1.msra.mxu0 0.0
    %7771 = vmatprep.subr.mxu0 0.0
    %7772 = vmatpush1.msra.mxu0 0.0
    %7773 = vmatprep.subr.mxu0 0.0
    %7774 = vmatpush1.msra.mxu0 0.0
    %7775 = vmatprep.subr.mxu0 0.0
    %7776 = vmatpush1.msra.mxu0 0.0
    %7777 = vmatprep.subr.mxu0 0.0
    %7778 = vmatpush1.msra.mxu0 0.0
    %7779 = vmatprep.subr.mxu0 0.0
    %7780 = vmatpush1.msra.mxu0 0.0
    %7781 = vmatprep.subr.mxu0 0.0
    %7782 = vmatpush1.msra.mxu0 0.0
    %7783 = vmatprep.subr.mxu0 0.0
    %7784 = vmatpush1.msra.mxu0 0.0
    %7785 = vmatprep.subr.mxu0 0.0
    %7786 = vmatpush1.msra.mxu0 0.0
    %7787 = vmatprep.subr.mxu0 %v7560
    %7788 = vmatpush1.msra.mxu0 %v7559
    %7789 = vmatprep.subr.mxu0 %v7546
    %7790 = vmatpush1.msra.mxu0 %v7545
    %7791 = vmatprep.subr.mxu0 0.0
    %7792 = vmatpush2.msra.mxu0 0.0
    %7793 = vmatprep.subr.mxu0 0.0
    %7794 = vmatpush2.msra.mxu0 0.0
    %7795 = vmatprep.subr.mxu0 0.0
    %7796 = vmatpush2.msra.mxu0 0.0
    %7797 = vmatprep.subr.mxu0 0.0
    %7798 = vmatpush2.msra.mxu0 0.0
    %7799 = vmatprep.subr.mxu0 0.0
    %7800 = vmatpush2.msra.mxu0 0.0
    %7801 = vmatprep.subr.mxu0 0.0
    %7802 = vmatpush2.msra.mxu0 0.0
    %7803 = vmatprep.subr.mxu0 0.0
    %7804 = vmatpush2.msra.mxu0 0.0
    %7805 = vmatprep.subr.mxu0 0.0
    %7806 = vmatpush2.msra.mxu0 0.0
    %7807 = vmatprep.subr.mxu0 0.0
    %7808 = vmatpush2.msra.mxu0 0.0
    %7809 = vmatprep.subr.mxu0 0.0
    %7810 = vmatpush2.msra.mxu0 0.0
    %7811 = vmatprep.subr.mxu0 0.0
    %7812 = vmatpush2.msra.mxu0 0.0
    %7813 = vmatprep.subr.mxu0 0.0
    %7814 = vmatpush2.msra.mxu0 0.0
    %7815 = vmatprep.subr.mxu0 0.0
    %7816 = vmatpush2.msra.mxu0 0.0
    %7817 = vmatprep.subr.mxu0 0.0
    %7818 = vmatpush2.msra.mxu0 0.0
    %7819 = vmatprep.subr.mxu0 0.0
    %7820 = vmatpush2.msra.mxu0 0.0
    %7821 = vmatprep.subr.mxu0 0.0
    %7822 = vmatpush2.msra.mxu0 0.0
    %7823 = vmatprep.mubr.f32.mxu0 0.0
    %7824 = vmatmul.mubr.f32.gmra.mxu0 %v7600
    %v7825 = vpop.f32.mrf.mxu0
    %v7826 = vadd.f32 0.0, %v7825
    %v7827 = vpop.f32.mrf.mxu0
    %v7828 = vadd.f32 0.0, %v7827
    %7829 = vmatprep.mubr.f32.mxu0 0.0
    %7830 = vmatmul.mubr.f32.gmra.mxu0 %v7603
    %v7831 = vpop.f32.mrf.mxu0
    %v7832 = vadd.f32 0.0, %v7831
    %v7833 = vpop.f32.mrf.mxu0
    %v7834 = vadd.f32 0.0, %v7833
    %7835 = vdwg.mxu0
    %7836 = vmatprep.subr.mxu0 0.0
    %7837 = vmatpush1.msra.mxu0 0.0
    %7838 = vmatprep.subr.mxu0 0.0
    %7839 = vmatpush1.msra.mxu0 0.0
    %7840 = vmatprep.subr.mxu0 0.0
    %7841 = vmatpush1.msra.mxu0 0.0
    %7842 = vmatprep.subr.mxu0 0.0
    %7843 = vmatpush1.msra.mxu0 0.0
    %7844 = vmatprep.subr.mxu0 0.0
    %7845 = vmatpush1.msra.mxu0 0.0
    %7846 = vmatprep.subr.mxu0 0.0
    %7847 = vmatpush1.msra.mxu0 0.0
    %7848 = vmatprep.subr.mxu0 0.0
    %7849 = vmatpush1.msra.mxu0 0.0
    %7850 = vmatprep.subr.mxu0 0.0
    %7851 = vmatpush1.msra.mxu0 0.0
    %7852 = vmatprep.subr.mxu0 0.0
    %7853 = vmatpush1.msra.mxu0 0.0
    %7854 = vmatprep.subr.mxu0 0.0
    %7855 = vmatpush1.msra.mxu0 0.0
    %7856 = vmatprep.subr.mxu0 0.0
    %7857 = vmatpush1.msra.mxu0 0.0
    %7858 = vmatprep.subr.mxu0 0.0
    %7859 = vmatpush1.msra.mxu0 0.0
    %7860 = vmatprep.subr.mxu0 0.0
    %7861 = vmatpush1.msra.mxu0 0.0
    %7862 = vmatprep.subr.mxu0 0.0
    %7863 = vmatpush1.msra.mxu0 0.0
    %7864 = vmatprep.subr.mxu0 %v7562
    %7865 = vmatpush1.msra.mxu0 %v7561
    %7866 = vmatprep.subr.mxu0 %v7548
    %7867 = vmatpush1.msra.mxu0 %v7547
    %7868 = vmatprep.subr.mxu0 0.0
    %7869 = vmatpush2.msra.mxu0 0.0
    %7870 = vmatprep.subr.mxu0 0.0
    %7871 = vmatpush2.msra.mxu0 0.0
    %7872 = vmatprep.subr.mxu0 0.0
    %7873 = vmatpush2.msra.mxu0 0.0
    %7874 = vmatprep.subr.mxu0 0.0
    %7875 = vmatpush2.msra.mxu0 0.0
    %7876 = vmatprep.subr.mxu0 0.0
    %7877 = vmatpush2.msra.mxu0 0.0
    %7878 = vmatprep.subr.mxu0 0.0
    %7879 = vmatpush2.msra.mxu0 0.0
    %7880 = vmatprep.subr.mxu0 0.0
    %7881 = vmatpush2.msra.mxu0 0.0
    %7882 = vmatprep.subr.mxu0 0.0
    %7883 = vmatpush2.msra.mxu0 0.0
    %7884 = vmatprep.subr.mxu0 0.0
    %7885 = vmatpush2.msra.mxu0 0.0
    %7886 = vmatprep.subr.mxu0 0.0
    %7887 = vmatpush2.msra.mxu0 0.0
    %7888 = vmatprep.subr.mxu0 0.0
    %7889 = vmatpush2.msra.mxu0 0.0
    %7890 = vmatprep.subr.mxu0 0.0
    %7891 = vmatpush2.msra.mxu0 0.0
    %7892 = vmatprep.subr.mxu0 0.0
    %7893 = vmatpush2.msra.mxu0 0.0
    %7894 = vmatprep.subr.mxu0 0.0
    %7895 = vmatpush2.msra.mxu0 0.0
    %7896 = vmatprep.subr.mxu0 0.0
    %7897 = vmatpush2.msra.mxu0 0.0
    %7898 = vmatprep.subr.mxu0 0.0
    %7899 = vmatpush2.msra.mxu0 0.0
    %7900 = vmatprep.mubr.f32.mxu0 0.0
    %7901 = vmatmul.mubr.f32.gmra.mxu0 %v7600
    %v7902 = vpop.f32.mrf.mxu0
    %v7903 = vadd.f32 0.0, %v7902
    %v7904 = vpop.f32.mrf.mxu0
    %v7905 = vadd.f32 0.0, %v7904
    %7906 = vmatprep.mubr.f32.mxu0 0.0
    %7907 = vmatmul.mubr.f32.gmra.mxu0 %v7603
    %v7908 = vpop.f32.mrf.mxu0
    %v7909 = vadd.f32 0.0, %v7908
    %v7910 = vpop.f32.mrf.mxu0
    %v7911 = vadd.f32 0.0, %v7910
    %7912 = vdwg.mxu0
    %7913 = vmatprep.subr.mxu0 0.0
    %7914 = vmatpush1.msra.mxu0 0.0
    %7915 = vmatprep.subr.mxu0 0.0
    %7916 = vmatpush1.msra.mxu0 0.0
    %7917 = vmatprep.subr.mxu0 0.0
    %7918 = vmatpush1.msra.mxu0 0.0
    %7919 = vmatprep.subr.mxu0 0.0
    %7920 = vmatpush1.msra.mxu0 0.0
    %7921 = vmatprep.subr.mxu0 0.0
    %7922 = vmatpush1.msra.mxu0 0.0
    %7923 = vmatprep.subr.mxu0 0.0
    %7924 = vmatpush1.msra.mxu0 0.0
    %7925 = vmatprep.subr.mxu0 0.0
    %7926 = vmatpush1.msra.mxu0 0.0
    %7927 = vmatprep.subr.mxu0 0.0
    %7928 = vmatpush1.msra.mxu0 0.0
    %7929 = vmatprep.subr.mxu0 0.0
    %7930 = vmatpush1.msra.mxu0 0.0
    %7931 = vmatprep.subr.mxu0 0.0
    %7932 = vmatpush1.msra.mxu0 0.0
    %7933 = vmatprep.subr.mxu0 0.0
    %7934 = vmatpush1.msra.mxu0 0.0
    %7935 = vmatprep.subr.mxu0 0.0
    %7936 = vmatpush1.msra.mxu0 0.0
    %7937 = vmatprep.subr.mxu0 0.0
    %7938 = vmatpush1.msra.mxu0 0.0
    %7939 = vmatprep.subr.mxu0 0.0
    %7940 = vmatpush1.msra.mxu0 0.0
    %7941 = vmatprep.subr.mxu0 %v7564
    %7942 = vmatpush1.msra.mxu0 %v7563
    %7943 = vmatprep.subr.mxu0 %v7550
    %7944 = vmatpush1.msra.mxu0 %v7549
    %7945 = vmatprep.subr.mxu0 0.0
    %7946 = vmatpush2.msra.mxu0 0.0
    %7947 = vmatprep.subr.mxu0 0.0
    %7948 = vmatpush2.msra.mxu0 0.0
    %7949 = vmatprep.subr.mxu0 0.0
    %7950 = vmatpush2.msra.mxu0 0.0
    %7951 = vmatprep.subr.mxu0 0.0
    %7952 = vmatpush2.msra.mxu0 0.0
    %7953 = vmatprep.subr.mxu0 0.0
    %7954 = vmatpush2.msra.mxu0 0.0
    %7955 = vmatprep.subr.mxu0 0.0
    %7956 = vmatpush2.msra.mxu0 0.0
    %7957 = vmatprep.subr.mxu0 0.0
    %7958 = vmatpush2.msra.mxu0 0.0
    %7959 = vmatprep.subr.mxu0 0.0
    %7960 = vmatpush2.msra.mxu0 0.0
    %7961 = vmatprep.subr.mxu0 0.0
    %7962 = vmatpush2.msra.mxu0 0.0
    %7963 = vmatprep.subr.mxu0 0.0
    %7964 = vmatpush2.msra.mxu0 0.0
    %7965 = vmatprep.subr.mxu0 0.0
    %7966 = vmatpush2.msra.mxu0 0.0
    %7967 = vmatprep.subr.mxu0 0.0
    %7968 = vmatpush2.msra.mxu0 0.0
    %7969 = vmatprep.subr.mxu0 0.0
    %7970 = vmatpush2.msra.mxu0 0.0
    %7971 = vmatprep.subr.mxu0 0.0
    %7972 = vmatpush2.msra.mxu0 0.0
    %7973 = vmatprep.subr.mxu0 0.0
    %7974 = vmatpush2.msra.mxu0 0.0
    %7975 = vmatprep.subr.mxu0 0.0
    %7976 = vmatpush2.msra.mxu0 0.0
    %7977 = vmatprep.mubr.f32.mxu0 0.0
    %7978 = vmatmul.mubr.f32.gmra.mxu0 %v7600
    %v7979 = vpop.f32.mrf.mxu0
    %v7980 = vadd.f32 0.0, %v7979
    %v7981 = vpop.f32.mrf.mxu0
    %v7982 = vadd.f32 0.0, %v7981
    %7983 = vmatprep.mubr.f32.mxu0 0.0
    %7984 = vmatmul.mubr.f32.gmra.mxu0 %v7603
    %v7985 = vpop.f32.mrf.mxu0
    %v7986 = vadd.f32 0.0, %v7985
    %v7987 = vpop.f32.mrf.mxu0
    %v7988 = vadd.f32 0.0, %v7987
    %7989 = vdwg.mxu0
    %7990 = vmatprep.subr.mxu0 0.0
    %7991 = vmatpush1.msra.mxu0 0.0
    %7992 = vmatprep.subr.mxu0 0.0
    %7993 = vmatpush1.msra.mxu0 0.0
    %7994 = vmatprep.subr.mxu0 0.0
    %7995 = vmatpush1.msra.mxu0 0.0
    %7996 = vmatprep.subr.mxu0 0.0
    %7997 = vmatpush1.msra.mxu0 0.0
    %7998 = vmatprep.subr.mxu0 0.0
    %7999 = vmatpush1.msra.mxu0 0.0
    %8000 = vmatprep.subr.mxu0 0.0
    %8001 = vmatpush1.msra.mxu0 0.0
    %8002 = vmatprep.subr.mxu0 0.0
    %8003 = vmatpush1.msra.mxu0 0.0
    %8004 = vmatprep.subr.mxu0 0.0
    %8005 = vmatpush1.msra.mxu0 0.0
    %8006 = vmatprep.subr.mxu0 0.0
    %8007 = vmatpush1.msra.mxu0 0.0
    %8008 = vmatprep.subr.mxu0 0.0
    %8009 = vmatpush1.msra.mxu0 0.0
    %8010 = vmatprep.subr.mxu0 0.0
    %8011 = vmatpush1.msra.mxu0 0.0
    %8012 = vmatprep.subr.mxu0 0.0
    %8013 = vmatpush1.msra.mxu0 0.0
    %8014 = vmatprep.subr.mxu0 0.0
    %8015 = vmatpush1.msra.mxu0 0.0
    %8016 = vmatprep.subr.mxu0 0.0
    %8017 = vmatpush1.msra.mxu0 0.0
    %8018 = vmatprep.subr.mxu0 %v7566
    %8019 = vmatpush1.msra.mxu0 %v7565
    %8020 = vmatprep.subr.mxu0 %v7552
    %8021 = vmatpush1.msra.mxu0 %v7551
    %8022 = vmatprep.subr.mxu0 0.0
    %8023 = vmatpush2.msra.mxu0 0.0
    %8024 = vmatprep.subr.mxu0 0.0
    %8025 = vmatpush2.msra.mxu0 0.0
    %8026 = vmatprep.subr.mxu0 0.0
    %8027 = vmatpush2.msra.mxu0 0.0
    %8028 = vmatprep.subr.mxu0 0.0
    %8029 = vmatpush2.msra.mxu0 0.0
    %8030 = vmatprep.subr.mxu0 0.0
    %8031 = vmatpush2.msra.mxu0 0.0
    %8032 = vmatprep.subr.mxu0 0.0
    %8033 = vmatpush2.msra.mxu0 0.0
    %8034 = vmatprep.subr.mxu0 0.0
    %8035 = vmatpush2.msra.mxu0 0.0
    %8036 = vmatprep.subr.mxu0 0.0
    %8037 = vmatpush2.msra.mxu0 0.0
    %8038 = vmatprep.subr.mxu0 0.0
    %8039 = vmatpush2.msra.mxu0 0.0
    %8040 = vmatprep.subr.mxu0 0.0
    %8041 = vmatpush2.msra.mxu0 0.0
    %8042 = vmatprep.subr.mxu0 0.0
    %8043 = vmatpush2.msra.mxu0 0.0
    %8044 = vmatprep.subr.mxu0 0.0
    %8045 = vmatpush2.msra.mxu0 0.0
    %8046 = vmatprep.subr.mxu0 0.0
    %8047 = vmatpush2.msra.mxu0 0.0
    %8048 = vmatprep.subr.mxu0 0.0
    %8049 = vmatpush2.msra.mxu0 0.0
    %8050 = vmatprep.subr.mxu0 0.0
    %8051 = vmatpush2.msra.mxu0 0.0
    %8052 = vmatprep.subr.mxu0 0.0
    %8053 = vmatpush2.msra.mxu0 0.0
    %8054 = vmatprep.mubr.f32.mxu0 0.0
    %8055 = vmatmul.mubr.f32.gmra.mxu0 %v7600
    %v8056 = vpop.f32.mrf.mxu0
    %v8057 = vadd.f32 0.0, %v8056
    %v8058 = vpop.f32.mrf.mxu0
    %v8059 = vadd.f32 0.0, %v8058
    %8060 = vmatprep.mubr.f32.mxu0 0.0
    %8061 = vmatmul.mubr.f32.gmra.mxu0 %v7603
    %v8062 = vpop.f32.mrf.mxu0
    %v8063 = vadd.f32 0.0, %v8062
    %v8064 = vpop.f32.mrf.mxu0
    %v8065 = vadd.f32 0.0, %v8064
    %8066 = vdwg.mxu0
    %8067 = vmatprep.subr.mxu0 0.0
    %8068 = vmatpush1.msra.mxu0 0.0
    %8069 = vmatprep.subr.mxu0 0.0
    %8070 = vmatpush1.msra.mxu0 0.0
    %8071 = vmatprep.subr.mxu0 0.0
    %8072 = vmatpush1.msra.mxu0 0.0
    %8073 = vmatprep.subr.mxu0 0.0
    %8074 = vmatpush1.msra.mxu0 0.0
    %8075 = vmatprep.subr.mxu0 0.0
    %8076 = vmatpush1.msra.mxu0 0.0
    %8077 = vmatprep.subr.mxu0 0.0
    %8078 = vmatpush1.msra.mxu0 0.0
    %8079 = vmatprep.subr.mxu0 0.0
    %8080 = vmatpush1.msra.mxu0 0.0
    %8081 = vmatprep.subr.mxu0 0.0
    %8082 = vmatpush1.msra.mxu0 0.0
    %8083 = vmatprep.subr.mxu0 0.0
    %8084 = vmatpush1.msra.mxu0 0.0
    %8085 = vmatprep.subr.mxu0 0.0
    %8086 = vmatpush1.msra.mxu0 0.0
    %8087 = vmatprep.subr.mxu0 0.0
    %8088 = vmatpush1.msra.mxu0 0.0
    %8089 = vmatprep.subr.mxu0 0.0
    %8090 = vmatpush1.msra.mxu0 0.0
    %8091 = vmatprep.subr.mxu0 0.0
    %8092 = vmatpush1.msra.mxu0 0.0
    %8093 = vmatprep.subr.mxu0 0.0
    %8094 = vmatpush1.msra.mxu0 0.0
    %8095 = vmatprep.subr.mxu0 %v7568
    %8096 = vmatpush1.msra.mxu0 %v7567
    %8097 = vmatprep.subr.mxu0 %v7554
    %8098 = vmatpush1.msra.mxu0 %v7553
    %8099 = vmatprep.subr.mxu0 0.0
    %8100 = vmatpush2.msra.mxu0 0.0
    %8101 = vmatprep.subr.mxu0 0.0
    %8102 = vmatpush2.msra.mxu0 0.0
    %8103 = vmatprep.subr.mxu0 0.0
    %8104 = vmatpush2.msra.mxu0 0.0
    %8105 = vmatprep.subr.mxu0 0.0
    %8106 = vmatpush2.msra.mxu0 0.0
    %8107 = vmatprep.subr.mxu0 0.0
    %8108 = vmatpush2.msra.mxu0 0.0
    %8109 = vmatprep.subr.mxu0 0.0
    %8110 = vmatpush2.msra.mxu0 0.0
    %8111 = vmatprep.subr.mxu0 0.0
    %8112 = vmatpush2.msra.mxu0 0.0
    %8113 = vmatprep.subr.mxu0 0.0
    %8114 = vmatpush2.msra.mxu0 0.0
    %8115 = vmatprep.subr.mxu0 0.0
    %8116 = vmatpush2.msra.mxu0 0.0
    %8117 = vmatprep.subr.mxu0 0.0
    %8118 = vmatpush2.msra.mxu0 0.0
    %8119 = vmatprep.subr.mxu0 0.0
    %8120 = vmatpush2.msra.mxu0 0.0
    %8121 = vmatprep.subr.mxu0 0.0
    %8122 = vmatpush2.msra.mxu0 0.0
    %8123 = vmatprep.subr.mxu0 0.0
    %8124 = vmatpush2.msra.mxu0 0.0
    %8125 = vmatprep.subr.mxu0 0.0
    %8126 = vmatpush2.msra.mxu0 0.0
    %8127 = vmatprep.subr.mxu0 0.0
    %8128 = vmatpush2.msra.mxu0 0.0
    %8129 = vmatprep.subr.mxu0 0.0
    %8130 = vmatpush2.msra.mxu0 0.0
    %8131 = vmatprep.mubr.f32.mxu0 0.0
    %8132 = vmatmul.mubr.f32.gmra.mxu0 %v7600
    %v8133 = vpop.f32.mrf.mxu0
    %v8134 = vadd.f32 0.0, %v8133
    %v8135 = vpop.f32.mrf.mxu0
    %v8136 = vadd.f32 0.0, %v8135
    %8137 = vmatprep.mubr.f32.mxu0 0.0
    %8138 = vmatmul.mubr.f32.gmra.mxu0 %v7603
    %v8139 = vpop.f32.mrf.mxu0
    %v8140 = vadd.f32 0.0, %v8139
    %v8141 = vpop.f32.mrf.mxu0
    %v8142 = vadd.f32 0.0, %v8141
    %8143 = vdwg.mxu0
    %8144 = vmatprep.subr.mxu0 0.0
    %8145 = vmatpush1.msra.mxu0 0.0
    %8146 = vmatprep.subr.mxu0 0.0
    %8147 = vmatpush1.msra.mxu0 0.0
    %8148 = vmatprep.subr.mxu0 0.0
    %8149 = vmatpush1.msra.mxu0 0.0
    %8150 = vmatprep.subr.mxu0 0.0
    %8151 = vmatpush1.msra.mxu0 0.0
    %8152 = vmatprep.subr.mxu0 0.0
    %8153 = vmatpush1.msra.mxu0 0.0
    %8154 = vmatprep.subr.mxu0 0.0
    %8155 = vmatpush1.msra.mxu0 0.0
    %8156 = vmatprep.subr.mxu0 0.0
    %8157 = vmatpush1.msra.mxu0 0.0
    %8158 = vmatprep.subr.mxu0 0.0
    %8159 = vmatpush1.msra.mxu0 0.0
    %8160 = vmatprep.subr.mxu0 0.0
    %8161 = vmatpush1.msra.mxu0 0.0
    %8162 = vmatprep.subr.mxu0 0.0
    %8163 = vmatpush1.msra.mxu0 0.0
    %8164 = vmatprep.subr.mxu0 0.0
    %8165 = vmatpush1.msra.mxu0 0.0
    %8166 = vmatprep.subr.mxu0 0.0
    %8167 = vmatpush1.msra.mxu0 0.0
    %8168 = vmatprep.subr.mxu0 0.0
    %8169 = vmatpush1.msra.mxu0 0.0
    %8170 = vmatprep.subr.mxu0 0.0
    %8171 = vmatpush1.msra.mxu0 0.0
    %8172 = vmatprep.subr.mxu0 0.0
    %8173 = vmatpush1.msra.mxu0 %v7540
    %8174 = vmatprep.subr.mxu0 0.0
    %8175 = vmatpush1.msra.mxu0 %v7510
    %8176 = vmatprep.subr.mxu0 0.0
    %8177 = vmatpush2.msra.mxu0 0.0
    %8178 = vmatprep.subr.mxu0 0.0
    %8179 = vmatpush2.msra.mxu0 0.0
    %8180 = vmatprep.subr.mxu0 0.0
    %8181 = vmatpush2.msra.mxu0 0.0
    %8182 = vmatprep.subr.mxu0 0.0
    %8183 = vmatpush2.msra.mxu0 0.0
    %8184 = vmatprep.subr.mxu0 0.0
    %8185 = vmatpush2.msra.mxu0 0.0
    %8186 = vmatprep.subr.mxu0 0.0
    %8187 = vmatpush2.msra.mxu0 0.0
    %8188 = vmatprep.subr.mxu0 0.0
    %8189 = vmatpush2.msra.mxu0 0.0
    %8190 = vmatprep.subr.mxu0 0.0
    %8191 = vmatpush2.msra.mxu0 0.0
    %8192 = vmatprep.subr.mxu0 0.0
    %8193 = vmatpush2.msra.mxu0 0.0
    %8194 = vmatprep.subr.mxu0 0.0
    %8195 = vmatpush2.msra.mxu0 0.0
    %8196 = vmatprep.subr.mxu0 0.0
    %8197 = vmatpush2.msra.mxu0 0.0
    %8198 = vmatprep.subr.mxu0 0.0
    %8199 = vmatpush2.msra.mxu0 0.0
    %8200 = vmatprep.subr.mxu0 0.0
    %8201 = vmatpush2.msra.mxu0 0.0
    %8202 = vmatprep.subr.mxu0 0.0
    %8203 = vmatpush2.msra.mxu0 0.0
    %8204 = vmatprep.subr.mxu0 0.0
    %8205 = vmatpush2.msra.mxu0 0.0
    %8206 = vmatprep.subr.mxu0 0.0
    %8207 = vmatpush2.msra.mxu0 0.0
    %8208 = vmatprep.mubr.f32.mxu0 0.0
    %8209 = vmatmul.mubr.f32.gmra.mxu0 %v7600
    %v8210 = vpop.f32.mrf.mxu0
    %v8211 = vadd.f32 0.0, %v8210
    %v8212 = vpop.f32.mrf.mxu0
    %8213 = vmatprep.mubr.f32.mxu0 0.0
    %8214 = vmatmul.mubr.f32.gmra.mxu0 %v7603
    %v8215 = vpop.f32.mrf.mxu0
    %v8216 = vadd.f32 0.0, %v8215
    %v8217 = vpop.f32.mrf.mxu0
    %8218 = vdwg.mxu0
    %v8219 = vadd.f32 %v7448, %v7672
    %v8220 = vadd.f32 %v7449, %v7674
    %v8221 = vadd.f32 %v7450, %v7749
    %v8222 = vadd.f32 %v7451, %v7751
    %v8223 = vadd.f32 %v7452, %v7826
    %v8224 = vadd.f32 %v7453, %v7828
    %v8225 = vadd.f32 %v7454, %v7903
    %v8226 = vadd.f32 %v7455, %v7905
    %v8227 = vadd.f32 %v7456, %v7980
    %v8228 = vadd.f32 %v7457, %v7982
    %v8229 = vadd.f32 %v7458, %v8057
    %v8230 = vadd.f32 %v7459, %v8059
    %v8231 = vadd.f32 %v7460, %v8134
    %v8232 = vadd.f32 %v7461, %v8136
    %v8233 = vadd.f32 %v7462, %v8211
    %v8234 = vadd.f32 %v7463, %v7678
    %v8235 = vadd.f32 %v7464, %v7680
    %v8236 = vadd.f32 %v7465, %v7755
    %v8237 = vadd.f32 %v7466, %v7757
    %v8238 = vadd.f32 %v7467, %v7832
    %v8239 = vadd.f32 %v7468, %v7834
    %v8240 = vadd.f32 %v7469, %v7909
    %v8241 = vadd.f32 %v7470, %v7911
    %v8242 = vadd.f32 %v7471, %v7986
    %v8243 = vadd.f32 %v7472, %v7988
    %v8244 = vadd.f32 %v7473, %v8063
    %v8245 = vadd.f32 %v7474, %v8065
    %v8246 = vadd.f32 %v7475, %v8140
    %v8247 = vadd.f32 %v7476, %v8142
    %v8248 = vadd.f32 %v7477, %v8216
    %s8249 = scalar_lea.vmem %s3, 112
    %v8250 = vld [vmem:[%s8249] sm:$0xff]
    %v8251 = vld [vmem:[%s8249 + $0x8] sm:$0xff]
    %8252 = vrot.lane.b32.xlu0 %v2850, 66
    %v8253 = vpop.permute.xlu0 %8252
    %8254 = vrot.lane.b32.xlu0 %v2851, 66
    %v8255 = vpop.permute.xlu0 %8254
    %8256 = vrot.lane.b32.xlu0 %v2852, 66
    %v8257 = vpop.permute.xlu0 %8256
    %8258 = vrot.lane.b32.xlu0 %v2853, 66
    %v8259 = vpop.permute.xlu0 %8258
    %8260 = vrot.lane.b32.xlu0 %v2854, 66
    %v8261 = vpop.permute.xlu0 %8260
    %8262 = vrot.lane.b32.xlu0 %v2855, 66
    %v8263 = vpop.permute.xlu0 %8262
    %8264 = vrot.lane.b32.xlu0 %v2856, 66
    %v8265 = vpop.permute.xlu0 %8264
    %8266 = vrot.lane.b32.xlu0 %v2857, 66
    %v8267 = vpop.permute.xlu0 %8266
    %8268 = vrot.lane.b32.xlu0 %v2858, 66
    %v8269 = vpop.permute.xlu0 %8268
    %8270 = vrot.lane.b32.xlu0 %v2859, 66
    %v8271 = vpop.permute.xlu0 %8270
    %8272 = vrot.lane.b32.xlu0 %v2860, 66
    %v8273 = vpop.permute.xlu0 %8272
    %8274 = vrot.lane.b32.xlu0 %v2861, 66
    %v8275 = vpop.permute.xlu0 %8274
    %8276 = vrot.lane.b32.xlu0 %v2862, 66
    %v8277 = vpop.permute.xlu0 %8276
    %8278 = vrot.lane.b32.xlu0 %v2863, 66
    %v8279 = vpop.permute.xlu0 %8278
    %8280 = vrot.lane.b32.xlu0 %v2864, 66
    %v8281 = vpop.permute.xlu0 %8280
    %8282 = vrot.lane.b32.xlu0 %v2865, 66
    %v8283 = vpop.permute.xlu0 %8282
    %8284 = vrot.lane.b32.xlu0 %v2866, 66
    %v8285 = vpop.permute.xlu0 %8284
    %8286 = vrot.lane.b32.xlu0 %v2867, 66
    %v8287 = vpop.permute.xlu0 %8286
    %8288 = vrot.lane.b32.xlu0 %v2868, 66
    %v8289 = vpop.permute.xlu0 %8288
    %8290 = vrot.lane.b32.xlu0 %v2869, 66
    %v8291 = vpop.permute.xlu0 %8290
    %8292 = vrot.lane.b32.xlu0 %v2870, 66
    %v8293 = vpop.permute.xlu0 %8292
    %8294 = vrot.lane.b32.xlu0 %v2871, 66
    %v8295 = vpop.permute.xlu0 %8294
    %8296 = vrot.lane.b32.xlu0 %v2872, 66
    %v8297 = vpop.permute.xlu0 %8296
    %8298 = vrot.lane.b32.xlu0 %v2873, 66
    %v8299 = vpop.permute.xlu0 %8298
    %8300 = vrot.lane.b32.xlu0 %v2874, 66
    %v8301 = vpop.permute.xlu0 %8300
    %8302 = vrot.lane.b32.xlu0 %v2875, 66
    %v8303 = vpop.permute.xlu0 %8302
    %8304 = vrot.lane.b32.xlu0 %v2876, 66
    %v8305 = vpop.permute.xlu0 %8304
    %8306 = vrot.lane.b32.xlu0 %v2877, 66
    %v8307 = vpop.permute.xlu0 %8306
    %8308 = vrot.lane.b32.xlu0 %v2878, 66
    %v8309 = vpop.permute.xlu0 %8308
    %8310 = vrot.lane.b32.xlu0 %v2879, 66
    %v8311 = vpop.permute.xlu0 %8310
    %v8312 = vsel %vm2315, %v8253, %v8255
    %v8313 = vsel %vm2315, %v8255, %v8257
    %v8314 = vsel %vm2315, %v8257, %v8259
    %v8315 = vsel %vm2315, %v8259, %v8261
    %v8316 = vsel %vm2315, %v8261, %v8263
    %v8317 = vsel %vm2315, %v8263, %v8265
    %v8318 = vsel %vm2315, %v8265, %v8267
    %v8319 = vsel %vm2315, %v8267, %v8269
    %v8320 = vsel %vm2315, %v8269, %v8271
    %v8321 = vsel %vm2315, %v8271, %v8273
    %v8322 = vsel %vm2315, %v8273, %v8275
    %v8323 = vsel %vm2315, %v8275, %v8277
    %v8324 = vsel %vm2315, %v8277, %v8279
    %v8325 = vsel %vm2315, %v8279, %v8281
    %v8326 = vsel %vm2315, %v8283, %v8285
    %v8327 = vsel %vm2315, %v8285, %v8287
    %v8328 = vsel %vm2315, %v8287, %v8289
    %v8329 = vsel %vm2315, %v8289, %v8291
    %v8330 = vsel %vm2315, %v8291, %v8293
    %v8331 = vsel %vm2315, %v8293, %v8295
    %v8332 = vsel %vm2315, %v8295, %v8297
    %v8333 = vsel %vm2315, %v8297, %v8299
    %v8334 = vsel %vm2315, %v8299, %v8301
    %v8335 = vsel %vm2315, %v8301, %v8303
    %v8336 = vsel %vm2315, %v8303, %v8305
    %v8337 = vsel %vm2315, %v8305, %v8307
    %v8338 = vsel %vm2315, %v8307, %v8309
    %v8339 = vsel %vm2315, %v8309, %v8311
    %v8371 = vsel %vm3033, %v8250, 0
    %v8374 = vsel %vm3033, %v8251, 0
    %8376 = vmatprep.subr.mxu0 0.0
    %8377 = vmatpush1.msra.mxu0 0.0
    %8378 = vmatprep.subr.mxu0 0.0
    %8379 = vmatpush1.msra.mxu0 0.0
    %8380 = vmatprep.subr.mxu0 0.0
    %8381 = vmatpush1.msra.mxu0 0.0
    %8382 = vmatprep.subr.mxu0 0.0
    %8383 = vmatpush1.msra.mxu0 0.0
    %8384 = vmatprep.subr.mxu0 0.0
    %8385 = vmatpush1.msra.mxu0 0.0
    %8386 = vmatprep.subr.mxu0 0.0
    %8387 = vmatpush1.msra.mxu0 0.0
    %8388 = vmatprep.subr.mxu0 0.0
    %8389 = vmatpush1.msra.mxu0 0.0
    %8390 = vmatprep.subr.mxu0 0.0
    %8391 = vmatpush1.msra.mxu0 0.0
    %8392 = vmatprep.subr.mxu0 0.0
    %8393 = vmatpush1.msra.mxu0 0.0
    %8394 = vmatprep.subr.mxu0 0.0
    %8395 = vmatpush1.msra.mxu0 0.0
    %8396 = vmatprep.subr.mxu0 0.0
    %8397 = vmatpush1.msra.mxu0 0.0
    %8398 = vmatprep.subr.mxu0 0.0
    %8399 = vmatpush1.msra.mxu0 0.0
    %8400 = vmatprep.subr.mxu0 0.0
    %8401 = vmatpush1.msra.mxu0 0.0
    %8402 = vmatprep.subr.mxu0 0.0
    %8403 = vmatpush1.msra.mxu0 0.0
    %8404 = vmatprep.subr.mxu0 %v8327
    %8405 = vmatpush1.msra.mxu0 %v8326
    %8406 = vmatprep.subr.mxu0 %v8313
    %8407 = vmatpush1.msra.mxu0 %v8312
    %8408 = vmatprep.subr.mxu0 0.0
    %8409 = vmatpush2.msra.mxu0 0.0
    %8410 = vmatprep.subr.mxu0 0.0
    %8411 = vmatpush2.msra.mxu0 0.0
    %8412 = vmatprep.subr.mxu0 0.0
    %8413 = vmatpush2.msra.mxu0 0.0
    %8414 = vmatprep.subr.mxu0 0.0
    %8415 = vmatpush2.msra.mxu0 0.0
    %8416 = vmatprep.subr.mxu0 0.0
    %8417 = vmatpush2.msra.mxu0 0.0
    %8418 = vmatprep.subr.mxu0 0.0
    %8419 = vmatpush2.msra.mxu0 0.0
    %8420 = vmatprep.subr.mxu0 0.0
    %8421 = vmatpush2.msra.mxu0 0.0
    %8422 = vmatprep.subr.mxu0 0.0
    %8423 = vmatpush2.msra.mxu0 0.0
    %8424 = vmatprep.subr.mxu0 0.0
    %8425 = vmatpush2.msra.mxu0 0.0
    %8426 = vmatprep.subr.mxu0 0.0
    %8427 = vmatpush2.msra.mxu0 0.0
    %8428 = vmatprep.subr.mxu0 0.0
    %8429 = vmatpush2.msra.mxu0 0.0
    %8430 = vmatprep.subr.mxu0 0.0
    %8431 = vmatpush2.msra.mxu0 0.0
    %8432 = vmatprep.subr.mxu0 0.0
    %8433 = vmatpush2.msra.mxu0 0.0
    %8434 = vmatprep.subr.mxu0 0.0
    %8435 = vmatpush2.msra.mxu0 0.0
    %8436 = vmatprep.subr.mxu0 0.0
    %8437 = vmatpush2.msra.mxu0 0.0
    %8438 = vmatprep.subr.mxu0 0.0
    %8439 = vmatpush2.msra.mxu0 0.0
    %8440 = vmatprep.mubr.f32.mxu0 0.0
    %8441 = vmatmul.mubr.f32.gmra.mxu0 %v8371
    %v8442 = vpop.f32.mrf.mxu0
    %v8443 = vadd.f32 0.0, %v8442
    %v8444 = vpop.f32.mrf.mxu0
    %v8445 = vadd.f32 0.0, %v8444
    %8446 = vmatprep.mubr.f32.mxu0 0.0
    %8447 = vmatmul.mubr.f32.gmra.mxu0 %v8374
    %v8448 = vpop.f32.mrf.mxu0
    %v8449 = vadd.f32 0.0, %v8448
    %v8450 = vpop.f32.mrf.mxu0
    %v8451 = vadd.f32 0.0, %v8450
    %8452 = vdwg.mxu0
    %8453 = vmatprep.subr.mxu0 0.0
    %8454 = vmatpush1.msra.mxu0 0.0
    %8455 = vmatprep.subr.mxu0 0.0
    %8456 = vmatpush1.msra.mxu0 0.0
    %8457 = vmatprep.subr.mxu0 0.0
    %8458 = vmatpush1.msra.mxu0 0.0
    %8459 = vmatprep.subr.mxu0 0.0
    %8460 = vmatpush1.msra.mxu0 0.0
    %8461 = vmatprep.subr.mxu0 0.0
    %8462 = vmatpush1.msra.mxu0 0.0
    %8463 = vmatprep.subr.mxu0 0.0
    %8464 = vmatpush1.msra.mxu0 0.0
    %8465 = vmatprep.subr.mxu0 0.0
    %8466 = vmatpush1.msra.mxu0 0.0
    %8467 = vmatprep.subr.mxu0 0.0
    %8468 = vmatpush1.msra.mxu0 0.0
    %8469 = vmatprep.subr.mxu0 0.0
    %8470 = vmatpush1.msra.mxu0 0.0
    %8471 = vmatprep.subr.mxu0 0.0
    %8472 = vmatpush1.msra.mxu0 0.0
    %8473 = vmatprep.subr.mxu0 0.0
    %8474 = vmatpush1.msra.mxu0 0.0
    %8475 = vmatprep.subr.mxu0 0.0
    %8476 = vmatpush1.msra.mxu0 0.0
    %8477 = vmatprep.subr.mxu0 0.0
    %8478 = vmatpush1.msra.mxu0 0.0
    %8479 = vmatprep.subr.mxu0 0.0
    %8480 = vmatpush1.msra.mxu0 0.0
    %8481 = vmatprep.subr.mxu0 %v8329
    %8482 = vmatpush1.msra.mxu0 %v8328
    %8483 = vmatprep.subr.mxu0 %v8315
    %8484 = vmatpush1.msra.mxu0 %v8314
    %8485 = vmatprep.subr.mxu0 0.0
    %8486 = vmatpush2.msra.mxu0 0.0
    %8487 = vmatprep.subr.mxu0 0.0
    %8488 = vmatpush2.msra.mxu0 0.0
    %8489 = vmatprep.subr.mxu0 0.0
    %8490 = vmatpush2.msra.mxu0 0.0
    %8491 = vmatprep.subr.mxu0 0.0
    %8492 = vmatpush2.msra.mxu0 0.0
    %8493 = vmatprep.subr.mxu0 0.0
    %8494 = vmatpush2.msra.mxu0 0.0
    %8495 = vmatprep.subr.mxu0 0.0
    %8496 = vmatpush2.msra.mxu0 0.0
    %8497 = vmatprep.subr.mxu0 0.0
    %8498 = vmatpush2.msra.mxu0 0.0
    %8499 = vmatprep.subr.mxu0 0.0
    %8500 = vmatpush2.msra.mxu0 0.0
    %8501 = vmatprep.subr.mxu0 0.0
    %8502 = vmatpush2.msra.mxu0 0.0
    %8503 = vmatprep.subr.mxu0 0.0
    %8504 = vmatpush2.msra.mxu0 0.0
    %8505 = vmatprep.subr.mxu0 0.0
    %8506 = vmatpush2.msra.mxu0 0.0
    %8507 = vmatprep.subr.mxu0 0.0
    %8508 = vmatpush2.msra.mxu0 0.0
    %8509 = vmatprep.subr.mxu0 0.0
    %8510 = vmatpush2.msra.mxu0 0.0
    %8511 = vmatprep.subr.mxu0 0.0
    %8512 = vmatpush2.msra.mxu0 0.0
    %8513 = vmatprep.subr.mxu0 0.0
    %8514 = vmatpush2.msra.mxu0 0.0
    %8515 = vmatprep.subr.mxu0 0.0
    %8516 = vmatpush2.msra.mxu0 0.0
    %8517 = vmatprep.mubr.f32.mxu0 0.0
    %8518 = vmatmul.mubr.f32.gmra.mxu0 %v8371
    %v8519 = vpop.f32.mrf.mxu0
    %v8520 = vadd.f32 0.0, %v8519
    %v8521 = vpop.f32.mrf.mxu0
    %v8522 = vadd.f32 0.0, %v8521
    %8523 = vmatprep.mubr.f32.mxu0 0.0
    %8524 = vmatmul.mubr.f32.gmra.mxu0 %v8374
    %v8525 = vpop.f32.mrf.mxu0
    %v8526 = vadd.f32 0.0, %v8525
    %v8527 = vpop.f32.mrf.mxu0
    %v8528 = vadd.f32 0.0, %v8527
    %8529 = vdwg.mxu0
    %8530 = vmatprep.subr.mxu0 0.0
    %8531 = vmatpush1.msra.mxu0 0.0
    %8532 = vmatprep.subr.mxu0 0.0
    %8533 = vmatpush1.msra.mxu0 0.0
    %8534 = vmatprep.subr.mxu0 0.0
    %8535 = vmatpush1.msra.mxu0 0.0
    %8536 = vmatprep.subr.mxu0 0.0
    %8537 = vmatpush1.msra.mxu0 0.0
    %8538 = vmatprep.subr.mxu0 0.0
    %8539 = vmatpush1.msra.mxu0 0.0
    %8540 = vmatprep.subr.mxu0 0.0
    %8541 = vmatpush1.msra.mxu0 0.0
    %8542 = vmatprep.subr.mxu0 0.0
    %8543 = vmatpush1.msra.mxu0 0.0
    %8544 = vmatprep.subr.mxu0 0.0
    %8545 = vmatpush1.msra.mxu0 0.0
    %8546 = vmatprep.subr.mxu0 0.0
    %8547 = vmatpush1.msra.mxu0 0.0
    %8548 = vmatprep.subr.mxu0 0.0
    %8549 = vmatpush1.msra.mxu0 0.0
    %8550 = vmatprep.subr.mxu0 0.0
    %8551 = vmatpush1.msra.mxu0 0.0
    %8552 = vmatprep.subr.mxu0 0.0
    %8553 = vmatpush1.msra.mxu0 0.0
    %8554 = vmatprep.subr.mxu0 0.0
    %8555 = vmatpush1.msra.mxu0 0.0
    %8556 = vmatprep.subr.mxu0 0.0
    %8557 = vmatpush1.msra.mxu0 0.0
    %8558 = vmatprep.subr.mxu0 %v8331
    %8559 = vmatpush1.msra.mxu0 %v8330
    %8560 = vmatprep.subr.mxu0 %v8317
    %8561 = vmatpush1.msra.mxu0 %v8316
    %8562 = vmatprep.subr.mxu0 0.0
    %8563 = vmatpush2.msra.mxu0 0.0
    %8564 = vmatprep.subr.mxu0 0.0
    %8565 = vmatpush2.msra.mxu0 0.0
    %8566 = vmatprep.subr.mxu0 0.0
    %8567 = vmatpush2.msra.mxu0 0.0
    %8568 = vmatprep.subr.mxu0 0.0
    %8569 = vmatpush2.msra.mxu0 0.0
    %8570 = vmatprep.subr.mxu0 0.0
    %8571 = vmatpush2.msra.mxu0 0.0
    %8572 = vmatprep.subr.mxu0 0.0
    %8573 = vmatpush2.msra.mxu0 0.0
    %8574 = vmatprep.subr.mxu0 0.0
    %8575 = vmatpush2.msra.mxu0 0.0
    %8576 = vmatprep.subr.mxu0 0.0
    %8577 = vmatpush2.msra.mxu0 0.0
    %8578 = vmatprep.subr.mxu0 0.0
    %8579 = vmatpush2.msra.mxu0 0.0
    %8580 = vmatprep.subr.mxu0 0.0
    %8581 = vmatpush2.msra.mxu0 0.0
    %8582 = vmatprep.subr.mxu0 0.0
    %8583 = vmatpush2.msra.mxu0 0.0
    %8584 = vmatprep.subr.mxu0 0.0
    %8585 = vmatpush2.msra.mxu0 0.0
    %8586 = vmatprep.subr.mxu0 0.0
    %8587 = vmatpush2.msra.mxu0 0.0
    %8588 = vmatprep.subr.mxu0 0.0
    %8589 = vmatpush2.msra.mxu0 0.0
    %8590 = vmatprep.subr.mxu0 0.0
    %8591 = vmatpush2.msra.mxu0 0.0
    %8592 = vmatprep.subr.mxu0 0.0
    %8593 = vmatpush2.msra.mxu0 0.0
    %8594 = vmatprep.mubr.f32.mxu0 0.0
    %8595 = vmatmul.mubr.f32.gmra.mxu0 %v8371
    %v8596 = vpop.f32.mrf.mxu0
    %v8597 = vadd.f32 0.0, %v8596
    %v8598 = vpop.f32.mrf.mxu0
    %v8599 = vadd.f32 0.0, %v8598
    %8600 = vmatprep.mubr.f32.mxu0 0.0
    %8601 = vmatmul.mubr.f32.gmra.mxu0 %v8374
    %v8602 = vpop.f32.mrf.mxu0
    %v8603 = vadd.f32 0.0, %v8602
    %v8604 = vpop.f32.mrf.mxu0
    %v8605 = vadd.f32 0.0, %v8604
    %8606 = vdwg.mxu0
    %8607 = vmatprep.subr.mxu0 0.0
    %8608 = vmatpush1.msra.mxu0 0.0
    %8609 = vmatprep.subr.mxu0 0.0
    %8610 = vmatpush1.msra.mxu0 0.0
    %8611 = vmatprep.subr.mxu0 0.0
    %8612 = vmatpush1.msra.mxu0 0.0
    %8613 = vmatprep.subr.mxu0 0.0
    %8614 = vmatpush1.msra.mxu0 0.0
    %8615 = vmatprep.subr.mxu0 0.0
    %8616 = vmatpush1.msra.mxu0 0.0
    %8617 = vmatprep.subr.mxu0 0.0
    %8618 = vmatpush1.msra.mxu0 0.0
    %8619 = vmatprep.subr.mxu0 0.0
    %8620 = vmatpush1.msra.mxu0 0.0
    %8621 = vmatprep.subr.mxu0 0.0
    %8622 = vmatpush1.msra.mxu0 0.0
    %8623 = vmatprep.subr.mxu0 0.0
    %8624 = vmatpush1.msra.mxu0 0.0
    %8625 = vmatprep.subr.mxu0 0.0
    %8626 = vmatpush1.msra.mxu0 0.0
    %8627 = vmatprep.subr.mxu0 0.0
    %8628 = vmatpush1.msra.mxu0 0.0
    %8629 = vmatprep.subr.mxu0 0.0
    %8630 = vmatpush1.msra.mxu0 0.0
    %8631 = vmatprep.subr.mxu0 0.0
    %8632 = vmatpush1.msra.mxu0 0.0
    %8633 = vmatprep.subr.mxu0 0.0
    %8634 = vmatpush1.msra.mxu0 0.0
    %8635 = vmatprep.subr.mxu0 %v8333
    %8636 = vmatpush1.msra.mxu0 %v8332
    %8637 = vmatprep.subr.mxu0 %v8319
    %8638 = vmatpush1.msra.mxu0 %v8318
    %8639 = vmatprep.subr.mxu0 0.0
    %8640 = vmatpush2.msra.mxu0 0.0
    %8641 = vmatprep.subr.mxu0 0.0
    %8642 = vmatpush2.msra.mxu0 0.0
    %8643 = vmatprep.subr.mxu0 0.0
    %8644 = vmatpush2.msra.mxu0 0.0
    %8645 = vmatprep.subr.mxu0 0.0
    %8646 = vmatpush2.msra.mxu0 0.0
    %8647 = vmatprep.subr.mxu0 0.0
    %8648 = vmatpush2.msra.mxu0 0.0
    %8649 = vmatprep.subr.mxu0 0.0
    %8650 = vmatpush2.msra.mxu0 0.0
    %8651 = vmatprep.subr.mxu0 0.0
    %8652 = vmatpush2.msra.mxu0 0.0
    %8653 = vmatprep.subr.mxu0 0.0
    %8654 = vmatpush2.msra.mxu0 0.0
    %8655 = vmatprep.subr.mxu0 0.0
    %8656 = vmatpush2.msra.mxu0 0.0
    %8657 = vmatprep.subr.mxu0 0.0
    %8658 = vmatpush2.msra.mxu0 0.0
    %8659 = vmatprep.subr.mxu0 0.0
    %8660 = vmatpush2.msra.mxu0 0.0
    %8661 = vmatprep.subr.mxu0 0.0
    %8662 = vmatpush2.msra.mxu0 0.0
    %8663 = vmatprep.subr.mxu0 0.0
    %8664 = vmatpush2.msra.mxu0 0.0
    %8665 = vmatprep.subr.mxu0 0.0
    %8666 = vmatpush2.msra.mxu0 0.0
    %8667 = vmatprep.subr.mxu0 0.0
    %8668 = vmatpush2.msra.mxu0 0.0
    %8669 = vmatprep.subr.mxu0 0.0
    %8670 = vmatpush2.msra.mxu0 0.0
    %8671 = vmatprep.mubr.f32.mxu0 0.0
    %8672 = vmatmul.mubr.f32.gmra.mxu0 %v8371
    %v8673 = vpop.f32.mrf.mxu0
    %v8674 = vadd.f32 0.0, %v8673
    %v8675 = vpop.f32.mrf.mxu0
    %v8676 = vadd.f32 0.0, %v8675
    %8677 = vmatprep.mubr.f32.mxu0 0.0
    %8678 = vmatmul.mubr.f32.gmra.mxu0 %v8374
    %v8679 = vpop.f32.mrf.mxu0
    %v8680 = vadd.f32 0.0, %v8679
    %v8681 = vpop.f32.mrf.mxu0
    %v8682 = vadd.f32 0.0, %v8681
    %8683 = vdwg.mxu0
    %8684 = vmatprep.subr.mxu0 0.0
    %8685 = vmatpush1.msra.mxu0 0.0
    %8686 = vmatprep.subr.mxu0 0.0
    %8687 = vmatpush1.msra.mxu0 0.0
    %8688 = vmatprep.subr.mxu0 0.0
    %8689 = vmatpush1.msra.mxu0 0.0
    %8690 = vmatprep.subr.mxu0 0.0
    %8691 = vmatpush1.msra.mxu0 0.0
    %8692 = vmatprep.subr.mxu0 0.0
    %8693 = vmatpush1.msra.mxu0 0.0
    %8694 = vmatprep.subr.mxu0 0.0
    %8695 = vmatpush1.msra.mxu0 0.0
    %8696 = vmatprep.subr.mxu0 0.0
    %8697 = vmatpush1.msra.mxu0 0.0
    %8698 = vmatprep.subr.mxu0 0.0
    %8699 = vmatpush1.msra.mxu0 0.0
    %8700 = vmatprep.subr.mxu0 0.0
    %8701 = vmatpush1.msra.mxu0 0.0
    %8702 = vmatprep.subr.mxu0 0.0
    %8703 = vmatpush1.msra.mxu0 0.0
    %8704 = vmatprep.subr.mxu0 0.0
    %8705 = vmatpush1.msra.mxu0 0.0
    %8706 = vmatprep.subr.mxu0 0.0
    %8707 = vmatpush1.msra.mxu0 0.0
    %8708 = vmatprep.subr.mxu0 0.0
    %8709 = vmatpush1.msra.mxu0 0.0
    %8710 = vmatprep.subr.mxu0 0.0
    %8711 = vmatpush1.msra.mxu0 0.0
    %8712 = vmatprep.subr.mxu0 %v8335
    %8713 = vmatpush1.msra.mxu0 %v8334
    %8714 = vmatprep.subr.mxu0 %v8321
    %8715 = vmatpush1.msra.mxu0 %v8320
    %8716 = vmatprep.subr.mxu0 0.0
    %8717 = vmatpush2.msra.mxu0 0.0
    %8718 = vmatprep.subr.mxu0 0.0
    %8719 = vmatpush2.msra.mxu0 0.0
    %8720 = vmatprep.subr.mxu0 0.0
    %8721 = vmatpush2.msra.mxu0 0.0
    %8722 = vmatprep.subr.mxu0 0.0
    %8723 = vmatpush2.msra.mxu0 0.0
    %8724 = vmatprep.subr.mxu0 0.0
    %8725 = vmatpush2.msra.mxu0 0.0
    %8726 = vmatprep.subr.mxu0 0.0
    %8727 = vmatpush2.msra.mxu0 0.0
    %8728 = vmatprep.subr.mxu0 0.0
    %8729 = vmatpush2.msra.mxu0 0.0
    %8730 = vmatprep.subr.mxu0 0.0
    %8731 = vmatpush2.msra.mxu0 0.0
    %8732 = vmatprep.subr.mxu0 0.0
    %8733 = vmatpush2.msra.mxu0 0.0
    %8734 = vmatprep.subr.mxu0 0.0
    %8735 = vmatpush2.msra.mxu0 0.0
    %8736 = vmatprep.subr.mxu0 0.0
    %8737 = vmatpush2.msra.mxu0 0.0
    %8738 = vmatprep.subr.mxu0 0.0
    %8739 = vmatpush2.msra.mxu0 0.0
    %8740 = vmatprep.subr.mxu0 0.0
    %8741 = vmatpush2.msra.mxu0 0.0
    %8742 = vmatprep.subr.mxu0 0.0
    %8743 = vmatpush2.msra.mxu0 0.0
    %8744 = vmatprep.subr.mxu0 0.0
    %8745 = vmatpush2.msra.mxu0 0.0
    %8746 = vmatprep.subr.mxu0 0.0
    %8747 = vmatpush2.msra.mxu0 0.0
    %8748 = vmatprep.mubr.f32.mxu0 0.0
    %8749 = vmatmul.mubr.f32.gmra.mxu0 %v8371
    %v8750 = vpop.f32.mrf.mxu0
    %v8751 = vadd.f32 0.0, %v8750
    %v8752 = vpop.f32.mrf.mxu0
    %v8753 = vadd.f32 0.0, %v8752
    %8754 = vmatprep.mubr.f32.mxu0 0.0
    %8755 = vmatmul.mubr.f32.gmra.mxu0 %v8374
    %v8756 = vpop.f32.mrf.mxu0
    %v8757 = vadd.f32 0.0, %v8756
    %v8758 = vpop.f32.mrf.mxu0
    %v8759 = vadd.f32 0.0, %v8758
    %8760 = vdwg.mxu0
    %8761 = vmatprep.subr.mxu0 0.0
    %8762 = vmatpush1.msra.mxu0 0.0
    %8763 = vmatprep.subr.mxu0 0.0
    %8764 = vmatpush1.msra.mxu0 0.0
    %8765 = vmatprep.subr.mxu0 0.0
    %8766 = vmatpush1.msra.mxu0 0.0
    %8767 = vmatprep.subr.mxu0 0.0
    %8768 = vmatpush1.msra.mxu0 0.0
    %8769 = vmatprep.subr.mxu0 0.0
    %8770 = vmatpush1.msra.mxu0 0.0
    %8771 = vmatprep.subr.mxu0 0.0
    %8772 = vmatpush1.msra.mxu0 0.0
    %8773 = vmatprep.subr.mxu0 0.0
    %8774 = vmatpush1.msra.mxu0 0.0
    %8775 = vmatprep.subr.mxu0 0.0
    %8776 = vmatpush1.msra.mxu0 0.0
    %8777 = vmatprep.subr.mxu0 0.0
    %8778 = vmatpush1.msra.mxu0 0.0
    %8779 = vmatprep.subr.mxu0 0.0
    %8780 = vmatpush1.msra.mxu0 0.0
    %8781 = vmatprep.subr.mxu0 0.0
    %8782 = vmatpush1.msra.mxu0 0.0
    %8783 = vmatprep.subr.mxu0 0.0
    %8784 = vmatpush1.msra.mxu0 0.0
    %8785 = vmatprep.subr.mxu0 0.0
    %8786 = vmatpush1.msra.mxu0 0.0
    %8787 = vmatprep.subr.mxu0 0.0
    %8788 = vmatpush1.msra.mxu0 0.0
    %8789 = vmatprep.subr.mxu0 %v8337
    %8790 = vmatpush1.msra.mxu0 %v8336
    %8791 = vmatprep.subr.mxu0 %v8323
    %8792 = vmatpush1.msra.mxu0 %v8322
    %8793 = vmatprep.subr.mxu0 0.0
    %8794 = vmatpush2.msra.mxu0 0.0
    %8795 = vmatprep.subr.mxu0 0.0
    %8796 = vmatpush2.msra.mxu0 0.0
    %8797 = vmatprep.subr.mxu0 0.0
    %8798 = vmatpush2.msra.mxu0 0.0
    %8799 = vmatprep.subr.mxu0 0.0
    %8800 = vmatpush2.msra.mxu0 0.0
    %8801 = vmatprep.subr.mxu0 0.0
    %8802 = vmatpush2.msra.mxu0 0.0
    %8803 = vmatprep.subr.mxu0 0.0
    %8804 = vmatpush2.msra.mxu0 0.0
    %8805 = vmatprep.subr.mxu0 0.0
    %8806 = vmatpush2.msra.mxu0 0.0
    %8807 = vmatprep.subr.mxu0 0.0
    %8808 = vmatpush2.msra.mxu0 0.0
    %8809 = vmatprep.subr.mxu0 0.0
    %8810 = vmatpush2.msra.mxu0 0.0
    %8811 = vmatprep.subr.mxu0 0.0
    %8812 = vmatpush2.msra.mxu0 0.0
    %8813 = vmatprep.subr.mxu0 0.0
    %8814 = vmatpush2.msra.mxu0 0.0
    %8815 = vmatprep.subr.mxu0 0.0
    %8816 = vmatpush2.msra.mxu0 0.0
    %8817 = vmatprep.subr.mxu0 0.0
    %8818 = vmatpush2.msra.mxu0 0.0
    %8819 = vmatprep.subr.mxu0 0.0
    %8820 = vmatpush2.msra.mxu0 0.0
    %8821 = vmatprep.subr.mxu0 0.0
    %8822 = vmatpush2.msra.mxu0 0.0
    %8823 = vmatprep.subr.mxu0 0.0
    %8824 = vmatpush2.msra.mxu0 0.0
    %8825 = vmatprep.mubr.f32.mxu0 0.0
    %8826 = vmatmul.mubr.f32.gmra.mxu0 %v8371
    %v8827 = vpop.f32.mrf.mxu0
    %v8828 = vadd.f32 0.0, %v8827
    %v8829 = vpop.f32.mrf.mxu0
    %v8830 = vadd.f32 0.0, %v8829
    %8831 = vmatprep.mubr.f32.mxu0 0.0
    %8832 = vmatmul.mubr.f32.gmra.mxu0 %v8374
    %v8833 = vpop.f32.mrf.mxu0
    %v8834 = vadd.f32 0.0, %v8833
    %v8835 = vpop.f32.mrf.mxu0
    %v8836 = vadd.f32 0.0, %v8835
    %8837 = vdwg.mxu0
    %8838 = vmatprep.subr.mxu0 0.0
    %8839 = vmatpush1.msra.mxu0 0.0
    %8840 = vmatprep.subr.mxu0 0.0
    %8841 = vmatpush1.msra.mxu0 0.0
    %8842 = vmatprep.subr.mxu0 0.0
    %8843 = vmatpush1.msra.mxu0 0.0
    %8844 = vmatprep.subr.mxu0 0.0
    %8845 = vmatpush1.msra.mxu0 0.0
    %8846 = vmatprep.subr.mxu0 0.0
    %8847 = vmatpush1.msra.mxu0 0.0
    %8848 = vmatprep.subr.mxu0 0.0
    %8849 = vmatpush1.msra.mxu0 0.0
    %8850 = vmatprep.subr.mxu0 0.0
    %8851 = vmatpush1.msra.mxu0 0.0
    %8852 = vmatprep.subr.mxu0 0.0
    %8853 = vmatpush1.msra.mxu0 0.0
    %8854 = vmatprep.subr.mxu0 0.0
    %8855 = vmatpush1.msra.mxu0 0.0
    %8856 = vmatprep.subr.mxu0 0.0
    %8857 = vmatpush1.msra.mxu0 0.0
    %8858 = vmatprep.subr.mxu0 0.0
    %8859 = vmatpush1.msra.mxu0 0.0
    %8860 = vmatprep.subr.mxu0 0.0
    %8861 = vmatpush1.msra.mxu0 0.0
    %8862 = vmatprep.subr.mxu0 0.0
    %8863 = vmatpush1.msra.mxu0 0.0
    %8864 = vmatprep.subr.mxu0 0.0
    %8865 = vmatpush1.msra.mxu0 0.0
    %8866 = vmatprep.subr.mxu0 %v8339
    %8867 = vmatpush1.msra.mxu0 %v8338
    %8868 = vmatprep.subr.mxu0 %v8325
    %8869 = vmatpush1.msra.mxu0 %v8324
    %8870 = vmatprep.subr.mxu0 0.0
    %8871 = vmatpush2.msra.mxu0 0.0
    %8872 = vmatprep.subr.mxu0 0.0
    %8873 = vmatpush2.msra.mxu0 0.0
    %8874 = vmatprep.subr.mxu0 0.0
    %8875 = vmatpush2.msra.mxu0 0.0
    %8876 = vmatprep.subr.mxu0 0.0
    %8877 = vmatpush2.msra.mxu0 0.0
    %8878 = vmatprep.subr.mxu0 0.0
    %8879 = vmatpush2.msra.mxu0 0.0
    %8880 = vmatprep.subr.mxu0 0.0
    %8881 = vmatpush2.msra.mxu0 0.0
    %8882 = vmatprep.subr.mxu0 0.0
    %8883 = vmatpush2.msra.mxu0 0.0
    %8884 = vmatprep.subr.mxu0 0.0
    %8885 = vmatpush2.msra.mxu0 0.0
    %8886 = vmatprep.subr.mxu0 0.0
    %8887 = vmatpush2.msra.mxu0 0.0
    %8888 = vmatprep.subr.mxu0 0.0
    %8889 = vmatpush2.msra.mxu0 0.0
    %8890 = vmatprep.subr.mxu0 0.0
    %8891 = vmatpush2.msra.mxu0 0.0
    %8892 = vmatprep.subr.mxu0 0.0
    %8893 = vmatpush2.msra.mxu0 0.0
    %8894 = vmatprep.subr.mxu0 0.0
    %8895 = vmatpush2.msra.mxu0 0.0
    %8896 = vmatprep.subr.mxu0 0.0
    %8897 = vmatpush2.msra.mxu0 0.0
    %8898 = vmatprep.subr.mxu0 0.0
    %8899 = vmatpush2.msra.mxu0 0.0
    %8900 = vmatprep.subr.mxu0 0.0
    %8901 = vmatpush2.msra.mxu0 0.0
    %8902 = vmatprep.mubr.f32.mxu0 0.0
    %8903 = vmatmul.mubr.f32.gmra.mxu0 %v8371
    %v8904 = vpop.f32.mrf.mxu0
    %v8905 = vadd.f32 0.0, %v8904
    %v8906 = vpop.f32.mrf.mxu0
    %v8907 = vadd.f32 0.0, %v8906
    %8908 = vmatprep.mubr.f32.mxu0 0.0
    %8909 = vmatmul.mubr.f32.gmra.mxu0 %v8374
    %v8910 = vpop.f32.mrf.mxu0
    %v8911 = vadd.f32 0.0, %v8910
    %v8912 = vpop.f32.mrf.mxu0
    %v8913 = vadd.f32 0.0, %v8912
    %8914 = vdwg.mxu0
    %8915 = vmatprep.subr.mxu0 0.0
    %8916 = vmatpush1.msra.mxu0 0.0
    %8917 = vmatprep.subr.mxu0 0.0
    %8918 = vmatpush1.msra.mxu0 0.0
    %8919 = vmatprep.subr.mxu0 0.0
    %8920 = vmatpush1.msra.mxu0 0.0
    %8921 = vmatprep.subr.mxu0 0.0
    %8922 = vmatpush1.msra.mxu0 0.0
    %8923 = vmatprep.subr.mxu0 0.0
    %8924 = vmatpush1.msra.mxu0 0.0
    %8925 = vmatprep.subr.mxu0 0.0
    %8926 = vmatpush1.msra.mxu0 0.0
    %8927 = vmatprep.subr.mxu0 0.0
    %8928 = vmatpush1.msra.mxu0 0.0
    %8929 = vmatprep.subr.mxu0 0.0
    %8930 = vmatpush1.msra.mxu0 0.0
    %8931 = vmatprep.subr.mxu0 0.0
    %8932 = vmatpush1.msra.mxu0 0.0
    %8933 = vmatprep.subr.mxu0 0.0
    %8934 = vmatpush1.msra.mxu0 0.0
    %8935 = vmatprep.subr.mxu0 0.0
    %8936 = vmatpush1.msra.mxu0 0.0
    %8937 = vmatprep.subr.mxu0 0.0
    %8938 = vmatpush1.msra.mxu0 0.0
    %8939 = vmatprep.subr.mxu0 0.0
    %8940 = vmatpush1.msra.mxu0 0.0
    %8941 = vmatprep.subr.mxu0 0.0
    %8942 = vmatpush1.msra.mxu0 0.0
    %8943 = vmatprep.subr.mxu0 0.0
    %8944 = vmatpush1.msra.mxu0 %v8311
    %8945 = vmatprep.subr.mxu0 0.0
    %8946 = vmatpush1.msra.mxu0 %v8281
    %8947 = vmatprep.subr.mxu0 0.0
    %8948 = vmatpush2.msra.mxu0 0.0
    %8949 = vmatprep.subr.mxu0 0.0
    %8950 = vmatpush2.msra.mxu0 0.0
    %8951 = vmatprep.subr.mxu0 0.0
    %8952 = vmatpush2.msra.mxu0 0.0
    %8953 = vmatprep.subr.mxu0 0.0
    %8954 = vmatpush2.msra.mxu0 0.0
    %8955 = vmatprep.subr.mxu0 0.0
    %8956 = vmatpush2.msra.mxu0 0.0
    %8957 = vmatprep.subr.mxu0 0.0
    %8958 = vmatpush2.msra.mxu0 0.0
    %8959 = vmatprep.subr.mxu0 0.0
    %8960 = vmatpush2.msra.mxu0 0.0
    %8961 = vmatprep.subr.mxu0 0.0
    %8962 = vmatpush2.msra.mxu0 0.0
    %8963 = vmatprep.subr.mxu0 0.0
    %8964 = vmatpush2.msra.mxu0 0.0
    %8965 = vmatprep.subr.mxu0 0.0
    %8966 = vmatpush2.msra.mxu0 0.0
    %8967 = vmatprep.subr.mxu0 0.0
    %8968 = vmatpush2.msra.mxu0 0.0
    %8969 = vmatprep.subr.mxu0 0.0
    %8970 = vmatpush2.msra.mxu0 0.0
    %8971 = vmatprep.subr.mxu0 0.0
    %8972 = vmatpush2.msra.mxu0 0.0
    %8973 = vmatprep.subr.mxu0 0.0
    %8974 = vmatpush2.msra.mxu0 0.0
    %8975 = vmatprep.subr.mxu0 0.0
    %8976 = vmatpush2.msra.mxu0 0.0
    %8977 = vmatprep.subr.mxu0 0.0
    %8978 = vmatpush2.msra.mxu0 0.0
    %8979 = vmatprep.mubr.f32.mxu0 0.0
    %8980 = vmatmul.mubr.f32.gmra.mxu0 %v8371
    %v8981 = vpop.f32.mrf.mxu0
    %v8982 = vadd.f32 0.0, %v8981
    %v8983 = vpop.f32.mrf.mxu0
    %8984 = vmatprep.mubr.f32.mxu0 0.0
    %8985 = vmatmul.mubr.f32.gmra.mxu0 %v8374
    %v8986 = vpop.f32.mrf.mxu0
    %v8987 = vadd.f32 0.0, %v8986
    %v8988 = vpop.f32.mrf.mxu0
    %8989 = vdwg.mxu0
    %v8990 = vadd.f32 %v8219, %v8443
    %v8991 = vadd.f32 %v8220, %v8445
    %v8992 = vadd.f32 %v8221, %v8520
    %v8993 = vadd.f32 %v8222, %v8522
    %v8994 = vadd.f32 %v8223, %v8597
    %v8995 = vadd.f32 %v8224, %v8599
    %v8996 = vadd.f32 %v8225, %v8674
    %v8997 = vadd.f32 %v8226, %v8676
    %v8998 = vadd.f32 %v8227, %v8751
    %v8999 = vadd.f32 %v8228, %v8753
    %v9000 = vadd.f32 %v8229, %v8828
    %v9001 = vadd.f32 %v8230, %v8830
    %v9002 = vadd.f32 %v8231, %v8905
    %v9003 = vadd.f32 %v8232, %v8907
    %v9004 = vadd.f32 %v8233, %v8982
    %v9005 = vadd.f32 %v8234, %v8449
    %v9006 = vadd.f32 %v8235, %v8451
    %v9007 = vadd.f32 %v8236, %v8526
    %v9008 = vadd.f32 %v8237, %v8528
    %v9009 = vadd.f32 %v8238, %v8603
    %v9010 = vadd.f32 %v8239, %v8605
    %v9011 = vadd.f32 %v8240, %v8680
    %v9012 = vadd.f32 %v8241, %v8682
    %v9013 = vadd.f32 %v8242, %v8757
    %v9014 = vadd.f32 %v8243, %v8759
    %v9015 = vadd.f32 %v8244, %v8834
    %v9016 = vadd.f32 %v8245, %v8836
    %v9017 = vadd.f32 %v8246, %v8911
    %v9018 = vadd.f32 %v8247, %v8913
    %v9019 = vadd.f32 %v8248, %v8987
    %s9020 = scalar_lea.vmem %s3, 128
    %v9021 = vld [vmem:[%s9020] sm:$0xff]
    %v9022 = vld [vmem:[%s9020 + $0x8] sm:$0xff]
    %9023 = vrot.lane.b32.xlu0 %v2850, 65
    %v9024 = vpop.permute.xlu0 %9023
    %9025 = vrot.lane.b32.xlu0 %v2851, 65
    %v9026 = vpop.permute.xlu0 %9025
    %9027 = vrot.lane.b32.xlu0 %v2852, 65
    %v9028 = vpop.permute.xlu0 %9027
    %9029 = vrot.lane.b32.xlu0 %v2853, 65
    %v9030 = vpop.permute.xlu0 %9029
    %9031 = vrot.lane.b32.xlu0 %v2854, 65
    %v9032 = vpop.permute.xlu0 %9031
    %9033 = vrot.lane.b32.xlu0 %v2855, 65
    %v9034 = vpop.permute.xlu0 %9033
    %9035 = vrot.lane.b32.xlu0 %v2856, 65
    %v9036 = vpop.permute.xlu0 %9035
    %9037 = vrot.lane.b32.xlu0 %v2857, 65
    %v9038 = vpop.permute.xlu0 %9037
    %9039 = vrot.lane.b32.xlu0 %v2858, 65
    %v9040 = vpop.permute.xlu0 %9039
    %9041 = vrot.lane.b32.xlu0 %v2859, 65
    %v9042 = vpop.permute.xlu0 %9041
    %9043 = vrot.lane.b32.xlu0 %v2860, 65
    %v9044 = vpop.permute.xlu0 %9043
    %9045 = vrot.lane.b32.xlu0 %v2861, 65
    %v9046 = vpop.permute.xlu0 %9045
    %9047 = vrot.lane.b32.xlu0 %v2862, 65
    %v9048 = vpop.permute.xlu0 %9047
    %9049 = vrot.lane.b32.xlu0 %v2863, 65
    %v9050 = vpop.permute.xlu0 %9049
    %9051 = vrot.lane.b32.xlu0 %v2864, 65
    %v9052 = vpop.permute.xlu0 %9051
    %9053 = vrot.lane.b32.xlu0 %v2865, 65
    %v9054 = vpop.permute.xlu0 %9053
    %9055 = vrot.lane.b32.xlu0 %v2866, 65
    %v9056 = vpop.permute.xlu0 %9055
    %9057 = vrot.lane.b32.xlu0 %v2867, 65
    %v9058 = vpop.permute.xlu0 %9057
    %9059 = vrot.lane.b32.xlu0 %v2868, 65
    %v9060 = vpop.permute.xlu0 %9059
    %9061 = vrot.lane.b32.xlu0 %v2869, 65
    %v9062 = vpop.permute.xlu0 %9061
    %9063 = vrot.lane.b32.xlu0 %v2870, 65
    %v9064 = vpop.permute.xlu0 %9063
    %9065 = vrot.lane.b32.xlu0 %v2871, 65
    %v9066 = vpop.permute.xlu0 %9065
    %9067 = vrot.lane.b32.xlu0 %v2872, 65
    %v9068 = vpop.permute.xlu0 %9067
    %9069 = vrot.lane.b32.xlu0 %v2873, 65
    %v9070 = vpop.permute.xlu0 %9069
    %9071 = vrot.lane.b32.xlu0 %v2874, 65
    %v9072 = vpop.permute.xlu0 %9071
    %9073 = vrot.lane.b32.xlu0 %v2875, 65
    %v9074 = vpop.permute.xlu0 %9073
    %9075 = vrot.lane.b32.xlu0 %v2876, 65
    %v9076 = vpop.permute.xlu0 %9075
    %9077 = vrot.lane.b32.xlu0 %v2877, 65
    %v9078 = vpop.permute.xlu0 %9077
    %9079 = vrot.lane.b32.xlu0 %v2878, 65
    %v9080 = vpop.permute.xlu0 %9079
    %9081 = vrot.lane.b32.xlu0 %v2879, 65
    %v9082 = vpop.permute.xlu0 %9081
    %vm9083 = vcmask 531456
    %v9084 = vsel %vm9083, %v9024, %v9026
    %v9085 = vsel %vm9083, %v9026, %v9028
    %v9086 = vsel %vm9083, %v9028, %v9030
    %v9087 = vsel %vm9083, %v9030, %v9032
    %v9088 = vsel %vm9083, %v9032, %v9034
    %v9089 = vsel %vm9083, %v9034, %v9036
    %v9090 = vsel %vm9083, %v9036, %v9038
    %v9091 = vsel %vm9083, %v9038, %v9040
    %v9092 = vsel %vm9083, %v9040, %v9042
    %v9093 = vsel %vm9083, %v9042, %v9044
    %v9094 = vsel %vm9083, %v9044, %v9046
    %v9095 = vsel %vm9083, %v9046, %v9048
    %v9096 = vsel %vm9083, %v9048, %v9050
    %v9097 = vsel %vm9083, %v9050, %v9052
    %v9098 = vsel %vm9083, %v9054, %v9056
    %v9099 = vsel %vm9083, %v9056, %v9058
    %v9100 = vsel %vm9083, %v9058, %v9060
    %v9101 = vsel %vm9083, %v9060, %v9062
    %v9102 = vsel %vm9083, %v9062, %v9064
    %v9103 = vsel %vm9083, %v9064, %v9066
    %v9104 = vsel %vm9083, %v9066, %v9068
    %v9105 = vsel %vm9083, %v9068, %v9070
    %v9106 = vsel %vm9083, %v9070, %v9072
    %v9107 = vsel %vm9083, %v9072, %v9074
    %v9108 = vsel %vm9083, %v9074, %v9076
    %v9109 = vsel %vm9083, %v9076, %v9078
    %v9110 = vsel %vm9083, %v9078, %v9080
    %v9111 = vsel %vm9083, %v9080, %v9082
    %v9143 = vsel %vm3033, %v9021, 0
    %v9146 = vsel %vm3033, %v9022, 0
    %9148 = vmatprep.subr.mxu0 0.0
    %9149 = vmatpush1.msra.mxu0 0.0
    %9150 = vmatprep.subr.mxu0 0.0
    %9151 = vmatpush1.msra.mxu0 0.0
    %9152 = vmatprep.subr.mxu0 0.0
    %9153 = vmatpush1.msra.mxu0 0.0
    %9154 = vmatprep.subr.mxu0 0.0
    %9155 = vmatpush1.msra.mxu0 0.0
    %9156 = vmatprep.subr.mxu0 0.0
    %9157 = vmatpush1.msra.mxu0 0.0
    %9158 = vmatprep.subr.mxu0 0.0
    %9159 = vmatpush1.msra.mxu0 0.0
    %9160 = vmatprep.subr.mxu0 0.0
    %9161 = vmatpush1.msra.mxu0 0.0
    %9162 = vmatprep.subr.mxu0 0.0
    %9163 = vmatpush1.msra.mxu0 0.0
    %9164 = vmatprep.subr.mxu0 0.0
    %9165 = vmatpush1.msra.mxu0 0.0
    %9166 = vmatprep.subr.mxu0 0.0
    %9167 = vmatpush1.msra.mxu0 0.0
    %9168 = vmatprep.subr.mxu0 0.0
    %9169 = vmatpush1.msra.mxu0 0.0
    %9170 = vmatprep.subr.mxu0 0.0
    %9171 = vmatpush1.msra.mxu0 0.0
    %9172 = vmatprep.subr.mxu0 0.0
    %9173 = vmatpush1.msra.mxu0 0.0
    %9174 = vmatprep.subr.mxu0 0.0
    %9175 = vmatpush1.msra.mxu0 0.0
    %9176 = vmatprep.subr.mxu0 %v9099
    %9177 = vmatpush1.msra.mxu0 %v9098
    %9178 = vmatprep.subr.mxu0 %v9085
    %9179 = vmatpush1.msra.mxu0 %v9084
    %9180 = vmatprep.subr.mxu0 0.0
    %9181 = vmatpush2.msra.mxu0 0.0
    %9182 = vmatprep.subr.mxu0 0.0
    %9183 = vmatpush2.msra.mxu0 0.0
    %9184 = vmatprep.subr.mxu0 0.0
    %9185 = vmatpush2.msra.mxu0 0.0
    %9186 = vmatprep.subr.mxu0 0.0
    %9187 = vmatpush2.msra.mxu0 0.0
    %9188 = vmatprep.subr.mxu0 0.0
    %9189 = vmatpush2.msra.mxu0 0.0
    %9190 = vmatprep.subr.mxu0 0.0
    %9191 = vmatpush2.msra.mxu0 0.0
    %9192 = vmatprep.subr.mxu0 0.0
    %9193 = vmatpush2.msra.mxu0 0.0
    %9194 = vmatprep.subr.mxu0 0.0
    %9195 = vmatpush2.msra.mxu0 0.0
    %9196 = vmatprep.subr.mxu0 0.0
    %9197 = vmatpush2.msra.mxu0 0.0
    %9198 = vmatprep.subr.mxu0 0.0
    %9199 = vmatpush2.msra.mxu0 0.0
    %9200 = vmatprep.subr.mxu0 0.0
    %9201 = vmatpush2.msra.mxu0 0.0
    %9202 = vmatprep.subr.mxu0 0.0
    %9203 = vmatpush2.msra.mxu0 0.0
    %9204 = vmatprep.subr.mxu0 0.0
    %9205 = vmatpush2.msra.mxu0 0.0
    %9206 = vmatprep.subr.mxu0 0.0
    %9207 = vmatpush2.msra.mxu0 0.0
    %9208 = vmatprep.subr.mxu0 0.0
    %9209 = vmatpush2.msra.mxu0 0.0
    %9210 = vmatprep.subr.mxu0 0.0
    %9211 = vmatpush2.msra.mxu0 0.0
    %9212 = vmatprep.mubr.f32.mxu0 0.0
    %9213 = vmatmul.mubr.f32.gmra.mxu0 %v9143
    %v9214 = vpop.f32.mrf.mxu0
    %v9215 = vadd.f32 0.0, %v9214
    %v9216 = vpop.f32.mrf.mxu0
    %v9217 = vadd.f32 0.0, %v9216
    %9218 = vmatprep.mubr.f32.mxu0 0.0
    %9219 = vmatmul.mubr.f32.gmra.mxu0 %v9146
    %v9220 = vpop.f32.mrf.mxu0
    %v9221 = vadd.f32 0.0, %v9220
    %v9222 = vpop.f32.mrf.mxu0
    %v9223 = vadd.f32 0.0, %v9222
    %9224 = vdwg.mxu0
    %9225 = vmatprep.subr.mxu0 0.0
    %9226 = vmatpush1.msra.mxu0 0.0
    %9227 = vmatprep.subr.mxu0 0.0
    %9228 = vmatpush1.msra.mxu0 0.0
    %9229 = vmatprep.subr.mxu0 0.0
    %9230 = vmatpush1.msra.mxu0 0.0
    %9231 = vmatprep.subr.mxu0 0.0
    %9232 = vmatpush1.msra.mxu0 0.0
    %9233 = vmatprep.subr.mxu0 0.0
    %9234 = vmatpush1.msra.mxu0 0.0
    %9235 = vmatprep.subr.mxu0 0.0
    %9236 = vmatpush1.msra.mxu0 0.0
    %9237 = vmatprep.subr.mxu0 0.0
    %9238 = vmatpush1.msra.mxu0 0.0
    %9239 = vmatprep.subr.mxu0 0.0
    %9240 = vmatpush1.msra.mxu0 0.0
    %9241 = vmatprep.subr.mxu0 0.0
    %9242 = vmatpush1.msra.mxu0 0.0
    %9243 = vmatprep.subr.mxu0 0.0
    %9244 = vmatpush1.msra.mxu0 0.0
    %9245 = vmatprep.subr.mxu0 0.0
    %9246 = vmatpush1.msra.mxu0 0.0
    %9247 = vmatprep.subr.mxu0 0.0
    %9248 = vmatpush1.msra.mxu0 0.0
    %9249 = vmatprep.subr.mxu0 0.0
    %9250 = vmatpush1.msra.mxu0 0.0
    %9251 = vmatprep.subr.mxu0 0.0
    %9252 = vmatpush1.msra.mxu0 0.0
    %9253 = vmatprep.subr.mxu0 %v9101
    %9254 = vmatpush1.msra.mxu0 %v9100
    %9255 = vmatprep.subr.mxu0 %v9087
    %9256 = vmatpush1.msra.mxu0 %v9086
    %9257 = vmatprep.subr.mxu0 0.0
    %9258 = vmatpush2.msra.mxu0 0.0
    %9259 = vmatprep.subr.mxu0 0.0
    %9260 = vmatpush2.msra.mxu0 0.0
    %9261 = vmatprep.subr.mxu0 0.0
    %9262 = vmatpush2.msra.mxu0 0.0
    %9263 = vmatprep.subr.mxu0 0.0
    %9264 = vmatpush2.msra.mxu0 0.0
    %9265 = vmatprep.subr.mxu0 0.0
    %9266 = vmatpush2.msra.mxu0 0.0
    %9267 = vmatprep.subr.mxu0 0.0
    %9268 = vmatpush2.msra.mxu0 0.0
    %9269 = vmatprep.subr.mxu0 0.0
    %9270 = vmatpush2.msra.mxu0 0.0
    %9271 = vmatprep.subr.mxu0 0.0
    %9272 = vmatpush2.msra.mxu0 0.0
    %9273 = vmatprep.subr.mxu0 0.0
    %9274 = vmatpush2.msra.mxu0 0.0
    %9275 = vmatprep.subr.mxu0 0.0
    %9276 = vmatpush2.msra.mxu0 0.0
    %9277 = vmatprep.subr.mxu0 0.0
    %9278 = vmatpush2.msra.mxu0 0.0
    %9279 = vmatprep.subr.mxu0 0.0
    %9280 = vmatpush2.msra.mxu0 0.0
    %9281 = vmatprep.subr.mxu0 0.0
    %9282 = vmatpush2.msra.mxu0 0.0
    %9283 = vmatprep.subr.mxu0 0.0
    %9284 = vmatpush2.msra.mxu0 0.0
    %9285 = vmatprep.subr.mxu0 0.0
    %9286 = vmatpush2.msra.mxu0 0.0
    %9287 = vmatprep.subr.mxu0 0.0
    %9288 = vmatpush2.msra.mxu0 0.0
    %9289 = vmatprep.mubr.f32.mxu0 0.0
    %9290 = vmatmul.mubr.f32.gmra.mxu0 %v9143
    %v9291 = vpop.f32.mrf.mxu0
    %v9292 = vadd.f32 0.0, %v9291
    %v9293 = vpop.f32.mrf.mxu0
    %v9294 = vadd.f32 0.0, %v9293
    %9295 = vmatprep.mubr.f32.mxu0 0.0
    %9296 = vmatmul.mubr.f32.gmra.mxu0 %v9146
    %v9297 = vpop.f32.mrf.mxu0
    %v9298 = vadd.f32 0.0, %v9297
    %v9299 = vpop.f32.mrf.mxu0
    %v9300 = vadd.f32 0.0, %v9299
    %9301 = vdwg.mxu0
    %9302 = vmatprep.subr.mxu0 0.0
    %9303 = vmatpush1.msra.mxu0 0.0
    %9304 = vmatprep.subr.mxu0 0.0
    %9305 = vmatpush1.msra.mxu0 0.0
    %9306 = vmatprep.subr.mxu0 0.0
    %9307 = vmatpush1.msra.mxu0 0.0
    %9308 = vmatprep.subr.mxu0 0.0
    %9309 = vmatpush1.msra.mxu0 0.0
    %9310 = vmatprep.subr.mxu0 0.0
    %9311 = vmatpush1.msra.mxu0 0.0
    %9312 = vmatprep.subr.mxu0 0.0
    %9313 = vmatpush1.msra.mxu0 0.0
    %9314 = vmatprep.subr.mxu0 0.0
    %9315 = vmatpush1.msra.mxu0 0.0
    %9316 = vmatprep.subr.mxu0 0.0
    %9317 = vmatpush1.msra.mxu0 0.0
    %9318 = vmatprep.subr.mxu0 0.0
    %9319 = vmatpush1.msra.mxu0 0.0
    %9320 = vmatprep.subr.mxu0 0.0
    %9321 = vmatpush1.msra.mxu0 0.0
    %9322 = vmatprep.subr.mxu0 0.0
    %9323 = vmatpush1.msra.mxu0 0.0
    %9324 = vmatprep.subr.mxu0 0.0
    %9325 = vmatpush1.msra.mxu0 0.0
    %9326 = vmatprep.subr.mxu0 0.0
    %9327 = vmatpush1.msra.mxu0 0.0
    %9328 = vmatprep.subr.mxu0 0.0
    %9329 = vmatpush1.msra.mxu0 0.0
    %9330 = vmatprep.subr.mxu0 %v9103
    %9331 = vmatpush1.msra.mxu0 %v9102
    %9332 = vmatprep.subr.mxu0 %v9089
    %9333 = vmatpush1.msra.mxu0 %v9088
    %9334 = vmatprep.subr.mxu0 0.0
    %9335 = vmatpush2.msra.mxu0 0.0
    %9336 = vmatprep.subr.mxu0 0.0
    %9337 = vmatpush2.msra.mxu0 0.0
    %9338 = vmatprep.subr.mxu0 0.0
    %9339 = vmatpush2.msra.mxu0 0.0
    %9340 = vmatprep.subr.mxu0 0.0
    %9341 = vmatpush2.msra.mxu0 0.0
    %9342 = vmatprep.subr.mxu0 0.0
    %9343 = vmatpush2.msra.mxu0 0.0
    %9344 = vmatprep.subr.mxu0 0.0
    %9345 = vmatpush2.msra.mxu0 0.0
    %9346 = vmatprep.subr.mxu0 0.0
    %9347 = vmatpush2.msra.mxu0 0.0
    %9348 = vmatprep.subr.mxu0 0.0
    %9349 = vmatpush2.msra.mxu0 0.0
    %9350 = vmatprep.subr.mxu0 0.0
    %9351 = vmatpush2.msra.mxu0 0.0
    %9352 = vmatprep.subr.mxu0 0.0
    %9353 = vmatpush2.msra.mxu0 0.0
    %9354 = vmatprep.subr.mxu0 0.0
    %9355 = vmatpush2.msra.mxu0 0.0
    %9356 = vmatprep.subr.mxu0 0.0
    %9357 = vmatpush2.msra.mxu0 0.0
    %9358 = vmatprep.subr.mxu0 0.0
    %9359 = vmatpush2.msra.mxu0 0.0
    %9360 = vmatprep.subr.mxu0 0.0
    %9361 = vmatpush2.msra.mxu0 0.0
    %9362 = vmatprep.subr.mxu0 0.0
    %9363 = vmatpush2.msra.mxu0 0.0
    %9364 = vmatprep.subr.mxu0 0.0
    %9365 = vmatpush2.msra.mxu0 0.0
    %9366 = vmatprep.mubr.f32.mxu0 0.0
    %9367 = vmatmul.mubr.f32.gmra.mxu0 %v9143
    %v9368 = vpop.f32.mrf.mxu0
    %v9369 = vadd.f32 0.0, %v9368
    %v9370 = vpop.f32.mrf.mxu0
    %v9371 = vadd.f32 0.0, %v9370
    %9372 = vmatprep.mubr.f32.mxu0 0.0
    %9373 = vmatmul.mubr.f32.gmra.mxu0 %v9146
    %v9374 = vpop.f32.mrf.mxu0
    %v9375 = vadd.f32 0.0, %v9374
    %v9376 = vpop.f32.mrf.mxu0
    %v9377 = vadd.f32 0.0, %v9376
    %9378 = vdwg.mxu0
    %9379 = vmatprep.subr.mxu0 0.0
    %9380 = vmatpush1.msra.mxu0 0.0
    %9381 = vmatprep.subr.mxu0 0.0
    %9382 = vmatpush1.msra.mxu0 0.0
    %9383 = vmatprep.subr.mxu0 0.0
    %9384 = vmatpush1.msra.mxu0 0.0
    %9385 = vmatprep.subr.mxu0 0.0
    %9386 = vmatpush1.msra.mxu0 0.0
    %9387 = vmatprep.subr.mxu0 0.0
    %9388 = vmatpush1.msra.mxu0 0.0
    %9389 = vmatprep.subr.mxu0 0.0
    %9390 = vmatpush1.msra.mxu0 0.0
    %9391 = vmatprep.subr.mxu0 0.0
    %9392 = vmatpush1.msra.mxu0 0.0
    %9393 = vmatprep.subr.mxu0 0.0
    %9394 = vmatpush1.msra.mxu0 0.0
    %9395 = vmatprep.subr.mxu0 0.0
    %9396 = vmatpush1.msra.mxu0 0.0
    %9397 = vmatprep.subr.mxu0 0.0
    %9398 = vmatpush1.msra.mxu0 0.0
    %9399 = vmatprep.subr.mxu0 0.0
    %9400 = vmatpush1.msra.mxu0 0.0
    %9401 = vmatprep.subr.mxu0 0.0
    %9402 = vmatpush1.msra.mxu0 0.0
    %9403 = vmatprep.subr.mxu0 0.0
    %9404 = vmatpush1.msra.mxu0 0.0
    %9405 = vmatprep.subr.mxu0 0.0
    %9406 = vmatpush1.msra.mxu0 0.0
    %9407 = vmatprep.subr.mxu0 %v9105
    %9408 = vmatpush1.msra.mxu0 %v9104
    %9409 = vmatprep.subr.mxu0 %v9091
    %9410 = vmatpush1.msra.mxu0 %v9090
    %9411 = vmatprep.subr.mxu0 0.0
    %9412 = vmatpush2.msra.mxu0 0.0
    %9413 = vmatprep.subr.mxu0 0.0
    %9414 = vmatpush2.msra.mxu0 0.0
    %9415 = vmatprep.subr.mxu0 0.0
    %9416 = vmatpush2.msra.mxu0 0.0
    %9417 = vmatprep.subr.mxu0 0.0
    %9418 = vmatpush2.msra.mxu0 0.0
    %9419 = vmatprep.subr.mxu0 0.0
    %9420 = vmatpush2.msra.mxu0 0.0
    %9421 = vmatprep.subr.mxu0 0.0
    %9422 = vmatpush2.msra.mxu0 0.0
    %9423 = vmatprep.subr.mxu0 0.0
    %9424 = vmatpush2.msra.mxu0 0.0
    %9425 = vmatprep.subr.mxu0 0.0
    %9426 = vmatpush2.msra.mxu0 0.0
    %9427 = vmatprep.subr.mxu0 0.0
    %9428 = vmatpush2.msra.mxu0 0.0
    %9429 = vmatprep.subr.mxu0 0.0
    %9430 = vmatpush2.msra.mxu0 0.0
    %9431 = vmatprep.subr.mxu0 0.0
    %9432 = vmatpush2.msra.mxu0 0.0
    %9433 = vmatprep.subr.mxu0 0.0
    %9434 = vmatpush2.msra.mxu0 0.0
    %9435 = vmatprep.subr.mxu0 0.0
    %9436 = vmatpush2.msra.mxu0 0.0
    %9437 = vmatprep.subr.mxu0 0.0
    %9438 = vmatpush2.msra.mxu0 0.0
    %9439 = vmatprep.subr.mxu0 0.0
    %9440 = vmatpush2.msra.mxu0 0.0
    %9441 = vmatprep.subr.mxu0 0.0
    %9442 = vmatpush2.msra.mxu0 0.0
    %9443 = vmatprep.mubr.f32.mxu0 0.0
    %9444 = vmatmul.mubr.f32.gmra.mxu0 %v9143
    %v9445 = vpop.f32.mrf.mxu0
    %v9446 = vadd.f32 0.0, %v9445
    %v9447 = vpop.f32.mrf.mxu0
    %v9448 = vadd.f32 0.0, %v9447
    %9449 = vmatprep.mubr.f32.mxu0 0.0
    %9450 = vmatmul.mubr.f32.gmra.mxu0 %v9146
    %v9451 = vpop.f32.mrf.mxu0
    %v9452 = vadd.f32 0.0, %v9451
    %v9453 = vpop.f32.mrf.mxu0
    %v9454 = vadd.f32 0.0, %v9453
    %9455 = vdwg.mxu0
    %9456 = vmatprep.subr.mxu0 0.0
    %9457 = vmatpush1.msra.mxu0 0.0
    %9458 = vmatprep.subr.mxu0 0.0
    %9459 = vmatpush1.msra.mxu0 0.0
    %9460 = vmatprep.subr.mxu0 0.0
    %9461 = vmatpush1.msra.mxu0 0.0
    %9462 = vmatprep.subr.mxu0 0.0
    %9463 = vmatpush1.msra.mxu0 0.0
    %9464 = vmatprep.subr.mxu0 0.0
    %9465 = vmatpush1.msra.mxu0 0.0
    %9466 = vmatprep.subr.mxu0 0.0
    %9467 = vmatpush1.msra.mxu0 0.0
    %9468 = vmatprep.subr.mxu0 0.0
    %9469 = vmatpush1.msra.mxu0 0.0
    %9470 = vmatprep.subr.mxu0 0.0
    %9471 = vmatpush1.msra.mxu0 0.0
    %9472 = vmatprep.subr.mxu0 0.0
    %9473 = vmatpush1.msra.mxu0 0.0
    %9474 = vmatprep.subr.mxu0 0.0
    %9475 = vmatpush1.msra.mxu0 0.0
    %9476 = vmatprep.subr.mxu0 0.0
    %9477 = vmatpush1.msra.mxu0 0.0
    %9478 = vmatprep.subr.mxu0 0.0
    %9479 = vmatpush1.msra.mxu0 0.0
    %9480 = vmatprep.subr.mxu0 0.0
    %9481 = vmatpush1.msra.mxu0 0.0
    %9482 = vmatprep.subr.mxu0 0.0
    %9483 = vmatpush1.msra.mxu0 0.0
    %9484 = vmatprep.subr.mxu0 %v9107
    %9485 = vmatpush1.msra.mxu0 %v9106
    %9486 = vmatprep.subr.mxu0 %v9093
    %9487 = vmatpush1.msra.mxu0 %v9092
    %9488 = vmatprep.subr.mxu0 0.0
    %9489 = vmatpush2.msra.mxu0 0.0
    %9490 = vmatprep.subr.mxu0 0.0
    %9491 = vmatpush2.msra.mxu0 0.0
    %9492 = vmatprep.subr.mxu0 0.0
    %9493 = vmatpush2.msra.mxu0 0.0
    %9494 = vmatprep.subr.mxu0 0.0
    %9495 = vmatpush2.msra.mxu0 0.0
    %9496 = vmatprep.subr.mxu0 0.0
    %9497 = vmatpush2.msra.mxu0 0.0
    %9498 = vmatprep.subr.mxu0 0.0
    %9499 = vmatpush2.msra.mxu0 0.0
    %9500 = vmatprep.subr.mxu0 0.0
    %9501 = vmatpush2.msra.mxu0 0.0
    %9502 = vmatprep.subr.mxu0 0.0
    %9503 = vmatpush2.msra.mxu0 0.0
    %9504 = vmatprep.subr.mxu0 0.0
    %9505 = vmatpush2.msra.mxu0 0.0
    %9506 = vmatprep.subr.mxu0 0.0
    %9507 = vmatpush2.msra.mxu0 0.0
    %9508 = vmatprep.subr.mxu0 0.0
    %9509 = vmatpush2.msra.mxu0 0.0
    %9510 = vmatprep.subr.mxu0 0.0
    %9511 = vmatpush2.msra.mxu0 0.0
    %9512 = vmatprep.subr.mxu0 0.0
    %9513 = vmatpush2.msra.mxu0 0.0
    %9514 = vmatprep.subr.mxu0 0.0
    %9515 = vmatpush2.msra.mxu0 0.0
    %9516 = vmatprep.subr.mxu0 0.0
    %9517 = vmatpush2.msra.mxu0 0.0
    %9518 = vmatprep.subr.mxu0 0.0
    %9519 = vmatpush2.msra.mxu0 0.0
    %9520 = vmatprep.mubr.f32.mxu0 0.0
    %9521 = vmatmul.mubr.f32.gmra.mxu0 %v9143
    %v9522 = vpop.f32.mrf.mxu0
    %v9523 = vadd.f32 0.0, %v9522
    %v9524 = vpop.f32.mrf.mxu0
    %v9525 = vadd.f32 0.0, %v9524
    %9526 = vmatprep.mubr.f32.mxu0 0.0
    %9527 = vmatmul.mubr.f32.gmra.mxu0 %v9146
    %v9528 = vpop.f32.mrf.mxu0
    %v9529 = vadd.f32 0.0, %v9528
    %v9530 = vpop.f32.mrf.mxu0
    %v9531 = vadd.f32 0.0, %v9530
    %9532 = vdwg.mxu0
    %9533 = vmatprep.subr.mxu0 0.0
    %9534 = vmatpush1.msra.mxu0 0.0
    %9535 = vmatprep.subr.mxu0 0.0
    %9536 = vmatpush1.msra.mxu0 0.0
    %9537 = vmatprep.subr.mxu0 0.0
    %9538 = vmatpush1.msra.mxu0 0.0
    %9539 = vmatprep.subr.mxu0 0.0
    %9540 = vmatpush1.msra.mxu0 0.0
    %9541 = vmatprep.subr.mxu0 0.0
    %9542 = vmatpush1.msra.mxu0 0.0
    %9543 = vmatprep.subr.mxu0 0.0
    %9544 = vmatpush1.msra.mxu0 0.0
    %9545 = vmatprep.subr.mxu0 0.0
    %9546 = vmatpush1.msra.mxu0 0.0
    %9547 = vmatprep.subr.mxu0 0.0
    %9548 = vmatpush1.msra.mxu0 0.0
    %9549 = vmatprep.subr.mxu0 0.0
    %9550 = vmatpush1.msra.mxu0 0.0
    %9551 = vmatprep.subr.mxu0 0.0
    %9552 = vmatpush1.msra.mxu0 0.0
    %9553 = vmatprep.subr.mxu0 0.0
    %9554 = vmatpush1.msra.mxu0 0.0
    %9555 = vmatprep.subr.mxu0 0.0
    %9556 = vmatpush1.msra.mxu0 0.0
    %9557 = vmatprep.subr.mxu0 0.0
    %9558 = vmatpush1.msra.mxu0 0.0
    %9559 = vmatprep.subr.mxu0 0.0
    %9560 = vmatpush1.msra.mxu0 0.0
    %9561 = vmatprep.subr.mxu0 %v9109
    %9562 = vmatpush1.msra.mxu0 %v9108
    %9563 = vmatprep.subr.mxu0 %v9095
    %9564 = vmatpush1.msra.mxu0 %v9094
    %9565 = vmatprep.subr.mxu0 0.0
    %9566 = vmatpush2.msra.mxu0 0.0
    %9567 = vmatprep.subr.mxu0 0.0
    %9568 = vmatpush2.msra.mxu0 0.0
    %9569 = vmatprep.subr.mxu0 0.0
    %9570 = vmatpush2.msra.mxu0 0.0
    %9571 = vmatprep.subr.mxu0 0.0
    %9572 = vmatpush2.msra.mxu0 0.0
    %9573 = vmatprep.subr.mxu0 0.0
    %9574 = vmatpush2.msra.mxu0 0.0
    %9575 = vmatprep.subr.mxu0 0.0
    %9576 = vmatpush2.msra.mxu0 0.0
    %9577 = vmatprep.subr.mxu0 0.0
    %9578 = vmatpush2.msra.mxu0 0.0
    %9579 = vmatprep.subr.mxu0 0.0
    %9580 = vmatpush2.msra.mxu0 0.0
    %9581 = vmatprep.subr.mxu0 0.0
    %9582 = vmatpush2.msra.mxu0 0.0
    %9583 = vmatprep.subr.mxu0 0.0
    %9584 = vmatpush2.msra.mxu0 0.0
    %9585 = vmatprep.subr.mxu0 0.0
    %9586 = vmatpush2.msra.mxu0 0.0
    %9587 = vmatprep.subr.mxu0 0.0
    %9588 = vmatpush2.msra.mxu0 0.0
    %9589 = vmatprep.subr.mxu0 0.0
    %9590 = vmatpush2.msra.mxu0 0.0
    %9591 = vmatprep.subr.mxu0 0.0
    %9592 = vmatpush2.msra.mxu0 0.0
    %9593 = vmatprep.subr.mxu0 0.0
    %9594 = vmatpush2.msra.mxu0 0.0
    %9595 = vmatprep.subr.mxu0 0.0
    %9596 = vmatpush2.msra.mxu0 0.0
    %9597 = vmatprep.mubr.f32.mxu0 0.0
    %9598 = vmatmul.mubr.f32.gmra.mxu0 %v9143
    %v9599 = vpop.f32.mrf.mxu0
    %v9600 = vadd.f32 0.0, %v9599
    %v9601 = vpop.f32.mrf.mxu0
    %v9602 = vadd.f32 0.0, %v9601
    %9603 = vmatprep.mubr.f32.mxu0 0.0
    %9604 = vmatmul.mubr.f32.gmra.mxu0 %v9146
    %v9605 = vpop.f32.mrf.mxu0
    %v9606 = vadd.f32 0.0, %v9605
    %v9607 = vpop.f32.mrf.mxu0
    %v9608 = vadd.f32 0.0, %v9607
    %9609 = vdwg.mxu0
    %9610 = vmatprep.subr.mxu0 0.0
    %9611 = vmatpush1.msra.mxu0 0.0
    %9612 = vmatprep.subr.mxu0 0.0
    %9613 = vmatpush1.msra.mxu0 0.0
    %9614 = vmatprep.subr.mxu0 0.0
    %9615 = vmatpush1.msra.mxu0 0.0
    %9616 = vmatprep.subr.mxu0 0.0
    %9617 = vmatpush1.msra.mxu0 0.0
    %9618 = vmatprep.subr.mxu0 0.0
    %9619 = vmatpush1.msra.mxu0 0.0
    %9620 = vmatprep.subr.mxu0 0.0
    %9621 = vmatpush1.msra.mxu0 0.0
    %9622 = vmatprep.subr.mxu0 0.0
    %9623 = vmatpush1.msra.mxu0 0.0
    %9624 = vmatprep.subr.mxu0 0.0
    %9625 = vmatpush1.msra.mxu0 0.0
    %9626 = vmatprep.subr.mxu0 0.0
    %9627 = vmatpush1.msra.mxu0 0.0
    %9628 = vmatprep.subr.mxu0 0.0
    %9629 = vmatpush1.msra.mxu0 0.0
    %9630 = vmatprep.subr.mxu0 0.0
    %9631 = vmatpush1.msra.mxu0 0.0
    %9632 = vmatprep.subr.mxu0 0.0
    %9633 = vmatpush1.msra.mxu0 0.0
    %9634 = vmatprep.subr.mxu0 0.0
    %9635 = vmatpush1.msra.mxu0 0.0
    %9636 = vmatprep.subr.mxu0 0.0
    %9637 = vmatpush1.msra.mxu0 0.0
    %9638 = vmatprep.subr.mxu0 %v9111
    %9639 = vmatpush1.msra.mxu0 %v9110
    %9640 = vmatprep.subr.mxu0 %v9097
    %9641 = vmatpush1.msra.mxu0 %v9096
    %9642 = vmatprep.subr.mxu0 0.0
    %9643 = vmatpush2.msra.mxu0 0.0
    %9644 = vmatprep.subr.mxu0 0.0
    %9645 = vmatpush2.msra.mxu0 0.0
    %9646 = vmatprep.subr.mxu0 0.0
    %9647 = vmatpush2.msra.mxu0 0.0
    %9648 = vmatprep.subr.mxu0 0.0
    %9649 = vmatpush2.msra.mxu0 0.0
    %9650 = vmatprep.subr.mxu0 0.0
    %9651 = vmatpush2.msra.mxu0 0.0
    %9652 = vmatprep.subr.mxu0 0.0
    %9653 = vmatpush2.msra.mxu0 0.0
    %9654 = vmatprep.subr.mxu0 0.0
    %9655 = vmatpush2.msra.mxu0 0.0
    %9656 = vmatprep.subr.mxu0 0.0
    %9657 = vmatpush2.msra.mxu0 0.0
    %9658 = vmatprep.subr.mxu0 0.0
    %9659 = vmatpush2.msra.mxu0 0.0
    %9660 = vmatprep.subr.mxu0 0.0
    %9661 = vmatpush2.msra.mxu0 0.0
    %9662 = vmatprep.subr.mxu0 0.0
    %9663 = vmatpush2.msra.mxu0 0.0
    %9664 = vmatprep.subr.mxu0 0.0
    %9665 = vmatpush2.msra.mxu0 0.0
    %9666 = vmatprep.subr.mxu0 0.0
    %9667 = vmatpush2.msra.mxu0 0.0
    %9668 = vmatprep.subr.mxu0 0.0
    %9669 = vmatpush2.msra.mxu0 0.0
    %9670 = vmatprep.subr.mxu0 0.0
    %9671 = vmatpush2.msra.mxu0 0.0
    %9672 = vmatprep.subr.mxu0 0.0
    %9673 = vmatpush2.msra.mxu0 0.0
    %9674 = vmatprep.mubr.f32.mxu0 0.0
    %9675 = vmatmul.mubr.f32.gmra.mxu0 %v9143
    %v9676 = vpop.f32.mrf.mxu0
    %v9677 = vadd.f32 0.0, %v9676
    %v9678 = vpop.f32.mrf.mxu0
    %v9679 = vadd.f32 0.0, %v9678
    %9680 = vmatprep.mubr.f32.mxu0 0.0
    %9681 = vmatmul.mubr.f32.gmra.mxu0 %v9146
    %v9682 = vpop.f32.mrf.mxu0
    %v9683 = vadd.f32 0.0, %v9682
    %v9684 = vpop.f32.mrf.mxu0
    %v9685 = vadd.f32 0.0, %v9684
    %9686 = vdwg.mxu0
    %9687 = vmatprep.subr.mxu0 0.0
    %9688 = vmatpush1.msra.mxu0 0.0
    %9689 = vmatprep.subr.mxu0 0.0
    %9690 = vmatpush1.msra.mxu0 0.0
    %9691 = vmatprep.subr.mxu0 0.0
    %9692 = vmatpush1.msra.mxu0 0.0
    %9693 = vmatprep.subr.mxu0 0.0
    %9694 = vmatpush1.msra.mxu0 0.0
    %9695 = vmatprep.subr.mxu0 0.0
    %9696 = vmatpush1.msra.mxu0 0.0
    %9697 = vmatprep.subr.mxu0 0.0
    %9698 = vmatpush1.msra.mxu0 0.0
    %9699 = vmatprep.subr.mxu0 0.0
    %9700 = vmatpush1.msra.mxu0 0.0
    %9701 = vmatprep.subr.mxu0 0.0
    %9702 = vmatpush1.msra.mxu0 0.0
    %9703 = vmatprep.subr.mxu0 0.0
    %9704 = vmatpush1.msra.mxu0 0.0
    %9705 = vmatprep.subr.mxu0 0.0
    %9706 = vmatpush1.msra.mxu0 0.0
    %9707 = vmatprep.subr.mxu0 0.0
    %9708 = vmatpush1.msra.mxu0 0.0
    %9709 = vmatprep.subr.mxu0 0.0
    %9710 = vmatpush1.msra.mxu0 0.0
    %9711 = vmatprep.subr.mxu0 0.0
    %9712 = vmatpush1.msra.mxu0 0.0
    %9713 = vmatprep.subr.mxu0 0.0
    %9714 = vmatpush1.msra.mxu0 0.0
    %9715 = vmatprep.subr.mxu0 0.0
    %9716 = vmatpush1.msra.mxu0 %v9082
    %9717 = vmatprep.subr.mxu0 0.0
    %9718 = vmatpush1.msra.mxu0 %v9052
    %9719 = vmatprep.subr.mxu0 0.0
    %9720 = vmatpush2.msra.mxu0 0.0
    %9721 = vmatprep.subr.mxu0 0.0
    %9722 = vmatpush2.msra.mxu0 0.0
    %9723 = vmatprep.subr.mxu0 0.0
    %9724 = vmatpush2.msra.mxu0 0.0
    %9725 = vmatprep.subr.mxu0 0.0
    %9726 = vmatpush2.msra.mxu0 0.0
    %9727 = vmatprep.subr.mxu0 0.0
    %9728 = vmatpush2.msra.mxu0 0.0
    %9729 = vmatprep.subr.mxu0 0.0
    %9730 = vmatpush2.msra.mxu0 0.0
    %9731 = vmatprep.subr.mxu0 0.0
    %9732 = vmatpush2.msra.mxu0 0.0
    %9733 = vmatprep.subr.mxu0 0.0
    %9734 = vmatpush2.msra.mxu0 0.0
    %9735 = vmatprep.subr.mxu0 0.0
    %9736 = vmatpush2.msra.mxu0 0.0
    %9737 = vmatprep.subr.mxu0 0.0
    %9738 = vmatpush2.msra.mxu0 0.0
    %9739 = vmatprep.subr.mxu0 0.0
    %9740 = vmatpush2.msra.mxu0 0.0
    %9741 = vmatprep.subr.mxu0 0.0
    %9742 = vmatpush2.msra.mxu0 0.0
    %9743 = vmatprep.subr.mxu0 0.0
    %9744 = vmatpush2.msra.mxu0 0.0
    %9745 = vmatprep.subr.mxu0 0.0
    %9746 = vmatpush2.msra.mxu0 0.0
    %9747 = vmatprep.subr.mxu0 0.0
    %9748 = vmatpush2.msra.mxu0 0.0
    %9749 = vmatprep.subr.mxu0 0.0
    %9750 = vmatpush2.msra.mxu0 0.0
    %9751 = vmatprep.mubr.f32.mxu0 0.0
    %9752 = vmatmul.mubr.f32.gmra.mxu0 %v9143
    %v9753 = vpop.f32.mrf.mxu0
    %v9754 = vadd.f32 0.0, %v9753
    %v9755 = vpop.f32.mrf.mxu0
    %9756 = vmatprep.mubr.f32.mxu0 0.0
    %9757 = vmatmul.mubr.f32.gmra.mxu0 %v9146
    %v9758 = vpop.f32.mrf.mxu0
    %v9759 = vadd.f32 0.0, %v9758
    %v9760 = vpop.f32.mrf.mxu0
    %9761 = vdwg.mxu0
    %v9762 = vadd.f32 %v8990, %v9215
    %v9763 = vadd.f32 %v8991, %v9217
    %v9764 = vadd.f32 %v8992, %v9292
    %v9765 = vadd.f32 %v8993, %v9294
    %v9766 = vadd.f32 %v8994, %v9369
    %v9767 = vadd.f32 %v8995, %v9371
    %v9768 = vadd.f32 %v8996, %v9446
    %v9769 = vadd.f32 %v8997, %v9448
    %v9770 = vadd.f32 %v8998, %v9523
    %v9771 = vadd.f32 %v8999, %v9525
    %v9772 = vadd.f32 %v9000, %v9600
    %v9773 = vadd.f32 %v9001, %v9602
    %v9774 = vadd.f32 %v9002, %v9677
    %v9775 = vadd.f32 %v9003, %v9679
    %v9776 = vadd.f32 %v9004, %v9754
    %v9777 = vadd.f32 %v9005, %v9221
    %v9778 = vadd.f32 %v9006, %v9223
    %v9779 = vadd.f32 %v9007, %v9298
    %v9780 = vadd.f32 %v9008, %v9300
    %v9781 = vadd.f32 %v9009, %v9375
    %v9782 = vadd.f32 %v9010, %v9377
    %v9783 = vadd.f32 %v9011, %v9452
    %v9784 = vadd.f32 %v9012, %v9454
    %v9785 = vadd.f32 %v9013, %v9529
    %v9786 = vadd.f32 %v9014, %v9531
    %v9787 = vadd.f32 %v9015, %v9606
    %v9788 = vadd.f32 %v9016, %v9608
    %v9789 = vadd.f32 %v9017, %v9683
    %v9790 = vadd.f32 %v9018, %v9685
    %v9791 = vadd.f32 %v9019, %v9759
    %v9792 = vld [vmem:[%s0] sm:$0xff]
    %v9793 = vld [vmem:[%s0 + $0x8] sm:$0x7f]
    %v9794 = vld [vmem:[%s2] sm:$0xff]
    %v9795 = vld [vmem:[%s2 + $0x8] sm:$0xff]
    %9797 = vset.pattern.permute.xlu0 11
    %9798 = vperm.xlu0 %9797, %v9794
    %v9799 = vpop.permute.xlu0 %9798
    %9802 = vset.pattern.permute.xlu0 11
    %9803 = vperm.xlu0 %9802, %v9795
    %v9804 = vpop.permute.xlu0 %9803
    %v9808 = vlaneseq
    %v9809 = vshrl.u32 %v9808, 7
    %v9810 = vsub.s32 0, %v9809
    %v9811 = vrot.slane %v9792, %v9810
    %v9812 = vlaneseq
    %v9813 = vshrl.u32 %v9812, 7
    %v9814 = vsub.s32 1, %v9813
    %v9815 = vrot.slane %v9792, %v9814
    %v9816 = vlaneseq
    %v9817 = vshrl.u32 %v9816, 7
    %v9818 = vsub.s32 2, %v9817
    %v9819 = vrot.slane %v9792, %v9818
    %v9820 = vlaneseq
    %v9821 = vshrl.u32 %v9820, 7
    %v9822 = vsub.s32 3, %v9821
    %v9823 = vrot.slane %v9792, %v9822
    %v9824 = vlaneseq
    %v9825 = vshrl.u32 %v9824, 7
    %v9826 = vsub.s32 4, %v9825
    %v9827 = vrot.slane %v9792, %v9826
    %v9828 = vlaneseq
    %v9829 = vshrl.u32 %v9828, 7
    %v9830 = vsub.s32 5, %v9829
    %v9831 = vrot.slane %v9792, %v9830
    %v9832 = vlaneseq
    %v9833 = vshrl.u32 %v9832, 7
    %v9834 = vsub.s32 6, %v9833
    %v9835 = vrot.slane %v9792, %v9834
    %v9836 = vlaneseq
    %v9837 = vshrl.u32 %v9836, 7
    %v9838 = vsub.s32 7, %v9837
    %v9839 = vrot.slane %v9792, %v9838
    %v9840 = vlaneseq
    %v9841 = vshrl.u32 %v9840, 7
    %v9842 = vsub.s32 0, %v9841
    %v9843 = vrot.slane %v9793, %v9842
    %v9844 = vlaneseq
    %v9845 = vshrl.u32 %v9844, 7
    %v9846 = vsub.s32 1, %v9845
    %v9847 = vrot.slane %v9793, %v9846
    %v9848 = vlaneseq
    %v9849 = vshrl.u32 %v9848, 7
    %v9850 = vsub.s32 2, %v9849
    %v9851 = vrot.slane %v9793, %v9850
    %v9852 = vlaneseq
    %v9853 = vshrl.u32 %v9852, 7
    %v9854 = vsub.s32 3, %v9853
    %v9855 = vrot.slane %v9793, %v9854
    %v9856 = vlaneseq
    %v9857 = vshrl.u32 %v9856, 7
    %v9858 = vsub.s32 4, %v9857
    %v9859 = vrot.slane %v9793, %v9858
    %v9860 = vlaneseq
    %v9861 = vshrl.u32 %v9860, 7
    %v9862 = vsub.s32 5, %v9861
    %v9863 = vrot.slane %v9793, %v9862
    %v9864 = vlaneseq
    %v9865 = vshrl.u32 %v9864, 7
    %v9866 = vsub.s32 6, %v9865
    %v9867 = vrot.slane %v9793, %v9866
    %v9883 = vmul.f32 %v9799, %v9811
    %v9884 = vmul.f32 %v9799, %v9815
    %v9885 = vmul.f32 %v9799, %v9819
    %v9886 = vmul.f32 %v9799, %v9823
    %v9887 = vmul.f32 %v9799, %v9827
    %v9888 = vmul.f32 %v9799, %v9831
    %v9889 = vmul.f32 %v9799, %v9835
    %v9890 = vmul.f32 %v9799, %v9839
    %v9891 = vmul.f32 %v9799, %v9843
    %v9892 = vmul.f32 %v9799, %v9847
    %v9893 = vmul.f32 %v9799, %v9851
    %v9894 = vmul.f32 %v9799, %v9855
    %v9895 = vmul.f32 %v9799, %v9859
    %v9896 = vmul.f32 %v9799, %v9863
    %v9897 = vmul.f32 %v9799, %v9867
    %v9898 = vmul.f32 %v9804, %v9811
    %v9899 = vmul.f32 %v9804, %v9815
    %v9900 = vmul.f32 %v9804, %v9819
    %v9901 = vmul.f32 %v9804, %v9823
    %v9902 = vmul.f32 %v9804, %v9827
    %v9903 = vmul.f32 %v9804, %v9831
    %v9904 = vmul.f32 %v9804, %v9835
    %v9905 = vmul.f32 %v9804, %v9839
    %v9906 = vmul.f32 %v9804, %v9843
    %v9907 = vmul.f32 %v9804, %v9847
    %v9908 = vmul.f32 %v9804, %v9851
    %v9909 = vmul.f32 %v9804, %v9855
    %v9910 = vmul.f32 %v9804, %v9859
    %v9911 = vmul.f32 %v9804, %v9863
    %v9912 = vmul.f32 %v9804, %v9867
    %9913 = vset.pattern.permute.xlu0 12
    %9914 = vperm.xlu0 %9913, %v9794
    %v9915 = vpop.permute.xlu0 %9914
    %9917 = vset.pattern.permute.xlu0 12
    %9918 = vperm.xlu0 %9917, %v9795
    %v9919 = vpop.permute.xlu0 %9918
    %v9921 = vadd.f32 %v9883, %v9915
    %v9922 = vadd.f32 %v9884, %v9915
    %v9923 = vadd.f32 %v9885, %v9915
    %v9924 = vadd.f32 %v9886, %v9915
    %v9925 = vadd.f32 %v9887, %v9915
    %v9926 = vadd.f32 %v9888, %v9915
    %v9927 = vadd.f32 %v9889, %v9915
    %v9928 = vadd.f32 %v9890, %v9915
    %v9929 = vadd.f32 %v9891, %v9915
    %v9930 = vadd.f32 %v9892, %v9915
    %v9931 = vadd.f32 %v9893, %v9915
    %v9932 = vadd.f32 %v9894, %v9915
    %v9933 = vadd.f32 %v9895, %v9915
    %v9934 = vadd.f32 %v9896, %v9915
    %v9935 = vadd.f32 %v9897, %v9915
    %v9936 = vadd.f32 %v9898, %v9919
    %v9937 = vadd.f32 %v9899, %v9919
    %v9938 = vadd.f32 %v9900, %v9919
    %v9939 = vadd.f32 %v9901, %v9919
    %v9940 = vadd.f32 %v9902, %v9919
    %v9941 = vadd.f32 %v9903, %v9919
    %v9942 = vadd.f32 %v9904, %v9919
    %v9943 = vadd.f32 %v9905, %v9919
    %v9944 = vadd.f32 %v9906, %v9919
    %v9945 = vadd.f32 %v9907, %v9919
    %v9946 = vadd.f32 %v9908, %v9919
    %v9947 = vadd.f32 %v9909, %v9919
    %v9948 = vadd.f32 %v9910, %v9919
    %v9949 = vadd.f32 %v9911, %v9919
    %v9950 = vadd.f32 %v9912, %v9919
    %9951 = vset.pattern.permute.xlu0 10
    %9952 = vperm.xlu0 %9951, %v9794
    %v9953 = vpop.permute.xlu0 %9952
    %9955 = vset.pattern.permute.xlu0 10
    %9956 = vperm.xlu0 %9955, %v9795
    %v9957 = vpop.permute.xlu0 %9956
    %v9959 = vadd.f32 %v9762, %v9953
    %v9960 = vadd.f32 %v9763, %v9953
    %v9961 = vadd.f32 %v9764, %v9953
    %v9962 = vadd.f32 %v9765, %v9953
    %v9963 = vadd.f32 %v9766, %v9953
    %v9964 = vadd.f32 %v9767, %v9953
    %v9965 = vadd.f32 %v9768, %v9953
    %v9966 = vadd.f32 %v9769, %v9953
    %v9967 = vadd.f32 %v9770, %v9953
    %v9968 = vadd.f32 %v9771, %v9953
    %v9969 = vadd.f32 %v9772, %v9953
    %v9970 = vadd.f32 %v9773, %v9953
    %v9971 = vadd.f32 %v9774, %v9953
    %v9972 = vadd.f32 %v9775, %v9953
    %v9973 = vadd.f32 %v9776, %v9953
    %v9974 = vadd.f32 %v9777, %v9957
    %v9975 = vadd.f32 %v9778, %v9957
    %v9976 = vadd.f32 %v9779, %v9957
    %v9977 = vadd.f32 %v9780, %v9957
    %v9978 = vadd.f32 %v9781, %v9957
    %v9979 = vadd.f32 %v9782, %v9957
    %v9980 = vadd.f32 %v9783, %v9957
    %v9981 = vadd.f32 %v9784, %v9957
    %v9982 = vadd.f32 %v9785, %v9957
    %v9983 = vadd.f32 %v9786, %v9957
    %v9984 = vadd.f32 %v9787, %v9957
    %v9985 = vadd.f32 %v9788, %v9957
    %v9986 = vadd.f32 %v9789, %v9957
    %v9987 = vadd.f32 %v9790, %v9957
    %v9988 = vadd.f32 %v9791, %v9957
    %10019 = vrot.lane.b32.xlu0 %v9921, 96
    %v10020 = vpop.permute.xlu0 %10019
    %10021 = vrot.lane.b32.xlu0 %v9922, 96
    %v10022 = vpop.permute.xlu0 %10021
    %10023 = vrot.lane.b32.xlu0 %v9923, 96
    %v10024 = vpop.permute.xlu0 %10023
    %10025 = vrot.lane.b32.xlu0 %v9924, 96
    %v10026 = vpop.permute.xlu0 %10025
    %10027 = vrot.lane.b32.xlu0 %v9925, 96
    %v10028 = vpop.permute.xlu0 %10027
    %10029 = vrot.lane.b32.xlu0 %v9926, 96
    %v10030 = vpop.permute.xlu0 %10029
    %10031 = vrot.lane.b32.xlu0 %v9927, 96
    %v10032 = vpop.permute.xlu0 %10031
    %10033 = vrot.lane.b32.xlu0 %v9928, 96
    %v10034 = vpop.permute.xlu0 %10033
    %10035 = vrot.lane.b32.xlu0 %v9929, 96
    %v10036 = vpop.permute.xlu0 %10035
    %10037 = vrot.lane.b32.xlu0 %v9930, 96
    %v10038 = vpop.permute.xlu0 %10037
    %10039 = vrot.lane.b32.xlu0 %v9931, 96
    %v10040 = vpop.permute.xlu0 %10039
    %10041 = vrot.lane.b32.xlu0 %v9932, 96
    %v10042 = vpop.permute.xlu0 %10041
    %10043 = vrot.lane.b32.xlu0 %v9933, 96
    %v10044 = vpop.permute.xlu0 %10043
    %10045 = vrot.lane.b32.xlu0 %v9934, 96
    %v10046 = vpop.permute.xlu0 %10045
    %10047 = vrot.lane.b32.xlu0 %v9935, 96
    %v10048 = vpop.permute.xlu0 %10047
    %10049 = vrot.lane.b32.xlu0 %v9936, 96
    %v10050 = vpop.permute.xlu0 %10049
    %10051 = vrot.lane.b32.xlu0 %v9937, 96
    %v10052 = vpop.permute.xlu0 %10051
    %10053 = vrot.lane.b32.xlu0 %v9938, 96
    %v10054 = vpop.permute.xlu0 %10053
    %10055 = vrot.lane.b32.xlu0 %v9939, 96
    %v10056 = vpop.permute.xlu0 %10055
    %10057 = vrot.lane.b32.xlu0 %v9940, 96
    %v10058 = vpop.permute.xlu0 %10057
    %10059 = vrot.lane.b32.xlu0 %v9941, 96
    %v10060 = vpop.permute.xlu0 %10059
    %10061 = vrot.lane.b32.xlu0 %v9942, 96
    %v10062 = vpop.permute.xlu0 %10061
    %10063 = vrot.lane.b32.xlu0 %v9943, 96
    %v10064 = vpop.permute.xlu0 %10063
    %10065 = vrot.lane.b32.xlu0 %v9944, 96
    %v10066 = vpop.permute.xlu0 %10065
    %10067 = vrot.lane.b32.xlu0 %v9945, 96
    %v10068 = vpop.permute.xlu0 %10067
    %10069 = vrot.lane.b32.xlu0 %v9946, 96
    %v10070 = vpop.permute.xlu0 %10069
    %10071 = vrot.lane.b32.xlu0 %v9947, 96
    %v10072 = vpop.permute.xlu0 %10071
    %10073 = vrot.lane.b32.xlu0 %v9948, 96
    %v10074 = vpop.permute.xlu0 %10073
    %10075 = vrot.lane.b32.xlu0 %v9949, 96
    %v10076 = vpop.permute.xlu0 %10075
    %10077 = vrot.lane.b32.xlu0 %v9950, 96
    %v10078 = vpop.permute.xlu0 %10077
    %v10079 = vsel %vm1664, %v10020, %v10022
    %v10080 = vsel %vm1664, %v10022, %v10024
    %v10081 = vsel %vm1664, %v10024, %v10026
    %v10082 = vsel %vm1664, %v10026, %v10028
    %v10083 = vsel %vm1664, %v10028, %v10030
    %v10084 = vsel %vm1664, %v10030, %v10032
    %v10085 = vsel %vm1664, %v10032, %v10034
    %v10086 = vsel %vm1664, %v10034, %v10036
    %v10087 = vsel %vm1664, %v10036, %v10038
    %v10088 = vsel %vm1664, %v10038, %v10040
    %v10089 = vsel %vm1664, %v10040, %v10042
    %v10090 = vsel %vm1664, %v10042, %v10044
    %v10091 = vsel %vm1664, %v10044, %v10046
    %v10092 = vsel %vm1664, %v10046, %v10048
    %v10093 = vsel %vm1664, %v10050, %v10052
    %v10094 = vsel %vm1664, %v10052, %v10054
    %v10095 = vsel %vm1664, %v10054, %v10056
    %v10096 = vsel %vm1664, %v10056, %v10058
    %v10097 = vsel %vm1664, %v10058, %v10060
    %v10098 = vsel %vm1664, %v10060, %v10062
    %v10099 = vsel %vm1664, %v10062, %v10064
    %v10100 = vsel %vm1664, %v10064, %v10066
    %v10101 = vsel %vm1664, %v10066, %v10068
    %v10102 = vsel %vm1664, %v10068, %v10070
    %v10103 = vsel %vm1664, %v10070, %v10072
    %v10104 = vsel %vm1664, %v10072, %v10074
    %v10105 = vsel %vm1664, %v10074, %v10076
    %v10106 = vsel %vm1664, %v10076, %v10078
    %v10137 = vadd.f32 %v9959, %v10079
    %v10138 = vadd.f32 %v9960, %v10080
    %v10139 = vadd.f32 %v9961, %v10081
    %v10140 = vadd.f32 %v9962, %v10082
    %v10141 = vadd.f32 %v9963, %v10083
    %v10142 = vadd.f32 %v9964, %v10084
    %v10143 = vadd.f32 %v9965, %v10085
    %v10144 = vadd.f32 %v9966, %v10086
    %v10145 = vadd.f32 %v9967, %v10087
    %v10146 = vadd.f32 %v9968, %v10088
    %v10147 = vadd.f32 %v9969, %v10089
    %v10148 = vadd.f32 %v9970, %v10090
    %v10149 = vadd.f32 %v9971, %v10091
    %v10150 = vadd.f32 %v9972, %v10092
    %v10151 = vadd.f32 %v9973, %v10048
    %v10152 = vadd.f32 %v9974, %v10093
    %v10153 = vadd.f32 %v9975, %v10094
    %v10154 = vadd.f32 %v9976, %v10095
    %v10155 = vadd.f32 %v9977, %v10096
    %v10156 = vadd.f32 %v9978, %v10097
    %v10157 = vadd.f32 %v9979, %v10098
    %v10158 = vadd.f32 %v9980, %v10099
    %v10159 = vadd.f32 %v9981, %v10100
    %v10160 = vadd.f32 %v9982, %v10101
    %v10161 = vadd.f32 %v9983, %v10102
    %v10162 = vadd.f32 %v9984, %v10103
    %v10163 = vadd.f32 %v9985, %v10104
    %v10164 = vadd.f32 %v9986, %v10105
    %v10165 = vadd.f32 %v9987, %v10106
    %v10166 = vadd.f32 %v9988, %v10078
    %v10167 = vmax.f32 %v10137, 0.0
    %v10168 = vmax.f32 %v10138, 0.0
    %v10169 = vmax.f32 %v10139, 0.0
    %v10170 = vmax.f32 %v10140, 0.0
    %v10171 = vmax.f32 %v10141, 0.0
    %v10172 = vmax.f32 %v10142, 0.0
    %v10173 = vmax.f32 %v10143, 0.0
    %v10174 = vmax.f32 %v10144, 0.0
    %v10175 = vmax.f32 %v10145, 0.0
    %v10176 = vmax.f32 %v10146, 0.0
    %v10177 = vmax.f32 %v10147, 0.0
    %v10178 = vmax.f32 %v10148, 0.0
    %v10179 = vmax.f32 %v10149, 0.0
    %v10180 = vmax.f32 %v10150, 0.0
    %v10181 = vmax.f32 %v10151, 0.0
    %v10182 = vmax.f32 %v10152, 0.0
    %v10183 = vmax.f32 %v10153, 0.0
    %v10184 = vmax.f32 %v10154, 0.0
    %v10185 = vmax.f32 %v10155, 0.0
    %v10186 = vmax.f32 %v10156, 0.0
    %v10187 = vmax.f32 %v10157, 0.0
    %v10188 = vmax.f32 %v10158, 0.0
    %v10189 = vmax.f32 %v10159, 0.0
    %v10190 = vmax.f32 %v10160, 0.0
    %v10191 = vmax.f32 %v10161, 0.0
    %v10192 = vmax.f32 %v10162, 0.0
    %v10193 = vmax.f32 %v10163, 0.0
    %v10194 = vmax.f32 %v10164, 0.0
    %v10195 = vmax.f32 %v10165, 0.0
    %v10196 = vmax.f32 %v10166, 0.0
    %v10197 = vmul.f32 %v10167, %v2477
    %v10198 = vmul.f32 %v10168, %v2481
    %v10199 = vmul.f32 %v10169, %v2485
    %v10200 = vmul.f32 %v10170, %v2489
    %v10201 = vmul.f32 %v10171, %v2493
    %v10202 = vmul.f32 %v10172, %v2497
    %v10203 = vmul.f32 %v10173, %v2501
    %v10204 = vmul.f32 %v10174, %v2505
    %v10205 = vmul.f32 %v10175, %v2509
    %v10206 = vmul.f32 %v10176, %v2513
    %v10207 = vmul.f32 %v10177, %v2517
    %v10208 = vmul.f32 %v10178, %v2521
    %v10209 = vmul.f32 %v10179, %v2525
    %v10210 = vmul.f32 %v10180, %v2529
    %v10211 = vmul.f32 %v10181, %v2533
    %v10212 = vmul.f32 %v10182, %v2477
    %v10213 = vmul.f32 %v10183, %v2481
    %v10214 = vmul.f32 %v10184, %v2485
    %v10215 = vmul.f32 %v10185, %v2489
    %v10216 = vmul.f32 %v10186, %v2493
    %v10217 = vmul.f32 %v10187, %v2497
    %v10218 = vmul.f32 %v10188, %v2501
    %v10219 = vmul.f32 %v10189, %v2505
    %v10220 = vmul.f32 %v10190, %v2509
    %v10221 = vmul.f32 %v10191, %v2513
    %v10222 = vmul.f32 %v10192, %v2517
    %v10223 = vmul.f32 %v10193, %v2521
    %v10224 = vmul.f32 %v10194, %v2525
    %v10225 = vmul.f32 %v10195, %v2529
    %v10226 = vmul.f32 %v10196, %v2533
    %s10227 = smul.u32 8, 113
    %s10228 = smul.u32 %s10227, 2
    %s10229 = sshll.u32 %s10228, 4
    %10230 = dma.done [#allocation4], %s10229
    %v10231 = vld [vmem:[#allocation3] sm:$0xff]
    %v10232 = vld [vmem:[#allocation3 + $0x8] sm:$0xff]
    %v10233 = vld [vmem:[#allocation3 + $0x10] sm:$0xff]
    %v10234 = vld [vmem:[#allocation3 + $0x18] sm:$0xff]
    %v10235 = vld [vmem:[#allocation3 + $0x20] sm:$0xff]
    %v10236 = vld [vmem:[#allocation3 + $0x28] sm:$0xff]
    %v10237 = vld [vmem:[#allocation3 + $0x30] sm:$0xff]
    %v10238 = vld [vmem:[#allocation3 + $0x38] sm:$0xff]
    %v10239 = vld [vmem:[#allocation3 + $0x40] sm:$0xff]
    %v10240 = vld [vmem:[#allocation3 + $0x48] sm:$0xff]
    %v10241 = vld [vmem:[#allocation3 + $0x50] sm:$0xff]
    %v10242 = vld [vmem:[#allocation3 + $0x58] sm:$0xff]
    %v10243 = vld [vmem:[#allocation3 + $0x60] sm:$0xff]
    %v10244 = vld [vmem:[#allocation3 + $0x68] sm:$0xff]
    %v10245 = vld [vmem:[#allocation3 + $0x70] sm:$0xff]
    %v10246 = vld [vmem:[#allocation3 + $0x78] sm:$0xff]
    %v10247 = vld [vmem:[#allocation3 + $0x80] sm:$0xff]
    %v10248 = vld [vmem:[#allocation3 + $0x88] sm:$0xff]
    %v10249 = vld [vmem:[#allocation3 + $0x90] sm:$0xff]
    %v10250 = vld [vmem:[#allocation3 + $0x98] sm:$0xff]
    %v10251 = vld [vmem:[#allocation3 + $0xa0] sm:$0xff]
    %v10252 = vld [vmem:[#allocation3 + $0xa8] sm:$0xff]
    %v10253 = vld [vmem:[#allocation3 + $0xb0] sm:$0xff]
    %v10254 = vld [vmem:[#allocation3 + $0xb8] sm:$0xff]
    %v10255 = vld [vmem:[#allocation3 + $0xc0] sm:$0xff]
    %v10256 = vld [vmem:[#allocation3 + $0xc8] sm:$0xff]
    %v10257 = vld [vmem:[#allocation3 + $0xd0] sm:$0xff]
    %v10258 = vld [vmem:[#allocation3 + $0xd8] sm:$0xff]
    %v10259 = vld [vmem:[#allocation3 + $0xe0] sm:$0xff]
    %v10260 = vld [vmem:[#allocation3 + $0xe8] sm:$0xff]
    %v10261 = vld [vmem:[#allocation3 + $0xf0] sm:$0xff]
    %v10262 = vld [vmem:[#allocation3 + $0xf8] sm:$0xff]
    %v10263 = vld [vmem:[#allocation3 + $0x100] sm:$0xff]
    %v10264 = vld [vmem:[#allocation3 + $0x108] sm:$0xff]
    %v10265 = vld [vmem:[#allocation3 + $0x110] sm:$0xff]
    %v10266 = vld [vmem:[#allocation3 + $0x118] sm:$0xff]
    %v10267 = vld [vmem:[#allocation3 + $0x120] sm:$0xff]
    %v10268 = vld [vmem:[#allocation3 + $0x128] sm:$0xff]
    %v10269 = vld [vmem:[#allocation3 + $0x130] sm:$0xff]
    %v10270 = vld [vmem:[#allocation3 + $0x138] sm:$0xff]
    %v10271 = vld [vmem:[#allocation3 + $0x140] sm:$0xff]
    %v10272 = vld [vmem:[#allocation3 + $0x148] sm:$0xff]
    %v10273 = vld [vmem:[#allocation3 + $0x150] sm:$0xff]
    %v10274 = vld [vmem:[#allocation3 + $0x158] sm:$0xff]
    %v10275 = vld [vmem:[#allocation3 + $0x160] sm:$0xff]
    %v10276 = vld [vmem:[#allocation3 + $0x168] sm:$0xff]
    %v10277 = vld [vmem:[#allocation3 + $0x170] sm:$0xff]
    %v10278 = vld [vmem:[#allocation3 + $0x178] sm:$0xff]
    %v10279 = vld [vmem:[#allocation3 + $0x180] sm:$0xff]
    %v10280 = vld [vmem:[#allocation3 + $0x188] sm:$0xff]
    %v10281 = vld [vmem:[#allocation3 + $0x190] sm:$0xff]
    %v10282 = vld [vmem:[#allocation3 + $0x198] sm:$0xff]
    %v10283 = vld [vmem:[#allocation3 + $0x1a0] sm:$0xff]
    %v10284 = vld [vmem:[#allocation3 + $0x1a8] sm:$0xff]
    %v10285 = vld [vmem:[#allocation3 + $0x1b0] sm:$0xff]
    %v10286 = vld [vmem:[#allocation3 + $0x1b8] sm:$0xff]
    %v10287 = vld [vmem:[#allocation3 + $0x1c0] sm:$0xff]
    %v10288 = vld [vmem:[#allocation3 + $0x1c8] sm:$0xff]
    %v10289 = vld [vmem:[#allocation3 + $0x1d0] sm:$0xff]
    %v10290 = vld [vmem:[#allocation3 + $0x1d8] sm:$0xff]
    %v10291 = vld [vmem:[#allocation3 + $0x1e0] sm:$0xff]
    %v10292 = vld [vmem:[#allocation3 + $0x1e8] sm:$0xff]
    %v10293 = vld [vmem:[#allocation3 + $0x1f0] sm:$0xff]
    %v10294 = vld [vmem:[#allocation3 + $0x1f8] sm:$0xff]
    %v10295 = vld [vmem:[#allocation3 + $0x200] sm:$0xff]
    %v10296 = vld [vmem:[#allocation3 + $0x208] sm:$0xff]
    %v10297 = vld [vmem:[#allocation3 + $0x210] sm:$0xff]
    %v10298 = vld [vmem:[#allocation3 + $0x218] sm:$0xff]
    %v10299 = vld [vmem:[#allocation3 + $0x220] sm:$0xff]
    %v10300 = vld [vmem:[#allocation3 + $0x228] sm:$0xff]
    %v10301 = vld [vmem:[#allocation3 + $0x230] sm:$0xff]
    %v10302 = vld [vmem:[#allocation3 + $0x238] sm:$0xff]
    %v10303 = vld [vmem:[#allocation3 + $0x240] sm:$0xff]
    %v10304 = vld [vmem:[#allocation3 + $0x248] sm:$0xff]
    %v10305 = vld [vmem:[#allocation3 + $0x250] sm:$0xff]
    %v10306 = vld [vmem:[#allocation3 + $0x258] sm:$0xff]
    %v10307 = vld [vmem:[#allocation3 + $0x260] sm:$0xff]
    %v10308 = vld [vmem:[#allocation3 + $0x268] sm:$0xff]
    %v10309 = vld [vmem:[#allocation3 + $0x270] sm:$0xff]
    %v10310 = vld [vmem:[#allocation3 + $0x278] sm:$0xff]
    %v10311 = vld [vmem:[#allocation3 + $0x280] sm:$0xff]
    %v10312 = vld [vmem:[#allocation3 + $0x288] sm:$0xff]
    %v10313 = vld [vmem:[#allocation3 + $0x290] sm:$0xff]
    %v10314 = vld [vmem:[#allocation3 + $0x298] sm:$0xff]
    %v10315 = vld [vmem:[#allocation3 + $0x2a0] sm:$0xff]
    %v10316 = vld [vmem:[#allocation3 + $0x2a8] sm:$0xff]
    %v10317 = vld [vmem:[#allocation3 + $0x2b0] sm:$0xff]
    %v10318 = vld [vmem:[#allocation3 + $0x2b8] sm:$0xff]
    %v10319 = vld [vmem:[#allocation3 + $0x2c0] sm:$0xff]
    %v10320 = vld [vmem:[#allocation3 + $0x2c8] sm:$0xff]
    %v10321 = vld [vmem:[#allocation3 + $0x2d0] sm:$0xff]
    %v10322 = vld [vmem:[#allocation3 + $0x2d8] sm:$0xff]
    %v10323 = vld [vmem:[#allocation3 + $0x2e0] sm:$0xff]
    %v10324 = vld [vmem:[#allocation3 + $0x2e8] sm:$0xff]
    %v10325 = vld [vmem:[#allocation3 + $0x2f0] sm:$0xff]
    %v10326 = vld [vmem:[#allocation3 + $0x2f8] sm:$0xff]
    %v10327 = vld [vmem:[#allocation3 + $0x300] sm:$0xff]
    %v10328 = vld [vmem:[#allocation3 + $0x308] sm:$0xff]
    %v10329 = vld [vmem:[#allocation3 + $0x310] sm:$0xff]
    %v10330 = vld [vmem:[#allocation3 + $0x318] sm:$0xff]
    %v10331 = vld [vmem:[#allocation3 + $0x320] sm:$0xff]
    %v10332 = vld [vmem:[#allocation3 + $0x328] sm:$0xff]
    %v10333 = vld [vmem:[#allocation3 + $0x330] sm:$0xff]
    %v10334 = vld [vmem:[#allocation3 + $0x338] sm:$0xff]
    %v10335 = vld [vmem:[#allocation3 + $0x340] sm:$0xff]
    %v10336 = vld [vmem:[#allocation3 + $0x348] sm:$0xff]
    %v10337 = vld [vmem:[#allocation3 + $0x350] sm:$0xff]
    %v10338 = vld [vmem:[#allocation3 + $0x358] sm:$0xff]
    %v10339 = vld [vmem:[#allocation3 + $0x360] sm:$0xff]
    %v10340 = vld [vmem:[#allocation3 + $0x368] sm:$0xff]
    %v10341 = vld [vmem:[#allocation3 + $0x370] sm:$0xff]
    %v10342 = vld [vmem:[#allocation3 + $0x378] sm:$0xff]
    %v10343 = vld [vmem:[#allocation3 + $0x380] sm:$0xff]
    %v10344 = vld [vmem:[#allocation3 + $0x388] sm:$0xff]
    %v10345 = vld [vmem:[#allocation3 + $0x390] sm:$0xff]
    %v10346 = vld [vmem:[#allocation3 + $0x398] sm:$0xff]
    %v10347 = vld [vmem:[#allocation3 + $0x3a0] sm:$0xff]
    %v10348 = vld [vmem:[#allocation3 + $0x3a8] sm:$0xff]
    %v10349 = vld [vmem:[#allocation3 + $0x3b0] sm:$0xff]
    %v10350 = vld [vmem:[#allocation3 + $0x3b8] sm:$0xff]
    %v10351 = vld [vmem:[#allocation3 + $0x3c0] sm:$0xff]
    %v10352 = vld [vmem:[#allocation3 + $0x3c8] sm:$0xff]
    %v10353 = vld [vmem:[#allocation3 + $0x3d0] sm:$0xff]
    %v10354 = vld [vmem:[#allocation3 + $0x3d8] sm:$0xff]
    %v10355 = vld [vmem:[#allocation3 + $0x3e0] sm:$0xff]
    %v10356 = vld [vmem:[#allocation3 + $0x3e8] sm:$0xff]
    %v10357 = vld [vmem:[#allocation3 + $0x3f0] sm:$0xff]
    %v10358 = vld [vmem:[#allocation3 + $0x3f8] sm:$0xff]
    %v10359 = vld [vmem:[#allocation3 + $0x400] sm:$0xff]
    %v10360 = vld [vmem:[#allocation3 + $0x408] sm:$0xff]
    %v10361 = vld [vmem:[#allocation3 + $0x410] sm:$0xff]
    %v10362 = vld [vmem:[#allocation3 + $0x418] sm:$0xff]
    %v10363 = vld [vmem:[#allocation3 + $0x420] sm:$0xff]
    %v10364 = vld [vmem:[#allocation3 + $0x428] sm:$0xff]
    %v10365 = vld [vmem:[#allocation3 + $0x430] sm:$0xff]
    %v10366 = vld [vmem:[#allocation3 + $0x438] sm:$0xff]
    %v10367 = vld [vmem:[#allocation3 + $0x440] sm:$0xff]
    %v10368 = vld [vmem:[#allocation3 + $0x448] sm:$0xff]
    %v10369 = vld [vmem:[#allocation3 + $0x450] sm:$0xff]
    %v10370 = vld [vmem:[#allocation3 + $0x458] sm:$0xff]
    %v10371 = vld [vmem:[#allocation3 + $0x460] sm:$0xff]
    %v10372 = vld [vmem:[#allocation3 + $0x468] sm:$0xff]
    %v10373 = vld [vmem:[#allocation3 + $0x470] sm:$0xff]
    %v10374 = vld [vmem:[#allocation3 + $0x478] sm:$0xff]
    %v10375 = vld [vmem:[#allocation3 + $0x480] sm:$0xff]
    %v10376 = vld [vmem:[#allocation3 + $0x488] sm:$0xff]
    %v10377 = vld [vmem:[#allocation3 + $0x490] sm:$0xff]
    %v10378 = vld [vmem:[#allocation3 + $0x498] sm:$0xff]
    %v10379 = vld [vmem:[#allocation3 + $0x4a0] sm:$0xff]
    %v10380 = vld [vmem:[#allocation3 + $0x4a8] sm:$0xff]
    %v10381 = vld [vmem:[#allocation3 + $0x4b0] sm:$0xff]
    %v10382 = vld [vmem:[#allocation3 + $0x4b8] sm:$0xff]
    %v10383 = vld [vmem:[#allocation3 + $0x4c0] sm:$0xff]
    %v10384 = vld [vmem:[#allocation3 + $0x4c8] sm:$0xff]
    %v10385 = vld [vmem:[#allocation3 + $0x4d0] sm:$0xff]
    %v10386 = vld [vmem:[#allocation3 + $0x4d8] sm:$0xff]
    %v10387 = vld [vmem:[#allocation3 + $0x4e0] sm:$0xff]
    %v10388 = vld [vmem:[#allocation3 + $0x4e8] sm:$0xff]
    %v10389 = vld [vmem:[#allocation3 + $0x4f0] sm:$0xff]
    %v10390 = vld [vmem:[#allocation3 + $0x4f8] sm:$0xff]
    %v10391 = vld [vmem:[#allocation3 + $0x500] sm:$0xff]
    %v10392 = vld [vmem:[#allocation3 + $0x508] sm:$0xff]
    %v10393 = vld [vmem:[#allocation3 + $0x510] sm:$0xff]
    %v10394 = vld [vmem:[#allocation3 + $0x518] sm:$0xff]
    %v10395 = vld [vmem:[#allocation3 + $0x520] sm:$0xff]
    %v10396 = vld [vmem:[#allocation3 + $0x528] sm:$0xff]
    %v10397 = vld [vmem:[#allocation3 + $0x530] sm:$0xff]
    %v10398 = vld [vmem:[#allocation3 + $0x538] sm:$0xff]
    %v10399 = vld [vmem:[#allocation3 + $0x540] sm:$0xff]
    %v10400 = vld [vmem:[#allocation3 + $0x548] sm:$0xff]
    %v10401 = vld [vmem:[#allocation3 + $0x550] sm:$0xff]
    %v10402 = vld [vmem:[#allocation3 + $0x558] sm:$0xff]
    %v10403 = vld [vmem:[#allocation3 + $0x560] sm:$0xff]
    %v10404 = vld [vmem:[#allocation3 + $0x568] sm:$0xff]
    %v10405 = vld [vmem:[#allocation3 + $0x570] sm:$0xff]
    %v10406 = vld [vmem:[#allocation3 + $0x578] sm:$0xff]
    %v10407 = vld [vmem:[#allocation3 + $0x580] sm:$0xff]
    %v10408 = vld [vmem:[#allocation3 + $0x588] sm:$0xff]
    %v10409 = vld [vmem:[#allocation3 + $0x590] sm:$0xff]
    %v10410 = vld [vmem:[#allocation3 + $0x598] sm:$0xff]
    %v10411 = vld [vmem:[#allocation3 + $0x5a0] sm:$0xff]
    %v10412 = vld [vmem:[#allocation3 + $0x5a8] sm:$0xff]
    %v10413 = vld [vmem:[#allocation3 + $0x5b0] sm:$0xff]
    %v10414 = vld [vmem:[#allocation3 + $0x5b8] sm:$0xff]
    %v10415 = vld [vmem:[#allocation3 + $0x5c0] sm:$0xff]
    %v10416 = vld [vmem:[#allocation3 + $0x5c8] sm:$0xff]
    %v10417 = vld [vmem:[#allocation3 + $0x5d0] sm:$0xff]
    %v10418 = vld [vmem:[#allocation3 + $0x5d8] sm:$0xff]
    %v10419 = vld [vmem:[#allocation3 + $0x5e0] sm:$0xff]
    %v10420 = vld [vmem:[#allocation3 + $0x5e8] sm:$0xff]
    %v10421 = vld [vmem:[#allocation3 + $0x5f0] sm:$0xff]
    %v10422 = vld [vmem:[#allocation3 + $0x5f8] sm:$0xff]
    %v10423 = vld [vmem:[#allocation3 + $0x600] sm:$0xff]
    %v10424 = vld [vmem:[#allocation3 + $0x608] sm:$0xff]
    %v10425 = vld [vmem:[#allocation3 + $0x610] sm:$0xff]
    %v10426 = vld [vmem:[#allocation3 + $0x618] sm:$0xff]
    %v10427 = vld [vmem:[#allocation3 + $0x620] sm:$0xff]
    %v10428 = vld [vmem:[#allocation3 + $0x628] sm:$0xff]
    %v10429 = vld [vmem:[#allocation3 + $0x630] sm:$0xff]
    %v10430 = vld [vmem:[#allocation3 + $0x638] sm:$0xff]
    %v10431 = vld [vmem:[#allocation3 + $0x640] sm:$0xff]
    %v10432 = vld [vmem:[#allocation3 + $0x648] sm:$0xff]
    %v10433 = vld [vmem:[#allocation3 + $0x650] sm:$0xff]
    %v10434 = vld [vmem:[#allocation3 + $0x658] sm:$0xff]
    %v10435 = vld [vmem:[#allocation3 + $0x660] sm:$0xff]
    %v10436 = vld [vmem:[#allocation3 + $0x668] sm:$0xff]
    %v10437 = vld [vmem:[#allocation3 + $0x670] sm:$0xff]
    %v10438 = vld [vmem:[#allocation3 + $0x678] sm:$0xff]
    %v10439 = vld [vmem:[#allocation3 + $0x680] sm:$0xff]
    %v10440 = vld [vmem:[#allocation3 + $0x688] sm:$0xff]
    %v10441 = vld [vmem:[#allocation3 + $0x690] sm:$0xff]
    %v10442 = vld [vmem:[#allocation3 + $0x698] sm:$0xff]
    %v10443 = vld [vmem:[#allocation3 + $0x6a0] sm:$0xff]
    %v10444 = vld [vmem:[#allocation3 + $0x6a8] sm:$0xff]
    %v10445 = vld [vmem:[#allocation3 + $0x6b0] sm:$0xff]
    %v10446 = vld [vmem:[#allocation3 + $0x6b8] sm:$0xff]
    %v10447 = vld [vmem:[#allocation3 + $0x6c0] sm:$0xff]
    %v10448 = vld [vmem:[#allocation3 + $0x6c8] sm:$0xff]
    %v10449 = vld [vmem:[#allocation3 + $0x6d0] sm:$0xff]
    %v10450 = vld [vmem:[#allocation3 + $0x6d8] sm:$0xff]
    %v10451 = vld [vmem:[#allocation3 + $0x6e0] sm:$0xff]
    %v10452 = vld [vmem:[#allocation3 + $0x6e8] sm:$0xff]
    %v10453 = vld [vmem:[#allocation3 + $0x6f0] sm:$0xff]
    %v10454 = vld [vmem:[#allocation3 + $0x6f8] sm:$0xff]
    %v10455 = vld [vmem:[#allocation3 + $0x700] sm:$0xf]
    %v10456 = vld [vmem:[#allocation3 + $0x708] sm:$0xf]
    %vm10457 = vcmask 31744
    %v10459 = vsel %vm10457, %v10204, 0
    %v10462 = vsel %vm10457, %v10219, 0
    %vm10464 = vcmask 1043456
    %v10466 = vsel %vm10464, %v10455, 0
    %v10469 = vsel %vm10464, %v10456, 0
    %10471 = vmatprep.subr.mxu0 %v10262
    %10472 = vmatpush1.msra.mxu0 %v10261
    %10473 = vmatprep.subr.mxu0 %v10260
    %10474 = vmatpush1.msra.mxu0 %v10259
    %10475 = vmatprep.subr.mxu0 %v10258
    %10476 = vmatpush1.msra.mxu0 %v10257
    %10477 = vmatprep.subr.mxu0 %v10256
    %10478 = vmatpush1.msra.mxu0 %v10255
    %10479 = vmatprep.subr.mxu0 %v10254
    %10480 = vmatpush1.msra.mxu0 %v10253
    %10481 = vmatprep.subr.mxu0 %v10252
    %10482 = vmatpush1.msra.mxu0 %v10251
    %10483 = vmatprep.subr.mxu0 %v10250
    %10484 = vmatpush1.msra.mxu0 %v10249
    %10485 = vmatprep.subr.mxu0 %v10248
    %10486 = vmatpush1.msra.mxu0 %v10247
    %10487 = vmatprep.subr.mxu0 %v10246
    %10488 = vmatpush1.msra.mxu0 %v10245
    %10489 = vmatprep.subr.mxu0 %v10244
    %10490 = vmatpush1.msra.mxu0 %v10243
    %10491 = vmatprep.subr.mxu0 %v10242
    %10492 = vmatpush1.msra.mxu0 %v10241
    %10493 = vmatprep.subr.mxu0 %v10240
    %10494 = vmatpush1.msra.mxu0 %v10239
    %10495 = vmatprep.subr.mxu0 %v10238
    %10496 = vmatpush1.msra.mxu0 %v10237
    %10497 = vmatprep.subr.mxu0 %v10236
    %10498 = vmatpush1.msra.mxu0 %v10235
    %10499 = vmatprep.subr.mxu0 %v10234
    %10500 = vmatpush1.msra.mxu0 %v10233
    %10501 = vmatprep.subr.mxu0 %v10232
    %10502 = vmatpush1.msra.mxu0 %v10231
    %10503 = vmatprep.subr.mxu0 %v10294
    %10504 = vmatpush2.msra.mxu0 %v10293
    %10505 = vmatprep.subr.mxu0 %v10292
    %10506 = vmatpush2.msra.mxu0 %v10291
    %10507 = vmatprep.subr.mxu0 %v10290
    %10508 = vmatpush2.msra.mxu0 %v10289
    %10509 = vmatprep.subr.mxu0 %v10288
    %10510 = vmatpush2.msra.mxu0 %v10287
    %10511 = vmatprep.subr.mxu0 %v10286
    %10512 = vmatpush2.msra.mxu0 %v10285
    %10513 = vmatprep.subr.mxu0 %v10284
    %10514 = vmatpush2.msra.mxu0 %v10283
    %10515 = vmatprep.subr.mxu0 %v10282
    %10516 = vmatpush2.msra.mxu0 %v10281
    %10517 = vmatprep.subr.mxu0 %v10280
    %10518 = vmatpush2.msra.mxu0 %v10279
    %10519 = vmatprep.subr.mxu0 %v10278
    %10520 = vmatpush2.msra.mxu0 %v10277
    %10521 = vmatprep.subr.mxu0 %v10276
    %10522 = vmatpush2.msra.mxu0 %v10275
    %10523 = vmatprep.subr.mxu0 %v10274
    %10524 = vmatpush2.msra.mxu0 %v10273
    %10525 = vmatprep.subr.mxu0 %v10272
    %10526 = vmatpush2.msra.mxu0 %v10271
    %10527 = vmatprep.subr.mxu0 %v10270
    %10528 = vmatpush2.msra.mxu0 %v10269
    %10529 = vmatprep.subr.mxu0 %v10268
    %10530 = vmatpush2.msra.mxu0 %v10267
    %10531 = vmatprep.subr.mxu0 %v10266
    %10532 = vmatpush2.msra.mxu0 %v10265
    %10533 = vmatprep.subr.mxu0 %v10264
    %10534 = vmatpush2.msra.mxu0 %v10263
    %10535 = vmatprep.mubr.f32.mxu0 %v10198
    %10536 = vmatmul.mubr.f32.gmra.mxu0 %v10197
    %v10537 = vpop.f32.mrf.mxu0
    %v10538 = vadd.f32 0.0, %v10537
    %v10539 = vpop.f32.mrf.mxu0
    %10540 = vmatprep.mubr.f32.mxu0 %v10213
    %10541 = vmatmul.mubr.f32.gmra.mxu0 %v10212
    %v10542 = vpop.f32.mrf.mxu0
    %v10543 = vadd.f32 0.0, %v10542
    %v10544 = vpop.f32.mrf.mxu0
    %v10545 = vadd.f32 0.0, %v10544
    %10546 = vdwg.mxu0
    %10547 = vmatprep.subr.mxu0 %v10326
    %10548 = vmatpush1.msra.mxu0 %v10325
    %10549 = vmatprep.subr.mxu0 %v10324
    %10550 = vmatpush1.msra.mxu0 %v10323
    %10551 = vmatprep.subr.mxu0 %v10322
    %10552 = vmatpush1.msra.mxu0 %v10321
    %10553 = vmatprep.subr.mxu0 %v10320
    %10554 = vmatpush1.msra.mxu0 %v10319
    %10555 = vmatprep.subr.mxu0 %v10318
    %10556 = vmatpush1.msra.mxu0 %v10317
    %10557 = vmatprep.subr.mxu0 %v10316
    %10558 = vmatpush1.msra.mxu0 %v10315
    %10559 = vmatprep.subr.mxu0 %v10314
    %10560 = vmatpush1.msra.mxu0 %v10313
    %10561 = vmatprep.subr.mxu0 %v10312
    %10562 = vmatpush1.msra.mxu0 %v10311
    %10563 = vmatprep.subr.mxu0 %v10310
    %10564 = vmatpush1.msra.mxu0 %v10309
    %10565 = vmatprep.subr.mxu0 %v10308
    %10566 = vmatpush1.msra.mxu0 %v10307
    %10567 = vmatprep.subr.mxu0 %v10306
    %10568 = vmatpush1.msra.mxu0 %v10305
    %10569 = vmatprep.subr.mxu0 %v10304
    %10570 = vmatpush1.msra.mxu0 %v10303
    %10571 = vmatprep.subr.mxu0 %v10302
    %10572 = vmatpush1.msra.mxu0 %v10301
    %10573 = vmatprep.subr.mxu0 %v10300
    %10574 = vmatpush1.msra.mxu0 %v10299
    %10575 = vmatprep.subr.mxu0 %v10298
    %10576 = vmatpush1.msra.mxu0 %v10297
    %10577 = vmatprep.subr.mxu0 %v10296
    %10578 = vmatpush1.msra.mxu0 %v10295
    %10579 = vmatprep.subr.mxu0 %v10358
    %10580 = vmatpush2.msra.mxu0 %v10357
    %10581 = vmatprep.subr.mxu0 %v10356
    %10582 = vmatpush2.msra.mxu0 %v10355
    %10583 = vmatprep.subr.mxu0 %v10354
    %10584 = vmatpush2.msra.mxu0 %v10353
    %10585 = vmatprep.subr.mxu0 %v10352
    %10586 = vmatpush2.msra.mxu0 %v10351
    %10587 = vmatprep.subr.mxu0 %v10350
    %10588 = vmatpush2.msra.mxu0 %v10349
    %10589 = vmatprep.subr.mxu0 %v10348
    %10590 = vmatpush2.msra.mxu0 %v10347
    %10591 = vmatprep.subr.mxu0 %v10346
    %10592 = vmatpush2.msra.mxu0 %v10345
    %10593 = vmatprep.subr.mxu0 %v10344
    %10594 = vmatpush2.msra.mxu0 %v10343
    %10595 = vmatprep.subr.mxu0 %v10342
    %10596 = vmatpush2.msra.mxu0 %v10341
    %10597 = vmatprep.subr.mxu0 %v10340
    %10598 = vmatpush2.msra.mxu0 %v10339
    %10599 = vmatprep.subr.mxu0 %v10338
    %10600 = vmatpush2.msra.mxu0 %v10337
    %10601 = vmatprep.subr.mxu0 %v10336
    %10602 = vmatpush2.msra.mxu0 %v10335
    %10603 = vmatprep.subr.mxu0 %v10334
    %10604 = vmatpush2.msra.mxu0 %v10333
    %10605 = vmatprep.subr.mxu0 %v10332
    %10606 = vmatpush2.msra.mxu0 %v10331
    %10607 = vmatprep.subr.mxu0 %v10330
    %10608 = vmatpush2.msra.mxu0 %v10329
    %10609 = vmatprep.subr.mxu0 %v10328
    %10610 = vmatpush2.msra.mxu0 %v10327
    %10611 = vmatprep.mubr.f32.mxu0 %v10200
    %10612 = vmatmul.mubr.f32.gmra.mxu0 %v10199
    %v10613 = vpop.f32.mrf.mxu0
    %v10614 = vadd.f32 %v10538, %v10613
    %v10615 = vpop.f32.mrf.mxu0
    %10616 = vmatprep.mubr.f32.mxu0 %v10215
    %10617 = vmatmul.mubr.f32.gmra.mxu0 %v10214
    %v10618 = vpop.f32.mrf.mxu0
    %v10619 = vadd.f32 %v10543, %v10618
    %v10620 = vpop.f32.mrf.mxu0
    %v10621 = vadd.f32 %v10545, %v10620
    %10622 = vdwg.mxu0
    %10623 = vmatprep.subr.mxu0 %v10390
    %10624 = vmatpush1.msra.mxu0 %v10389
    %10625 = vmatprep.subr.mxu0 %v10388
    %10626 = vmatpush1.msra.mxu0 %v10387
    %10627 = vmatprep.subr.mxu0 %v10386
    %10628 = vmatpush1.msra.mxu0 %v10385
    %10629 = vmatprep.subr.mxu0 %v10384
    %10630 = vmatpush1.msra.mxu0 %v10383
    %10631 = vmatprep.subr.mxu0 %v10382
    %10632 = vmatpush1.msra.mxu0 %v10381
    %10633 = vmatprep.subr.mxu0 %v10380
    %10634 = vmatpush1.msra.mxu0 %v10379
    %10635 = vmatprep.subr.mxu0 %v10378
    %10636 = vmatpush1.msra.mxu0 %v10377
    %10637 = vmatprep.subr.mxu0 %v10376
    %10638 = vmatpush1.msra.mxu0 %v10375
    %10639 = vmatprep.subr.mxu0 %v10374
    %10640 = vmatpush1.msra.mxu0 %v10373
    %10641 = vmatprep.subr.mxu0 %v10372
    %10642 = vmatpush1.msra.mxu0 %v10371
    %10643 = vmatprep.subr.mxu0 %v10370
    %10644 = vmatpush1.msra.mxu0 %v10369
    %10645 = vmatprep.subr.mxu0 %v10368
    %10646 = vmatpush1.msra.mxu0 %v10367
    %10647 = vmatprep.subr.mxu0 %v10366
    %10648 = vmatpush1.msra.mxu0 %v10365
    %10649 = vmatprep.subr.mxu0 %v10364
    %10650 = vmatpush1.msra.mxu0 %v10363
    %10651 = vmatprep.subr.mxu0 %v10362
    %10652 = vmatpush1.msra.mxu0 %v10361
    %10653 = vmatprep.subr.mxu0 %v10360
    %10654 = vmatpush1.msra.mxu0 %v10359
    %10655 = vmatprep.subr.mxu0 %v10422
    %10656 = vmatpush2.msra.mxu0 %v10421
    %10657 = vmatprep.subr.mxu0 %v10420
    %10658 = vmatpush2.msra.mxu0 %v10419
    %10659 = vmatprep.subr.mxu0 %v10418
    %10660 = vmatpush2.msra.mxu0 %v10417
    %10661 = vmatprep.subr.mxu0 %v10416
    %10662 = vmatpush2.msra.mxu0 %v10415
    %10663 = vmatprep.subr.mxu0 %v10414
    %10664 = vmatpush2.msra.mxu0 %v10413
    %10665 = vmatprep.subr.mxu0 %v10412
    %10666 = vmatpush2.msra.mxu0 %v10411
    %10667 = vmatprep.subr.mxu0 %v10410
    %10668 = vmatpush2.msra.mxu0 %v10409
    %10669 = vmatprep.subr.mxu0 %v10408
    %10670 = vmatpush2.msra.mxu0 %v10407
    %10671 = vmatprep.subr.mxu0 %v10406
    %10672 = vmatpush2.msra.mxu0 %v10405
    %10673 = vmatprep.subr.mxu0 %v10404
    %10674 = vmatpush2.msra.mxu0 %v10403
    %10675 = vmatprep.subr.mxu0 %v10402
    %10676 = vmatpush2.msra.mxu0 %v10401
    %10677 = vmatprep.subr.mxu0 %v10400
    %10678 = vmatpush2.msra.mxu0 %v10399
    %10679 = vmatprep.subr.mxu0 %v10398
    %10680 = vmatpush2.msra.mxu0 %v10397
    %10681 = vmatprep.subr.mxu0 %v10396
    %10682 = vmatpush2.msra.mxu0 %v10395
    %10683 = vmatprep.subr.mxu0 %v10394
    %10684 = vmatpush2.msra.mxu0 %v10393
    %10685 = vmatprep.subr.mxu0 %v10392
    %10686 = vmatpush2.msra.mxu0 %v10391
    %10687 = vmatprep.mubr.f32.mxu0 %v10202
    %10688 = vmatmul.mubr.f32.gmra.mxu0 %v10201
    %v10689 = vpop.f32.mrf.mxu0
    %v10690 = vadd.f32 %v10614, %v10689
    %v10691 = vpop.f32.mrf.mxu0
    %10692 = vmatprep.mubr.f32.mxu0 %v10217
    %10693 = vmatmul.mubr.f32.gmra.mxu0 %v10216
    %v10694 = vpop.f32.mrf.mxu0
    %v10695 = vadd.f32 %v10619, %v10694
    %v10696 = vpop.f32.mrf.mxu0
    %v10697 = vadd.f32 %v10621, %v10696
    %10698 = vdwg.mxu0
    %10699 = vmatprep.subr.mxu0 %v10454
    %10700 = vmatpush1.msra.mxu0 %v10453
    %10701 = vmatprep.subr.mxu0 %v10452
    %10702 = vmatpush1.msra.mxu0 %v10451
    %10703 = vmatprep.subr.mxu0 %v10450
    %10704 = vmatpush1.msra.mxu0 %v10449
    %10705 = vmatprep.subr.mxu0 %v10448
    %10706 = vmatpush1.msra.mxu0 %v10447
    %10707 = vmatprep.subr.mxu0 %v10446
    %10708 = vmatpush1.msra.mxu0 %v10445
    %10709 = vmatprep.subr.mxu0 %v10444
    %10710 = vmatpush1.msra.mxu0 %v10443
    %10711 = vmatprep.subr.mxu0 %v10442
    %10712 = vmatpush1.msra.mxu0 %v10441
    %10713 = vmatprep.subr.mxu0 %v10440
    %10714 = vmatpush1.msra.mxu0 %v10439
    %10715 = vmatprep.subr.mxu0 %v10438
    %10716 = vmatpush1.msra.mxu0 %v10437
    %10717 = vmatprep.subr.mxu0 %v10436
    %10718 = vmatpush1.msra.mxu0 %v10435
    %10719 = vmatprep.subr.mxu0 %v10434
    %10720 = vmatpush1.msra.mxu0 %v10433
    %10721 = vmatprep.subr.mxu0 %v10432
    %10722 = vmatpush1.msra.mxu0 %v10431
    %10723 = vmatprep.subr.mxu0 %v10430
    %10724 = vmatpush1.msra.mxu0 %v10429
    %10725 = vmatprep.subr.mxu0 %v10428
    %10726 = vmatpush1.msra.mxu0 %v10427
    %10727 = vmatprep.subr.mxu0 %v10426
    %10728 = vmatpush1.msra.mxu0 %v10425
    %10729 = vmatprep.subr.mxu0 %v10424
    %10730 = vmatpush1.msra.mxu0 %v10423
    %10731 = vmatprep.subr.mxu0 0.0
    %10732 = vmatpush2.msra.mxu0 0.0
    %10733 = vmatprep.subr.mxu0 0.0
    %10734 = vmatpush2.msra.mxu0 0.0
    %10735 = vmatprep.subr.mxu0 0.0
    %10736 = vmatpush2.msra.mxu0 0.0
    %10737 = vmatprep.subr.mxu0 0.0
    %10738 = vmatpush2.msra.mxu0 0.0
    %10739 = vmatprep.subr.mxu0 0.0
    %10740 = vmatpush2.msra.mxu0 0.0
    %10741 = vmatprep.subr.mxu0 0.0
    %10742 = vmatpush2.msra.mxu0 0.0
    %10743 = vmatprep.subr.mxu0 0.0
    %10744 = vmatpush2.msra.mxu0 0.0
    %10745 = vmatprep.subr.mxu0 0.0
    %10746 = vmatpush2.msra.mxu0 0.0
    %10747 = vmatprep.subr.mxu0 0.0
    %10748 = vmatpush2.msra.mxu0 0.0
    %10749 = vmatprep.subr.mxu0 0.0
    %10750 = vmatpush2.msra.mxu0 0.0
    %10751 = vmatprep.subr.mxu0 0.0
    %10752 = vmatpush2.msra.mxu0 0.0
    %10753 = vmatprep.subr.mxu0 0.0
    %10754 = vmatpush2.msra.mxu0 0.0
    %10755 = vmatprep.subr.mxu0 0.0
    %10756 = vmatpush2.msra.mxu0 0.0
    %10757 = vmatprep.subr.mxu0 0.0
    %10758 = vmatpush2.msra.mxu0 0.0
    %10759 = vmatprep.subr.mxu0 0.0
    %10760 = vmatpush2.msra.mxu0 0.0
    %10761 = vmatprep.subr.mxu0 %v10469
    %10762 = vmatpush2.msra.mxu0 %v10466
    %10763 = vmatprep.mubr.f32.mxu0 %v10459
    %10764 = vmatmul.mubr.f32.gmra.mxu0 %v10203
    %v10765 = vpop.f32.mrf.mxu0
    %v10766 = vadd.f32 %v10690, %v10765
    %v10767 = vpop.f32.mrf.mxu0
    %10768 = vmatprep.mubr.f32.mxu0 %v10462
    %10769 = vmatmul.mubr.f32.gmra.mxu0 %v10218
    %v10770 = vpop.f32.mrf.mxu0
    %v10771 = vadd.f32 %v10695, %v10770
    %v10772 = vpop.f32.mrf.mxu0
    %v10773 = vadd.f32 %v10697, %v10772
    %10774 = vdwg.mxu0
    %v10775 = vld [vmem:[%s4] sm:$0x1]
    %v10776 = vadd.f32 %v10775, %v10766
    %v10779 = vunpack.c.l.s4 1966171168
    %v10780 = vunpack.c.0.s8 %v10779
    %v10781 = vlaneseq
    %v10782 = vshrl.u32 %v10781, 7
    %v10783 = vsub.s32 %v10780, %v10782
    %v10784 = vrot.slane %v10766, %v10783
    %v10785 = vcombine.high %v10784, %v10784
    %v10787 = vunpack.c.l.s4 1966171168
    %v10788 = vunpack.c.0.s8 %v10787
    %v10789 = vlaneseq
    %v10790 = vshrl.u32 %v10789, 7
    %v10791 = vsub.s32 %v10788, %v10790
    %v10792 = vrot.slane %v10784, %v10791
    %v10794 = vunpack.c.l.s4 1966171168
    %v10795 = vunpack.c.0.s8 %v10794
    %v10796 = vlaneseq
    %v10797 = vshrl.u32 %v10796, 7
    %v10798 = vsub.s32 %v10795, %v10797
    %v10799 = vrot.slane %v10785, %v10798
    %10800 = vrot.lane.b32.xlu0 %v10799, 118
    %v10801 = vpop.permute.xlu0 %10800
    %v10803 = vadd.f32 %v10776, %v10801
    %v10804 = vcombine.high %v10792, %v10792
    %10805 = vrot.lane.b32.xlu0 %v10804, 108
    %v10806 = vpop.permute.xlu0 %10805
    %v10808 = vadd.f32 %v10803, %v10806
    %v10809 = vcombine.high %v10799, %v10799
    %10810 = vrot.lane.b32.xlu0 %v10809, 98
    %v10811 = vpop.permute.xlu0 %10810
    %v10813 = vadd.f32 %v10808, %v10811
    %v10814 = vcombine.high %v10766, %v10766
    %v10816 = vunpack.c.l.s4 1966171168
    %v10817 = vunpack.c.0.s8 %v10816
    %v10818 = vlaneseq
    %v10819 = vshrl.u32 %v10818, 7
    %v10820 = vsub.s32 %v10817, %v10819
    %v10821 = vrot.slane %v10814, %v10820
    %v10823 = vunpack.c.l.s4 1966171168
    %v10824 = vunpack.c.0.s8 %v10823
    %v10825 = vlaneseq
    %v10826 = vshrl.u32 %v10825, 7
    %v10827 = vsub.s32 %v10824, %v10826
    %v10828 = vrot.slane %v10821, %v10827
    %10829 = vrot.lane.b32.xlu0 %v10828, 88
    %v10830 = vpop.permute.xlu0 %10829
    %v10832 = vadd.f32 %v10813, %v10830
    %v10833 = vcombine.high %v10821, %v10821
    %v10835 = vunpack.c.l.s4 1966171168
    %v10836 = vunpack.c.0.s8 %v10835
    %v10837 = vlaneseq
    %v10838 = vshrl.u32 %v10837, 7
    %v10839 = vsub.s32 %v10836, %v10838
    %v10840 = vrot.slane %v10833, %v10839
    %10841 = vrot.lane.b32.xlu0 %v10840, 78
    %v10842 = vpop.permute.xlu0 %10841
    %v10844 = vadd.f32 %v10832, %v10842
    %v10845 = vcombine.high %v10828, %v10828
    %10846 = vrot.lane.b32.xlu0 %v10845, 68
    %v10847 = vpop.permute.xlu0 %10846
    %v10849 = vadd.f32 %v10844, %v10847
    %v10850 = vcombine.high %v10840, %v10840
    %10851 = vrot.lane.b32.xlu0 %v10850, 58
    %v10852 = vpop.permute.xlu0 %10851
    %v10854 = vadd.f32 %v10849, %v10852
    %v10857 = vunpack.c.l.s4 1966171168
    %v10858 = vunpack.c.0.s8 %v10857
    %v10859 = vlaneseq
    %v10860 = vshrl.u32 %v10859, 7
    %v10861 = vsub.s32 %v10858, %v10860
    %v10862 = vrot.slane %v10771, %v10861
    %v10864 = vunpack.c.l.s4 1966171168
    %v10865 = vunpack.c.0.s8 %v10864
    %v10866 = vlaneseq
    %v10867 = vshrl.u32 %v10866, 7
    %v10868 = vsub.s32 %v10865, %v10867
    %v10869 = vrot.slane %v10862, %v10868
    %10870 = vrot.lane.b32.xlu0 %v10869, 48
    %v10871 = vpop.permute.xlu0 %10870
    %v10873 = vadd.f32 %v10854, %v10871
    %v10874 = vcombine.high %v10862, %v10862
    %v10876 = vunpack.c.l.s4 1966171168
    %v10877 = vunpack.c.0.s8 %v10876
    %v10878 = vlaneseq
    %v10879 = vshrl.u32 %v10878, 7
    %v10880 = vsub.s32 %v10877, %v10879
    %v10881 = vrot.slane %v10874, %v10880
    %10882 = vrot.lane.b32.xlu0 %v10881, 38
    %v10883 = vpop.permute.xlu0 %10882
    %v10885 = vadd.f32 %v10873, %v10883
    %v10886 = vcombine.high %v10869, %v10869
    %10887 = vrot.lane.b32.xlu0 %v10886, 28
    %v10888 = vpop.permute.xlu0 %10887
    %v10890 = vadd.f32 %v10885, %v10888
    %v10891 = vcombine.high %v10881, %v10881
    %10892 = vrot.lane.b32.xlu0 %v10891, 18
    %v10893 = vpop.permute.xlu0 %10892
    %v10895 = vadd.f32 %v10890, %v10893
    %v10897 = vcombine.high %v10771, %v10773
    %v10899 = vunpack.c.l.s4 1966171168
    %v10900 = vunpack.c.0.s8 %v10899
    %v10901 = vlaneseq
    %v10902 = vshrl.u32 %v10901, 7
    %v10903 = vsub.s32 %v10900, %v10902
    %v10904 = vrot.slane %v10897, %v10903
    %v10906 = vunpack.c.l.s4 1966171168
    %v10907 = vunpack.c.0.s8 %v10906
    %v10908 = vlaneseq
    %v10909 = vshrl.u32 %v10908, 7
    %v10910 = vsub.s32 %v10907, %v10909
    %v10911 = vrot.slane %v10904, %v10910
    %10912 = vrot.lane.b32.xlu0 %v10911, 8
    %v10913 = vpop.permute.xlu0 %10912
    %v10914 = vrot.slane %v10913, 1
    %vm10915 = vcmask 64512
    %v10916 = vsel %vm10915, %v10913, %v10914
    %v10918 = vadd.f32 %v10895, %v10916
    %v10919 = vcombine.high %v10773, %v10773
    %v10921 = vunpack.c.l.s4 1966171168
    %v10922 = vunpack.c.0.s8 %v10921
    %v10923 = vlaneseq
    %v10924 = vshrl.u32 %v10923, 7
    %v10925 = vsub.s32 %v10922, %v10924
    %v10926 = vrot.slane %v10919, %v10925
    %v10927 = vcombine.high %v10926, %v10926
    %v10929 = vunpack.c.l.s4 1966171168
    %v10930 = vunpack.c.0.s8 %v10929
    %v10931 = vlaneseq
    %v10932 = vshrl.u32 %v10931, 7
    %v10933 = vsub.s32 %v10930, %v10932
    %v10934 = vrot.slane %v10927, %v10933
    %10935 = vrot.lane.b32.xlu0 %v10934, 126
    %v10936 = vpop.permute.xlu0 %10935
    %v10938 = vadd.f32 %v10918, %v10936
    %v10940 = vunpack.c.l.s4 1966171168
    %v10941 = vunpack.c.0.s8 %v10940
    %v10942 = vlaneseq
    %v10943 = vshrl.u32 %v10942, 7
    %v10944 = vsub.s32 %v10941, %v10943
    %v10945 = vrot.slane %v10926, %v10944
    %v10946 = vcombine.high %v10945, %v10945
    %10947 = vrot.lane.b32.xlu0 %v10946, 116
    %v10948 = vpop.permute.xlu0 %10947
    %v10950 = vadd.f32 %v10938, %v10948
    %v10951 = vcombine.high %v10934, %v10934
    %10952 = vrot.lane.b32.xlu0 %v10951, 106
    %v10953 = vpop.permute.xlu0 %10952
    %v10955 = vadd.f32 %v10950, %v10953
    %vm10956 = vcmask 73728
    %10957 = vst.msk [vmem:[#allocation5] sm:$0x1] %vm10956, %v10955
    %10972 = vrot.lane.b32.xlu0 %v10204, 124
    %v10973 = vpop.permute.xlu0 %10972
    %10974 = vrot.lane.b32.xlu0 %v10205, 124
    %v10975 = vpop.permute.xlu0 %10974
    %10976 = vrot.lane.b32.xlu0 %v10206, 124
    %v10977 = vpop.permute.xlu0 %10976
    %10978 = vrot.lane.b32.xlu0 %v10207, 124
    %v10979 = vpop.permute.xlu0 %10978
    %10980 = vrot.lane.b32.xlu0 %v10208, 124
    %v10981 = vpop.permute.xlu0 %10980
    %10982 = vrot.lane.b32.xlu0 %v10209, 124
    %v10983 = vpop.permute.xlu0 %10982
    %10984 = vrot.lane.b32.xlu0 %v10210, 124
    %v10985 = vpop.permute.xlu0 %10984
    %10986 = vrot.lane.b32.xlu0 %v10211, 124
    %v10987 = vpop.permute.xlu0 %10986
    %10988 = vrot.lane.b32.xlu0 %v10219, 124
    %v10989 = vpop.permute.xlu0 %10988
    %10990 = vrot.lane.b32.xlu0 %v10220, 124
    %v10991 = vpop.permute.xlu0 %10990
    %10992 = vrot.lane.b32.xlu0 %v10221, 124
    %v10993 = vpop.permute.xlu0 %10992
    %10994 = vrot.lane.b32.xlu0 %v10222, 124
    %v10995 = vpop.permute.xlu0 %10994
    %10996 = vrot.lane.b32.xlu0 %v10223, 124
    %v10997 = vpop.permute.xlu0 %10996
    %10998 = vrot.lane.b32.xlu0 %v10224, 124
    %v10999 = vpop.permute.xlu0 %10998
    %11000 = vrot.lane.b32.xlu0 %v10225, 124
    %v11001 = vpop.permute.xlu0 %11000
    %11002 = vrot.lane.b32.xlu0 %v10226, 124
    %v11003 = vpop.permute.xlu0 %11002
    %vm11004 = vcmask 1014784
    %v11005 = vsel %vm11004, %v10973, %v10975
    %v11006 = vsel %vm11004, %v10975, %v10977
    %v11007 = vsel %vm11004, %v10977, %v10979
    %v11008 = vsel %vm11004, %v10979, %v10981
    %v11009 = vsel %vm11004, %v10981, %v10983
    %v11010 = vsel %vm11004, %v10983, %v10985
    %v11011 = vsel %vm11004, %v10985, %v10987
    %v11012 = vsel %vm11004, %v10989, %v10991
    %v11013 = vsel %vm11004, %v10991, %v10993
    %v11014 = vsel %vm11004, %v10993, %v10995
    %v11015 = vsel %vm11004, %v10995, %v10997
    %v11016 = vsel %vm11004, %v10997, %v10999
    %v11017 = vsel %vm11004, %v10999, %v11001
    %v11018 = vsel %vm11004, %v11001, %v11003
    %v11033 = vsel %vm10457, %v10987, 0
    %v11035 = vsel %vm10457, %v11003, 0
    %11037 = vmatprep.subr.mxu0 %v10262
    %11038 = vmatpush1.msra.mxu0 %v10261
    %11039 = vmatprep.subr.mxu0 %v10260
    %11040 = vmatpush1.msra.mxu0 %v10259
    %11041 = vmatprep.subr.mxu0 %v10258
    %11042 = vmatpush1.msra.mxu0 %v10257
    %11043 = vmatprep.subr.mxu0 %v10256
    %11044 = vmatpush1.msra.mxu0 %v10255
    %11045 = vmatprep.subr.mxu0 %v10254
    %11046 = vmatpush1.msra.mxu0 %v10253
    %11047 = vmatprep.subr.mxu0 %v10252
    %11048 = vmatpush1.msra.mxu0 %v10251
    %11049 = vmatprep.subr.mxu0 %v10250
    %11050 = vmatpush1.msra.mxu0 %v10249
    %11051 = vmatprep.subr.mxu0 %v10248
    %11052 = vmatpush1.msra.mxu0 %v10247
    %11053 = vmatprep.subr.mxu0 %v10246
    %11054 = vmatpush1.msra.mxu0 %v10245
    %11055 = vmatprep.subr.mxu0 %v10244
    %11056 = vmatpush1.msra.mxu0 %v10243
    %11057 = vmatprep.subr.mxu0 %v10242
    %11058 = vmatpush1.msra.mxu0 %v10241
    %11059 = vmatprep.subr.mxu0 %v10240
    %11060 = vmatpush1.msra.mxu0 %v10239
    %11061 = vmatprep.subr.mxu0 %v10238
    %11062 = vmatpush1.msra.mxu0 %v10237
    %11063 = vmatprep.subr.mxu0 %v10236
    %11064 = vmatpush1.msra.mxu0 %v10235
    %11065 = vmatprep.subr.mxu0 %v10234
    %11066 = vmatpush1.msra.mxu0 %v10233
    %11067 = vmatprep.subr.mxu0 %v10232
    %11068 = vmatpush1.msra.mxu0 %v10231
    %11069 = vmatprep.subr.mxu0 %v10294
    %11070 = vmatpush2.msra.mxu0 %v10293
    %11071 = vmatprep.subr.mxu0 %v10292
    %11072 = vmatpush2.msra.mxu0 %v10291
    %11073 = vmatprep.subr.mxu0 %v10290
    %11074 = vmatpush2.msra.mxu0 %v10289
    %11075 = vmatprep.subr.mxu0 %v10288
    %11076 = vmatpush2.msra.mxu0 %v10287
    %11077 = vmatprep.subr.mxu0 %v10286
    %11078 = vmatpush2.msra.mxu0 %v10285
    %11079 = vmatprep.subr.mxu0 %v10284
    %11080 = vmatpush2.msra.mxu0 %v10283
    %11081 = vmatprep.subr.mxu0 %v10282
    %11082 = vmatpush2.msra.mxu0 %v10281
    %11083 = vmatprep.subr.mxu0 %v10280
    %11084 = vmatpush2.msra.mxu0 %v10279
    %11085 = vmatprep.subr.mxu0 %v10278
    %11086 = vmatpush2.msra.mxu0 %v10277
    %11087 = vmatprep.subr.mxu0 %v10276
    %11088 = vmatpush2.msra.mxu0 %v10275
    %11089 = vmatprep.subr.mxu0 %v10274
    %11090 = vmatpush2.msra.mxu0 %v10273
    %11091 = vmatprep.subr.mxu0 %v10272
    %11092 = vmatpush2.msra.mxu0 %v10271
    %11093 = vmatprep.subr.mxu0 %v10270
    %11094 = vmatpush2.msra.mxu0 %v10269
    %11095 = vmatprep.subr.mxu0 %v10268
    %11096 = vmatpush2.msra.mxu0 %v10267
    %11097 = vmatprep.subr.mxu0 %v10266
    %11098 = vmatpush2.msra.mxu0 %v10265
    %11099 = vmatprep.subr.mxu0 %v10264
    %11100 = vmatpush2.msra.mxu0 %v10263
    %11101 = vmatprep.mubr.f32.mxu0 %v11006
    %11102 = vmatmul.mubr.f32.gmra.mxu0 %v11005
    %v11103 = vpop.f32.mrf.mxu0
    %v11104 = vadd.f32 0.0, %v11103
    %v11105 = vpop.f32.mrf.mxu0
    %11106 = vmatprep.mubr.f32.mxu0 %v11013
    %11107 = vmatmul.mubr.f32.gmra.mxu0 %v11012
    %v11108 = vpop.f32.mrf.mxu0
    %v11109 = vadd.f32 0.0, %v11108
    %v11110 = vpop.f32.mrf.mxu0
    %v11111 = vadd.f32 0.0, %v11110
    %11112 = vdwg.mxu0
    %11113 = vmatprep.subr.mxu0 %v10326
    %11114 = vmatpush1.msra.mxu0 %v10325
    %11115 = vmatprep.subr.mxu0 %v10324
    %11116 = vmatpush1.msra.mxu0 %v10323
    %11117 = vmatprep.subr.mxu0 %v10322
    %11118 = vmatpush1.msra.mxu0 %v10321
    %11119 = vmatprep.subr.mxu0 %v10320
    %11120 = vmatpush1.msra.mxu0 %v10319
    %11121 = vmatprep.subr.mxu0 %v10318
    %11122 = vmatpush1.msra.mxu0 %v10317
    %11123 = vmatprep.subr.mxu0 %v10316
    %11124 = vmatpush1.msra.mxu0 %v10315
    %11125 = vmatprep.subr.mxu0 %v10314
    %11126 = vmatpush1.msra.mxu0 %v10313
    %11127 = vmatprep.subr.mxu0 %v10312
    %11128 = vmatpush1.msra.mxu0 %v10311
    %11129 = vmatprep.subr.mxu0 %v10310
    %11130 = vmatpush1.msra.mxu0 %v10309
    %11131 = vmatprep.subr.mxu0 %v10308
    %11132 = vmatpush1.msra.mxu0 %v10307
    %11133 = vmatprep.subr.mxu0 %v10306
    %11134 = vmatpush1.msra.mxu0 %v10305
    %11135 = vmatprep.subr.mxu0 %v10304
    %11136 = vmatpush1.msra.mxu0 %v10303
    %11137 = vmatprep.subr.mxu0 %v10302
    %11138 = vmatpush1.msra.mxu0 %v10301
    %11139 = vmatprep.subr.mxu0 %v10300
    %11140 = vmatpush1.msra.mxu0 %v10299
    %11141 = vmatprep.subr.mxu0 %v10298
    %11142 = vmatpush1.msra.mxu0 %v10297
    %11143 = vmatprep.subr.mxu0 %v10296
    %11144 = vmatpush1.msra.mxu0 %v10295
    %11145 = vmatprep.subr.mxu0 %v10358
    %11146 = vmatpush2.msra.mxu0 %v10357
    %11147 = vmatprep.subr.mxu0 %v10356
    %11148 = vmatpush2.msra.mxu0 %v10355
    %11149 = vmatprep.subr.mxu0 %v10354
    %11150 = vmatpush2.msra.mxu0 %v10353
    %11151 = vmatprep.subr.mxu0 %v10352
    %11152 = vmatpush2.msra.mxu0 %v10351
    %11153 = vmatprep.subr.mxu0 %v10350
    %11154 = vmatpush2.msra.mxu0 %v10349
    %11155 = vmatprep.subr.mxu0 %v10348
    %11156 = vmatpush2.msra.mxu0 %v10347
    %11157 = vmatprep.subr.mxu0 %v10346
    %11158 = vmatpush2.msra.mxu0 %v10345
    %11159 = vmatprep.subr.mxu0 %v10344
    %11160 = vmatpush2.msra.mxu0 %v10343
    %11161 = vmatprep.subr.mxu0 %v10342
    %11162 = vmatpush2.msra.mxu0 %v10341
    %11163 = vmatprep.subr.mxu0 %v10340
    %11164 = vmatpush2.msra.mxu0 %v10339
    %11165 = vmatprep.subr.mxu0 %v10338
    %11166 = vmatpush2.msra.mxu0 %v10337
    %11167 = vmatprep.subr.mxu0 %v10336
    %11168 = vmatpush2.msra.mxu0 %v10335
    %11169 = vmatprep.subr.mxu0 %v10334
    %11170 = vmatpush2.msra.mxu0 %v10333
    %11171 = vmatprep.subr.mxu0 %v10332
    %11172 = vmatpush2.msra.mxu0 %v10331
    %11173 = vmatprep.subr.mxu0 %v10330
    %11174 = vmatpush2.msra.mxu0 %v10329
    %11175 = vmatprep.subr.mxu0 %v10328
    %11176 = vmatpush2.msra.mxu0 %v10327
    %11177 = vmatprep.mubr.f32.mxu0 %v11008
    %11178 = vmatmul.mubr.f32.gmra.mxu0 %v11007
    %v11179 = vpop.f32.mrf.mxu0
    %v11180 = vadd.f32 %v11104, %v11179
    %v11181 = vpop.f32.mrf.mxu0
    %11182 = vmatprep.mubr.f32.mxu0 %v11015
    %11183 = vmatmul.mubr.f32.gmra.mxu0 %v11014
    %v11184 = vpop.f32.mrf.mxu0
    %v11185 = vadd.f32 %v11109, %v11184
    %v11186 = vpop.f32.mrf.mxu0
    %v11187 = vadd.f32 %v11111, %v11186
    %11188 = vdwg.mxu0
    %11189 = vmatprep.subr.mxu0 %v10390
    %11190 = vmatpush1.msra.mxu0 %v10389
    %11191 = vmatprep.subr.mxu0 %v10388
    %11192 = vmatpush1.msra.mxu0 %v10387
    %11193 = vmatprep.subr.mxu0 %v10386
    %11194 = vmatpush1.msra.mxu0 %v10385
    %11195 = vmatprep.subr.mxu0 %v10384
    %11196 = vmatpush1.msra.mxu0 %v10383
    %11197 = vmatprep.subr.mxu0 %v10382
    %11198 = vmatpush1.msra.mxu0 %v10381
    %11199 = vmatprep.subr.mxu0 %v10380
    %11200 = vmatpush1.msra.mxu0 %v10379
    %11201 = vmatprep.subr.mxu0 %v10378
    %11202 = vmatpush1.msra.mxu0 %v10377
    %11203 = vmatprep.subr.mxu0 %v10376
    %11204 = vmatpush1.msra.mxu0 %v10375
    %11205 = vmatprep.subr.mxu0 %v10374
    %11206 = vmatpush1.msra.mxu0 %v10373
    %11207 = vmatprep.subr.mxu0 %v10372
    %11208 = vmatpush1.msra.mxu0 %v10371
    %11209 = vmatprep.subr.mxu0 %v10370
    %11210 = vmatpush1.msra.mxu0 %v10369
    %11211 = vmatprep.subr.mxu0 %v10368
    %11212 = vmatpush1.msra.mxu0 %v10367
    %11213 = vmatprep.subr.mxu0 %v10366
    %11214 = vmatpush1.msra.mxu0 %v10365
    %11215 = vmatprep.subr.mxu0 %v10364
    %11216 = vmatpush1.msra.mxu0 %v10363
    %11217 = vmatprep.subr.mxu0 %v10362
    %11218 = vmatpush1.msra.mxu0 %v10361
    %11219 = vmatprep.subr.mxu0 %v10360
    %11220 = vmatpush1.msra.mxu0 %v10359
    %11221 = vmatprep.subr.mxu0 %v10422
    %11222 = vmatpush2.msra.mxu0 %v10421
    %11223 = vmatprep.subr.mxu0 %v10420
    %11224 = vmatpush2.msra.mxu0 %v10419
    %11225 = vmatprep.subr.mxu0 %v10418
    %11226 = vmatpush2.msra.mxu0 %v10417
    %11227 = vmatprep.subr.mxu0 %v10416
    %11228 = vmatpush2.msra.mxu0 %v10415
    %11229 = vmatprep.subr.mxu0 %v10414
    %11230 = vmatpush2.msra.mxu0 %v10413
    %11231 = vmatprep.subr.mxu0 %v10412
    %11232 = vmatpush2.msra.mxu0 %v10411
    %11233 = vmatprep.subr.mxu0 %v10410
    %11234 = vmatpush2.msra.mxu0 %v10409
    %11235 = vmatprep.subr.mxu0 %v10408
    %11236 = vmatpush2.msra.mxu0 %v10407
    %11237 = vmatprep.subr.mxu0 %v10406
    %11238 = vmatpush2.msra.mxu0 %v10405
    %11239 = vmatprep.subr.mxu0 %v10404
    %11240 = vmatpush2.msra.mxu0 %v10403
    %11241 = vmatprep.subr.mxu0 %v10402
    %11242 = vmatpush2.msra.mxu0 %v10401
    %11243 = vmatprep.subr.mxu0 %v10400
    %11244 = vmatpush2.msra.mxu0 %v10399
    %11245 = vmatprep.subr.mxu0 %v10398
    %11246 = vmatpush2.msra.mxu0 %v10397
    %11247 = vmatprep.subr.mxu0 %v10396
    %11248 = vmatpush2.msra.mxu0 %v10395
    %11249 = vmatprep.subr.mxu0 %v10394
    %11250 = vmatpush2.msra.mxu0 %v10393
    %11251 = vmatprep.subr.mxu0 %v10392
    %11252 = vmatpush2.msra.mxu0 %v10391
    %11253 = vmatprep.mubr.f32.mxu0 %v11010
    %11254 = vmatmul.mubr.f32.gmra.mxu0 %v11009
    %v11255 = vpop.f32.mrf.mxu0
    %v11256 = vadd.f32 %v11180, %v11255
    %v11257 = vpop.f32.mrf.mxu0
    %11258 = vmatprep.mubr.f32.mxu0 %v11017
    %11259 = vmatmul.mubr.f32.gmra.mxu0 %v11016
    %v11260 = vpop.f32.mrf.mxu0
    %v11261 = vadd.f32 %v11185, %v11260
    %v11262 = vpop.f32.mrf.mxu0
    %v11263 = vadd.f32 %v11187, %v11262
    %11264 = vdwg.mxu0
    %11265 = vmatprep.subr.mxu0 %v10454
    %11266 = vmatpush1.msra.mxu0 %v10453
    %11267 = vmatprep.subr.mxu0 %v10452
    %11268 = vmatpush1.msra.mxu0 %v10451
    %11269 = vmatprep.subr.mxu0 %v10450
    %11270 = vmatpush1.msra.mxu0 %v10449
    %11271 = vmatprep.subr.mxu0 %v10448
    %11272 = vmatpush1.msra.mxu0 %v10447
    %11273 = vmatprep.subr.mxu0 %v10446
    %11274 = vmatpush1.msra.mxu0 %v10445
    %11275 = vmatprep.subr.mxu0 %v10444
    %11276 = vmatpush1.msra.mxu0 %v10443
    %11277 = vmatprep.subr.mxu0 %v10442
    %11278 = vmatpush1.msra.mxu0 %v10441
    %11279 = vmatprep.subr.mxu0 %v10440
    %11280 = vmatpush1.msra.mxu0 %v10439
    %11281 = vmatprep.subr.mxu0 %v10438
    %11282 = vmatpush1.msra.mxu0 %v10437
    %11283 = vmatprep.subr.mxu0 %v10436
    %11284 = vmatpush1.msra.mxu0 %v10435
    %11285 = vmatprep.subr.mxu0 %v10434
    %11286 = vmatpush1.msra.mxu0 %v10433
    %11287 = vmatprep.subr.mxu0 %v10432
    %11288 = vmatpush1.msra.mxu0 %v10431
    %11289 = vmatprep.subr.mxu0 %v10430
    %11290 = vmatpush1.msra.mxu0 %v10429
    %11291 = vmatprep.subr.mxu0 %v10428
    %11292 = vmatpush1.msra.mxu0 %v10427
    %11293 = vmatprep.subr.mxu0 %v10426
    %11294 = vmatpush1.msra.mxu0 %v10425
    %11295 = vmatprep.subr.mxu0 %v10424
    %11296 = vmatpush1.msra.mxu0 %v10423
    %11297 = vmatprep.subr.mxu0 0.0
    %11298 = vmatpush2.msra.mxu0 0.0
    %11299 = vmatprep.subr.mxu0 0.0
    %11300 = vmatpush2.msra.mxu0 0.0
    %11301 = vmatprep.subr.mxu0 0.0
    %11302 = vmatpush2.msra.mxu0 0.0
    %11303 = vmatprep.subr.mxu0 0.0
    %11304 = vmatpush2.msra.mxu0 0.0
    %11305 = vmatprep.subr.mxu0 0.0
    %11306 = vmatpush2.msra.mxu0 0.0
    %11307 = vmatprep.subr.mxu0 0.0
    %11308 = vmatpush2.msra.mxu0 0.0
    %11309 = vmatprep.subr.mxu0 0.0
    %11310 = vmatpush2.msra.mxu0 0.0
    %11311 = vmatprep.subr.mxu0 0.0
    %11312 = vmatpush2.msra.mxu0 0.0
    %11313 = vmatprep.subr.mxu0 0.0
    %11314 = vmatpush2.msra.mxu0 0.0
    %11315 = vmatprep.subr.mxu0 0.0
    %11316 = vmatpush2.msra.mxu0 0.0
    %11317 = vmatprep.subr.mxu0 0.0
    %11318 = vmatpush2.msra.mxu0 0.0
    %11319 = vmatprep.subr.mxu0 0.0
    %11320 = vmatpush2.msra.mxu0 0.0
    %11321 = vmatprep.subr.mxu0 0.0
    %11322 = vmatpush2.msra.mxu0 0.0
    %11323 = vmatprep.subr.mxu0 0.0
    %11324 = vmatpush2.msra.mxu0 0.0
    %11325 = vmatprep.subr.mxu0 0.0
    %11326 = vmatpush2.msra.mxu0 0.0
    %11327 = vmatprep.subr.mxu0 %v10469
    %11328 = vmatpush2.msra.mxu0 %v10466
    %11329 = vmatprep.mubr.f32.mxu0 %v11033
    %11330 = vmatmul.mubr.f32.gmra.mxu0 %v11011
    %v11331 = vpop.f32.mrf.mxu0
    %v11332 = vadd.f32 %v11256, %v11331
    %v11333 = vpop.f32.mrf.mxu0
    %11334 = vmatprep.mubr.f32.mxu0 %v11035
    %11335 = vmatmul.mubr.f32.gmra.mxu0 %v11018
    %v11336 = vpop.f32.mrf.mxu0
    %v11337 = vadd.f32 %v11261, %v11336
    %v11338 = vpop.f32.mrf.mxu0
    %v11339 = vadd.f32 %v11263, %v11338
    %11340 = vdwg.mxu0
    %v11341 = vld [vmem:[%s4] sm:$0x1]
    %v11342 = vadd.f32 %v11341, %v11332
    %v11345 = vunpack.c.l.s4 1966171168
    %v11346 = vunpack.c.0.s8 %v11345
    %v11347 = vlaneseq
    %v11348 = vshrl.u32 %v11347, 7
    %v11349 = vsub.s32 %v11346, %v11348
    %v11350 = vrot.slane %v11332, %v11349
    %v11351 = vcombine.high %v11350, %v11350
    %v11353 = vunpack.c.l.s4 1966171168
    %v11354 = vunpack.c.0.s8 %v11353
    %v11355 = vlaneseq
    %v11356 = vshrl.u32 %v11355, 7
    %v11357 = vsub.s32 %v11354, %v11356
    %v11358 = vrot.slane %v11350, %v11357
    %v11360 = vunpack.c.l.s4 1966171168
    %v11361 = vunpack.c.0.s8 %v11360
    %v11362 = vlaneseq
    %v11363 = vshrl.u32 %v11362, 7
    %v11364 = vsub.s32 %v11361, %v11363
    %v11365 = vrot.slane %v11351, %v11364
    %11366 = vrot.lane.b32.xlu0 %v11365, 118
    %v11367 = vpop.permute.xlu0 %11366
    %v11369 = vadd.f32 %v11342, %v11367
    %v11370 = vcombine.high %v11358, %v11358
    %11371 = vrot.lane.b32.xlu0 %v11370, 108
    %v11372 = vpop.permute.xlu0 %11371
    %v11374 = vadd.f32 %v11369, %v11372
    %v11375 = vcombine.high %v11365, %v11365
    %11376 = vrot.lane.b32.xlu0 %v11375, 98
    %v11377 = vpop.permute.xlu0 %11376
    %v11379 = vadd.f32 %v11374, %v11377
    %v11380 = vcombine.high %v11332, %v11332
    %v11382 = vunpack.c.l.s4 1966171168
    %v11383 = vunpack.c.0.s8 %v11382
    %v11384 = vlaneseq
    %v11385 = vshrl.u32 %v11384, 7
    %v11386 = vsub.s32 %v11383, %v11385
    %v11387 = vrot.slane %v11380, %v11386
    %v11389 = vunpack.c.l.s4 1966171168
    %v11390 = vunpack.c.0.s8 %v11389
    %v11391 = vlaneseq
    %v11392 = vshrl.u32 %v11391, 7
    %v11393 = vsub.s32 %v11390, %v11392
    %v11394 = vrot.slane %v11387, %v11393
    %11395 = vrot.lane.b32.xlu0 %v11394, 88
    %v11396 = vpop.permute.xlu0 %11395
    %v11398 = vadd.f32 %v11379, %v11396
    %v11399 = vcombine.high %v11387, %v11387
    %v11401 = vunpack.c.l.s4 1966171168
    %v11402 = vunpack.c.0.s8 %v11401
    %v11403 = vlaneseq
    %v11404 = vshrl.u32 %v11403, 7
    %v11405 = vsub.s32 %v11402, %v11404
    %v11406 = vrot.slane %v11399, %v11405
    %11407 = vrot.lane.b32.xlu0 %v11406, 78
    %v11408 = vpop.permute.xlu0 %11407
    %v11410 = vadd.f32 %v11398, %v11408
    %v11411 = vcombine.high %v11394, %v11394
    %11412 = vrot.lane.b32.xlu0 %v11411, 68
    %v11413 = vpop.permute.xlu0 %11412
    %v11415 = vadd.f32 %v11410, %v11413
    %v11416 = vcombine.high %v11406, %v11406
    %11417 = vrot.lane.b32.xlu0 %v11416, 58
    %v11418 = vpop.permute.xlu0 %11417
    %v11420 = vadd.f32 %v11415, %v11418
    %v11423 = vunpack.c.l.s4 1966171168
    %v11424 = vunpack.c.0.s8 %v11423
    %v11425 = vlaneseq
    %v11426 = vshrl.u32 %v11425, 7
    %v11427 = vsub.s32 %v11424, %v11426
    %v11428 = vrot.slane %v11337, %v11427
    %v11430 = vunpack.c.l.s4 1966171168
    %v11431 = vunpack.c.0.s8 %v11430
    %v11432 = vlaneseq
    %v11433 = vshrl.u32 %v11432, 7
    %v11434 = vsub.s32 %v11431, %v11433
    %v11435 = vrot.slane %v11428, %v11434
    %11436 = vrot.lane.b32.xlu0 %v11435, 48
    %v11437 = vpop.permute.xlu0 %11436
    %v11439 = vadd.f32 %v11420, %v11437
    %v11440 = vcombine.high %v11428, %v11428
    %v11442 = vunpack.c.l.s4 1966171168
    %v11443 = vunpack.c.0.s8 %v11442
    %v11444 = vlaneseq
    %v11445 = vshrl.u32 %v11444, 7
    %v11446 = vsub.s32 %v11443, %v11445
    %v11447 = vrot.slane %v11440, %v11446
    %11448 = vrot.lane.b32.xlu0 %v11447, 38
    %v11449 = vpop.permute.xlu0 %11448
    %v11451 = vadd.f32 %v11439, %v11449
    %v11452 = vcombine.high %v11435, %v11435
    %11453 = vrot.lane.b32.xlu0 %v11452, 28
    %v11454 = vpop.permute.xlu0 %11453
    %v11456 = vadd.f32 %v11451, %v11454
    %v11457 = vcombine.high %v11447, %v11447
    %11458 = vrot.lane.b32.xlu0 %v11457, 18
    %v11459 = vpop.permute.xlu0 %11458
    %v11461 = vadd.f32 %v11456, %v11459
    %v11463 = vcombine.high %v11337, %v11339
    %v11465 = vunpack.c.l.s4 1966171168
    %v11466 = vunpack.c.0.s8 %v11465
    %v11467 = vlaneseq
    %v11468 = vshrl.u32 %v11467, 7
    %v11469 = vsub.s32 %v11466, %v11468
    %v11470 = vrot.slane %v11463, %v11469
    %v11472 = vunpack.c.l.s4 1966171168
    %v11473 = vunpack.c.0.s8 %v11472
    %v11474 = vlaneseq
    %v11475 = vshrl.u32 %v11474, 7
    %v11476 = vsub.s32 %v11473, %v11475
    %v11477 = vrot.slane %v11470, %v11476
    %11478 = vrot.lane.b32.xlu0 %v11477, 8
    %v11479 = vpop.permute.xlu0 %11478
    %v11480 = vrot.slane %v11479, 1
    %v11481 = vsel %vm10915, %v11479, %v11480
    %v11483 = vadd.f32 %v11461, %v11481
    %v11484 = vcombine.high %v11339, %v11339
    %v11486 = vunpack.c.l.s4 1966171168
    %v11487 = vunpack.c.0.s8 %v11486
    %v11488 = vlaneseq
    %v11489 = vshrl.u32 %v11488, 7
    %v11490 = vsub.s32 %v11487, %v11489
    %v11491 = vrot.slane %v11484, %v11490
    %v11492 = vcombine.high %v11491, %v11491
    %v11494 = vunpack.c.l.s4 1966171168
    %v11495 = vunpack.c.0.s8 %v11494
    %v11496 = vlaneseq
    %v11497 = vshrl.u32 %v11496, 7
    %v11498 = vsub.s32 %v11495, %v11497
    %v11499 = vrot.slane %v11492, %v11498
    %11500 = vrot.lane.b32.xlu0 %v11499, 126
    %v11501 = vpop.permute.xlu0 %11500
    %v11503 = vadd.f32 %v11483, %v11501
    %v11505 = vunpack.c.l.s4 1966171168
    %v11506 = vunpack.c.0.s8 %v11505
    %v11507 = vlaneseq
    %v11508 = vshrl.u32 %v11507, 7
    %v11509 = vsub.s32 %v11506, %v11508
    %v11510 = vrot.slane %v11491, %v11509
    %v11511 = vcombine.high %v11510, %v11510
    %11512 = vrot.lane.b32.xlu0 %v11511, 116
    %v11513 = vpop.permute.xlu0 %11512
    %v11515 = vadd.f32 %v11503, %v11513
    %v11516 = vcombine.high %v11499, %v11499
    %11517 = vrot.lane.b32.xlu0 %v11516, 106
    %v11518 = vpop.permute.xlu0 %11517
    %v11520 = vadd.f32 %v11515, %v11518
    %11521 = vst.msk [vmem:[#allocation5 + $0x1] sm:$0x1] %vm10956, %v11520
    // Predicated region
    $region56: #{simple_resnet_forward.1} parent=1 // pred_check
      _
    $region57: #{simple_resnet_forward.1} parent=1 // pred_check_branch
      %11523 = sbr.rel (0) target = $region59
    $region58: #{simple_resnet_forward.1} parent=1 // pred_region
      %s11525 = ssub.s32 32, 32
      %11526 = vsyncadd [#allocation6], %s11525
      %s11528 = sshll.u32 [#allocation5], 4
      %s11529 = int_to_ptr.vmem [resolvable:$true] %s11528
      %11531 = dma.vmem_to_hbm [thread:$0]  %s11529, 32, %s6, [#allocation6]
    $region59: #{simple_resnet_forward.1} parent=1 // pred_fallthru
      _
    // Predicated region
    $region60: #{simple_resnet_forward.1} parent=1 // pred_check
      _
    $region61: #{simple_resnet_forward.1} parent=1 // pred_check_branch
      %11533 = sbr.rel (0) target = $region63
    $region62: #{simple_resnet_forward.1} parent=1 // pred_region
      %11534 = dma.done [#allocation6], 32
    $region63: #{simple_resnet_forward.1} parent=1 // pred_fallthru
      _
    %11535 = vsyncpa [#allocation6], 1
  %11536 = vsyncmov [#allocation4]
  %s11537 = vpop.sfrf %11536
  %p11538 = scmp.eq.s32.totalorder %s11537, 0
  %p11539 = pneg %p11538
  %11541 = shalt.err (%p11539)

</llo_original>
